<compile_context>
chip_gen: v7x
topology: tpu7x:2x2x1
jax: 0.10.0
libtpu: 0.0.40
codegen_flags: <defaults>
</compile_context>

<pallas_src>
import functools

import jax
import jax.numpy as jnp
from jax.experimental import pallas as pl
from jax.experimental.pallas import tpu as pltpu

HID = 64
LANE = 128


def _snake(h, a, inv_a, *, bf16_sin=False):
    # snake(h) = h + sin(a*h)^2 / a, with 1/a precomputed (no per-element divide).
    ah = a * h
    if bf16_sin:
        # v6e/v7x only: bf16 EUP ~2x sin throughput; exceeds 1e-5 tolerance.
        s = jnp.sin(ah.astype(jnp.bfloat16)).astype(jnp.float32)
    else:
        s = jnp.sin(ah)
    return h + (s * s) * inv_a


def distinguisher_kernel(x_ref, c_ref, w2_ref, w3_ref, w4_ref, b4_ref, o_ref,
                         *, bf16_sin=False):
    # Batch-on-lanes layout: activations are (HID=64 sublanes, TB lanes).
    x = x_ref[...]                         # (1, TB)
    c = c_ref[...]                         # (HID, 10) constants slab

    w1 = c[:, 0:1]
    b1 = c[:, 1:2]; a1 = c[:, 2:3]; ia1 = c[:, 3:4]
    b2 = c[:, 4:5]; a2 = c[:, 5:6]; ia2 = c[:, 6:7]
    b3 = c[:, 7:8]; a3 = c[:, 8:9]; ia3 = c[:, 9:10]

    # Layer 1: Linear(1, 64) with K=1 -> broadcast outer product on the VPU.
    h = w1 * x + b1                        # (HID, TB)
    h = _snake(h, a1, ia1, bf16_sin=bf16_sin)

    # Layers 2/3: 64x64 MXU matmuls; weights kept in PyTorch (out, in) layout
    # so h_out = W @ h_in directly (no transpose needed).
    h = jnp.dot(w2_ref[...], h, preferred_element_type=jnp.float32) + b2
    h = _snake(h, a2, ia2, bf16_sin=bf16_sin)

    h = jnp.dot(w3_ref[...], h, preferred_element_type=jnp.float32) + b3
    h = _snake(h, a3, ia3, bf16_sin=bf16_sin)

    # Layer 4: Linear(64, 1) + Sigmoid; output stays lane-dense (1, TB).
    z = jnp.dot(w4_ref[...], h, preferred_element_type=jnp.float32) + b4_ref[...]
    o_ref[...] = jax.nn.sigmoid(z)


def distinguisher_forward(x, params, *, tb=1024, bf16_sin=False):
    """x: (N, 1) float32 -> (N, 1) float32. Params use PyTorch layouts."""
    N = x.shape[0]
    assert tb % LANE == 0, "tile width must be a multiple of 128 lanes"

    # Lane-dense relayout: batch goes on the lane axis, padded to a tile.
    tb_eff = min(tb, max(LANE, ((N + LANE - 1) // LANE) * LANE))
    n_pad = (-N) % tb_eff
    xt = x.reshape(1, N).astype(jnp.float32)
    if n_pad:
        xt = jnp.pad(xt, ((0, 0), (0, n_pad)))
    n_padded = N + n_pad
    grid = n_padded // tb_eff

    # Pack the per-feature constants into a single (HID, 10) slab:
    # [w1, b1, a1, 1/a1, b2, a2, 1/a2, b3, a3, 1/a3]
    col = lambda v: jnp.reshape(v, (HID, 1)).astype(jnp.float32)
    a1, a2, a3 = params["a1"], params["a2"], params["a3"]
    consts = jnp.concatenate(
        [
            col(params["w1"]),
            col(params["b1"]), col(a1), col(1.0 / a1),
            col(params["b2"]), col(a2), col(1.0 / a2),
            col(params["b3"]), col(a3), col(1.0 / a3),
        ],
        axis=1,
    )                                                   # (HID, 10)

    w2 = params["w2"].astype(jnp.float32)               # (64, 64), (out, in)
    w3 = params["w3"].astype(jnp.float32)               # (64, 64), (out, in)
    w4 = params["w4"].reshape(1, HID).astype(jnp.float32)
    b4 = params["b4"].reshape(1, 1).astype(jnp.float32)

    kernel = functools.partial(distinguisher_kernel, bf16_sin=bf16_sin)
    full = lambda shape: pl.BlockSpec(shape, lambda i: (0, 0))

    cp_kwargs = dict(dimension_semantics=("parallel",))
    if tb_eff >= 8192:
        # Large tiles: raise the scoped-VMEM cap (stay under v7x's 64 MiB/TC).
        cp_kwargs["vmem_limit_bytes"] = 48 * 1024 * 1024

    out = pl.pallas_call(
        kernel,
        out_shape=jax.ShapeDtypeStruct((1, n_padded), jnp.float32),
        grid_spec=pltpu.PrefetchScalarGridSpec(
            num_scalar_prefetch=0,
            grid=(grid,),
            in_specs=[
                pl.BlockSpec((1, tb_eff), lambda i: (0, i)),   # x tile (lane-dense)
                full((HID, 10)),                               # constants slab
                full((HID, HID)),                              # w2
                full((HID, HID)),                              # w3
                full((1, HID)),                                # w4
                full((1, 1)),                                  # b4
            ],
            out_specs=pl.BlockSpec((1, tb_eff), lambda i: (0, i)),
        ),
        compiler_params=pltpu.CompilerParams(**cp_kwargs),
    )(xt, consts, w2, w3, w4, b4)

    return out[:, :N].reshape(N, 1)


def init_params(key):
    """PyTorch-convention init: nn.Linear weights (out, in), U(-1/sqrt(fan_in), ..).
    Snake alphas init to 1 (as in the reference Snake module)."""
    ks = jax.random.split(key, 8)

    def linear(kw, kb, fan_in, fan_out):
        bound = 1.0 / jnp.sqrt(jnp.float32(fan_in))
        w = jax.random.uniform(kw, (fan_out, fan_in), jnp.float32, -bound, bound)
        b = jax.random.uniform(kb, (fan_out,), jnp.float32, -bound, bound)
        return w, b

    w1, b1 = linear(ks[0], ks[1], 1, HID)
    w2, b2 = linear(ks[2], ks[3], HID, HID)
    w3, b3 = linear(ks[4], ks[5], HID, HID)
    w4, b4 = linear(ks[6], ks[7], HID, 1)

    ones = jnp.ones((HID,), jnp.float32)
    return dict(
        w1=w1, b1=b1, a1=ones,
        w2=w2, b2=b2, a2=ones,
        w3=w3, b3=b3, a3=ones,
        w4=w4, b4=b4,
    )


def _reference(x, p):
    def snake(h, a):
        return h + jnp.sin(a * h) ** 2 / a

    h = snake(x @ p["w1"].T + p["b1"], p["a1"])
    h = snake(h @ p["w2"].T + p["b2"], p["a2"])
    h = snake(h @ p["w3"].T + p["b3"], p["a3"])
    return jax.nn.sigmoid(h @ p["w4"].T + p["b4"])


if __name__ == "__main__":
    key = jax.random.PRNGKey(0)
    k_param, k_x = jax.random.split(key)

    params = init_params(k_param)
    N = 512                                   # small batch of scalar inputs
    x = jax.random.normal(k_x, (N, 1), jnp.float32)

    out = distinguisher_forward(x, params, tb=1024)
    out = jax.block_until_ready(out)

    ref = _reference(x, params)
    assert out.shape == (N, 1)
    assert jnp.allclose(out, ref, atol=1e-5, rtol=1e-5), "mismatch vs reference"

    print("KERNEL_OK")
</pallas_src>

<mosaic_0001>
module attributes {stable_mosaic.version = 11 : i64} {
  func.func @distinguisher_kernel(%arg0: i32, %arg1: memref<1x512xf32, #tpu.memory_space<vmem>>, %arg2: memref<64x10xf32, #tpu.memory_space<vmem>>, %arg3: memref<64x64xf32, #tpu.memory_space<vmem>>, %arg4: memref<64x64xf32, #tpu.memory_space<vmem>>, %arg5: memref<1x64xf32, #tpu.memory_space<vmem>>, %arg6: memref<1x1xf32, #tpu.memory_space<vmem>>, %arg7: memref<1x512xf32, #tpu.memory_space<vmem>>) attributes {dimension_semantics = [#tpu.dimension_semantics<parallel>], iteration_bounds = array<i64: 1>, scalar_prefetch = 0 : i64, scratch_operands = 0 : i64, tpu.core_type = #tpu.core_type<tc>, window_params = [{transform_indices = @transform_0, window_bounds = array<i64: 1, 512>}, {pipeline_mode = #tpu.pipeline_mode<synchronous>, transform_indices = @transform_1, window_bounds = array<i64: 64, 10>}, {pipeline_mode = #tpu.pipeline_mode<synchronous>, transform_indices = @transform_2, window_bounds = array<i64: 64, 64>}, {pipeline_mode = #tpu.pipeline_mode<synchronous>, transform_indices = @transform_3, window_bounds = array<i64: 64, 64>}, {pipeline_mode = #tpu.pipeline_mode<synchronous>, transform_indices = @transform_4, window_bounds = array<i64: 1, 64>}, {pipeline_mode = #tpu.pipeline_mode<synchronous>, transform_indices = @transform_5, window_bounds = array<i64: 1, 1>}, {transform_indices = @transform_6, window_bounds = array<i64: 1, 512>}]} {
    %c0 = arith.constant 0 : index
    %c0_0 = arith.constant 0 : index
    %0 = vector.load %arg1[%c0, %c0_0] : memref<1x512xf32, #tpu.memory_space<vmem>>, vector<1x512xf32>
    %c0_1 = arith.constant 0 : index
    %c0_2 = arith.constant 0 : index
    %1 = vector.load %arg2[%c0_1, %c0_2] : memref<64x10xf32, #tpu.memory_space<vmem>>, vector<64x10xf32>
    %2 = vector.extract_strided_slice %1 {offsets = [0, 0], sizes = [64, 1], strides = [1, 1]} : vector<64x10xf32> to vector<64x1xf32>
    %3 = vector.extract_strided_slice %1 {offsets = [0, 1], sizes = [64, 1], strides = [1, 1]} : vector<64x10xf32> to vector<64x1xf32>
    %4 = vector.extract_strided_slice %1 {offsets = [0, 2], sizes = [64, 1], strides = [1, 1]} : vector<64x10xf32> to vector<64x1xf32>
    %5 = vector.extract_strided_slice %1 {offsets = [0, 3], sizes = [64, 1], strides = [1, 1]} : vector<64x10xf32> to vector<64x1xf32>
    %6 = vector.extract_strided_slice %1 {offsets = [0, 4], sizes = [64, 1], strides = [1, 1]} : vector<64x10xf32> to vector<64x1xf32>
    %7 = vector.extract_strided_slice %1 {offsets = [0, 5], sizes = [64, 1], strides = [1, 1]} : vector<64x10xf32> to vector<64x1xf32>
    %8 = vector.extract_strided_slice %1 {offsets = [0, 6], sizes = [64, 1], strides = [1, 1]} : vector<64x10xf32> to vector<64x1xf32>
    %9 = vector.extract_strided_slice %1 {offsets = [0, 7], sizes = [64, 1], strides = [1, 1]} : vector<64x10xf32> to vector<64x1xf32>
    %10 = vector.extract_strided_slice %1 {offsets = [0, 8], sizes = [64, 1], strides = [1, 1]} : vector<64x10xf32> to vector<64x1xf32>
    %11 = vector.extract_strided_slice %1 {offsets = [0, 9], sizes = [64, 1], strides = [1, 1]} : vector<64x10xf32> to vector<64x1xf32>
    %12 = vector.broadcast %2 : vector<64x1xf32> to vector<64x512xf32>
    %13 = vector.broadcast %0 : vector<1x512xf32> to vector<64x512xf32>
    %14 = arith.mulf %12, %13 : vector<64x512xf32>
    %15 = vector.broadcast %3 : vector<64x1xf32> to vector<64x512xf32>
    %16 = arith.addf %14, %15 : vector<64x512xf32>
    %17 = vector.broadcast %4 : vector<64x1xf32> to vector<64x512xf32>
    %18 = arith.mulf %17, %16 : vector<64x512xf32>
    %19 = math.sin %18 : vector<64x512xf32>
    %20 = arith.mulf %19, %19 : vector<64x512xf32>
    %21 = vector.broadcast %5 : vector<64x1xf32> to vector<64x512xf32>
    %22 = arith.mulf %20, %21 : vector<64x512xf32>
    %23 = arith.addf %16, %22 : vector<64x512xf32>
    %c0_3 = arith.constant 0 : index
    %c0_4 = arith.constant 0 : index
    %24 = vector.load %arg3[%c0_3, %c0_4] : memref<64x64xf32, #tpu.memory_space<vmem>>, vector<64x64xf32>
    %cst = arith.constant dense<0.000000e+00> : vector<64x512xf32>
    %25 = tpu.matmul %24, %23, %cst {dimension_numbers = #tpu.dot_dimension_numbers<[1], [0], [0], [1], [0, 0, 1, 1], [], []>} : vector<64x64xf32>, vector<64x512xf32>, vector<64x512xf32> -> vector<64x512xf32>
    %26 = vector.broadcast %6 : vector<64x1xf32> to vector<64x512xf32>
    %27 = arith.addf %25, %26 : vector<64x512xf32>
    %28 = vector.broadcast %7 : vector<64x1xf32> to vector<64x512xf32>
    %29 = arith.mulf %28, %27 : vector<64x512xf32>
    %30 = math.sin %29 : vector<64x512xf32>
    %31 = arith.mulf %30, %30 : vector<64x512xf32>
    %32 = vector.broadcast %8 : vector<64x1xf32> to vector<64x512xf32>
    %33 = arith.mulf %31, %32 : vector<64x512xf32>
    %34 = arith.addf %27, %33 : vector<64x512xf32>
    %c0_5 = arith.constant 0 : index
    %c0_6 = arith.constant 0 : index
    %35 = vector.load %arg4[%c0_5, %c0_6] : memref<64x64xf32, #tpu.memory_space<vmem>>, vector<64x64xf32>
    %cst_7 = arith.constant dense<0.000000e+00> : vector<64x512xf32>
    %36 = tpu.matmul %35, %34, %cst_7 {dimension_numbers = #tpu.dot_dimension_numbers<[1], [0], [0], [1], [0, 0, 1, 1], [], []>} : vector<64x64xf32>, vector<64x512xf32>, vector<64x512xf32> -> vector<64x512xf32>
    %37 = vector.broadcast %9 : vector<64x1xf32> to vector<64x512xf32>
    %38 = arith.addf %36, %37 : vector<64x512xf32>
    %39 = vector.broadcast %10 : vector<64x1xf32> to vector<64x512xf32>
    %40 = arith.mulf %39, %38 : vector<64x512xf32>
    %41 = math.sin %40 : vector<64x512xf32>
    %42 = arith.mulf %41, %41 : vector<64x512xf32>
    %43 = vector.broadcast %11 : vector<64x1xf32> to vector<64x512xf32>
    %44 = arith.mulf %42, %43 : vector<64x512xf32>
    %45 = arith.addf %38, %44 : vector<64x512xf32>
    %c0_8 = arith.constant 0 : index
    %c0_9 = arith.constant 0 : index
    %46 = vector.load %arg5[%c0_8, %c0_9] : memref<1x64xf32, #tpu.memory_space<vmem>>, vector<1x64xf32>
    %cst_10 = arith.constant dense<0.000000e+00> : vector<1x512xf32>
    %47 = tpu.matmul %46, %45, %cst_10 {dimension_numbers = #tpu.dot_dimension_numbers<[1], [0], [0], [1], [0, 0, 1, 1], [], []>} : vector<1x64xf32>, vector<64x512xf32>, vector<1x512xf32> -> vector<1x512xf32>
    %c0_11 = arith.constant 0 : index
    %c0_12 = arith.constant 0 : index
    %48 = vector.load %arg6[%c0_11, %c0_12] : memref<1x1xf32, #tpu.memory_space<vmem>>, vector<1x1xf32>
    %49 = vector.broadcast %48 : vector<1x1xf32> to vector<1x512xf32>
    %50 = arith.addf %47, %49 : vector<1x512xf32>
    %51 = arith.negf %50 : vector<1x512xf32>
    %52 = math.exp %51 : vector<1x512xf32>
    %cst_13 = arith.constant 1.000000e+00 : f32
    %53 = vector.broadcast %cst_13 : f32 to vector<1x512xf32>
    %54 = arith.addf %53, %52 : vector<1x512xf32>
    %55 = arith.divf %53, %54 : vector<1x512xf32>
    %c0_14 = arith.constant 0 : index
    %c0_15 = arith.constant 0 : index
    %56 = vector.load %arg7[%c0_14, %c0_15] : memref<1x512xf32, #tpu.memory_space<vmem>>, vector<1x512xf32>
    tpu.vector_store %arg7[%c0_14, %c0_15], %55 {strides = array<i32>} : memref<1x512xf32, #tpu.memory_space<vmem>>, vector<1x512xf32>,
    return
  }
  func.func @transform_0(%arg0: i32) -> (i32, i32) {
    %c0_i32 = arith.constant 0 : i32
    %c0_i32_0 = arith.constant 0 : i32
    return %c0_i32, %arg0 : i32, i32
  }
  func.func @transform_1(%arg0: i32) -> (i32, i32) {
    %c0_i32 = arith.constant 0 : i32
    %c0_i32_0 = arith.constant 0 : i32
    %c0_i32_1 = arith.constant 0 : i32
    return %c0_i32, %c0_i32_0 : i32, i32
  }
  func.func @transform_2(%arg0: i32) -> (i32, i32) {
    %c0_i32 = arith.constant 0 : i32
    %c0_i32_0 = arith.constant 0 : i32
    %c0_i32_1 = arith.constant 0 : i32
    return %c0_i32, %c0_i32_0 : i32, i32
  }
  func.func @transform_3(%arg0: i32) -> (i32, i32) {
    %c0_i32 = arith.constant 0 : i32
    %c0_i32_0 = arith.constant 0 : i32
    %c0_i32_1 = arith.constant 0 : i32
    return %c0_i32, %c0_i32_0 : i32, i32
  }
  func.func @transform_4(%arg0: i32) -> (i32, i32) {
    %c0_i32 = arith.constant 0 : i32
    %c0_i32_0 = arith.constant 0 : i32
    %c0_i32_1 = arith.constant 0 : i32
    return %c0_i32, %c0_i32_0 : i32, i32
  }
  func.func @transform_5(%arg0: i32) -> (i32, i32) {
    %c0_i32 = arith.constant 0 : i32
    %c0_i32_0 = arith.constant 0 : i32
    %c0_i32_1 = arith.constant 0 : i32
    return %c0_i32, %c0_i32_0 : i32, i32
  }
  func.func @transform_6(%arg0: i32) -> (i32, i32) {
    %c0_i32 = arith.constant 0 : i32
    %c0_i32_0 = arith.constant 0 : i32
    return %c0_i32, %arg0 : i32, i32
  }
}

</mosaic_0001>

<llo_original>
// kernel: tpu_custom_call.1
$region0: #{tpu_custom_call.1}
  #allocation0 [shape = 'u32[]', space=smem, size = 0x4, offset = 0x4, fixed_abs, tag = 'smem constant byte address 0x4 - core index']
  #allocation1 [shape = 'u32[144,128]{1,0:T(1,128)}', space=vmem, size = 0x12000, scoped, tag = 'internal scratch']
  #allocation2 [shape = 'f32[1,1]{1,0:T(1,128)S(1)}', space=vmem, size = 0x200, scoped, tag = 'scoped memory for tpu_custom_call.1']
  %s0 = inlined_call_operand.vmem [shape: f32[1,512], index: 0, kind: input, shape index: {}]
  %s1 = inlined_call_operand.vmem [shape: f32[64,10], index: 1, kind: input, shape index: {}]
  %s2 = inlined_call_operand.vmem [shape: f32[64,64], index: 2, kind: input, shape index: {}]
  %s3 = inlined_call_operand.hbm [shape: f32[64,64], index: 3, kind: input, shape index: {}]
  %s4 = inlined_call_operand.vmem [shape: f32[1,64], index: 4, kind: input, shape index: {}]
  %s5 = inlined_call_operand.<no memory space> [shape: f32[1,1], index: 5, kind: input, shape index: {}]
  %s6 = inlined_call_operand.hbm [shape: f32[1,512], index: 6, kind: output, shape index: {}]
  %s7 = sld [smem:[#allocation0]]
  $region38: #{tpu_custom_call.1} parent=0
    _
  %s9 = ssub.s32 1, %s7
  %s10 = scalar_select 0, %s9, %s7
  %v11 = vstv %s5
  %12 = vst [vmem:[#allocation2] sm:$0x1] %v11
  $region1: #{tpu_custom_call.1} parent=0
    #allocation3 [shape = 'u8[32768]{0}', space=vmem, size = 0x8000, scoped, tag = 'input window, operand 3, single buffered']
    #allocation4 [shape = 's32[1]{0}', space=sflag, size = 0x4, scoped, tag = 'scoped memory for tpu_custom_call.1']
    #allocation5 [shape = 's32[1]{0}', space=sflag, size = 0x4, scoped, tag = 'scoped memory for tpu_custom_call.1']
    #allocation6 [shape = 'u8[2048]{0}', space=vmem, size = 0x800, scoped, tag = 'output window, operand 0, single buffered']
    %13 = vsyncpa [#allocation4], 0
    %14 = vsyncpa [#allocation5], 0
    // Predicated region
    $region2: #{tpu_custom_call.1} parent=1 // pred_check
      _
    $region3: #{tpu_custom_call.1} parent=1 // pred_check_branch
      %16 = sbr.rel (0) target = $region5
    $region4: #{tpu_custom_call.1} parent=1 // pred_region
      _
    $region5: #{tpu_custom_call.1} parent=1 // pred_fallthru
      _
    // Predicated region
    $region6: #{tpu_custom_call.1} parent=1 // pred_check
      _
    $region7: #{tpu_custom_call.1} parent=1 // pred_check_branch
      %18 = sbr.rel (0) target = $region9
    $region8: #{tpu_custom_call.1} parent=1 // pred_region
      _
    $region9: #{tpu_custom_call.1} parent=1 // pred_fallthru
      _
    // Predicated region
    $region10: #{tpu_custom_call.1} parent=1 // pred_check
      _
    $region11: #{tpu_custom_call.1} parent=1 // pred_check_branch
      %20 = sbr.rel (0) target = $region13
    $region12: #{tpu_custom_call.1} parent=1 // pred_region
      _
    $region13: #{tpu_custom_call.1} parent=1 // pred_fallthru
      _
    // Predicated region
    $region14: #{tpu_custom_call.1} parent=1 // pred_check
      _
    $region15: #{tpu_custom_call.1} parent=1 // pred_check_branch
      %22 = sbr.rel (0) target = $region17
    $region16: #{tpu_custom_call.1} parent=1 // pred_region
      %s24 = ssub.s32 1024, 1024
      %25 = vsyncadd [#allocation4], %s24
      %s26 = sshll.u32 [#allocation3], 4
      %s27 = int_to_ptr.vmem [resolvable:$true] %s26
      %32 = dma.hbm_to_vmem [thread:$0]  %s3, 1024, %s27, [#allocation4], 128, 128, 8
    $region17: #{tpu_custom_call.1} parent=1 // pred_fallthru
      _
    // Predicated region
    $region18: #{tpu_custom_call.1} parent=1 // pred_check
      _
    $region19: #{tpu_custom_call.1} parent=1 // pred_check_branch
      %34 = sbr.rel (0) target = $region21
    $region20: #{tpu_custom_call.1} parent=1 // pred_region
      _
    $region21: #{tpu_custom_call.1} parent=1 // pred_fallthru
      _
    // Predicated region
    $region22: #{tpu_custom_call.1} parent=1 // pred_check
      _
    $region23: #{tpu_custom_call.1} parent=1 // pred_check_branch
      %36 = sbr.rel (0) target = $region25
    $region24: #{tpu_custom_call.1} parent=1 // pred_region
      _
    $region25: #{tpu_custom_call.1} parent=1 // pred_fallthru
      _
    // Predicated region
    $region26: #{tpu_custom_call.1} parent=1 // pred_check
      _
    $region27: #{tpu_custom_call.1} parent=1 // pred_check_branch
      %38 = sbr.rel (0) target = $region29
    $region28: #{tpu_custom_call.1} parent=1 // pred_region
      %39 = dma.done [#allocation4], 1024
    $region29: #{tpu_custom_call.1} parent=1 // pred_fallthru
      _
    %v40 = vld [vmem:[%s0] sm:$0xf]
    %v41 = vld [vmem:[%s1] sm:$0xff]
    %v42 = vld [vmem:[%s1 + $0x8] sm:$0xff]
    %v43 = vld [vmem:[%s1 + $0x10] sm:$0xff]
    %v44 = vld [vmem:[%s1 + $0x18] sm:$0xff]
    %v45 = vld [vmem:[%s1 + $0x20] sm:$0xff]
    %v46 = vld [vmem:[%s1 + $0x28] sm:$0xff]
    %v47 = vld [vmem:[%s1 + $0x30] sm:$0xff]
    %v48 = vld [vmem:[%s1 + $0x38] sm:$0xff]
    %50 = vset.pattern.permute.xlu0 0
    %51 = vperm.xlu0 %50, %v41
    %v52 = vpop.permute.xlu0 %51
    %55 = vset.pattern.permute.xlu0 0
    %56 = vperm.xlu0 %55, %v42
    %v57 = vpop.permute.xlu0 %56
    %60 = vset.pattern.permute.xlu0 0
    %61 = vperm.xlu0 %60, %v43
    %v62 = vpop.permute.xlu0 %61
    %65 = vset.pattern.permute.xlu0 0
    %66 = vperm.xlu0 %65, %v44
    %v67 = vpop.permute.xlu0 %66
    %70 = vset.pattern.permute.xlu0 0
    %71 = vperm.xlu0 %70, %v45
    %v72 = vpop.permute.xlu0 %71
    %75 = vset.pattern.permute.xlu0 0
    %76 = vperm.xlu0 %75, %v46
    %v77 = vpop.permute.xlu0 %76
    %80 = vset.pattern.permute.xlu0 0
    %81 = vperm.xlu0 %80, %v47
    %v82 = vpop.permute.xlu0 %81
    %85 = vset.pattern.permute.xlu0 0
    %86 = vperm.xlu0 %85, %v48
    %v87 = vpop.permute.xlu0 %86
    %v90 = vlaneseq
    %v91 = vshrl.u32 %v90, 7
    %v92 = vsub.s32 0, %v91
    %v93 = vrot.slane %v40, %v92
    %v94 = vlaneseq
    %v95 = vshrl.u32 %v94, 7
    %v96 = vsub.s32 1, %v95
    %v97 = vrot.slane %v40, %v96
    %v98 = vlaneseq
    %v99 = vshrl.u32 %v98, 7
    %v100 = vsub.s32 2, %v99
    %v101 = vrot.slane %v40, %v100
    %v102 = vlaneseq
    %v103 = vshrl.u32 %v102, 7
    %v104 = vsub.s32 3, %v103
    %v105 = vrot.slane %v40, %v104
    %v110 = vmul.f32 %v52, %v93
    %v111 = vmul.f32 %v52, %v97
    %v112 = vmul.f32 %v52, %v101
    %v113 = vmul.f32 %v52, %v105
    %v114 = vmul.f32 %v57, %v93
    %v115 = vmul.f32 %v57, %v97
    %v116 = vmul.f32 %v57, %v101
    %v117 = vmul.f32 %v57, %v105
    %v118 = vmul.f32 %v62, %v93
    %v119 = vmul.f32 %v62, %v97
    %v120 = vmul.f32 %v62, %v101
    %v121 = vmul.f32 %v62, %v105
    %v122 = vmul.f32 %v67, %v93
    %v123 = vmul.f32 %v67, %v97
    %v124 = vmul.f32 %v67, %v101
    %v125 = vmul.f32 %v67, %v105
    %v126 = vmul.f32 %v72, %v93
    %v127 = vmul.f32 %v72, %v97
    %v128 = vmul.f32 %v72, %v101
    %v129 = vmul.f32 %v72, %v105
    %v130 = vmul.f32 %v77, %v93
    %v131 = vmul.f32 %v77, %v97
    %v132 = vmul.f32 %v77, %v101
    %v133 = vmul.f32 %v77, %v105
    %v134 = vmul.f32 %v82, %v93
    %v135 = vmul.f32 %v82, %v97
    %v136 = vmul.f32 %v82, %v101
    %v137 = vmul.f32 %v82, %v105
    %v138 = vmul.f32 %v87, %v93
    %v139 = vmul.f32 %v87, %v97
    %v140 = vmul.f32 %v87, %v101
    %v141 = vmul.f32 %v87, %v105
    %142 = vset.pattern.permute.xlu0 1
    %143 = vperm.xlu0 %142, %v41
    %v144 = vpop.permute.xlu0 %143
    %146 = vset.pattern.permute.xlu0 1
    %147 = vperm.xlu0 %146, %v42
    %v148 = vpop.permute.xlu0 %147
    %150 = vset.pattern.permute.xlu0 1
    %151 = vperm.xlu0 %150, %v43
    %v152 = vpop.permute.xlu0 %151
    %154 = vset.pattern.permute.xlu0 1
    %155 = vperm.xlu0 %154, %v44
    %v156 = vpop.permute.xlu0 %155
    %158 = vset.pattern.permute.xlu0 1
    %159 = vperm.xlu0 %158, %v45
    %v160 = vpop.permute.xlu0 %159
    %162 = vset.pattern.permute.xlu0 1
    %163 = vperm.xlu0 %162, %v46
    %v164 = vpop.permute.xlu0 %163
    %166 = vset.pattern.permute.xlu0 1
    %167 = vperm.xlu0 %166, %v47
    %v168 = vpop.permute.xlu0 %167
    %170 = vset.pattern.permute.xlu0 1
    %171 = vperm.xlu0 %170, %v48
    %v172 = vpop.permute.xlu0 %171
    %v174 = vadd.f32 %v110, %v144
    %v175 = vadd.f32 %v111, %v144
    %v176 = vadd.f32 %v112, %v144
    %v177 = vadd.f32 %v113, %v144
    %v178 = vadd.f32 %v114, %v148
    %v179 = vadd.f32 %v115, %v148
    %v180 = vadd.f32 %v116, %v148
    %v181 = vadd.f32 %v117, %v148
    %v182 = vadd.f32 %v118, %v152
    %v183 = vadd.f32 %v119, %v152
    %v184 = vadd.f32 %v120, %v152
    %v185 = vadd.f32 %v121, %v152
    %v186 = vadd.f32 %v122, %v156
    %v187 = vadd.f32 %v123, %v156
    %v188 = vadd.f32 %v124, %v156
    %v189 = vadd.f32 %v125, %v156
    %v190 = vadd.f32 %v126, %v160
    %v191 = vadd.f32 %v127, %v160
    %v192 = vadd.f32 %v128, %v160
    %v193 = vadd.f32 %v129, %v160
    %v194 = vadd.f32 %v130, %v164
    %v195 = vadd.f32 %v131, %v164
    %v196 = vadd.f32 %v132, %v164
    %v197 = vadd.f32 %v133, %v164
    %v198 = vadd.f32 %v134, %v168
    %v199 = vadd.f32 %v135, %v168
    %v200 = vadd.f32 %v136, %v168
    %v201 = vadd.f32 %v137, %v168
    %v202 = vadd.f32 %v138, %v172
    %v203 = vadd.f32 %v139, %v172
    %v204 = vadd.f32 %v140, %v172
    %v205 = vadd.f32 %v141, %v172
    %206 = vset.pattern.permute.xlu0 2
    %207 = vperm.xlu0 %206, %v41
    %v208 = vpop.permute.xlu0 %207
    %210 = vset.pattern.permute.xlu0 2
    %211 = vperm.xlu0 %210, %v42
    %v212 = vpop.permute.xlu0 %211
    %214 = vset.pattern.permute.xlu0 2
    %215 = vperm.xlu0 %214, %v43
    %v216 = vpop.permute.xlu0 %215
    %218 = vset.pattern.permute.xlu0 2
    %219 = vperm.xlu0 %218, %v44
    %v220 = vpop.permute.xlu0 %219
    %222 = vset.pattern.permute.xlu0 2
    %223 = vperm.xlu0 %222, %v45
    %v224 = vpop.permute.xlu0 %223
    %226 = vset.pattern.permute.xlu0 2
    %227 = vperm.xlu0 %226, %v46
    %v228 = vpop.permute.xlu0 %227
    %230 = vset.pattern.permute.xlu0 2
    %231 = vperm.xlu0 %230, %v47
    %v232 = vpop.permute.xlu0 %231
    %234 = vset.pattern.permute.xlu0 2
    %235 = vperm.xlu0 %234, %v48
    %v236 = vpop.permute.xlu0 %235
    %v238 = vmul.f32 %v208, %v174
    %v239 = vmul.f32 %v208, %v175
    %v240 = vmul.f32 %v208, %v176
    %v241 = vmul.f32 %v208, %v177
    %v242 = vmul.f32 %v212, %v178
    %v243 = vmul.f32 %v212, %v179
    %v244 = vmul.f32 %v212, %v180
    %v245 = vmul.f32 %v212, %v181
    %v246 = vmul.f32 %v216, %v182
    %v247 = vmul.f32 %v216, %v183
    %v248 = vmul.f32 %v216, %v184
    %v249 = vmul.f32 %v216, %v185
    %v250 = vmul.f32 %v220, %v186
    %v251 = vmul.f32 %v220, %v187
    %v252 = vmul.f32 %v220, %v188
    %v253 = vmul.f32 %v220, %v189
    %v254 = vmul.f32 %v224, %v190
    %v255 = vmul.f32 %v224, %v191
    %v256 = vmul.f32 %v224, %v192
    %v257 = vmul.f32 %v224, %v193
    %v258 = vmul.f32 %v228, %v194
    %v259 = vmul.f32 %v228, %v195
    %v260 = vmul.f32 %v228, %v196
    %v261 = vmul.f32 %v228, %v197
    %v262 = vmul.f32 %v232, %v198
    %v263 = vmul.f32 %v232, %v199
    %v264 = vmul.f32 %v232, %v200
    %v265 = vmul.f32 %v232, %v201
    %v266 = vmul.f32 %v236, %v202
    %v267 = vmul.f32 %v236, %v203
    %v268 = vmul.f32 %v236, %v204
    %v269 = vmul.f32 %v236, %v205
    %v270 = vand.u32 2147483647, %v238
    %vm271 = vcmp.le.f32.partialorder %v270, 0.7853982
    %vm272 = vcmp.lt.s32.totalorder %v238, 0
    %v273 = vand.u32 %v238, 2139095040
    %v274 = vshrl.u32 %v273, 23
    %v275 = vsub.s32 %v274, 127
    %v276 = vand.u32 2147483647, %v238
    %v277 = vand.u32 %v276, 8388607
    %v278 = vor.u32 %v277, 8388608
    %v279 = vsub.s32 0, %v278
    %v280 = vadd.s32 %v275, 1
    %vm281 = vcmp.gt.s32.totalorder %v280, 0
    %v282 = vsel %vm281, %v280, 0
    %v283 = vshrl.u32 %v282, 5
    %v284 = vand.u32 %v282, 31
    %v285 = vsub.s32 32, %v284
    %v286 = vshrl.u32 683565275, %v285
    %v287 = vshll.u32 683565275, %v284
    %v288 = vshrl.u32 2475754826, %v285
    %v289 = vor.u32 %v287, %v288
    %v290 = vshll.u32 2475754826, %v284
    %v291 = vshrl.u32 2131351028, %v285
    %v292 = vor.u32 %v290, %v291
    %v293 = vshll.u32 2131351028, %v284
    %v294 = vshrl.u32 2102212464, %v285
    %v295 = vor.u32 %v293, %v294
    %v296 = vshll.u32 2102212464, %v284
    %v297 = vshrl.u32 920167782, %v285
    %v298 = vor.u32 %v296, %v297
    %v299 = vshll.u32 920167782, %v284
    %v300 = vshrl.u32 1326507024, %v285
    %v301 = vor.u32 %v299, %v300
    %vm302 = vcmp.lt.s32.totalorder %v283, 1
    %vm303 = vcmp.lt.s32.totalorder %v283, 2
    %vm304 = vcmp.lt.s32.totalorder %v283, 3
    %vm305 = vcmp.lt.s32.totalorder %v283, 4
    %v306 = vsel %vm302, %v286, %v289
    %v307 = vsel %vm305, %v295, 2102212464
    %v308 = vsel %vm304, %v292, %v307
    %v309 = vsel %vm303, %v306, %v308
    %v310 = vsel %vm302, %v289, %v292
    %v311 = vsel %vm305, %v298, 920167782
    %v312 = vsel %vm304, %v295, %v311
    %v313 = vsel %vm303, %v310, %v312
    %v314 = vsel %vm302, %v292, %v295
    %v315 = vsel %vm305, %v301, 1326507024
    %v316 = vsel %vm304, %v298, %v315
    %v317 = vsel %vm303, %v314, %v316
    %v318 = vshll.u32 %v278, 8
    %v319 = vmul.u32.u64.compose %v318, %v317
    %v320 = vextract.low.u32 %v319
    %v321 = vextract.high.u32 %v319
    %v322 = vmul.u32.u64.compose %v318, %v313
    %v323 = vextract.low.u32 %v322
    %v324 = vextract.high.u32 %v322
    %v325 = vmul.u32 %v318, %v309
    %v326 = vadd.s32 %v321, %v323
    %vm327 = vc.u32 %v321, %v323
    %v328 = vadd.s32 %v324, 1
    %v329 = vsel %vm327, %v328, %v324
    %v330 = vadd.s32 %v325, %v329
    %v331 = vadd.s32 %v330, 536870912
    %v332 = vshrl.u32 %v331, 30
    %v333 = vshll.u32 %v332, 30
    %v334 = vsub.s32 %v330, %v333
    %vm335 = vcmp.lt.s32.totalorder %v334, 0
    %v336 = vsub.s32 0, %v334
    %v337 = vsel %vm335, %v336, %v334
    %v338 = vclz %v337
    %v339 = vsub.s32 %v338, 2
    %vm340 = vcmp.gt.s32.totalorder 0, %v339
    %v341 = vsel %vm340, 0, %v339
    %v342 = vsub.s32 32, %v341
    %v343 = vshll.u32 %v334, %v341
    %v344 = vshrl.u32 %v326, %v342
    %v345 = vor.u32 %v343, %v344
    %v346 = vsub.s32 4294967266, %v341
    %v347 = vadd.s32 %v346, 127
    %v348 = vshll.u32 %v347, 23
    %v349 = vor.u32 4788187, %v348
    %v350 = vand.u32 2147483647, %v349
    %v352 = vcvt.s32.f32 %v345
    %v353 = vmul.f32 %v352, %v350
    %v354 = vxor.u32 %v353, 2147483648
    %v355 = vsel %vm272, %v354, %v353
    %v356 = vsub.s32 4, %v332
    %v357 = vsel %vm272, %v356, %v332
    %v358 = vsel %vm271, %v238, %v355
    %v359 = vsel %vm271, 0, %v357
    %v360 = vcosq.f32.pop %v358
    %v361 = vsinq.f32.pop %v358
    %vm362 = vweird.f32 %v238
    %v363 = vadd.s32 %v359, 3
    %v364 = vand.u32 %v363, 3
    %vm365 = vcmp.lt.s32.totalorder %v364, 2
    %vm366 = vcmp.eq.s32.totalorder %v364, 0
    %v367 = vxor.u32 %v361, 2147483648
    %v368 = vsel %vm366, %v360, %v367
    %vm369 = vcmp.eq.s32.totalorder %v364, 2
    %v370 = vxor.u32 %v360, 2147483648
    %v371 = vsel %vm369, %v370, %v361
    %v372 = vsel %vm365, %v368, %v371
    %v373 = vsel %vm362, nan, %v372
    %v374 = vand.u32 2147483647, %v239
    %vm375 = vcmp.le.f32.partialorder %v374, 0.7853982
    %vm376 = vcmp.lt.s32.totalorder %v239, 0
    %v377 = vand.u32 %v239, 2139095040
    %v378 = vshrl.u32 %v377, 23
    %v379 = vsub.s32 %v378, 127
    %v380 = vand.u32 2147483647, %v239
    %v381 = vand.u32 %v380, 8388607
    %v382 = vor.u32 %v381, 8388608
    %v383 = vsub.s32 0, %v382
    %v384 = vadd.s32 %v379, 1
    %vm385 = vcmp.gt.s32.totalorder %v384, 0
    %v386 = vsel %vm385, %v384, 0
    %v387 = vshrl.u32 %v386, 5
    %v388 = vand.u32 %v386, 31
    %v389 = vsub.s32 32, %v388
    %v390 = vshrl.u32 683565275, %v389
    %v391 = vshll.u32 683565275, %v388
    %v392 = vshrl.u32 2475754826, %v389
    %v393 = vor.u32 %v391, %v392
    %v394 = vshll.u32 2475754826, %v388
    %v395 = vshrl.u32 2131351028, %v389
    %v396 = vor.u32 %v394, %v395
    %v397 = vshll.u32 2131351028, %v388
    %v398 = vshrl.u32 2102212464, %v389
    %v399 = vor.u32 %v397, %v398
    %v400 = vshll.u32 2102212464, %v388
    %v401 = vshrl.u32 920167782, %v389
    %v402 = vor.u32 %v400, %v401
    %v403 = vshll.u32 920167782, %v388
    %v404 = vshrl.u32 1326507024, %v389
    %v405 = vor.u32 %v403, %v404
    %vm406 = vcmp.lt.s32.totalorder %v387, 1
    %vm407 = vcmp.lt.s32.totalorder %v387, 2
    %vm408 = vcmp.lt.s32.totalorder %v387, 3
    %vm409 = vcmp.lt.s32.totalorder %v387, 4
    %v410 = vsel %vm406, %v390, %v393
    %v411 = vsel %vm409, %v399, 2102212464
    %v412 = vsel %vm408, %v396, %v411
    %v413 = vsel %vm407, %v410, %v412
    %v414 = vsel %vm406, %v393, %v396
    %v415 = vsel %vm409, %v402, 920167782
    %v416 = vsel %vm408, %v399, %v415
    %v417 = vsel %vm407, %v414, %v416
    %v418 = vsel %vm406, %v396, %v399
    %v419 = vsel %vm409, %v405, 1326507024
    %v420 = vsel %vm408, %v402, %v419
    %v421 = vsel %vm407, %v418, %v420
    %v422 = vshll.u32 %v382, 8
    %v423 = vmul.u32.u64.compose %v422, %v421
    %v424 = vextract.low.u32 %v423
    %v425 = vextract.high.u32 %v423
    %v426 = vmul.u32.u64.compose %v422, %v417
    %v427 = vextract.low.u32 %v426
    %v428 = vextract.high.u32 %v426
    %v429 = vmul.u32 %v422, %v413
    %v430 = vadd.s32 %v425, %v427
    %vm431 = vc.u32 %v425, %v427
    %v432 = vadd.s32 %v428, 1
    %v433 = vsel %vm431, %v432, %v428
    %v434 = vadd.s32 %v429, %v433
    %v435 = vadd.s32 %v434, 536870912
    %v436 = vshrl.u32 %v435, 30
    %v437 = vshll.u32 %v436, 30
    %v438 = vsub.s32 %v434, %v437
    %vm439 = vcmp.lt.s32.totalorder %v438, 0
    %v440 = vsub.s32 0, %v438
    %v441 = vsel %vm439, %v440, %v438
    %v442 = vclz %v441
    %v443 = vsub.s32 %v442, 2
    %vm444 = vcmp.gt.s32.totalorder 0, %v443
    %v445 = vsel %vm444, 0, %v443
    %v446 = vsub.s32 32, %v445
    %v447 = vshll.u32 %v438, %v445
    %v448 = vshrl.u32 %v430, %v446
    %v449 = vor.u32 %v447, %v448
    %v450 = vsub.s32 4294967266, %v445
    %v451 = vadd.s32 %v450, 127
    %v452 = vshll.u32 %v451, 23
    %v453 = vor.u32 4788187, %v452
    %v454 = vand.u32 2147483647, %v453
    %v456 = vcvt.s32.f32 %v449
    %v457 = vmul.f32 %v456, %v454
    %v458 = vxor.u32 %v457, 2147483648
    %v459 = vsel %vm376, %v458, %v457
    %v460 = vsub.s32 4, %v436
    %v461 = vsel %vm376, %v460, %v436
    %v462 = vsel %vm375, %v239, %v459
    %v463 = vsel %vm375, 0, %v461
    %v464 = vcosq.f32.pop %v462
    %v465 = vsinq.f32.pop %v462
    %vm466 = vweird.f32 %v239
    %v467 = vadd.s32 %v463, 3
    %v468 = vand.u32 %v467, 3
    %vm469 = vcmp.lt.s32.totalorder %v468, 2
    %vm470 = vcmp.eq.s32.totalorder %v468, 0
    %v471 = vxor.u32 %v465, 2147483648
    %v472 = vsel %vm470, %v464, %v471
    %vm473 = vcmp.eq.s32.totalorder %v468, 2
    %v474 = vxor.u32 %v464, 2147483648
    %v475 = vsel %vm473, %v474, %v465
    %v476 = vsel %vm469, %v472, %v475
    %v477 = vsel %vm466, nan, %v476
    %v478 = vand.u32 2147483647, %v240
    %vm479 = vcmp.le.f32.partialorder %v478, 0.7853982
    %vm480 = vcmp.lt.s32.totalorder %v240, 0
    %v481 = vand.u32 %v240, 2139095040
    %v482 = vshrl.u32 %v481, 23
    %v483 = vsub.s32 %v482, 127
    %v484 = vand.u32 2147483647, %v240
    %v485 = vand.u32 %v484, 8388607
    %v486 = vor.u32 %v485, 8388608
    %v487 = vsub.s32 0, %v486
    %v488 = vadd.s32 %v483, 1
    %vm489 = vcmp.gt.s32.totalorder %v488, 0
    %v490 = vsel %vm489, %v488, 0
    %v491 = vshrl.u32 %v490, 5
    %v492 = vand.u32 %v490, 31
    %v493 = vsub.s32 32, %v492
    %v494 = vshrl.u32 683565275, %v493
    %v495 = vshll.u32 683565275, %v492
    %v496 = vshrl.u32 2475754826, %v493
    %v497 = vor.u32 %v495, %v496
    %v498 = vshll.u32 2475754826, %v492
    %v499 = vshrl.u32 2131351028, %v493
    %v500 = vor.u32 %v498, %v499
    %v501 = vshll.u32 2131351028, %v492
    %v502 = vshrl.u32 2102212464, %v493
    %v503 = vor.u32 %v501, %v502
    %v504 = vshll.u32 2102212464, %v492
    %v505 = vshrl.u32 920167782, %v493
    %v506 = vor.u32 %v504, %v505
    %v507 = vshll.u32 920167782, %v492
    %v508 = vshrl.u32 1326507024, %v493
    %v509 = vor.u32 %v507, %v508
    %vm510 = vcmp.lt.s32.totalorder %v491, 1
    %vm511 = vcmp.lt.s32.totalorder %v491, 2
    %vm512 = vcmp.lt.s32.totalorder %v491, 3
    %vm513 = vcmp.lt.s32.totalorder %v491, 4
    %v514 = vsel %vm510, %v494, %v497
    %v515 = vsel %vm513, %v503, 2102212464
    %v516 = vsel %vm512, %v500, %v515
    %v517 = vsel %vm511, %v514, %v516
    %v518 = vsel %vm510, %v497, %v500
    %v519 = vsel %vm513, %v506, 920167782
    %v520 = vsel %vm512, %v503, %v519
    %v521 = vsel %vm511, %v518, %v520
    %v522 = vsel %vm510, %v500, %v503
    %v523 = vsel %vm513, %v509, 1326507024
    %v524 = vsel %vm512, %v506, %v523
    %v525 = vsel %vm511, %v522, %v524
    %v526 = vshll.u32 %v486, 8
    %v527 = vmul.u32.u64.compose %v526, %v525
    %v528 = vextract.low.u32 %v527
    %v529 = vextract.high.u32 %v527
    %v530 = vmul.u32.u64.compose %v526, %v521
    %v531 = vextract.low.u32 %v530
    %v532 = vextract.high.u32 %v530
    %v533 = vmul.u32 %v526, %v517
    %v534 = vadd.s32 %v529, %v531
    %vm535 = vc.u32 %v529, %v531
    %v536 = vadd.s32 %v532, 1
    %v537 = vsel %vm535, %v536, %v532
    %v538 = vadd.s32 %v533, %v537
    %v539 = vadd.s32 %v538, 536870912
    %v540 = vshrl.u32 %v539, 30
    %v541 = vshll.u32 %v540, 30
    %v542 = vsub.s32 %v538, %v541
    %vm543 = vcmp.lt.s32.totalorder %v542, 0
    %v544 = vsub.s32 0, %v542
    %v545 = vsel %vm543, %v544, %v542
    %v546 = vclz %v545
    %v547 = vsub.s32 %v546, 2
    %vm548 = vcmp.gt.s32.totalorder 0, %v547
    %v549 = vsel %vm548, 0, %v547
    %v550 = vsub.s32 32, %v549
    %v551 = vshll.u32 %v542, %v549
    %v552 = vshrl.u32 %v534, %v550
    %v553 = vor.u32 %v551, %v552
    %v554 = vsub.s32 4294967266, %v549
    %v555 = vadd.s32 %v554, 127
    %v556 = vshll.u32 %v555, 23
    %v557 = vor.u32 4788187, %v556
    %v558 = vand.u32 2147483647, %v557
    %v560 = vcvt.s32.f32 %v553
    %v561 = vmul.f32 %v560, %v558
    %v562 = vxor.u32 %v561, 2147483648
    %v563 = vsel %vm480, %v562, %v561
    %v564 = vsub.s32 4, %v540
    %v565 = vsel %vm480, %v564, %v540
    %v566 = vsel %vm479, %v240, %v563
    %v567 = vsel %vm479, 0, %v565
    %v568 = vcosq.f32.pop %v566
    %v569 = vsinq.f32.pop %v566
    %vm570 = vweird.f32 %v240
    %v571 = vadd.s32 %v567, 3
    %v572 = vand.u32 %v571, 3
    %vm573 = vcmp.lt.s32.totalorder %v572, 2
    %vm574 = vcmp.eq.s32.totalorder %v572, 0
    %v575 = vxor.u32 %v569, 2147483648
    %v576 = vsel %vm574, %v568, %v575
    %vm577 = vcmp.eq.s32.totalorder %v572, 2
    %v578 = vxor.u32 %v568, 2147483648
    %v579 = vsel %vm577, %v578, %v569
    %v580 = vsel %vm573, %v576, %v579
    %v581 = vsel %vm570, nan, %v580
    %v582 = vand.u32 2147483647, %v241
    %vm583 = vcmp.le.f32.partialorder %v582, 0.7853982
    %vm584 = vcmp.lt.s32.totalorder %v241, 0
    %v585 = vand.u32 %v241, 2139095040
    %v586 = vshrl.u32 %v585, 23
    %v587 = vsub.s32 %v586, 127
    %v588 = vand.u32 2147483647, %v241
    %v589 = vand.u32 %v588, 8388607
    %v590 = vor.u32 %v589, 8388608
    %v591 = vsub.s32 0, %v590
    %v592 = vadd.s32 %v587, 1
    %vm593 = vcmp.gt.s32.totalorder %v592, 0
    %v594 = vsel %vm593, %v592, 0
    %v595 = vshrl.u32 %v594, 5
    %v596 = vand.u32 %v594, 31
    %v597 = vsub.s32 32, %v596
    %v598 = vshrl.u32 683565275, %v597
    %v599 = vshll.u32 683565275, %v596
    %v600 = vshrl.u32 2475754826, %v597
    %v601 = vor.u32 %v599, %v600
    %v602 = vshll.u32 2475754826, %v596
    %v603 = vshrl.u32 2131351028, %v597
    %v604 = vor.u32 %v602, %v603
    %v605 = vshll.u32 2131351028, %v596
    %v606 = vshrl.u32 2102212464, %v597
    %v607 = vor.u32 %v605, %v606
    %v608 = vshll.u32 2102212464, %v596
    %v609 = vshrl.u32 920167782, %v597
    %v610 = vor.u32 %v608, %v609
    %v611 = vshll.u32 920167782, %v596
    %v612 = vshrl.u32 1326507024, %v597
    %v613 = vor.u32 %v611, %v612
    %vm614 = vcmp.lt.s32.totalorder %v595, 1
    %vm615 = vcmp.lt.s32.totalorder %v595, 2
    %vm616 = vcmp.lt.s32.totalorder %v595, 3
    %vm617 = vcmp.lt.s32.totalorder %v595, 4
    %v618 = vsel %vm614, %v598, %v601
    %v619 = vsel %vm617, %v607, 2102212464
    %v620 = vsel %vm616, %v604, %v619
    %v621 = vsel %vm615, %v618, %v620
    %v622 = vsel %vm614, %v601, %v604
    %v623 = vsel %vm617, %v610, 920167782
    %v624 = vsel %vm616, %v607, %v623
    %v625 = vsel %vm615, %v622, %v624
    %v626 = vsel %vm614, %v604, %v607
    %v627 = vsel %vm617, %v613, 1326507024
    %v628 = vsel %vm616, %v610, %v627
    %v629 = vsel %vm615, %v626, %v628
    %v630 = vshll.u32 %v590, 8
    %v631 = vmul.u32.u64.compose %v630, %v629
    %v632 = vextract.low.u32 %v631
    %v633 = vextract.high.u32 %v631
    %v634 = vmul.u32.u64.compose %v630, %v625
    %v635 = vextract.low.u32 %v634
    %v636 = vextract.high.u32 %v634
    %v637 = vmul.u32 %v630, %v621
    %v638 = vadd.s32 %v633, %v635
    %vm639 = vc.u32 %v633, %v635
    %v640 = vadd.s32 %v636, 1
    %v641 = vsel %vm639, %v640, %v636
    %v642 = vadd.s32 %v637, %v641
    %v643 = vadd.s32 %v642, 536870912
    %v644 = vshrl.u32 %v643, 30
    %v645 = vshll.u32 %v644, 30
    %v646 = vsub.s32 %v642, %v645
    %vm647 = vcmp.lt.s32.totalorder %v646, 0
    %v648 = vsub.s32 0, %v646
    %v649 = vsel %vm647, %v648, %v646
    %v650 = vclz %v649
    %v651 = vsub.s32 %v650, 2
    %vm652 = vcmp.gt.s32.totalorder 0, %v651
    %v653 = vsel %vm652, 0, %v651
    %v654 = vsub.s32 32, %v653
    %v655 = vshll.u32 %v646, %v653
    %v656 = vshrl.u32 %v638, %v654
    %v657 = vor.u32 %v655, %v656
    %v658 = vsub.s32 4294967266, %v653
    %v659 = vadd.s32 %v658, 127
    %v660 = vshll.u32 %v659, 23
    %v661 = vor.u32 4788187, %v660
    %v662 = vand.u32 2147483647, %v661
    %v664 = vcvt.s32.f32 %v657
    %v665 = vmul.f32 %v664, %v662
    %v666 = vxor.u32 %v665, 2147483648
    %v667 = vsel %vm584, %v666, %v665
    %v668 = vsub.s32 4, %v644
    %v669 = vsel %vm584, %v668, %v644
    %v670 = vsel %vm583, %v241, %v667
    %v671 = vsel %vm583, 0, %v669
    %v672 = vcosq.f32.pop %v670
    %v673 = vsinq.f32.pop %v670
    %vm674 = vweird.f32 %v241
    %v675 = vadd.s32 %v671, 3
    %v676 = vand.u32 %v675, 3
    %vm677 = vcmp.lt.s32.totalorder %v676, 2
    %vm678 = vcmp.eq.s32.totalorder %v676, 0
    %v679 = vxor.u32 %v673, 2147483648
    %v680 = vsel %vm678, %v672, %v679
    %vm681 = vcmp.eq.s32.totalorder %v676, 2
    %v682 = vxor.u32 %v672, 2147483648
    %v683 = vsel %vm681, %v682, %v673
    %v684 = vsel %vm677, %v680, %v683
    %v685 = vsel %vm674, nan, %v684
    %v686 = vand.u32 2147483647, %v242
    %vm687 = vcmp.le.f32.partialorder %v686, 0.7853982
    %vm688 = vcmp.lt.s32.totalorder %v242, 0
    %v689 = vand.u32 %v242, 2139095040
    %v690 = vshrl.u32 %v689, 23
    %v691 = vsub.s32 %v690, 127
    %v692 = vand.u32 2147483647, %v242
    %v693 = vand.u32 %v692, 8388607
    %v694 = vor.u32 %v693, 8388608
    %v695 = vsub.s32 0, %v694
    %v696 = vadd.s32 %v691, 1
    %vm697 = vcmp.gt.s32.totalorder %v696, 0
    %v698 = vsel %vm697, %v696, 0
    %v699 = vshrl.u32 %v698, 5
    %v700 = vand.u32 %v698, 31
    %v701 = vsub.s32 32, %v700
    %v702 = vshrl.u32 683565275, %v701
    %v703 = vshll.u32 683565275, %v700
    %v704 = vshrl.u32 2475754826, %v701
    %v705 = vor.u32 %v703, %v704
    %v706 = vshll.u32 2475754826, %v700
    %v707 = vshrl.u32 2131351028, %v701
    %v708 = vor.u32 %v706, %v707
    %v709 = vshll.u32 2131351028, %v700
    %v710 = vshrl.u32 2102212464, %v701
    %v711 = vor.u32 %v709, %v710
    %v712 = vshll.u32 2102212464, %v700
    %v713 = vshrl.u32 920167782, %v701
    %v714 = vor.u32 %v712, %v713
    %v715 = vshll.u32 920167782, %v700
    %v716 = vshrl.u32 1326507024, %v701
    %v717 = vor.u32 %v715, %v716
    %vm718 = vcmp.lt.s32.totalorder %v699, 1
    %vm719 = vcmp.lt.s32.totalorder %v699, 2
    %vm720 = vcmp.lt.s32.totalorder %v699, 3
    %vm721 = vcmp.lt.s32.totalorder %v699, 4
    %v722 = vsel %vm718, %v702, %v705
    %v723 = vsel %vm721, %v711, 2102212464
    %v724 = vsel %vm720, %v708, %v723
    %v725 = vsel %vm719, %v722, %v724
    %v726 = vsel %vm718, %v705, %v708
    %v727 = vsel %vm721, %v714, 920167782
    %v728 = vsel %vm720, %v711, %v727
    %v729 = vsel %vm719, %v726, %v728
    %v730 = vsel %vm718, %v708, %v711
    %v731 = vsel %vm721, %v717, 1326507024
    %v732 = vsel %vm720, %v714, %v731
    %v733 = vsel %vm719, %v730, %v732
    %v734 = vshll.u32 %v694, 8
    %v735 = vmul.u32.u64.compose %v734, %v733
    %v736 = vextract.low.u32 %v735
    %v737 = vextract.high.u32 %v735
    %v738 = vmul.u32.u64.compose %v734, %v729
    %v739 = vextract.low.u32 %v738
    %v740 = vextract.high.u32 %v738
    %v741 = vmul.u32 %v734, %v725
    %v742 = vadd.s32 %v737, %v739
    %vm743 = vc.u32 %v737, %v739
    %v744 = vadd.s32 %v740, 1
    %v745 = vsel %vm743, %v744, %v740
    %v746 = vadd.s32 %v741, %v745
    %v747 = vadd.s32 %v746, 536870912
    %v748 = vshrl.u32 %v747, 30
    %v749 = vshll.u32 %v748, 30
    %v750 = vsub.s32 %v746, %v749
    %vm751 = vcmp.lt.s32.totalorder %v750, 0
    %v752 = vsub.s32 0, %v750
    %v753 = vsel %vm751, %v752, %v750
    %v754 = vclz %v753
    %v755 = vsub.s32 %v754, 2
    %vm756 = vcmp.gt.s32.totalorder 0, %v755
    %v757 = vsel %vm756, 0, %v755
    %v758 = vsub.s32 32, %v757
    %v759 = vshll.u32 %v750, %v757
    %v760 = vshrl.u32 %v742, %v758
    %v761 = vor.u32 %v759, %v760
    %v762 = vsub.s32 4294967266, %v757
    %v763 = vadd.s32 %v762, 127
    %v764 = vshll.u32 %v763, 23
    %v765 = vor.u32 4788187, %v764
    %v766 = vand.u32 2147483647, %v765
    %v768 = vcvt.s32.f32 %v761
    %v769 = vmul.f32 %v768, %v766
    %v770 = vxor.u32 %v769, 2147483648
    %v771 = vsel %vm688, %v770, %v769
    %v772 = vsub.s32 4, %v748
    %v773 = vsel %vm688, %v772, %v748
    %v774 = vsel %vm687, %v242, %v771
    %v775 = vsel %vm687, 0, %v773
    %v776 = vcosq.f32.pop %v774
    %v777 = vsinq.f32.pop %v774
    %vm778 = vweird.f32 %v242
    %v779 = vadd.s32 %v775, 3
    %v780 = vand.u32 %v779, 3
    %vm781 = vcmp.lt.s32.totalorder %v780, 2
    %vm782 = vcmp.eq.s32.totalorder %v780, 0
    %v783 = vxor.u32 %v777, 2147483648
    %v784 = vsel %vm782, %v776, %v783
    %vm785 = vcmp.eq.s32.totalorder %v780, 2
    %v786 = vxor.u32 %v776, 2147483648
    %v787 = vsel %vm785, %v786, %v777
    %v788 = vsel %vm781, %v784, %v787
    %v789 = vsel %vm778, nan, %v788
    %v790 = vand.u32 2147483647, %v243
    %vm791 = vcmp.le.f32.partialorder %v790, 0.7853982
    %vm792 = vcmp.lt.s32.totalorder %v243, 0
    %v793 = vand.u32 %v243, 2139095040
    %v794 = vshrl.u32 %v793, 23
    %v795 = vsub.s32 %v794, 127
    %v796 = vand.u32 2147483647, %v243
    %v797 = vand.u32 %v796, 8388607
    %v798 = vor.u32 %v797, 8388608
    %v799 = vsub.s32 0, %v798
    %v800 = vadd.s32 %v795, 1
    %vm801 = vcmp.gt.s32.totalorder %v800, 0
    %v802 = vsel %vm801, %v800, 0
    %v803 = vshrl.u32 %v802, 5
    %v804 = vand.u32 %v802, 31
    %v805 = vsub.s32 32, %v804
    %v806 = vshrl.u32 683565275, %v805
    %v807 = vshll.u32 683565275, %v804
    %v808 = vshrl.u32 2475754826, %v805
    %v809 = vor.u32 %v807, %v808
    %v810 = vshll.u32 2475754826, %v804
    %v811 = vshrl.u32 2131351028, %v805
    %v812 = vor.u32 %v810, %v811
    %v813 = vshll.u32 2131351028, %v804
    %v814 = vshrl.u32 2102212464, %v805
    %v815 = vor.u32 %v813, %v814
    %v816 = vshll.u32 2102212464, %v804
    %v817 = vshrl.u32 920167782, %v805
    %v818 = vor.u32 %v816, %v817
    %v819 = vshll.u32 920167782, %v804
    %v820 = vshrl.u32 1326507024, %v805
    %v821 = vor.u32 %v819, %v820
    %vm822 = vcmp.lt.s32.totalorder %v803, 1
    %vm823 = vcmp.lt.s32.totalorder %v803, 2
    %vm824 = vcmp.lt.s32.totalorder %v803, 3
    %vm825 = vcmp.lt.s32.totalorder %v803, 4
    %v826 = vsel %vm822, %v806, %v809
    %v827 = vsel %vm825, %v815, 2102212464
    %v828 = vsel %vm824, %v812, %v827
    %v829 = vsel %vm823, %v826, %v828
    %v830 = vsel %vm822, %v809, %v812
    %v831 = vsel %vm825, %v818, 920167782
    %v832 = vsel %vm824, %v815, %v831
    %v833 = vsel %vm823, %v830, %v832
    %v834 = vsel %vm822, %v812, %v815
    %v835 = vsel %vm825, %v821, 1326507024
    %v836 = vsel %vm824, %v818, %v835
    %v837 = vsel %vm823, %v834, %v836
    %v838 = vshll.u32 %v798, 8
    %v839 = vmul.u32.u64.compose %v838, %v837
    %v840 = vextract.low.u32 %v839
    %v841 = vextract.high.u32 %v839
    %v842 = vmul.u32.u64.compose %v838, %v833
    %v843 = vextract.low.u32 %v842
    %v844 = vextract.high.u32 %v842
    %v845 = vmul.u32 %v838, %v829
    %v846 = vadd.s32 %v841, %v843
    %vm847 = vc.u32 %v841, %v843
    %v848 = vadd.s32 %v844, 1
    %v849 = vsel %vm847, %v848, %v844
    %v850 = vadd.s32 %v845, %v849
    %v851 = vadd.s32 %v850, 536870912
    %v852 = vshrl.u32 %v851, 30
    %v853 = vshll.u32 %v852, 30
    %v854 = vsub.s32 %v850, %v853
    %vm855 = vcmp.lt.s32.totalorder %v854, 0
    %v856 = vsub.s32 0, %v854
    %v857 = vsel %vm855, %v856, %v854
    %v858 = vclz %v857
    %v859 = vsub.s32 %v858, 2
    %vm860 = vcmp.gt.s32.totalorder 0, %v859
    %v861 = vsel %vm860, 0, %v859
    %v862 = vsub.s32 32, %v861
    %v863 = vshll.u32 %v854, %v861
    %v864 = vshrl.u32 %v846, %v862
    %v865 = vor.u32 %v863, %v864
    %v866 = vsub.s32 4294967266, %v861
    %v867 = vadd.s32 %v866, 127
    %v868 = vshll.u32 %v867, 23
    %v869 = vor.u32 4788187, %v868
    %v870 = vand.u32 2147483647, %v869
    %v872 = vcvt.s32.f32 %v865
    %v873 = vmul.f32 %v872, %v870
    %v874 = vxor.u32 %v873, 2147483648
    %v875 = vsel %vm792, %v874, %v873
    %v876 = vsub.s32 4, %v852
    %v877 = vsel %vm792, %v876, %v852
    %v878 = vsel %vm791, %v243, %v875
    %v879 = vsel %vm791, 0, %v877
    %v880 = vcosq.f32.pop %v878
    %v881 = vsinq.f32.pop %v878
    %vm882 = vweird.f32 %v243
    %v883 = vadd.s32 %v879, 3
    %v884 = vand.u32 %v883, 3
    %vm885 = vcmp.lt.s32.totalorder %v884, 2
    %vm886 = vcmp.eq.s32.totalorder %v884, 0
    %v887 = vxor.u32 %v881, 2147483648
    %v888 = vsel %vm886, %v880, %v887
    %vm889 = vcmp.eq.s32.totalorder %v884, 2
    %v890 = vxor.u32 %v880, 2147483648
    %v891 = vsel %vm889, %v890, %v881
    %v892 = vsel %vm885, %v888, %v891
    %v893 = vsel %vm882, nan, %v892
    %v894 = vand.u32 2147483647, %v244
    %vm895 = vcmp.le.f32.partialorder %v894, 0.7853982
    %vm896 = vcmp.lt.s32.totalorder %v244, 0
    %v897 = vand.u32 %v244, 2139095040
    %v898 = vshrl.u32 %v897, 23
    %v899 = vsub.s32 %v898, 127
    %v900 = vand.u32 2147483647, %v244
    %v901 = vand.u32 %v900, 8388607
    %v902 = vor.u32 %v901, 8388608
    %v903 = vsub.s32 0, %v902
    %v904 = vadd.s32 %v899, 1
    %vm905 = vcmp.gt.s32.totalorder %v904, 0
    %v906 = vsel %vm905, %v904, 0
    %v907 = vshrl.u32 %v906, 5
    %v908 = vand.u32 %v906, 31
    %v909 = vsub.s32 32, %v908
    %v910 = vshrl.u32 683565275, %v909
    %v911 = vshll.u32 683565275, %v908
    %v912 = vshrl.u32 2475754826, %v909
    %v913 = vor.u32 %v911, %v912
    %v914 = vshll.u32 2475754826, %v908
    %v915 = vshrl.u32 2131351028, %v909
    %v916 = vor.u32 %v914, %v915
    %v917 = vshll.u32 2131351028, %v908
    %v918 = vshrl.u32 2102212464, %v909
    %v919 = vor.u32 %v917, %v918
    %v920 = vshll.u32 2102212464, %v908
    %v921 = vshrl.u32 920167782, %v909
    %v922 = vor.u32 %v920, %v921
    %v923 = vshll.u32 920167782, %v908
    %v924 = vshrl.u32 1326507024, %v909
    %v925 = vor.u32 %v923, %v924
    %vm926 = vcmp.lt.s32.totalorder %v907, 1
    %vm927 = vcmp.lt.s32.totalorder %v907, 2
    %vm928 = vcmp.lt.s32.totalorder %v907, 3
    %vm929 = vcmp.lt.s32.totalorder %v907, 4
    %v930 = vsel %vm926, %v910, %v913
    %v931 = vsel %vm929, %v919, 2102212464
    %v932 = vsel %vm928, %v916, %v931
    %v933 = vsel %vm927, %v930, %v932
    %v934 = vsel %vm926, %v913, %v916
    %v935 = vsel %vm929, %v922, 920167782
    %v936 = vsel %vm928, %v919, %v935
    %v937 = vsel %vm927, %v934, %v936
    %v938 = vsel %vm926, %v916, %v919
    %v939 = vsel %vm929, %v925, 1326507024
    %v940 = vsel %vm928, %v922, %v939
    %v941 = vsel %vm927, %v938, %v940
    %v942 = vshll.u32 %v902, 8
    %v943 = vmul.u32.u64.compose %v942, %v941
    %v944 = vextract.low.u32 %v943
    %v945 = vextract.high.u32 %v943
    %v946 = vmul.u32.u64.compose %v942, %v937
    %v947 = vextract.low.u32 %v946
    %v948 = vextract.high.u32 %v946
    %v949 = vmul.u32 %v942, %v933
    %v950 = vadd.s32 %v945, %v947
    %vm951 = vc.u32 %v945, %v947
    %v952 = vadd.s32 %v948, 1
    %v953 = vsel %vm951, %v952, %v948
    %v954 = vadd.s32 %v949, %v953
    %v955 = vadd.s32 %v954, 536870912
    %v956 = vshrl.u32 %v955, 30
    %v957 = vshll.u32 %v956, 30
    %v958 = vsub.s32 %v954, %v957
    %vm959 = vcmp.lt.s32.totalorder %v958, 0
    %v960 = vsub.s32 0, %v958
    %v961 = vsel %vm959, %v960, %v958
    %v962 = vclz %v961
    %v963 = vsub.s32 %v962, 2
    %vm964 = vcmp.gt.s32.totalorder 0, %v963
    %v965 = vsel %vm964, 0, %v963
    %v966 = vsub.s32 32, %v965
    %v967 = vshll.u32 %v958, %v965
    %v968 = vshrl.u32 %v950, %v966
    %v969 = vor.u32 %v967, %v968
    %v970 = vsub.s32 4294967266, %v965
    %v971 = vadd.s32 %v970, 127
    %v972 = vshll.u32 %v971, 23
    %v973 = vor.u32 4788187, %v972
    %v974 = vand.u32 2147483647, %v973
    %v976 = vcvt.s32.f32 %v969
    %v977 = vmul.f32 %v976, %v974
    %v978 = vxor.u32 %v977, 2147483648
    %v979 = vsel %vm896, %v978, %v977
    %v980 = vsub.s32 4, %v956
    %v981 = vsel %vm896, %v980, %v956
    %v982 = vsel %vm895, %v244, %v979
    %v983 = vsel %vm895, 0, %v981
    %v984 = vcosq.f32.pop %v982
    %v985 = vsinq.f32.pop %v982
    %vm986 = vweird.f32 %v244
    %v987 = vadd.s32 %v983, 3
    %v988 = vand.u32 %v987, 3
    %vm989 = vcmp.lt.s32.totalorder %v988, 2
    %vm990 = vcmp.eq.s32.totalorder %v988, 0
    %v991 = vxor.u32 %v985, 2147483648
    %v992 = vsel %vm990, %v984, %v991
    %vm993 = vcmp.eq.s32.totalorder %v988, 2
    %v994 = vxor.u32 %v984, 2147483648
    %v995 = vsel %vm993, %v994, %v985
    %v996 = vsel %vm989, %v992, %v995
    %v997 = vsel %vm986, nan, %v996
    %v998 = vand.u32 2147483647, %v245
    %vm999 = vcmp.le.f32.partialorder %v998, 0.7853982
    %vm1000 = vcmp.lt.s32.totalorder %v245, 0
    %v1001 = vand.u32 %v245, 2139095040
    %v1002 = vshrl.u32 %v1001, 23
    %v1003 = vsub.s32 %v1002, 127
    %v1004 = vand.u32 2147483647, %v245
    %v1005 = vand.u32 %v1004, 8388607
    %v1006 = vor.u32 %v1005, 8388608
    %v1007 = vsub.s32 0, %v1006
    %v1008 = vadd.s32 %v1003, 1
    %vm1009 = vcmp.gt.s32.totalorder %v1008, 0
    %v1010 = vsel %vm1009, %v1008, 0
    %v1011 = vshrl.u32 %v1010, 5
    %v1012 = vand.u32 %v1010, 31
    %v1013 = vsub.s32 32, %v1012
    %v1014 = vshrl.u32 683565275, %v1013
    %v1015 = vshll.u32 683565275, %v1012
    %v1016 = vshrl.u32 2475754826, %v1013
    %v1017 = vor.u32 %v1015, %v1016
    %v1018 = vshll.u32 2475754826, %v1012
    %v1019 = vshrl.u32 2131351028, %v1013
    %v1020 = vor.u32 %v1018, %v1019
    %v1021 = vshll.u32 2131351028, %v1012
    %v1022 = vshrl.u32 2102212464, %v1013
    %v1023 = vor.u32 %v1021, %v1022
    %v1024 = vshll.u32 2102212464, %v1012
    %v1025 = vshrl.u32 920167782, %v1013
    %v1026 = vor.u32 %v1024, %v1025
    %v1027 = vshll.u32 920167782, %v1012
    %v1028 = vshrl.u32 1326507024, %v1013
    %v1029 = vor.u32 %v1027, %v1028
    %vm1030 = vcmp.lt.s32.totalorder %v1011, 1
    %vm1031 = vcmp.lt.s32.totalorder %v1011, 2
    %vm1032 = vcmp.lt.s32.totalorder %v1011, 3
    %vm1033 = vcmp.lt.s32.totalorder %v1011, 4
    %v1034 = vsel %vm1030, %v1014, %v1017
    %v1035 = vsel %vm1033, %v1023, 2102212464
    %v1036 = vsel %vm1032, %v1020, %v1035
    %v1037 = vsel %vm1031, %v1034, %v1036
    %v1038 = vsel %vm1030, %v1017, %v1020
    %v1039 = vsel %vm1033, %v1026, 920167782
    %v1040 = vsel %vm1032, %v1023, %v1039
    %v1041 = vsel %vm1031, %v1038, %v1040
    %v1042 = vsel %vm1030, %v1020, %v1023
    %v1043 = vsel %vm1033, %v1029, 1326507024
    %v1044 = vsel %vm1032, %v1026, %v1043
    %v1045 = vsel %vm1031, %v1042, %v1044
    %v1046 = vshll.u32 %v1006, 8
    %v1047 = vmul.u32.u64.compose %v1046, %v1045
    %v1048 = vextract.low.u32 %v1047
    %v1049 = vextract.high.u32 %v1047
    %v1050 = vmul.u32.u64.compose %v1046, %v1041
    %v1051 = vextract.low.u32 %v1050
    %v1052 = vextract.high.u32 %v1050
    %v1053 = vmul.u32 %v1046, %v1037
    %v1054 = vadd.s32 %v1049, %v1051
    %vm1055 = vc.u32 %v1049, %v1051
    %v1056 = vadd.s32 %v1052, 1
    %v1057 = vsel %vm1055, %v1056, %v1052
    %v1058 = vadd.s32 %v1053, %v1057
    %v1059 = vadd.s32 %v1058, 536870912
    %v1060 = vshrl.u32 %v1059, 30
    %v1061 = vshll.u32 %v1060, 30
    %v1062 = vsub.s32 %v1058, %v1061
    %vm1063 = vcmp.lt.s32.totalorder %v1062, 0
    %v1064 = vsub.s32 0, %v1062
    %v1065 = vsel %vm1063, %v1064, %v1062
    %v1066 = vclz %v1065
    %v1067 = vsub.s32 %v1066, 2
    %vm1068 = vcmp.gt.s32.totalorder 0, %v1067
    %v1069 = vsel %vm1068, 0, %v1067
    %v1070 = vsub.s32 32, %v1069
    %v1071 = vshll.u32 %v1062, %v1069
    %v1072 = vshrl.u32 %v1054, %v1070
    %v1073 = vor.u32 %v1071, %v1072
    %v1074 = vsub.s32 4294967266, %v1069
    %v1075 = vadd.s32 %v1074, 127
    %v1076 = vshll.u32 %v1075, 23
    %v1077 = vor.u32 4788187, %v1076
    %v1078 = vand.u32 2147483647, %v1077
    %v1080 = vcvt.s32.f32 %v1073
    %v1081 = vmul.f32 %v1080, %v1078
    %v1082 = vxor.u32 %v1081, 2147483648
    %v1083 = vsel %vm1000, %v1082, %v1081
    %v1084 = vsub.s32 4, %v1060
    %v1085 = vsel %vm1000, %v1084, %v1060
    %v1086 = vsel %vm999, %v245, %v1083
    %v1087 = vsel %vm999, 0, %v1085
    %v1088 = vcosq.f32.pop %v1086
    %v1089 = vsinq.f32.pop %v1086
    %vm1090 = vweird.f32 %v245
    %v1091 = vadd.s32 %v1087, 3
    %v1092 = vand.u32 %v1091, 3
    %vm1093 = vcmp.lt.s32.totalorder %v1092, 2
    %vm1094 = vcmp.eq.s32.totalorder %v1092, 0
    %v1095 = vxor.u32 %v1089, 2147483648
    %v1096 = vsel %vm1094, %v1088, %v1095
    %vm1097 = vcmp.eq.s32.totalorder %v1092, 2
    %v1098 = vxor.u32 %v1088, 2147483648
    %v1099 = vsel %vm1097, %v1098, %v1089
    %v1100 = vsel %vm1093, %v1096, %v1099
    %v1101 = vsel %vm1090, nan, %v1100
    %v1102 = vand.u32 2147483647, %v246
    %vm1103 = vcmp.le.f32.partialorder %v1102, 0.7853982
    %vm1104 = vcmp.lt.s32.totalorder %v246, 0
    %v1105 = vand.u32 %v246, 2139095040
    %v1106 = vshrl.u32 %v1105, 23
    %v1107 = vsub.s32 %v1106, 127
    %v1108 = vand.u32 2147483647, %v246
    %v1109 = vand.u32 %v1108, 8388607
    %v1110 = vor.u32 %v1109, 8388608
    %v1111 = vsub.s32 0, %v1110
    %v1112 = vadd.s32 %v1107, 1
    %vm1113 = vcmp.gt.s32.totalorder %v1112, 0
    %v1114 = vsel %vm1113, %v1112, 0
    %v1115 = vshrl.u32 %v1114, 5
    %v1116 = vand.u32 %v1114, 31
    %v1117 = vsub.s32 32, %v1116
    %v1118 = vshrl.u32 683565275, %v1117
    %v1119 = vshll.u32 683565275, %v1116
    %v1120 = vshrl.u32 2475754826, %v1117
    %v1121 = vor.u32 %v1119, %v1120
    %v1122 = vshll.u32 2475754826, %v1116
    %v1123 = vshrl.u32 2131351028, %v1117
    %v1124 = vor.u32 %v1122, %v1123
    %v1125 = vshll.u32 2131351028, %v1116
    %v1126 = vshrl.u32 2102212464, %v1117
    %v1127 = vor.u32 %v1125, %v1126
    %v1128 = vshll.u32 2102212464, %v1116
    %v1129 = vshrl.u32 920167782, %v1117
    %v1130 = vor.u32 %v1128, %v1129
    %v1131 = vshll.u32 920167782, %v1116
    %v1132 = vshrl.u32 1326507024, %v1117
    %v1133 = vor.u32 %v1131, %v1132
    %vm1134 = vcmp.lt.s32.totalorder %v1115, 1
    %vm1135 = vcmp.lt.s32.totalorder %v1115, 2
    %vm1136 = vcmp.lt.s32.totalorder %v1115, 3
    %vm1137 = vcmp.lt.s32.totalorder %v1115, 4
    %v1138 = vsel %vm1134, %v1118, %v1121
    %v1139 = vsel %vm1137, %v1127, 2102212464
    %v1140 = vsel %vm1136, %v1124, %v1139
    %v1141 = vsel %vm1135, %v1138, %v1140
    %v1142 = vsel %vm1134, %v1121, %v1124
    %v1143 = vsel %vm1137, %v1130, 920167782
    %v1144 = vsel %vm1136, %v1127, %v1143
    %v1145 = vsel %vm1135, %v1142, %v1144
    %v1146 = vsel %vm1134, %v1124, %v1127
    %v1147 = vsel %vm1137, %v1133, 1326507024
    %v1148 = vsel %vm1136, %v1130, %v1147
    %v1149 = vsel %vm1135, %v1146, %v1148
    %v1150 = vshll.u32 %v1110, 8
    %v1151 = vmul.u32.u64.compose %v1150, %v1149
    %v1152 = vextract.low.u32 %v1151
    %v1153 = vextract.high.u32 %v1151
    %v1154 = vmul.u32.u64.compose %v1150, %v1145
    %v1155 = vextract.low.u32 %v1154
    %v1156 = vextract.high.u32 %v1154
    %v1157 = vmul.u32 %v1150, %v1141
    %v1158 = vadd.s32 %v1153, %v1155
    %vm1159 = vc.u32 %v1153, %v1155
    %v1160 = vadd.s32 %v1156, 1
    %v1161 = vsel %vm1159, %v1160, %v1156
    %v1162 = vadd.s32 %v1157, %v1161
    %v1163 = vadd.s32 %v1162, 536870912
    %v1164 = vshrl.u32 %v1163, 30
    %v1165 = vshll.u32 %v1164, 30
    %v1166 = vsub.s32 %v1162, %v1165
    %vm1167 = vcmp.lt.s32.totalorder %v1166, 0
    %v1168 = vsub.s32 0, %v1166
    %v1169 = vsel %vm1167, %v1168, %v1166
    %v1170 = vclz %v1169
    %v1171 = vsub.s32 %v1170, 2
    %vm1172 = vcmp.gt.s32.totalorder 0, %v1171
    %v1173 = vsel %vm1172, 0, %v1171
    %v1174 = vsub.s32 32, %v1173
    %v1175 = vshll.u32 %v1166, %v1173
    %v1176 = vshrl.u32 %v1158, %v1174
    %v1177 = vor.u32 %v1175, %v1176
    %v1178 = vsub.s32 4294967266, %v1173
    %v1179 = vadd.s32 %v1178, 127
    %v1180 = vshll.u32 %v1179, 23
    %v1181 = vor.u32 4788187, %v1180
    %v1182 = vand.u32 2147483647, %v1181
    %v1184 = vcvt.s32.f32 %v1177
    %v1185 = vmul.f32 %v1184, %v1182
    %v1186 = vxor.u32 %v1185, 2147483648
    %v1187 = vsel %vm1104, %v1186, %v1185
    %v1188 = vsub.s32 4, %v1164
    %v1189 = vsel %vm1104, %v1188, %v1164
    %v1190 = vsel %vm1103, %v246, %v1187
    %v1191 = vsel %vm1103, 0, %v1189
    %v1192 = vcosq.f32.pop %v1190
    %v1193 = vsinq.f32.pop %v1190
    %vm1194 = vweird.f32 %v246
    %v1195 = vadd.s32 %v1191, 3
    %v1196 = vand.u32 %v1195, 3
    %vm1197 = vcmp.lt.s32.totalorder %v1196, 2
    %vm1198 = vcmp.eq.s32.totalorder %v1196, 0
    %v1199 = vxor.u32 %v1193, 2147483648
    %v1200 = vsel %vm1198, %v1192, %v1199
    %vm1201 = vcmp.eq.s32.totalorder %v1196, 2
    %v1202 = vxor.u32 %v1192, 2147483648
    %v1203 = vsel %vm1201, %v1202, %v1193
    %v1204 = vsel %vm1197, %v1200, %v1203
    %v1205 = vsel %vm1194, nan, %v1204
    %v1206 = vand.u32 2147483647, %v247
    %vm1207 = vcmp.le.f32.partialorder %v1206, 0.7853982
    %vm1208 = vcmp.lt.s32.totalorder %v247, 0
    %v1209 = vand.u32 %v247, 2139095040
    %v1210 = vshrl.u32 %v1209, 23
    %v1211 = vsub.s32 %v1210, 127
    %v1212 = vand.u32 2147483647, %v247
    %v1213 = vand.u32 %v1212, 8388607
    %v1214 = vor.u32 %v1213, 8388608
    %v1215 = vsub.s32 0, %v1214
    %v1216 = vadd.s32 %v1211, 1
    %vm1217 = vcmp.gt.s32.totalorder %v1216, 0
    %v1218 = vsel %vm1217, %v1216, 0
    %v1219 = vshrl.u32 %v1218, 5
    %v1220 = vand.u32 %v1218, 31
    %v1221 = vsub.s32 32, %v1220
    %v1222 = vshrl.u32 683565275, %v1221
    %v1223 = vshll.u32 683565275, %v1220
    %v1224 = vshrl.u32 2475754826, %v1221
    %v1225 = vor.u32 %v1223, %v1224
    %v1226 = vshll.u32 2475754826, %v1220
    %v1227 = vshrl.u32 2131351028, %v1221
    %v1228 = vor.u32 %v1226, %v1227
    %v1229 = vshll.u32 2131351028, %v1220
    %v1230 = vshrl.u32 2102212464, %v1221
    %v1231 = vor.u32 %v1229, %v1230
    %v1232 = vshll.u32 2102212464, %v1220
    %v1233 = vshrl.u32 920167782, %v1221
    %v1234 = vor.u32 %v1232, %v1233
    %v1235 = vshll.u32 920167782, %v1220
    %v1236 = vshrl.u32 1326507024, %v1221
    %v1237 = vor.u32 %v1235, %v1236
    %vm1238 = vcmp.lt.s32.totalorder %v1219, 1
    %vm1239 = vcmp.lt.s32.totalorder %v1219, 2
    %vm1240 = vcmp.lt.s32.totalorder %v1219, 3
    %vm1241 = vcmp.lt.s32.totalorder %v1219, 4
    %v1242 = vsel %vm1238, %v1222, %v1225
    %v1243 = vsel %vm1241, %v1231, 2102212464
    %v1244 = vsel %vm1240, %v1228, %v1243
    %v1245 = vsel %vm1239, %v1242, %v1244
    %v1246 = vsel %vm1238, %v1225, %v1228
    %v1247 = vsel %vm1241, %v1234, 920167782
    %v1248 = vsel %vm1240, %v1231, %v1247
    %v1249 = vsel %vm1239, %v1246, %v1248
    %v1250 = vsel %vm1238, %v1228, %v1231
    %v1251 = vsel %vm1241, %v1237, 1326507024
    %v1252 = vsel %vm1240, %v1234, %v1251
    %v1253 = vsel %vm1239, %v1250, %v1252
    %v1254 = vshll.u32 %v1214, 8
    %v1255 = vmul.u32.u64.compose %v1254, %v1253
    %v1256 = vextract.low.u32 %v1255
    %v1257 = vextract.high.u32 %v1255
    %v1258 = vmul.u32.u64.compose %v1254, %v1249
    %v1259 = vextract.low.u32 %v1258
    %v1260 = vextract.high.u32 %v1258
    %v1261 = vmul.u32 %v1254, %v1245
    %v1262 = vadd.s32 %v1257, %v1259
    %vm1263 = vc.u32 %v1257, %v1259
    %v1264 = vadd.s32 %v1260, 1
    %v1265 = vsel %vm1263, %v1264, %v1260
    %v1266 = vadd.s32 %v1261, %v1265
    %v1267 = vadd.s32 %v1266, 536870912
    %v1268 = vshrl.u32 %v1267, 30
    %v1269 = vshll.u32 %v1268, 30
    %v1270 = vsub.s32 %v1266, %v1269
    %vm1271 = vcmp.lt.s32.totalorder %v1270, 0
    %v1272 = vsub.s32 0, %v1270
    %v1273 = vsel %vm1271, %v1272, %v1270
    %v1274 = vclz %v1273
    %v1275 = vsub.s32 %v1274, 2
    %vm1276 = vcmp.gt.s32.totalorder 0, %v1275
    %v1277 = vsel %vm1276, 0, %v1275
    %v1278 = vsub.s32 32, %v1277
    %v1279 = vshll.u32 %v1270, %v1277
    %v1280 = vshrl.u32 %v1262, %v1278
    %v1281 = vor.u32 %v1279, %v1280
    %v1282 = vsub.s32 4294967266, %v1277
    %v1283 = vadd.s32 %v1282, 127
    %v1284 = vshll.u32 %v1283, 23
    %v1285 = vor.u32 4788187, %v1284
    %v1286 = vand.u32 2147483647, %v1285
    %v1288 = vcvt.s32.f32 %v1281
    %v1289 = vmul.f32 %v1288, %v1286
    %v1290 = vxor.u32 %v1289, 2147483648
    %v1291 = vsel %vm1208, %v1290, %v1289
    %v1292 = vsub.s32 4, %v1268
    %v1293 = vsel %vm1208, %v1292, %v1268
    %v1294 = vsel %vm1207, %v247, %v1291
    %v1295 = vsel %vm1207, 0, %v1293
    %v1296 = vcosq.f32.pop %v1294
    %v1297 = vsinq.f32.pop %v1294
    %vm1298 = vweird.f32 %v247
    %v1299 = vadd.s32 %v1295, 3
    %v1300 = vand.u32 %v1299, 3
    %vm1301 = vcmp.lt.s32.totalorder %v1300, 2
    %vm1302 = vcmp.eq.s32.totalorder %v1300, 0
    %v1303 = vxor.u32 %v1297, 2147483648
    %v1304 = vsel %vm1302, %v1296, %v1303
    %vm1305 = vcmp.eq.s32.totalorder %v1300, 2
    %v1306 = vxor.u32 %v1296, 2147483648
    %v1307 = vsel %vm1305, %v1306, %v1297
    %v1308 = vsel %vm1301, %v1304, %v1307
    %v1309 = vsel %vm1298, nan, %v1308
    %v1310 = vand.u32 2147483647, %v248
    %vm1311 = vcmp.le.f32.partialorder %v1310, 0.7853982
    %vm1312 = vcmp.lt.s32.totalorder %v248, 0
    %v1313 = vand.u32 %v248, 2139095040
    %v1314 = vshrl.u32 %v1313, 23
    %v1315 = vsub.s32 %v1314, 127
    %v1316 = vand.u32 2147483647, %v248
    %v1317 = vand.u32 %v1316, 8388607
    %v1318 = vor.u32 %v1317, 8388608
    %v1319 = vsub.s32 0, %v1318
    %v1320 = vadd.s32 %v1315, 1
    %vm1321 = vcmp.gt.s32.totalorder %v1320, 0
    %v1322 = vsel %vm1321, %v1320, 0
    %v1323 = vshrl.u32 %v1322, 5
    %v1324 = vand.u32 %v1322, 31
    %v1325 = vsub.s32 32, %v1324
    %v1326 = vshrl.u32 683565275, %v1325
    %v1327 = vshll.u32 683565275, %v1324
    %v1328 = vshrl.u32 2475754826, %v1325
    %v1329 = vor.u32 %v1327, %v1328
    %v1330 = vshll.u32 2475754826, %v1324
    %v1331 = vshrl.u32 2131351028, %v1325
    %v1332 = vor.u32 %v1330, %v1331
    %v1333 = vshll.u32 2131351028, %v1324
    %v1334 = vshrl.u32 2102212464, %v1325
    %v1335 = vor.u32 %v1333, %v1334
    %v1336 = vshll.u32 2102212464, %v1324
    %v1337 = vshrl.u32 920167782, %v1325
    %v1338 = vor.u32 %v1336, %v1337
    %v1339 = vshll.u32 920167782, %v1324
    %v1340 = vshrl.u32 1326507024, %v1325
    %v1341 = vor.u32 %v1339, %v1340
    %vm1342 = vcmp.lt.s32.totalorder %v1323, 1
    %vm1343 = vcmp.lt.s32.totalorder %v1323, 2
    %vm1344 = vcmp.lt.s32.totalorder %v1323, 3
    %vm1345 = vcmp.lt.s32.totalorder %v1323, 4
    %v1346 = vsel %vm1342, %v1326, %v1329
    %v1347 = vsel %vm1345, %v1335, 2102212464
    %v1348 = vsel %vm1344, %v1332, %v1347
    %v1349 = vsel %vm1343, %v1346, %v1348
    %v1350 = vsel %vm1342, %v1329, %v1332
    %v1351 = vsel %vm1345, %v1338, 920167782
    %v1352 = vsel %vm1344, %v1335, %v1351
    %v1353 = vsel %vm1343, %v1350, %v1352
    %v1354 = vsel %vm1342, %v1332, %v1335
    %v1355 = vsel %vm1345, %v1341, 1326507024
    %v1356 = vsel %vm1344, %v1338, %v1355
    %v1357 = vsel %vm1343, %v1354, %v1356
    %v1358 = vshll.u32 %v1318, 8
    %v1359 = vmul.u32.u64.compose %v1358, %v1357
    %v1360 = vextract.low.u32 %v1359
    %v1361 = vextract.high.u32 %v1359
    %v1362 = vmul.u32.u64.compose %v1358, %v1353
    %v1363 = vextract.low.u32 %v1362
    %v1364 = vextract.high.u32 %v1362
    %v1365 = vmul.u32 %v1358, %v1349
    %v1366 = vadd.s32 %v1361, %v1363
    %vm1367 = vc.u32 %v1361, %v1363
    %v1368 = vadd.s32 %v1364, 1
    %v1369 = vsel %vm1367, %v1368, %v1364
    %v1370 = vadd.s32 %v1365, %v1369
    %v1371 = vadd.s32 %v1370, 536870912
    %v1372 = vshrl.u32 %v1371, 30
    %v1373 = vshll.u32 %v1372, 30
    %v1374 = vsub.s32 %v1370, %v1373
    %vm1375 = vcmp.lt.s32.totalorder %v1374, 0
    %v1376 = vsub.s32 0, %v1374
    %v1377 = vsel %vm1375, %v1376, %v1374
    %v1378 = vclz %v1377
    %v1379 = vsub.s32 %v1378, 2
    %vm1380 = vcmp.gt.s32.totalorder 0, %v1379
    %v1381 = vsel %vm1380, 0, %v1379
    %v1382 = vsub.s32 32, %v1381
    %v1383 = vshll.u32 %v1374, %v1381
    %v1384 = vshrl.u32 %v1366, %v1382
    %v1385 = vor.u32 %v1383, %v1384
    %v1386 = vsub.s32 4294967266, %v1381
    %v1387 = vadd.s32 %v1386, 127
    %v1388 = vshll.u32 %v1387, 23
    %v1389 = vor.u32 4788187, %v1388
    %v1390 = vand.u32 2147483647, %v1389
    %v1392 = vcvt.s32.f32 %v1385
    %v1393 = vmul.f32 %v1392, %v1390
    %v1394 = vxor.u32 %v1393, 2147483648
    %v1395 = vsel %vm1312, %v1394, %v1393
    %v1396 = vsub.s32 4, %v1372
    %v1397 = vsel %vm1312, %v1396, %v1372
    %v1398 = vsel %vm1311, %v248, %v1395
    %v1399 = vsel %vm1311, 0, %v1397
    %v1400 = vcosq.f32.pop %v1398
    %v1401 = vsinq.f32.pop %v1398
    %vm1402 = vweird.f32 %v248
    %v1403 = vadd.s32 %v1399, 3
    %v1404 = vand.u32 %v1403, 3
    %vm1405 = vcmp.lt.s32.totalorder %v1404, 2
    %vm1406 = vcmp.eq.s32.totalorder %v1404, 0
    %v1407 = vxor.u32 %v1401, 2147483648
    %v1408 = vsel %vm1406, %v1400, %v1407
    %vm1409 = vcmp.eq.s32.totalorder %v1404, 2
    %v1410 = vxor.u32 %v1400, 2147483648
    %v1411 = vsel %vm1409, %v1410, %v1401
    %v1412 = vsel %vm1405, %v1408, %v1411
    %v1413 = vsel %vm1402, nan, %v1412
    %v1414 = vand.u32 2147483647, %v249
    %vm1415 = vcmp.le.f32.partialorder %v1414, 0.7853982
    %vm1416 = vcmp.lt.s32.totalorder %v249, 0
    %v1417 = vand.u32 %v249, 2139095040
    %v1418 = vshrl.u32 %v1417, 23
    %v1419 = vsub.s32 %v1418, 127
    %v1420 = vand.u32 2147483647, %v249
    %v1421 = vand.u32 %v1420, 8388607
    %v1422 = vor.u32 %v1421, 8388608
    %v1423 = vsub.s32 0, %v1422
    %v1424 = vadd.s32 %v1419, 1
    %vm1425 = vcmp.gt.s32.totalorder %v1424, 0
    %v1426 = vsel %vm1425, %v1424, 0
    %v1427 = vshrl.u32 %v1426, 5
    %v1428 = vand.u32 %v1426, 31
    %v1429 = vsub.s32 32, %v1428
    %v1430 = vshrl.u32 683565275, %v1429
    %v1431 = vshll.u32 683565275, %v1428
    %v1432 = vshrl.u32 2475754826, %v1429
    %v1433 = vor.u32 %v1431, %v1432
    %v1434 = vshll.u32 2475754826, %v1428
    %v1435 = vshrl.u32 2131351028, %v1429
    %v1436 = vor.u32 %v1434, %v1435
    %v1437 = vshll.u32 2131351028, %v1428
    %v1438 = vshrl.u32 2102212464, %v1429
    %v1439 = vor.u32 %v1437, %v1438
    %v1440 = vshll.u32 2102212464, %v1428
    %v1441 = vshrl.u32 920167782, %v1429
    %v1442 = vor.u32 %v1440, %v1441
    %v1443 = vshll.u32 920167782, %v1428
    %v1444 = vshrl.u32 1326507024, %v1429
    %v1445 = vor.u32 %v1443, %v1444
    %vm1446 = vcmp.lt.s32.totalorder %v1427, 1
    %vm1447 = vcmp.lt.s32.totalorder %v1427, 2
    %vm1448 = vcmp.lt.s32.totalorder %v1427, 3
    %vm1449 = vcmp.lt.s32.totalorder %v1427, 4
    %v1450 = vsel %vm1446, %v1430, %v1433
    %v1451 = vsel %vm1449, %v1439, 2102212464
    %v1452 = vsel %vm1448, %v1436, %v1451
    %v1453 = vsel %vm1447, %v1450, %v1452
    %v1454 = vsel %vm1446, %v1433, %v1436
    %v1455 = vsel %vm1449, %v1442, 920167782
    %v1456 = vsel %vm1448, %v1439, %v1455
    %v1457 = vsel %vm1447, %v1454, %v1456
    %v1458 = vsel %vm1446, %v1436, %v1439
    %v1459 = vsel %vm1449, %v1445, 1326507024
    %v1460 = vsel %vm1448, %v1442, %v1459
    %v1461 = vsel %vm1447, %v1458, %v1460
    %v1462 = vshll.u32 %v1422, 8
    %v1463 = vmul.u32.u64.compose %v1462, %v1461
    %v1464 = vextract.low.u32 %v1463
    %v1465 = vextract.high.u32 %v1463
    %v1466 = vmul.u32.u64.compose %v1462, %v1457
    %v1467 = vextract.low.u32 %v1466
    %v1468 = vextract.high.u32 %v1466
    %v1469 = vmul.u32 %v1462, %v1453
    %v1470 = vadd.s32 %v1465, %v1467
    %vm1471 = vc.u32 %v1465, %v1467
    %v1472 = vadd.s32 %v1468, 1
    %v1473 = vsel %vm1471, %v1472, %v1468
    %v1474 = vadd.s32 %v1469, %v1473
    %v1475 = vadd.s32 %v1474, 536870912
    %v1476 = vshrl.u32 %v1475, 30
    %v1477 = vshll.u32 %v1476, 30
    %v1478 = vsub.s32 %v1474, %v1477
    %vm1479 = vcmp.lt.s32.totalorder %v1478, 0
    %v1480 = vsub.s32 0, %v1478
    %v1481 = vsel %vm1479, %v1480, %v1478
    %v1482 = vclz %v1481
    %v1483 = vsub.s32 %v1482, 2
    %vm1484 = vcmp.gt.s32.totalorder 0, %v1483
    %v1485 = vsel %vm1484, 0, %v1483
    %v1486 = vsub.s32 32, %v1485
    %v1487 = vshll.u32 %v1478, %v1485
    %v1488 = vshrl.u32 %v1470, %v1486
    %v1489 = vor.u32 %v1487, %v1488
    %v1490 = vsub.s32 4294967266, %v1485
    %v1491 = vadd.s32 %v1490, 127
    %v1492 = vshll.u32 %v1491, 23
    %v1493 = vor.u32 4788187, %v1492
    %v1494 = vand.u32 2147483647, %v1493
    %v1496 = vcvt.s32.f32 %v1489
    %v1497 = vmul.f32 %v1496, %v1494
    %v1498 = vxor.u32 %v1497, 2147483648
    %v1499 = vsel %vm1416, %v1498, %v1497
    %v1500 = vsub.s32 4, %v1476
    %v1501 = vsel %vm1416, %v1500, %v1476
    %v1502 = vsel %vm1415, %v249, %v1499
    %v1503 = vsel %vm1415, 0, %v1501
    %v1504 = vcosq.f32.pop %v1502
    %v1505 = vsinq.f32.pop %v1502
    %vm1506 = vweird.f32 %v249
    %v1507 = vadd.s32 %v1503, 3
    %v1508 = vand.u32 %v1507, 3
    %vm1509 = vcmp.lt.s32.totalorder %v1508, 2
    %vm1510 = vcmp.eq.s32.totalorder %v1508, 0
    %v1511 = vxor.u32 %v1505, 2147483648
    %v1512 = vsel %vm1510, %v1504, %v1511
    %vm1513 = vcmp.eq.s32.totalorder %v1508, 2
    %v1514 = vxor.u32 %v1504, 2147483648
    %v1515 = vsel %vm1513, %v1514, %v1505
    %v1516 = vsel %vm1509, %v1512, %v1515
    %v1517 = vsel %vm1506, nan, %v1516
    %v1518 = vand.u32 2147483647, %v250
    %vm1519 = vcmp.le.f32.partialorder %v1518, 0.7853982
    %vm1520 = vcmp.lt.s32.totalorder %v250, 0
    %v1521 = vand.u32 %v250, 2139095040
    %v1522 = vshrl.u32 %v1521, 23
    %v1523 = vsub.s32 %v1522, 127
    %v1524 = vand.u32 2147483647, %v250
    %v1525 = vand.u32 %v1524, 8388607
    %v1526 = vor.u32 %v1525, 8388608
    %v1527 = vsub.s32 0, %v1526
    %v1528 = vadd.s32 %v1523, 1
    %vm1529 = vcmp.gt.s32.totalorder %v1528, 0
    %v1530 = vsel %vm1529, %v1528, 0
    %v1531 = vshrl.u32 %v1530, 5
    %v1532 = vand.u32 %v1530, 31
    %v1533 = vsub.s32 32, %v1532
    %v1534 = vshrl.u32 683565275, %v1533
    %v1535 = vshll.u32 683565275, %v1532
    %v1536 = vshrl.u32 2475754826, %v1533
    %v1537 = vor.u32 %v1535, %v1536
    %v1538 = vshll.u32 2475754826, %v1532
    %v1539 = vshrl.u32 2131351028, %v1533
    %v1540 = vor.u32 %v1538, %v1539
    %v1541 = vshll.u32 2131351028, %v1532
    %v1542 = vshrl.u32 2102212464, %v1533
    %v1543 = vor.u32 %v1541, %v1542
    %v1544 = vshll.u32 2102212464, %v1532
    %v1545 = vshrl.u32 920167782, %v1533
    %v1546 = vor.u32 %v1544, %v1545
    %v1547 = vshll.u32 920167782, %v1532
    %v1548 = vshrl.u32 1326507024, %v1533
    %v1549 = vor.u32 %v1547, %v1548
    %vm1550 = vcmp.lt.s32.totalorder %v1531, 1
    %vm1551 = vcmp.lt.s32.totalorder %v1531, 2
    %vm1552 = vcmp.lt.s32.totalorder %v1531, 3
    %vm1553 = vcmp.lt.s32.totalorder %v1531, 4
    %v1554 = vsel %vm1550, %v1534, %v1537
    %v1555 = vsel %vm1553, %v1543, 2102212464
    %v1556 = vsel %vm1552, %v1540, %v1555
    %v1557 = vsel %vm1551, %v1554, %v1556
    %v1558 = vsel %vm1550, %v1537, %v1540
    %v1559 = vsel %vm1553, %v1546, 920167782
    %v1560 = vsel %vm1552, %v1543, %v1559
    %v1561 = vsel %vm1551, %v1558, %v1560
    %v1562 = vsel %vm1550, %v1540, %v1543
    %v1563 = vsel %vm1553, %v1549, 1326507024
    %v1564 = vsel %vm1552, %v1546, %v1563
    %v1565 = vsel %vm1551, %v1562, %v1564
    %v1566 = vshll.u32 %v1526, 8
    %v1567 = vmul.u32.u64.compose %v1566, %v1565
    %v1568 = vextract.low.u32 %v1567
    %v1569 = vextract.high.u32 %v1567
    %v1570 = vmul.u32.u64.compose %v1566, %v1561
    %v1571 = vextract.low.u32 %v1570
    %v1572 = vextract.high.u32 %v1570
    %v1573 = vmul.u32 %v1566, %v1557
    %v1574 = vadd.s32 %v1569, %v1571
    %vm1575 = vc.u32 %v1569, %v1571
    %v1576 = vadd.s32 %v1572, 1
    %v1577 = vsel %vm1575, %v1576, %v1572
    %v1578 = vadd.s32 %v1573, %v1577
    %v1579 = vadd.s32 %v1578, 536870912
    %v1580 = vshrl.u32 %v1579, 30
    %v1581 = vshll.u32 %v1580, 30
    %v1582 = vsub.s32 %v1578, %v1581
    %vm1583 = vcmp.lt.s32.totalorder %v1582, 0
    %v1584 = vsub.s32 0, %v1582
    %v1585 = vsel %vm1583, %v1584, %v1582
    %v1586 = vclz %v1585
    %v1587 = vsub.s32 %v1586, 2
    %vm1588 = vcmp.gt.s32.totalorder 0, %v1587
    %v1589 = vsel %vm1588, 0, %v1587
    %v1590 = vsub.s32 32, %v1589
    %v1591 = vshll.u32 %v1582, %v1589
    %v1592 = vshrl.u32 %v1574, %v1590
    %v1593 = vor.u32 %v1591, %v1592
    %v1594 = vsub.s32 4294967266, %v1589
    %v1595 = vadd.s32 %v1594, 127
    %v1596 = vshll.u32 %v1595, 23
    %v1597 = vor.u32 4788187, %v1596
    %v1598 = vand.u32 2147483647, %v1597
    %v1600 = vcvt.s32.f32 %v1593
    %v1601 = vmul.f32 %v1600, %v1598
    %v1602 = vxor.u32 %v1601, 2147483648
    %v1603 = vsel %vm1520, %v1602, %v1601
    %v1604 = vsub.s32 4, %v1580
    %v1605 = vsel %vm1520, %v1604, %v1580
    %v1606 = vsel %vm1519, %v250, %v1603
    %v1607 = vsel %vm1519, 0, %v1605
    %v1608 = vcosq.f32.pop %v1606
    %v1609 = vsinq.f32.pop %v1606
    %vm1610 = vweird.f32 %v250
    %v1611 = vadd.s32 %v1607, 3
    %v1612 = vand.u32 %v1611, 3
    %vm1613 = vcmp.lt.s32.totalorder %v1612, 2
    %vm1614 = vcmp.eq.s32.totalorder %v1612, 0
    %v1615 = vxor.u32 %v1609, 2147483648
    %v1616 = vsel %vm1614, %v1608, %v1615
    %vm1617 = vcmp.eq.s32.totalorder %v1612, 2
    %v1618 = vxor.u32 %v1608, 2147483648
    %v1619 = vsel %vm1617, %v1618, %v1609
    %v1620 = vsel %vm1613, %v1616, %v1619
    %v1621 = vsel %vm1610, nan, %v1620
    %v1622 = vand.u32 2147483647, %v251
    %vm1623 = vcmp.le.f32.partialorder %v1622, 0.7853982
    %vm1624 = vcmp.lt.s32.totalorder %v251, 0
    %v1625 = vand.u32 %v251, 2139095040
    %v1626 = vshrl.u32 %v1625, 23
    %v1627 = vsub.s32 %v1626, 127
    %v1628 = vand.u32 2147483647, %v251
    %v1629 = vand.u32 %v1628, 8388607
    %v1630 = vor.u32 %v1629, 8388608
    %v1631 = vsub.s32 0, %v1630
    %v1632 = vadd.s32 %v1627, 1
    %vm1633 = vcmp.gt.s32.totalorder %v1632, 0
    %v1634 = vsel %vm1633, %v1632, 0
    %v1635 = vshrl.u32 %v1634, 5
    %v1636 = vand.u32 %v1634, 31
    %v1637 = vsub.s32 32, %v1636
    %v1638 = vshrl.u32 683565275, %v1637
    %v1639 = vshll.u32 683565275, %v1636
    %v1640 = vshrl.u32 2475754826, %v1637
    %v1641 = vor.u32 %v1639, %v1640
    %v1642 = vshll.u32 2475754826, %v1636
    %v1643 = vshrl.u32 2131351028, %v1637
    %v1644 = vor.u32 %v1642, %v1643
    %v1645 = vshll.u32 2131351028, %v1636
    %v1646 = vshrl.u32 2102212464, %v1637
    %v1647 = vor.u32 %v1645, %v1646
    %v1648 = vshll.u32 2102212464, %v1636
    %v1649 = vshrl.u32 920167782, %v1637
    %v1650 = vor.u32 %v1648, %v1649
    %v1651 = vshll.u32 920167782, %v1636
    %v1652 = vshrl.u32 1326507024, %v1637
    %v1653 = vor.u32 %v1651, %v1652
    %vm1654 = vcmp.lt.s32.totalorder %v1635, 1
    %vm1655 = vcmp.lt.s32.totalorder %v1635, 2
    %vm1656 = vcmp.lt.s32.totalorder %v1635, 3
    %vm1657 = vcmp.lt.s32.totalorder %v1635, 4
    %v1658 = vsel %vm1654, %v1638, %v1641
    %v1659 = vsel %vm1657, %v1647, 2102212464
    %v1660 = vsel %vm1656, %v1644, %v1659
    %v1661 = vsel %vm1655, %v1658, %v1660
    %v1662 = vsel %vm1654, %v1641, %v1644
    %v1663 = vsel %vm1657, %v1650, 920167782
    %v1664 = vsel %vm1656, %v1647, %v1663
    %v1665 = vsel %vm1655, %v1662, %v1664
    %v1666 = vsel %vm1654, %v1644, %v1647
    %v1667 = vsel %vm1657, %v1653, 1326507024
    %v1668 = vsel %vm1656, %v1650, %v1667
    %v1669 = vsel %vm1655, %v1666, %v1668
    %v1670 = vshll.u32 %v1630, 8
    %v1671 = vmul.u32.u64.compose %v1670, %v1669
    %v1672 = vextract.low.u32 %v1671
    %v1673 = vextract.high.u32 %v1671
    %v1674 = vmul.u32.u64.compose %v1670, %v1665
    %v1675 = vextract.low.u32 %v1674
    %v1676 = vextract.high.u32 %v1674
    %v1677 = vmul.u32 %v1670, %v1661
    %v1678 = vadd.s32 %v1673, %v1675
    %vm1679 = vc.u32 %v1673, %v1675
    %v1680 = vadd.s32 %v1676, 1
    %v1681 = vsel %vm1679, %v1680, %v1676
    %v1682 = vadd.s32 %v1677, %v1681
    %v1683 = vadd.s32 %v1682, 536870912
    %v1684 = vshrl.u32 %v1683, 30
    %v1685 = vshll.u32 %v1684, 30
    %v1686 = vsub.s32 %v1682, %v1685
    %vm1687 = vcmp.lt.s32.totalorder %v1686, 0
    %v1688 = vsub.s32 0, %v1686
    %v1689 = vsel %vm1687, %v1688, %v1686
    %v1690 = vclz %v1689
    %v1691 = vsub.s32 %v1690, 2
    %vm1692 = vcmp.gt.s32.totalorder 0, %v1691
    %v1693 = vsel %vm1692, 0, %v1691
    %v1694 = vsub.s32 32, %v1693
    %v1695 = vshll.u32 %v1686, %v1693
    %v1696 = vshrl.u32 %v1678, %v1694
    %v1697 = vor.u32 %v1695, %v1696
    %v1698 = vsub.s32 4294967266, %v1693
    %v1699 = vadd.s32 %v1698, 127
    %v1700 = vshll.u32 %v1699, 23
    %v1701 = vor.u32 4788187, %v1700
    %v1702 = vand.u32 2147483647, %v1701
    %v1704 = vcvt.s32.f32 %v1697
    %v1705 = vmul.f32 %v1704, %v1702
    %v1706 = vxor.u32 %v1705, 2147483648
    %v1707 = vsel %vm1624, %v1706, %v1705
    %v1708 = vsub.s32 4, %v1684
    %v1709 = vsel %vm1624, %v1708, %v1684
    %v1710 = vsel %vm1623, %v251, %v1707
    %v1711 = vsel %vm1623, 0, %v1709
    %v1712 = vcosq.f32.pop %v1710
    %v1713 = vsinq.f32.pop %v1710
    %vm1714 = vweird.f32 %v251
    %v1715 = vadd.s32 %v1711, 3
    %v1716 = vand.u32 %v1715, 3
    %vm1717 = vcmp.lt.s32.totalorder %v1716, 2
    %vm1718 = vcmp.eq.s32.totalorder %v1716, 0
    %v1719 = vxor.u32 %v1713, 2147483648
    %v1720 = vsel %vm1718, %v1712, %v1719
    %vm1721 = vcmp.eq.s32.totalorder %v1716, 2
    %v1722 = vxor.u32 %v1712, 2147483648
    %v1723 = vsel %vm1721, %v1722, %v1713
    %v1724 = vsel %vm1717, %v1720, %v1723
    %v1725 = vsel %vm1714, nan, %v1724
    %v1726 = vand.u32 2147483647, %v252
    %vm1727 = vcmp.le.f32.partialorder %v1726, 0.7853982
    %vm1728 = vcmp.lt.s32.totalorder %v252, 0
    %v1729 = vand.u32 %v252, 2139095040
    %v1730 = vshrl.u32 %v1729, 23
    %v1731 = vsub.s32 %v1730, 127
    %v1732 = vand.u32 2147483647, %v252
    %v1733 = vand.u32 %v1732, 8388607
    %v1734 = vor.u32 %v1733, 8388608
    %v1735 = vsub.s32 0, %v1734
    %v1736 = vadd.s32 %v1731, 1
    %vm1737 = vcmp.gt.s32.totalorder %v1736, 0
    %v1738 = vsel %vm1737, %v1736, 0
    %v1739 = vshrl.u32 %v1738, 5
    %v1740 = vand.u32 %v1738, 31
    %v1741 = vsub.s32 32, %v1740
    %v1742 = vshrl.u32 683565275, %v1741
    %v1743 = vshll.u32 683565275, %v1740
    %v1744 = vshrl.u32 2475754826, %v1741
    %v1745 = vor.u32 %v1743, %v1744
    %v1746 = vshll.u32 2475754826, %v1740
    %v1747 = vshrl.u32 2131351028, %v1741
    %v1748 = vor.u32 %v1746, %v1747
    %v1749 = vshll.u32 2131351028, %v1740
    %v1750 = vshrl.u32 2102212464, %v1741
    %v1751 = vor.u32 %v1749, %v1750
    %v1752 = vshll.u32 2102212464, %v1740
    %v1753 = vshrl.u32 920167782, %v1741
    %v1754 = vor.u32 %v1752, %v1753
    %v1755 = vshll.u32 920167782, %v1740
    %v1756 = vshrl.u32 1326507024, %v1741
    %v1757 = vor.u32 %v1755, %v1756
    %vm1758 = vcmp.lt.s32.totalorder %v1739, 1
    %vm1759 = vcmp.lt.s32.totalorder %v1739, 2
    %vm1760 = vcmp.lt.s32.totalorder %v1739, 3
    %vm1761 = vcmp.lt.s32.totalorder %v1739, 4
    %v1762 = vsel %vm1758, %v1742, %v1745
    %v1763 = vsel %vm1761, %v1751, 2102212464
    %v1764 = vsel %vm1760, %v1748, %v1763
    %v1765 = vsel %vm1759, %v1762, %v1764
    %v1766 = vsel %vm1758, %v1745, %v1748
    %v1767 = vsel %vm1761, %v1754, 920167782
    %v1768 = vsel %vm1760, %v1751, %v1767
    %v1769 = vsel %vm1759, %v1766, %v1768
    %v1770 = vsel %vm1758, %v1748, %v1751
    %v1771 = vsel %vm1761, %v1757, 1326507024
    %v1772 = vsel %vm1760, %v1754, %v1771
    %v1773 = vsel %vm1759, %v1770, %v1772
    %v1774 = vshll.u32 %v1734, 8
    %v1775 = vmul.u32.u64.compose %v1774, %v1773
    %v1776 = vextract.low.u32 %v1775
    %v1777 = vextract.high.u32 %v1775
    %v1778 = vmul.u32.u64.compose %v1774, %v1769
    %v1779 = vextract.low.u32 %v1778
    %v1780 = vextract.high.u32 %v1778
    %v1781 = vmul.u32 %v1774, %v1765
    %v1782 = vadd.s32 %v1777, %v1779
    %vm1783 = vc.u32 %v1777, %v1779
    %v1784 = vadd.s32 %v1780, 1
    %v1785 = vsel %vm1783, %v1784, %v1780
    %v1786 = vadd.s32 %v1781, %v1785
    %v1787 = vadd.s32 %v1786, 536870912
    %v1788 = vshrl.u32 %v1787, 30
    %v1789 = vshll.u32 %v1788, 30
    %v1790 = vsub.s32 %v1786, %v1789
    %vm1791 = vcmp.lt.s32.totalorder %v1790, 0
    %v1792 = vsub.s32 0, %v1790
    %v1793 = vsel %vm1791, %v1792, %v1790
    %v1794 = vclz %v1793
    %v1795 = vsub.s32 %v1794, 2
    %vm1796 = vcmp.gt.s32.totalorder 0, %v1795
    %v1797 = vsel %vm1796, 0, %v1795
    %v1798 = vsub.s32 32, %v1797
    %v1799 = vshll.u32 %v1790, %v1797
    %v1800 = vshrl.u32 %v1782, %v1798
    %v1801 = vor.u32 %v1799, %v1800
    %v1802 = vsub.s32 4294967266, %v1797
    %v1803 = vadd.s32 %v1802, 127
    %v1804 = vshll.u32 %v1803, 23
    %v1805 = vor.u32 4788187, %v1804
    %v1806 = vand.u32 2147483647, %v1805
    %v1808 = vcvt.s32.f32 %v1801
    %v1809 = vmul.f32 %v1808, %v1806
    %v1810 = vxor.u32 %v1809, 2147483648
    %v1811 = vsel %vm1728, %v1810, %v1809
    %v1812 = vsub.s32 4, %v1788
    %v1813 = vsel %vm1728, %v1812, %v1788
    %v1814 = vsel %vm1727, %v252, %v1811
    %v1815 = vsel %vm1727, 0, %v1813
    %v1816 = vcosq.f32.pop %v1814
    %v1817 = vsinq.f32.pop %v1814
    %vm1818 = vweird.f32 %v252
    %v1819 = vadd.s32 %v1815, 3
    %v1820 = vand.u32 %v1819, 3
    %vm1821 = vcmp.lt.s32.totalorder %v1820, 2
    %vm1822 = vcmp.eq.s32.totalorder %v1820, 0
    %v1823 = vxor.u32 %v1817, 2147483648
    %v1824 = vsel %vm1822, %v1816, %v1823
    %vm1825 = vcmp.eq.s32.totalorder %v1820, 2
    %v1826 = vxor.u32 %v1816, 2147483648
    %v1827 = vsel %vm1825, %v1826, %v1817
    %v1828 = vsel %vm1821, %v1824, %v1827
    %v1829 = vsel %vm1818, nan, %v1828
    %v1830 = vand.u32 2147483647, %v253
    %vm1831 = vcmp.le.f32.partialorder %v1830, 0.7853982
    %vm1832 = vcmp.lt.s32.totalorder %v253, 0
    %v1833 = vand.u32 %v253, 2139095040
    %v1834 = vshrl.u32 %v1833, 23
    %v1835 = vsub.s32 %v1834, 127
    %v1836 = vand.u32 2147483647, %v253
    %v1837 = vand.u32 %v1836, 8388607
    %v1838 = vor.u32 %v1837, 8388608
    %v1839 = vsub.s32 0, %v1838
    %v1840 = vadd.s32 %v1835, 1
    %vm1841 = vcmp.gt.s32.totalorder %v1840, 0
    %v1842 = vsel %vm1841, %v1840, 0
    %v1843 = vshrl.u32 %v1842, 5
    %v1844 = vand.u32 %v1842, 31
    %v1845 = vsub.s32 32, %v1844
    %v1846 = vshrl.u32 683565275, %v1845
    %v1847 = vshll.u32 683565275, %v1844
    %v1848 = vshrl.u32 2475754826, %v1845
    %v1849 = vor.u32 %v1847, %v1848
    %v1850 = vshll.u32 2475754826, %v1844
    %v1851 = vshrl.u32 2131351028, %v1845
    %v1852 = vor.u32 %v1850, %v1851
    %v1853 = vshll.u32 2131351028, %v1844
    %v1854 = vshrl.u32 2102212464, %v1845
    %v1855 = vor.u32 %v1853, %v1854
    %v1856 = vshll.u32 2102212464, %v1844
    %v1857 = vshrl.u32 920167782, %v1845
    %v1858 = vor.u32 %v1856, %v1857
    %v1859 = vshll.u32 920167782, %v1844
    %v1860 = vshrl.u32 1326507024, %v1845
    %v1861 = vor.u32 %v1859, %v1860
    %vm1862 = vcmp.lt.s32.totalorder %v1843, 1
    %vm1863 = vcmp.lt.s32.totalorder %v1843, 2
    %vm1864 = vcmp.lt.s32.totalorder %v1843, 3
    %vm1865 = vcmp.lt.s32.totalorder %v1843, 4
    %v1866 = vsel %vm1862, %v1846, %v1849
    %v1867 = vsel %vm1865, %v1855, 2102212464
    %v1868 = vsel %vm1864, %v1852, %v1867
    %v1869 = vsel %vm1863, %v1866, %v1868
    %v1870 = vsel %vm1862, %v1849, %v1852
    %v1871 = vsel %vm1865, %v1858, 920167782
    %v1872 = vsel %vm1864, %v1855, %v1871
    %v1873 = vsel %vm1863, %v1870, %v1872
    %v1874 = vsel %vm1862, %v1852, %v1855
    %v1875 = vsel %vm1865, %v1861, 1326507024
    %v1876 = vsel %vm1864, %v1858, %v1875
    %v1877 = vsel %vm1863, %v1874, %v1876
    %v1878 = vshll.u32 %v1838, 8
    %v1879 = vmul.u32.u64.compose %v1878, %v1877
    %v1880 = vextract.low.u32 %v1879
    %v1881 = vextract.high.u32 %v1879
    %v1882 = vmul.u32.u64.compose %v1878, %v1873
    %v1883 = vextract.low.u32 %v1882
    %v1884 = vextract.high.u32 %v1882
    %v1885 = vmul.u32 %v1878, %v1869
    %v1886 = vadd.s32 %v1881, %v1883
    %vm1887 = vc.u32 %v1881, %v1883
    %v1888 = vadd.s32 %v1884, 1
    %v1889 = vsel %vm1887, %v1888, %v1884
    %v1890 = vadd.s32 %v1885, %v1889
    %v1891 = vadd.s32 %v1890, 536870912
    %v1892 = vshrl.u32 %v1891, 30
    %v1893 = vshll.u32 %v1892, 30
    %v1894 = vsub.s32 %v1890, %v1893
    %vm1895 = vcmp.lt.s32.totalorder %v1894, 0
    %v1896 = vsub.s32 0, %v1894
    %v1897 = vsel %vm1895, %v1896, %v1894
    %v1898 = vclz %v1897
    %v1899 = vsub.s32 %v1898, 2
    %vm1900 = vcmp.gt.s32.totalorder 0, %v1899
    %v1901 = vsel %vm1900, 0, %v1899
    %v1902 = vsub.s32 32, %v1901
    %v1903 = vshll.u32 %v1894, %v1901
    %v1904 = vshrl.u32 %v1886, %v1902
    %v1905 = vor.u32 %v1903, %v1904
    %v1906 = vsub.s32 4294967266, %v1901
    %v1907 = vadd.s32 %v1906, 127
    %v1908 = vshll.u32 %v1907, 23
    %v1909 = vor.u32 4788187, %v1908
    %v1910 = vand.u32 2147483647, %v1909
    %v1912 = vcvt.s32.f32 %v1905
    %v1913 = vmul.f32 %v1912, %v1910
    %v1914 = vxor.u32 %v1913, 2147483648
    %v1915 = vsel %vm1832, %v1914, %v1913
    %v1916 = vsub.s32 4, %v1892
    %v1917 = vsel %vm1832, %v1916, %v1892
    %v1918 = vsel %vm1831, %v253, %v1915
    %v1919 = vsel %vm1831, 0, %v1917
    %v1920 = vcosq.f32.pop %v1918
    %v1921 = vsinq.f32.pop %v1918
    %vm1922 = vweird.f32 %v253
    %v1923 = vadd.s32 %v1919, 3
    %v1924 = vand.u32 %v1923, 3
    %vm1925 = vcmp.lt.s32.totalorder %v1924, 2
    %vm1926 = vcmp.eq.s32.totalorder %v1924, 0
    %v1927 = vxor.u32 %v1921, 2147483648
    %v1928 = vsel %vm1926, %v1920, %v1927
    %vm1929 = vcmp.eq.s32.totalorder %v1924, 2
    %v1930 = vxor.u32 %v1920, 2147483648
    %v1931 = vsel %vm1929, %v1930, %v1921
    %v1932 = vsel %vm1925, %v1928, %v1931
    %v1933 = vsel %vm1922, nan, %v1932
    %v1934 = vand.u32 2147483647, %v254
    %vm1935 = vcmp.le.f32.partialorder %v1934, 0.7853982
    %vm1936 = vcmp.lt.s32.totalorder %v254, 0
    %v1937 = vand.u32 %v254, 2139095040
    %v1938 = vshrl.u32 %v1937, 23
    %v1939 = vsub.s32 %v1938, 127
    %v1940 = vand.u32 2147483647, %v254
    %v1941 = vand.u32 %v1940, 8388607
    %v1942 = vor.u32 %v1941, 8388608
    %v1943 = vsub.s32 0, %v1942
    %v1944 = vadd.s32 %v1939, 1
    %vm1945 = vcmp.gt.s32.totalorder %v1944, 0
    %v1946 = vsel %vm1945, %v1944, 0
    %v1947 = vshrl.u32 %v1946, 5
    %v1948 = vand.u32 %v1946, 31
    %v1949 = vsub.s32 32, %v1948
    %v1950 = vshrl.u32 683565275, %v1949
    %v1951 = vshll.u32 683565275, %v1948
    %v1952 = vshrl.u32 2475754826, %v1949
    %v1953 = vor.u32 %v1951, %v1952
    %v1954 = vshll.u32 2475754826, %v1948
    %v1955 = vshrl.u32 2131351028, %v1949
    %v1956 = vor.u32 %v1954, %v1955
    %v1957 = vshll.u32 2131351028, %v1948
    %v1958 = vshrl.u32 2102212464, %v1949
    %v1959 = vor.u32 %v1957, %v1958
    %v1960 = vshll.u32 2102212464, %v1948
    %v1961 = vshrl.u32 920167782, %v1949
    %v1962 = vor.u32 %v1960, %v1961
    %v1963 = vshll.u32 920167782, %v1948
    %v1964 = vshrl.u32 1326507024, %v1949
    %v1965 = vor.u32 %v1963, %v1964
    %vm1966 = vcmp.lt.s32.totalorder %v1947, 1
    %vm1967 = vcmp.lt.s32.totalorder %v1947, 2
    %vm1968 = vcmp.lt.s32.totalorder %v1947, 3
    %vm1969 = vcmp.lt.s32.totalorder %v1947, 4
    %v1970 = vsel %vm1966, %v1950, %v1953
    %v1971 = vsel %vm1969, %v1959, 2102212464
    %v1972 = vsel %vm1968, %v1956, %v1971
    %v1973 = vsel %vm1967, %v1970, %v1972
    %v1974 = vsel %vm1966, %v1953, %v1956
    %v1975 = vsel %vm1969, %v1962, 920167782
    %v1976 = vsel %vm1968, %v1959, %v1975
    %v1977 = vsel %vm1967, %v1974, %v1976
    %v1978 = vsel %vm1966, %v1956, %v1959
    %v1979 = vsel %vm1969, %v1965, 1326507024
    %v1980 = vsel %vm1968, %v1962, %v1979
    %v1981 = vsel %vm1967, %v1978, %v1980
    %v1982 = vshll.u32 %v1942, 8
    %v1983 = vmul.u32.u64.compose %v1982, %v1981
    %v1984 = vextract.low.u32 %v1983
    %v1985 = vextract.high.u32 %v1983
    %v1986 = vmul.u32.u64.compose %v1982, %v1977
    %v1987 = vextract.low.u32 %v1986
    %v1988 = vextract.high.u32 %v1986
    %v1989 = vmul.u32 %v1982, %v1973
    %v1990 = vadd.s32 %v1985, %v1987
    %vm1991 = vc.u32 %v1985, %v1987
    %v1992 = vadd.s32 %v1988, 1
    %v1993 = vsel %vm1991, %v1992, %v1988
    %v1994 = vadd.s32 %v1989, %v1993
    %v1995 = vadd.s32 %v1994, 536870912
    %v1996 = vshrl.u32 %v1995, 30
    %v1997 = vshll.u32 %v1996, 30
    %v1998 = vsub.s32 %v1994, %v1997
    %vm1999 = vcmp.lt.s32.totalorder %v1998, 0
    %v2000 = vsub.s32 0, %v1998
    %v2001 = vsel %vm1999, %v2000, %v1998
    %v2002 = vclz %v2001
    %v2003 = vsub.s32 %v2002, 2
    %vm2004 = vcmp.gt.s32.totalorder 0, %v2003
    %v2005 = vsel %vm2004, 0, %v2003
    %v2006 = vsub.s32 32, %v2005
    %v2007 = vshll.u32 %v1998, %v2005
    %v2008 = vshrl.u32 %v1990, %v2006
    %v2009 = vor.u32 %v2007, %v2008
    %v2010 = vsub.s32 4294967266, %v2005
    %v2011 = vadd.s32 %v2010, 127
    %v2012 = vshll.u32 %v2011, 23
    %v2013 = vor.u32 4788187, %v2012
    %v2014 = vand.u32 2147483647, %v2013
    %v2016 = vcvt.s32.f32 %v2009
    %v2017 = vmul.f32 %v2016, %v2014
    %v2018 = vxor.u32 %v2017, 2147483648
    %v2019 = vsel %vm1936, %v2018, %v2017
    %v2020 = vsub.s32 4, %v1996
    %v2021 = vsel %vm1936, %v2020, %v1996
    %v2022 = vsel %vm1935, %v254, %v2019
    %v2023 = vsel %vm1935, 0, %v2021
    %v2024 = vcosq.f32.pop %v2022
    %v2025 = vsinq.f32.pop %v2022
    %vm2026 = vweird.f32 %v254
    %v2027 = vadd.s32 %v2023, 3
    %v2028 = vand.u32 %v2027, 3
    %vm2029 = vcmp.lt.s32.totalorder %v2028, 2
    %vm2030 = vcmp.eq.s32.totalorder %v2028, 0
    %v2031 = vxor.u32 %v2025, 2147483648
    %v2032 = vsel %vm2030, %v2024, %v2031
    %vm2033 = vcmp.eq.s32.totalorder %v2028, 2
    %v2034 = vxor.u32 %v2024, 2147483648
    %v2035 = vsel %vm2033, %v2034, %v2025
    %v2036 = vsel %vm2029, %v2032, %v2035
    %v2037 = vsel %vm2026, nan, %v2036
    %v2038 = vand.u32 2147483647, %v255
    %vm2039 = vcmp.le.f32.partialorder %v2038, 0.7853982
    %vm2040 = vcmp.lt.s32.totalorder %v255, 0
    %v2041 = vand.u32 %v255, 2139095040
    %v2042 = vshrl.u32 %v2041, 23
    %v2043 = vsub.s32 %v2042, 127
    %v2044 = vand.u32 2147483647, %v255
    %v2045 = vand.u32 %v2044, 8388607
    %v2046 = vor.u32 %v2045, 8388608
    %v2047 = vsub.s32 0, %v2046
    %v2048 = vadd.s32 %v2043, 1
    %vm2049 = vcmp.gt.s32.totalorder %v2048, 0
    %v2050 = vsel %vm2049, %v2048, 0
    %v2051 = vshrl.u32 %v2050, 5
    %v2052 = vand.u32 %v2050, 31
    %v2053 = vsub.s32 32, %v2052
    %v2054 = vshrl.u32 683565275, %v2053
    %v2055 = vshll.u32 683565275, %v2052
    %v2056 = vshrl.u32 2475754826, %v2053
    %v2057 = vor.u32 %v2055, %v2056
    %v2058 = vshll.u32 2475754826, %v2052
    %v2059 = vshrl.u32 2131351028, %v2053
    %v2060 = vor.u32 %v2058, %v2059
    %v2061 = vshll.u32 2131351028, %v2052
    %v2062 = vshrl.u32 2102212464, %v2053
    %v2063 = vor.u32 %v2061, %v2062
    %v2064 = vshll.u32 2102212464, %v2052
    %v2065 = vshrl.u32 920167782, %v2053
    %v2066 = vor.u32 %v2064, %v2065
    %v2067 = vshll.u32 920167782, %v2052
    %v2068 = vshrl.u32 1326507024, %v2053
    %v2069 = vor.u32 %v2067, %v2068
    %vm2070 = vcmp.lt.s32.totalorder %v2051, 1
    %vm2071 = vcmp.lt.s32.totalorder %v2051, 2
    %vm2072 = vcmp.lt.s32.totalorder %v2051, 3
    %vm2073 = vcmp.lt.s32.totalorder %v2051, 4
    %v2074 = vsel %vm2070, %v2054, %v2057
    %v2075 = vsel %vm2073, %v2063, 2102212464
    %v2076 = vsel %vm2072, %v2060, %v2075
    %v2077 = vsel %vm2071, %v2074, %v2076
    %v2078 = vsel %vm2070, %v2057, %v2060
    %v2079 = vsel %vm2073, %v2066, 920167782
    %v2080 = vsel %vm2072, %v2063, %v2079
    %v2081 = vsel %vm2071, %v2078, %v2080
    %v2082 = vsel %vm2070, %v2060, %v2063
    %v2083 = vsel %vm2073, %v2069, 1326507024
    %v2084 = vsel %vm2072, %v2066, %v2083
    %v2085 = vsel %vm2071, %v2082, %v2084
    %v2086 = vshll.u32 %v2046, 8
    %v2087 = vmul.u32.u64.compose %v2086, %v2085
    %v2088 = vextract.low.u32 %v2087
    %v2089 = vextract.high.u32 %v2087
    %v2090 = vmul.u32.u64.compose %v2086, %v2081
    %v2091 = vextract.low.u32 %v2090
    %v2092 = vextract.high.u32 %v2090
    %v2093 = vmul.u32 %v2086, %v2077
    %v2094 = vadd.s32 %v2089, %v2091
    %vm2095 = vc.u32 %v2089, %v2091
    %v2096 = vadd.s32 %v2092, 1
    %v2097 = vsel %vm2095, %v2096, %v2092
    %v2098 = vadd.s32 %v2093, %v2097
    %v2099 = vadd.s32 %v2098, 536870912
    %v2100 = vshrl.u32 %v2099, 30
    %v2101 = vshll.u32 %v2100, 30
    %v2102 = vsub.s32 %v2098, %v2101
    %vm2103 = vcmp.lt.s32.totalorder %v2102, 0
    %v2104 = vsub.s32 0, %v2102
    %v2105 = vsel %vm2103, %v2104, %v2102
    %v2106 = vclz %v2105
    %v2107 = vsub.s32 %v2106, 2
    %vm2108 = vcmp.gt.s32.totalorder 0, %v2107
    %v2109 = vsel %vm2108, 0, %v2107
    %v2110 = vsub.s32 32, %v2109
    %v2111 = vshll.u32 %v2102, %v2109
    %v2112 = vshrl.u32 %v2094, %v2110
    %v2113 = vor.u32 %v2111, %v2112
    %v2114 = vsub.s32 4294967266, %v2109
    %v2115 = vadd.s32 %v2114, 127
    %v2116 = vshll.u32 %v2115, 23
    %v2117 = vor.u32 4788187, %v2116
    %v2118 = vand.u32 2147483647, %v2117
    %v2120 = vcvt.s32.f32 %v2113
    %v2121 = vmul.f32 %v2120, %v2118
    %v2122 = vxor.u32 %v2121, 2147483648
    %v2123 = vsel %vm2040, %v2122, %v2121
    %v2124 = vsub.s32 4, %v2100
    %v2125 = vsel %vm2040, %v2124, %v2100
    %v2126 = vsel %vm2039, %v255, %v2123
    %v2127 = vsel %vm2039, 0, %v2125
    %v2128 = vcosq.f32.pop %v2126
    %v2129 = vsinq.f32.pop %v2126
    %vm2130 = vweird.f32 %v255
    %v2131 = vadd.s32 %v2127, 3
    %v2132 = vand.u32 %v2131, 3
    %vm2133 = vcmp.lt.s32.totalorder %v2132, 2
    %vm2134 = vcmp.eq.s32.totalorder %v2132, 0
    %v2135 = vxor.u32 %v2129, 2147483648
    %v2136 = vsel %vm2134, %v2128, %v2135
    %vm2137 = vcmp.eq.s32.totalorder %v2132, 2
    %v2138 = vxor.u32 %v2128, 2147483648
    %v2139 = vsel %vm2137, %v2138, %v2129
    %v2140 = vsel %vm2133, %v2136, %v2139
    %v2141 = vsel %vm2130, nan, %v2140
    %v2142 = vand.u32 2147483647, %v256
    %vm2143 = vcmp.le.f32.partialorder %v2142, 0.7853982
    %vm2144 = vcmp.lt.s32.totalorder %v256, 0
    %v2145 = vand.u32 %v256, 2139095040
    %v2146 = vshrl.u32 %v2145, 23
    %v2147 = vsub.s32 %v2146, 127
    %v2148 = vand.u32 2147483647, %v256
    %v2149 = vand.u32 %v2148, 8388607
    %v2150 = vor.u32 %v2149, 8388608
    %v2151 = vsub.s32 0, %v2150
    %v2152 = vadd.s32 %v2147, 1
    %vm2153 = vcmp.gt.s32.totalorder %v2152, 0
    %v2154 = vsel %vm2153, %v2152, 0
    %v2155 = vshrl.u32 %v2154, 5
    %v2156 = vand.u32 %v2154, 31
    %v2157 = vsub.s32 32, %v2156
    %v2158 = vshrl.u32 683565275, %v2157
    %v2159 = vshll.u32 683565275, %v2156
    %v2160 = vshrl.u32 2475754826, %v2157
    %v2161 = vor.u32 %v2159, %v2160
    %v2162 = vshll.u32 2475754826, %v2156
    %v2163 = vshrl.u32 2131351028, %v2157
    %v2164 = vor.u32 %v2162, %v2163
    %v2165 = vshll.u32 2131351028, %v2156
    %v2166 = vshrl.u32 2102212464, %v2157
    %v2167 = vor.u32 %v2165, %v2166
    %v2168 = vshll.u32 2102212464, %v2156
    %v2169 = vshrl.u32 920167782, %v2157
    %v2170 = vor.u32 %v2168, %v2169
    %v2171 = vshll.u32 920167782, %v2156
    %v2172 = vshrl.u32 1326507024, %v2157
    %v2173 = vor.u32 %v2171, %v2172
    %vm2174 = vcmp.lt.s32.totalorder %v2155, 1
    %vm2175 = vcmp.lt.s32.totalorder %v2155, 2
    %vm2176 = vcmp.lt.s32.totalorder %v2155, 3
    %vm2177 = vcmp.lt.s32.totalorder %v2155, 4
    %v2178 = vsel %vm2174, %v2158, %v2161
    %v2179 = vsel %vm2177, %v2167, 2102212464
    %v2180 = vsel %vm2176, %v2164, %v2179
    %v2181 = vsel %vm2175, %v2178, %v2180
    %v2182 = vsel %vm2174, %v2161, %v2164
    %v2183 = vsel %vm2177, %v2170, 920167782
    %v2184 = vsel %vm2176, %v2167, %v2183
    %v2185 = vsel %vm2175, %v2182, %v2184
    %v2186 = vsel %vm2174, %v2164, %v2167
    %v2187 = vsel %vm2177, %v2173, 1326507024
    %v2188 = vsel %vm2176, %v2170, %v2187
    %v2189 = vsel %vm2175, %v2186, %v2188
    %v2190 = vshll.u32 %v2150, 8
    %v2191 = vmul.u32.u64.compose %v2190, %v2189
    %v2192 = vextract.low.u32 %v2191
    %v2193 = vextract.high.u32 %v2191
    %v2194 = vmul.u32.u64.compose %v2190, %v2185
    %v2195 = vextract.low.u32 %v2194
    %v2196 = vextract.high.u32 %v2194
    %v2197 = vmul.u32 %v2190, %v2181
    %v2198 = vadd.s32 %v2193, %v2195
    %vm2199 = vc.u32 %v2193, %v2195
    %v2200 = vadd.s32 %v2196, 1
    %v2201 = vsel %vm2199, %v2200, %v2196
    %v2202 = vadd.s32 %v2197, %v2201
    %v2203 = vadd.s32 %v2202, 536870912
    %v2204 = vshrl.u32 %v2203, 30
    %v2205 = vshll.u32 %v2204, 30
    %v2206 = vsub.s32 %v2202, %v2205
    %vm2207 = vcmp.lt.s32.totalorder %v2206, 0
    %v2208 = vsub.s32 0, %v2206
    %v2209 = vsel %vm2207, %v2208, %v2206
    %v2210 = vclz %v2209
    %v2211 = vsub.s32 %v2210, 2
    %vm2212 = vcmp.gt.s32.totalorder 0, %v2211
    %v2213 = vsel %vm2212, 0, %v2211
    %v2214 = vsub.s32 32, %v2213
    %v2215 = vshll.u32 %v2206, %v2213
    %v2216 = vshrl.u32 %v2198, %v2214
    %v2217 = vor.u32 %v2215, %v2216
    %v2218 = vsub.s32 4294967266, %v2213
    %v2219 = vadd.s32 %v2218, 127
    %v2220 = vshll.u32 %v2219, 23
    %v2221 = vor.u32 4788187, %v2220
    %v2222 = vand.u32 2147483647, %v2221
    %v2224 = vcvt.s32.f32 %v2217
    %v2225 = vmul.f32 %v2224, %v2222
    %v2226 = vxor.u32 %v2225, 2147483648
    %v2227 = vsel %vm2144, %v2226, %v2225
    %v2228 = vsub.s32 4, %v2204
    %v2229 = vsel %vm2144, %v2228, %v2204
    %v2230 = vsel %vm2143, %v256, %v2227
    %v2231 = vsel %vm2143, 0, %v2229
    %v2232 = vcosq.f32.pop %v2230
    %v2233 = vsinq.f32.pop %v2230
    %vm2234 = vweird.f32 %v256
    %v2235 = vadd.s32 %v2231, 3
    %v2236 = vand.u32 %v2235, 3
    %vm2237 = vcmp.lt.s32.totalorder %v2236, 2
    %vm2238 = vcmp.eq.s32.totalorder %v2236, 0
    %v2239 = vxor.u32 %v2233, 2147483648
    %v2240 = vsel %vm2238, %v2232, %v2239
    %vm2241 = vcmp.eq.s32.totalorder %v2236, 2
    %v2242 = vxor.u32 %v2232, 2147483648
    %v2243 = vsel %vm2241, %v2242, %v2233
    %v2244 = vsel %vm2237, %v2240, %v2243
    %v2245 = vsel %vm2234, nan, %v2244
    %v2246 = vand.u32 2147483647, %v257
    %vm2247 = vcmp.le.f32.partialorder %v2246, 0.7853982
    %vm2248 = vcmp.lt.s32.totalorder %v257, 0
    %v2249 = vand.u32 %v257, 2139095040
    %v2250 = vshrl.u32 %v2249, 23
    %v2251 = vsub.s32 %v2250, 127
    %v2252 = vand.u32 2147483647, %v257
    %v2253 = vand.u32 %v2252, 8388607
    %v2254 = vor.u32 %v2253, 8388608
    %v2255 = vsub.s32 0, %v2254
    %v2256 = vadd.s32 %v2251, 1
    %vm2257 = vcmp.gt.s32.totalorder %v2256, 0
    %v2258 = vsel %vm2257, %v2256, 0
    %v2259 = vshrl.u32 %v2258, 5
    %v2260 = vand.u32 %v2258, 31
    %v2261 = vsub.s32 32, %v2260
    %v2262 = vshrl.u32 683565275, %v2261
    %v2263 = vshll.u32 683565275, %v2260
    %v2264 = vshrl.u32 2475754826, %v2261
    %v2265 = vor.u32 %v2263, %v2264
    %v2266 = vshll.u32 2475754826, %v2260
    %v2267 = vshrl.u32 2131351028, %v2261
    %v2268 = vor.u32 %v2266, %v2267
    %v2269 = vshll.u32 2131351028, %v2260
    %v2270 = vshrl.u32 2102212464, %v2261
    %v2271 = vor.u32 %v2269, %v2270
    %v2272 = vshll.u32 2102212464, %v2260
    %v2273 = vshrl.u32 920167782, %v2261
    %v2274 = vor.u32 %v2272, %v2273
    %v2275 = vshll.u32 920167782, %v2260
    %v2276 = vshrl.u32 1326507024, %v2261
    %v2277 = vor.u32 %v2275, %v2276
    %vm2278 = vcmp.lt.s32.totalorder %v2259, 1
    %vm2279 = vcmp.lt.s32.totalorder %v2259, 2
    %vm2280 = vcmp.lt.s32.totalorder %v2259, 3
    %vm2281 = vcmp.lt.s32.totalorder %v2259, 4
    %v2282 = vsel %vm2278, %v2262, %v2265
    %v2283 = vsel %vm2281, %v2271, 2102212464
    %v2284 = vsel %vm2280, %v2268, %v2283
    %v2285 = vsel %vm2279, %v2282, %v2284
    %v2286 = vsel %vm2278, %v2265, %v2268
    %v2287 = vsel %vm2281, %v2274, 920167782
    %v2288 = vsel %vm2280, %v2271, %v2287
    %v2289 = vsel %vm2279, %v2286, %v2288
    %v2290 = vsel %vm2278, %v2268, %v2271
    %v2291 = vsel %vm2281, %v2277, 1326507024
    %v2292 = vsel %vm2280, %v2274, %v2291
    %v2293 = vsel %vm2279, %v2290, %v2292
    %v2294 = vshll.u32 %v2254, 8
    %v2295 = vmul.u32.u64.compose %v2294, %v2293
    %v2296 = vextract.low.u32 %v2295
    %v2297 = vextract.high.u32 %v2295
    %v2298 = vmul.u32.u64.compose %v2294, %v2289
    %v2299 = vextract.low.u32 %v2298
    %v2300 = vextract.high.u32 %v2298
    %v2301 = vmul.u32 %v2294, %v2285
    %v2302 = vadd.s32 %v2297, %v2299
    %vm2303 = vc.u32 %v2297, %v2299
    %v2304 = vadd.s32 %v2300, 1
    %v2305 = vsel %vm2303, %v2304, %v2300
    %v2306 = vadd.s32 %v2301, %v2305
    %v2307 = vadd.s32 %v2306, 536870912
    %v2308 = vshrl.u32 %v2307, 30
    %v2309 = vshll.u32 %v2308, 30
    %v2310 = vsub.s32 %v2306, %v2309
    %vm2311 = vcmp.lt.s32.totalorder %v2310, 0
    %v2312 = vsub.s32 0, %v2310
    %v2313 = vsel %vm2311, %v2312, %v2310
    %v2314 = vclz %v2313
    %v2315 = vsub.s32 %v2314, 2
    %vm2316 = vcmp.gt.s32.totalorder 0, %v2315
    %v2317 = vsel %vm2316, 0, %v2315
    %v2318 = vsub.s32 32, %v2317
    %v2319 = vshll.u32 %v2310, %v2317
    %v2320 = vshrl.u32 %v2302, %v2318
    %v2321 = vor.u32 %v2319, %v2320
    %v2322 = vsub.s32 4294967266, %v2317
    %v2323 = vadd.s32 %v2322, 127
    %v2324 = vshll.u32 %v2323, 23
    %v2325 = vor.u32 4788187, %v2324
    %v2326 = vand.u32 2147483647, %v2325
    %v2328 = vcvt.s32.f32 %v2321
    %v2329 = vmul.f32 %v2328, %v2326
    %v2330 = vxor.u32 %v2329, 2147483648
    %v2331 = vsel %vm2248, %v2330, %v2329
    %v2332 = vsub.s32 4, %v2308
    %v2333 = vsel %vm2248, %v2332, %v2308
    %v2334 = vsel %vm2247, %v257, %v2331
    %v2335 = vsel %vm2247, 0, %v2333
    %v2336 = vcosq.f32.pop %v2334
    %v2337 = vsinq.f32.pop %v2334
    %vm2338 = vweird.f32 %v257
    %v2339 = vadd.s32 %v2335, 3
    %v2340 = vand.u32 %v2339, 3
    %vm2341 = vcmp.lt.s32.totalorder %v2340, 2
    %vm2342 = vcmp.eq.s32.totalorder %v2340, 0
    %v2343 = vxor.u32 %v2337, 2147483648
    %v2344 = vsel %vm2342, %v2336, %v2343
    %vm2345 = vcmp.eq.s32.totalorder %v2340, 2
    %v2346 = vxor.u32 %v2336, 2147483648
    %v2347 = vsel %vm2345, %v2346, %v2337
    %v2348 = vsel %vm2341, %v2344, %v2347
    %v2349 = vsel %vm2338, nan, %v2348
    %v2350 = vand.u32 2147483647, %v258
    %vm2351 = vcmp.le.f32.partialorder %v2350, 0.7853982
    %vm2352 = vcmp.lt.s32.totalorder %v258, 0
    %v2353 = vand.u32 %v258, 2139095040
    %v2354 = vshrl.u32 %v2353, 23
    %v2355 = vsub.s32 %v2354, 127
    %v2356 = vand.u32 2147483647, %v258
    %v2357 = vand.u32 %v2356, 8388607
    %v2358 = vor.u32 %v2357, 8388608
    %v2359 = vsub.s32 0, %v2358
    %v2360 = vadd.s32 %v2355, 1
    %vm2361 = vcmp.gt.s32.totalorder %v2360, 0
    %v2362 = vsel %vm2361, %v2360, 0
    %v2363 = vshrl.u32 %v2362, 5
    %v2364 = vand.u32 %v2362, 31
    %v2365 = vsub.s32 32, %v2364
    %v2366 = vshrl.u32 683565275, %v2365
    %v2367 = vshll.u32 683565275, %v2364
    %v2368 = vshrl.u32 2475754826, %v2365
    %v2369 = vor.u32 %v2367, %v2368
    %v2370 = vshll.u32 2475754826, %v2364
    %v2371 = vshrl.u32 2131351028, %v2365
    %v2372 = vor.u32 %v2370, %v2371
    %v2373 = vshll.u32 2131351028, %v2364
    %v2374 = vshrl.u32 2102212464, %v2365
    %v2375 = vor.u32 %v2373, %v2374
    %v2376 = vshll.u32 2102212464, %v2364
    %v2377 = vshrl.u32 920167782, %v2365
    %v2378 = vor.u32 %v2376, %v2377
    %v2379 = vshll.u32 920167782, %v2364
    %v2380 = vshrl.u32 1326507024, %v2365
    %v2381 = vor.u32 %v2379, %v2380
    %vm2382 = vcmp.lt.s32.totalorder %v2363, 1
    %vm2383 = vcmp.lt.s32.totalorder %v2363, 2
    %vm2384 = vcmp.lt.s32.totalorder %v2363, 3
    %vm2385 = vcmp.lt.s32.totalorder %v2363, 4
    %v2386 = vsel %vm2382, %v2366, %v2369
    %v2387 = vsel %vm2385, %v2375, 2102212464
    %v2388 = vsel %vm2384, %v2372, %v2387
    %v2389 = vsel %vm2383, %v2386, %v2388
    %v2390 = vsel %vm2382, %v2369, %v2372
    %v2391 = vsel %vm2385, %v2378, 920167782
    %v2392 = vsel %vm2384, %v2375, %v2391
    %v2393 = vsel %vm2383, %v2390, %v2392
    %v2394 = vsel %vm2382, %v2372, %v2375
    %v2395 = vsel %vm2385, %v2381, 1326507024
    %v2396 = vsel %vm2384, %v2378, %v2395
    %v2397 = vsel %vm2383, %v2394, %v2396
    %v2398 = vshll.u32 %v2358, 8
    %v2399 = vmul.u32.u64.compose %v2398, %v2397
    %v2400 = vextract.low.u32 %v2399
    %v2401 = vextract.high.u32 %v2399
    %v2402 = vmul.u32.u64.compose %v2398, %v2393
    %v2403 = vextract.low.u32 %v2402
    %v2404 = vextract.high.u32 %v2402
    %v2405 = vmul.u32 %v2398, %v2389
    %v2406 = vadd.s32 %v2401, %v2403
    %vm2407 = vc.u32 %v2401, %v2403
    %v2408 = vadd.s32 %v2404, 1
    %v2409 = vsel %vm2407, %v2408, %v2404
    %v2410 = vadd.s32 %v2405, %v2409
    %v2411 = vadd.s32 %v2410, 536870912
    %v2412 = vshrl.u32 %v2411, 30
    %v2413 = vshll.u32 %v2412, 30
    %v2414 = vsub.s32 %v2410, %v2413
    %vm2415 = vcmp.lt.s32.totalorder %v2414, 0
    %v2416 = vsub.s32 0, %v2414
    %v2417 = vsel %vm2415, %v2416, %v2414
    %v2418 = vclz %v2417
    %v2419 = vsub.s32 %v2418, 2
    %vm2420 = vcmp.gt.s32.totalorder 0, %v2419
    %v2421 = vsel %vm2420, 0, %v2419
    %v2422 = vsub.s32 32, %v2421
    %v2423 = vshll.u32 %v2414, %v2421
    %v2424 = vshrl.u32 %v2406, %v2422
    %v2425 = vor.u32 %v2423, %v2424
    %v2426 = vsub.s32 4294967266, %v2421
    %v2427 = vadd.s32 %v2426, 127
    %v2428 = vshll.u32 %v2427, 23
    %v2429 = vor.u32 4788187, %v2428
    %v2430 = vand.u32 2147483647, %v2429
    %v2432 = vcvt.s32.f32 %v2425
    %v2433 = vmul.f32 %v2432, %v2430
    %v2434 = vxor.u32 %v2433, 2147483648
    %v2435 = vsel %vm2352, %v2434, %v2433
    %v2436 = vsub.s32 4, %v2412
    %v2437 = vsel %vm2352, %v2436, %v2412
    %v2438 = vsel %vm2351, %v258, %v2435
    %v2439 = vsel %vm2351, 0, %v2437
    %v2440 = vcosq.f32.pop %v2438
    %v2441 = vsinq.f32.pop %v2438
    %vm2442 = vweird.f32 %v258
    %v2443 = vadd.s32 %v2439, 3
    %v2444 = vand.u32 %v2443, 3
    %vm2445 = vcmp.lt.s32.totalorder %v2444, 2
    %vm2446 = vcmp.eq.s32.totalorder %v2444, 0
    %v2447 = vxor.u32 %v2441, 2147483648
    %v2448 = vsel %vm2446, %v2440, %v2447
    %vm2449 = vcmp.eq.s32.totalorder %v2444, 2
    %v2450 = vxor.u32 %v2440, 2147483648
    %v2451 = vsel %vm2449, %v2450, %v2441
    %v2452 = vsel %vm2445, %v2448, %v2451
    %v2453 = vsel %vm2442, nan, %v2452
    %v2454 = vand.u32 2147483647, %v259
    %vm2455 = vcmp.le.f32.partialorder %v2454, 0.7853982
    %vm2456 = vcmp.lt.s32.totalorder %v259, 0
    %v2457 = vand.u32 %v259, 2139095040
    %v2458 = vshrl.u32 %v2457, 23
    %v2459 = vsub.s32 %v2458, 127
    %v2460 = vand.u32 2147483647, %v259
    %v2461 = vand.u32 %v2460, 8388607
    %v2462 = vor.u32 %v2461, 8388608
    %v2463 = vsub.s32 0, %v2462
    %v2464 = vadd.s32 %v2459, 1
    %vm2465 = vcmp.gt.s32.totalorder %v2464, 0
    %v2466 = vsel %vm2465, %v2464, 0
    %v2467 = vshrl.u32 %v2466, 5
    %v2468 = vand.u32 %v2466, 31
    %v2469 = vsub.s32 32, %v2468
    %v2470 = vshrl.u32 683565275, %v2469
    %v2471 = vshll.u32 683565275, %v2468
    %v2472 = vshrl.u32 2475754826, %v2469
    %v2473 = vor.u32 %v2471, %v2472
    %v2474 = vshll.u32 2475754826, %v2468
    %v2475 = vshrl.u32 2131351028, %v2469
    %v2476 = vor.u32 %v2474, %v2475
    %v2477 = vshll.u32 2131351028, %v2468
    %v2478 = vshrl.u32 2102212464, %v2469
    %v2479 = vor.u32 %v2477, %v2478
    %v2480 = vshll.u32 2102212464, %v2468
    %v2481 = vshrl.u32 920167782, %v2469
    %v2482 = vor.u32 %v2480, %v2481
    %v2483 = vshll.u32 920167782, %v2468
    %v2484 = vshrl.u32 1326507024, %v2469
    %v2485 = vor.u32 %v2483, %v2484
    %vm2486 = vcmp.lt.s32.totalorder %v2467, 1
    %vm2487 = vcmp.lt.s32.totalorder %v2467, 2
    %vm2488 = vcmp.lt.s32.totalorder %v2467, 3
    %vm2489 = vcmp.lt.s32.totalorder %v2467, 4
    %v2490 = vsel %vm2486, %v2470, %v2473
    %v2491 = vsel %vm2489, %v2479, 2102212464
    %v2492 = vsel %vm2488, %v2476, %v2491
    %v2493 = vsel %vm2487, %v2490, %v2492
    %v2494 = vsel %vm2486, %v2473, %v2476
    %v2495 = vsel %vm2489, %v2482, 920167782
    %v2496 = vsel %vm2488, %v2479, %v2495
    %v2497 = vsel %vm2487, %v2494, %v2496
    %v2498 = vsel %vm2486, %v2476, %v2479
    %v2499 = vsel %vm2489, %v2485, 1326507024
    %v2500 = vsel %vm2488, %v2482, %v2499
    %v2501 = vsel %vm2487, %v2498, %v2500
    %v2502 = vshll.u32 %v2462, 8
    %v2503 = vmul.u32.u64.compose %v2502, %v2501
    %v2504 = vextract.low.u32 %v2503
    %v2505 = vextract.high.u32 %v2503
    %v2506 = vmul.u32.u64.compose %v2502, %v2497
    %v2507 = vextract.low.u32 %v2506
    %v2508 = vextract.high.u32 %v2506
    %v2509 = vmul.u32 %v2502, %v2493
    %v2510 = vadd.s32 %v2505, %v2507
    %vm2511 = vc.u32 %v2505, %v2507
    %v2512 = vadd.s32 %v2508, 1
    %v2513 = vsel %vm2511, %v2512, %v2508
    %v2514 = vadd.s32 %v2509, %v2513
    %v2515 = vadd.s32 %v2514, 536870912
    %v2516 = vshrl.u32 %v2515, 30
    %v2517 = vshll.u32 %v2516, 30
    %v2518 = vsub.s32 %v2514, %v2517
    %vm2519 = vcmp.lt.s32.totalorder %v2518, 0
    %v2520 = vsub.s32 0, %v2518
    %v2521 = vsel %vm2519, %v2520, %v2518
    %v2522 = vclz %v2521
    %v2523 = vsub.s32 %v2522, 2
    %vm2524 = vcmp.gt.s32.totalorder 0, %v2523
    %v2525 = vsel %vm2524, 0, %v2523
    %v2526 = vsub.s32 32, %v2525
    %v2527 = vshll.u32 %v2518, %v2525
    %v2528 = vshrl.u32 %v2510, %v2526
    %v2529 = vor.u32 %v2527, %v2528
    %v2530 = vsub.s32 4294967266, %v2525
    %v2531 = vadd.s32 %v2530, 127
    %v2532 = vshll.u32 %v2531, 23
    %v2533 = vor.u32 4788187, %v2532
    %v2534 = vand.u32 2147483647, %v2533
    %v2536 = vcvt.s32.f32 %v2529
    %v2537 = vmul.f32 %v2536, %v2534
    %v2538 = vxor.u32 %v2537, 2147483648
    %v2539 = vsel %vm2456, %v2538, %v2537
    %v2540 = vsub.s32 4, %v2516
    %v2541 = vsel %vm2456, %v2540, %v2516
    %v2542 = vsel %vm2455, %v259, %v2539
    %v2543 = vsel %vm2455, 0, %v2541
    %v2544 = vcosq.f32.pop %v2542
    %v2545 = vsinq.f32.pop %v2542
    %vm2546 = vweird.f32 %v259
    %v2547 = vadd.s32 %v2543, 3
    %v2548 = vand.u32 %v2547, 3
    %vm2549 = vcmp.lt.s32.totalorder %v2548, 2
    %vm2550 = vcmp.eq.s32.totalorder %v2548, 0
    %v2551 = vxor.u32 %v2545, 2147483648
    %v2552 = vsel %vm2550, %v2544, %v2551
    %vm2553 = vcmp.eq.s32.totalorder %v2548, 2
    %v2554 = vxor.u32 %v2544, 2147483648
    %v2555 = vsel %vm2553, %v2554, %v2545
    %v2556 = vsel %vm2549, %v2552, %v2555
    %v2557 = vsel %vm2546, nan, %v2556
    %v2558 = vand.u32 2147483647, %v260
    %vm2559 = vcmp.le.f32.partialorder %v2558, 0.7853982
    %vm2560 = vcmp.lt.s32.totalorder %v260, 0
    %v2561 = vand.u32 %v260, 2139095040
    %v2562 = vshrl.u32 %v2561, 23
    %v2563 = vsub.s32 %v2562, 127
    %v2564 = vand.u32 2147483647, %v260
    %v2565 = vand.u32 %v2564, 8388607
    %v2566 = vor.u32 %v2565, 8388608
    %v2567 = vsub.s32 0, %v2566
    %v2568 = vadd.s32 %v2563, 1
    %vm2569 = vcmp.gt.s32.totalorder %v2568, 0
    %v2570 = vsel %vm2569, %v2568, 0
    %v2571 = vshrl.u32 %v2570, 5
    %v2572 = vand.u32 %v2570, 31
    %v2573 = vsub.s32 32, %v2572
    %v2574 = vshrl.u32 683565275, %v2573
    %v2575 = vshll.u32 683565275, %v2572
    %v2576 = vshrl.u32 2475754826, %v2573
    %v2577 = vor.u32 %v2575, %v2576
    %v2578 = vshll.u32 2475754826, %v2572
    %v2579 = vshrl.u32 2131351028, %v2573
    %v2580 = vor.u32 %v2578, %v2579
    %v2581 = vshll.u32 2131351028, %v2572
    %v2582 = vshrl.u32 2102212464, %v2573
    %v2583 = vor.u32 %v2581, %v2582
    %v2584 = vshll.u32 2102212464, %v2572
    %v2585 = vshrl.u32 920167782, %v2573
    %v2586 = vor.u32 %v2584, %v2585
    %v2587 = vshll.u32 920167782, %v2572
    %v2588 = vshrl.u32 1326507024, %v2573
    %v2589 = vor.u32 %v2587, %v2588
    %vm2590 = vcmp.lt.s32.totalorder %v2571, 1
    %vm2591 = vcmp.lt.s32.totalorder %v2571, 2
    %vm2592 = vcmp.lt.s32.totalorder %v2571, 3
    %vm2593 = vcmp.lt.s32.totalorder %v2571, 4
    %v2594 = vsel %vm2590, %v2574, %v2577
    %v2595 = vsel %vm2593, %v2583, 2102212464
    %v2596 = vsel %vm2592, %v2580, %v2595
    %v2597 = vsel %vm2591, %v2594, %v2596
    %v2598 = vsel %vm2590, %v2577, %v2580
    %v2599 = vsel %vm2593, %v2586, 920167782
    %v2600 = vsel %vm2592, %v2583, %v2599
    %v2601 = vsel %vm2591, %v2598, %v2600
    %v2602 = vsel %vm2590, %v2580, %v2583
    %v2603 = vsel %vm2593, %v2589, 1326507024
    %v2604 = vsel %vm2592, %v2586, %v2603
    %v2605 = vsel %vm2591, %v2602, %v2604
    %v2606 = vshll.u32 %v2566, 8
    %v2607 = vmul.u32.u64.compose %v2606, %v2605
    %v2608 = vextract.low.u32 %v2607
    %v2609 = vextract.high.u32 %v2607
    %v2610 = vmul.u32.u64.compose %v2606, %v2601
    %v2611 = vextract.low.u32 %v2610
    %v2612 = vextract.high.u32 %v2610
    %v2613 = vmul.u32 %v2606, %v2597
    %v2614 = vadd.s32 %v2609, %v2611
    %vm2615 = vc.u32 %v2609, %v2611
    %v2616 = vadd.s32 %v2612, 1
    %v2617 = vsel %vm2615, %v2616, %v2612
    %v2618 = vadd.s32 %v2613, %v2617
    %v2619 = vadd.s32 %v2618, 536870912
    %v2620 = vshrl.u32 %v2619, 30
    %v2621 = vshll.u32 %v2620, 30
    %v2622 = vsub.s32 %v2618, %v2621
    %vm2623 = vcmp.lt.s32.totalorder %v2622, 0
    %v2624 = vsub.s32 0, %v2622
    %v2625 = vsel %vm2623, %v2624, %v2622
    %v2626 = vclz %v2625
    %v2627 = vsub.s32 %v2626, 2
    %vm2628 = vcmp.gt.s32.totalorder 0, %v2627
    %v2629 = vsel %vm2628, 0, %v2627
    %v2630 = vsub.s32 32, %v2629
    %v2631 = vshll.u32 %v2622, %v2629
    %v2632 = vshrl.u32 %v2614, %v2630
    %v2633 = vor.u32 %v2631, %v2632
    %v2634 = vsub.s32 4294967266, %v2629
    %v2635 = vadd.s32 %v2634, 127
    %v2636 = vshll.u32 %v2635, 23
    %v2637 = vor.u32 4788187, %v2636
    %v2638 = vand.u32 2147483647, %v2637
    %v2640 = vcvt.s32.f32 %v2633
    %v2641 = vmul.f32 %v2640, %v2638
    %v2642 = vxor.u32 %v2641, 2147483648
    %v2643 = vsel %vm2560, %v2642, %v2641
    %v2644 = vsub.s32 4, %v2620
    %v2645 = vsel %vm2560, %v2644, %v2620
    %v2646 = vsel %vm2559, %v260, %v2643
    %v2647 = vsel %vm2559, 0, %v2645
    %v2648 = vcosq.f32.pop %v2646
    %v2649 = vsinq.f32.pop %v2646
    %vm2650 = vweird.f32 %v260
    %v2651 = vadd.s32 %v2647, 3
    %v2652 = vand.u32 %v2651, 3
    %vm2653 = vcmp.lt.s32.totalorder %v2652, 2
    %vm2654 = vcmp.eq.s32.totalorder %v2652, 0
    %v2655 = vxor.u32 %v2649, 2147483648
    %v2656 = vsel %vm2654, %v2648, %v2655
    %vm2657 = vcmp.eq.s32.totalorder %v2652, 2
    %v2658 = vxor.u32 %v2648, 2147483648
    %v2659 = vsel %vm2657, %v2658, %v2649
    %v2660 = vsel %vm2653, %v2656, %v2659
    %v2661 = vsel %vm2650, nan, %v2660
    %v2662 = vand.u32 2147483647, %v261
    %vm2663 = vcmp.le.f32.partialorder %v2662, 0.7853982
    %vm2664 = vcmp.lt.s32.totalorder %v261, 0
    %v2665 = vand.u32 %v261, 2139095040
    %v2666 = vshrl.u32 %v2665, 23
    %v2667 = vsub.s32 %v2666, 127
    %v2668 = vand.u32 2147483647, %v261
    %v2669 = vand.u32 %v2668, 8388607
    %v2670 = vor.u32 %v2669, 8388608
    %v2671 = vsub.s32 0, %v2670
    %v2672 = vadd.s32 %v2667, 1
    %vm2673 = vcmp.gt.s32.totalorder %v2672, 0
    %v2674 = vsel %vm2673, %v2672, 0
    %v2675 = vshrl.u32 %v2674, 5
    %v2676 = vand.u32 %v2674, 31
    %v2677 = vsub.s32 32, %v2676
    %v2678 = vshrl.u32 683565275, %v2677
    %v2679 = vshll.u32 683565275, %v2676
    %v2680 = vshrl.u32 2475754826, %v2677
    %v2681 = vor.u32 %v2679, %v2680
    %v2682 = vshll.u32 2475754826, %v2676
    %v2683 = vshrl.u32 2131351028, %v2677
    %v2684 = vor.u32 %v2682, %v2683
    %v2685 = vshll.u32 2131351028, %v2676
    %v2686 = vshrl.u32 2102212464, %v2677
    %v2687 = vor.u32 %v2685, %v2686
    %v2688 = vshll.u32 2102212464, %v2676
    %v2689 = vshrl.u32 920167782, %v2677
    %v2690 = vor.u32 %v2688, %v2689
    %v2691 = vshll.u32 920167782, %v2676
    %v2692 = vshrl.u32 1326507024, %v2677
    %v2693 = vor.u32 %v2691, %v2692
    %vm2694 = vcmp.lt.s32.totalorder %v2675, 1
    %vm2695 = vcmp.lt.s32.totalorder %v2675, 2
    %vm2696 = vcmp.lt.s32.totalorder %v2675, 3
    %vm2697 = vcmp.lt.s32.totalorder %v2675, 4
    %v2698 = vsel %vm2694, %v2678, %v2681
    %v2699 = vsel %vm2697, %v2687, 2102212464
    %v2700 = vsel %vm2696, %v2684, %v2699
    %v2701 = vsel %vm2695, %v2698, %v2700
    %v2702 = vsel %vm2694, %v2681, %v2684
    %v2703 = vsel %vm2697, %v2690, 920167782
    %v2704 = vsel %vm2696, %v2687, %v2703
    %v2705 = vsel %vm2695, %v2702, %v2704
    %v2706 = vsel %vm2694, %v2684, %v2687
    %v2707 = vsel %vm2697, %v2693, 1326507024
    %v2708 = vsel %vm2696, %v2690, %v2707
    %v2709 = vsel %vm2695, %v2706, %v2708
    %v2710 = vshll.u32 %v2670, 8
    %v2711 = vmul.u32.u64.compose %v2710, %v2709
    %v2712 = vextract.low.u32 %v2711
    %v2713 = vextract.high.u32 %v2711
    %v2714 = vmul.u32.u64.compose %v2710, %v2705
    %v2715 = vextract.low.u32 %v2714
    %v2716 = vextract.high.u32 %v2714
    %v2717 = vmul.u32 %v2710, %v2701
    %v2718 = vadd.s32 %v2713, %v2715
    %vm2719 = vc.u32 %v2713, %v2715
    %v2720 = vadd.s32 %v2716, 1
    %v2721 = vsel %vm2719, %v2720, %v2716
    %v2722 = vadd.s32 %v2717, %v2721
    %v2723 = vadd.s32 %v2722, 536870912
    %v2724 = vshrl.u32 %v2723, 30
    %v2725 = vshll.u32 %v2724, 30
    %v2726 = vsub.s32 %v2722, %v2725
    %vm2727 = vcmp.lt.s32.totalorder %v2726, 0
    %v2728 = vsub.s32 0, %v2726
    %v2729 = vsel %vm2727, %v2728, %v2726
    %v2730 = vclz %v2729
    %v2731 = vsub.s32 %v2730, 2
    %vm2732 = vcmp.gt.s32.totalorder 0, %v2731
    %v2733 = vsel %vm2732, 0, %v2731
    %v2734 = vsub.s32 32, %v2733
    %v2735 = vshll.u32 %v2726, %v2733
    %v2736 = vshrl.u32 %v2718, %v2734
    %v2737 = vor.u32 %v2735, %v2736
    %v2738 = vsub.s32 4294967266, %v2733
    %v2739 = vadd.s32 %v2738, 127
    %v2740 = vshll.u32 %v2739, 23
    %v2741 = vor.u32 4788187, %v2740
    %v2742 = vand.u32 2147483647, %v2741
    %v2744 = vcvt.s32.f32 %v2737
    %v2745 = vmul.f32 %v2744, %v2742
    %v2746 = vxor.u32 %v2745, 2147483648
    %v2747 = vsel %vm2664, %v2746, %v2745
    %v2748 = vsub.s32 4, %v2724
    %v2749 = vsel %vm2664, %v2748, %v2724
    %v2750 = vsel %vm2663, %v261, %v2747
    %v2751 = vsel %vm2663, 0, %v2749
    %v2752 = vcosq.f32.pop %v2750
    %v2753 = vsinq.f32.pop %v2750
    %vm2754 = vweird.f32 %v261
    %v2755 = vadd.s32 %v2751, 3
    %v2756 = vand.u32 %v2755, 3
    %vm2757 = vcmp.lt.s32.totalorder %v2756, 2
    %vm2758 = vcmp.eq.s32.totalorder %v2756, 0
    %v2759 = vxor.u32 %v2753, 2147483648
    %v2760 = vsel %vm2758, %v2752, %v2759
    %vm2761 = vcmp.eq.s32.totalorder %v2756, 2
    %v2762 = vxor.u32 %v2752, 2147483648
    %v2763 = vsel %vm2761, %v2762, %v2753
    %v2764 = vsel %vm2757, %v2760, %v2763
    %v2765 = vsel %vm2754, nan, %v2764
    %v2766 = vand.u32 2147483647, %v262
    %vm2767 = vcmp.le.f32.partialorder %v2766, 0.7853982
    %vm2768 = vcmp.lt.s32.totalorder %v262, 0
    %v2769 = vand.u32 %v262, 2139095040
    %v2770 = vshrl.u32 %v2769, 23
    %v2771 = vsub.s32 %v2770, 127
    %v2772 = vand.u32 2147483647, %v262
    %v2773 = vand.u32 %v2772, 8388607
    %v2774 = vor.u32 %v2773, 8388608
    %v2775 = vsub.s32 0, %v2774
    %v2776 = vadd.s32 %v2771, 1
    %vm2777 = vcmp.gt.s32.totalorder %v2776, 0
    %v2778 = vsel %vm2777, %v2776, 0
    %v2779 = vshrl.u32 %v2778, 5
    %v2780 = vand.u32 %v2778, 31
    %v2781 = vsub.s32 32, %v2780
    %v2782 = vshrl.u32 683565275, %v2781
    %v2783 = vshll.u32 683565275, %v2780
    %v2784 = vshrl.u32 2475754826, %v2781
    %v2785 = vor.u32 %v2783, %v2784
    %v2786 = vshll.u32 2475754826, %v2780
    %v2787 = vshrl.u32 2131351028, %v2781
    %v2788 = vor.u32 %v2786, %v2787
    %v2789 = vshll.u32 2131351028, %v2780
    %v2790 = vshrl.u32 2102212464, %v2781
    %v2791 = vor.u32 %v2789, %v2790
    %v2792 = vshll.u32 2102212464, %v2780
    %v2793 = vshrl.u32 920167782, %v2781
    %v2794 = vor.u32 %v2792, %v2793
    %v2795 = vshll.u32 920167782, %v2780
    %v2796 = vshrl.u32 1326507024, %v2781
    %v2797 = vor.u32 %v2795, %v2796
    %vm2798 = vcmp.lt.s32.totalorder %v2779, 1
    %vm2799 = vcmp.lt.s32.totalorder %v2779, 2
    %vm2800 = vcmp.lt.s32.totalorder %v2779, 3
    %vm2801 = vcmp.lt.s32.totalorder %v2779, 4
    %v2802 = vsel %vm2798, %v2782, %v2785
    %v2803 = vsel %vm2801, %v2791, 2102212464
    %v2804 = vsel %vm2800, %v2788, %v2803
    %v2805 = vsel %vm2799, %v2802, %v2804
    %v2806 = vsel %vm2798, %v2785, %v2788
    %v2807 = vsel %vm2801, %v2794, 920167782
    %v2808 = vsel %vm2800, %v2791, %v2807
    %v2809 = vsel %vm2799, %v2806, %v2808
    %v2810 = vsel %vm2798, %v2788, %v2791
    %v2811 = vsel %vm2801, %v2797, 1326507024
    %v2812 = vsel %vm2800, %v2794, %v2811
    %v2813 = vsel %vm2799, %v2810, %v2812
    %v2814 = vshll.u32 %v2774, 8
    %v2815 = vmul.u32.u64.compose %v2814, %v2813
    %v2816 = vextract.low.u32 %v2815
    %v2817 = vextract.high.u32 %v2815
    %v2818 = vmul.u32.u64.compose %v2814, %v2809
    %v2819 = vextract.low.u32 %v2818
    %v2820 = vextract.high.u32 %v2818
    %v2821 = vmul.u32 %v2814, %v2805
    %v2822 = vadd.s32 %v2817, %v2819
    %vm2823 = vc.u32 %v2817, %v2819
    %v2824 = vadd.s32 %v2820, 1
    %v2825 = vsel %vm2823, %v2824, %v2820
    %v2826 = vadd.s32 %v2821, %v2825
    %v2827 = vadd.s32 %v2826, 536870912
    %v2828 = vshrl.u32 %v2827, 30
    %v2829 = vshll.u32 %v2828, 30
    %v2830 = vsub.s32 %v2826, %v2829
    %vm2831 = vcmp.lt.s32.totalorder %v2830, 0
    %v2832 = vsub.s32 0, %v2830
    %v2833 = vsel %vm2831, %v2832, %v2830
    %v2834 = vclz %v2833
    %v2835 = vsub.s32 %v2834, 2
    %vm2836 = vcmp.gt.s32.totalorder 0, %v2835
    %v2837 = vsel %vm2836, 0, %v2835
    %v2838 = vsub.s32 32, %v2837
    %v2839 = vshll.u32 %v2830, %v2837
    %v2840 = vshrl.u32 %v2822, %v2838
    %v2841 = vor.u32 %v2839, %v2840
    %v2842 = vsub.s32 4294967266, %v2837
    %v2843 = vadd.s32 %v2842, 127
    %v2844 = vshll.u32 %v2843, 23
    %v2845 = vor.u32 4788187, %v2844
    %v2846 = vand.u32 2147483647, %v2845
    %v2848 = vcvt.s32.f32 %v2841
    %v2849 = vmul.f32 %v2848, %v2846
    %v2850 = vxor.u32 %v2849, 2147483648
    %v2851 = vsel %vm2768, %v2850, %v2849
    %v2852 = vsub.s32 4, %v2828
    %v2853 = vsel %vm2768, %v2852, %v2828
    %v2854 = vsel %vm2767, %v262, %v2851
    %v2855 = vsel %vm2767, 0, %v2853
    %v2856 = vcosq.f32.pop %v2854
    %v2857 = vsinq.f32.pop %v2854
    %vm2858 = vweird.f32 %v262
    %v2859 = vadd.s32 %v2855, 3
    %v2860 = vand.u32 %v2859, 3
    %vm2861 = vcmp.lt.s32.totalorder %v2860, 2
    %vm2862 = vcmp.eq.s32.totalorder %v2860, 0
    %v2863 = vxor.u32 %v2857, 2147483648
    %v2864 = vsel %vm2862, %v2856, %v2863
    %vm2865 = vcmp.eq.s32.totalorder %v2860, 2
    %v2866 = vxor.u32 %v2856, 2147483648
    %v2867 = vsel %vm2865, %v2866, %v2857
    %v2868 = vsel %vm2861, %v2864, %v2867
    %v2869 = vsel %vm2858, nan, %v2868
    %v2870 = vand.u32 2147483647, %v263
    %vm2871 = vcmp.le.f32.partialorder %v2870, 0.7853982
    %vm2872 = vcmp.lt.s32.totalorder %v263, 0
    %v2873 = vand.u32 %v263, 2139095040
    %v2874 = vshrl.u32 %v2873, 23
    %v2875 = vsub.s32 %v2874, 127
    %v2876 = vand.u32 2147483647, %v263
    %v2877 = vand.u32 %v2876, 8388607
    %v2878 = vor.u32 %v2877, 8388608
    %v2879 = vsub.s32 0, %v2878
    %v2880 = vadd.s32 %v2875, 1
    %vm2881 = vcmp.gt.s32.totalorder %v2880, 0
    %v2882 = vsel %vm2881, %v2880, 0
    %v2883 = vshrl.u32 %v2882, 5
    %v2884 = vand.u32 %v2882, 31
    %v2885 = vsub.s32 32, %v2884
    %v2886 = vshrl.u32 683565275, %v2885
    %v2887 = vshll.u32 683565275, %v2884
    %v2888 = vshrl.u32 2475754826, %v2885
    %v2889 = vor.u32 %v2887, %v2888
    %v2890 = vshll.u32 2475754826, %v2884
    %v2891 = vshrl.u32 2131351028, %v2885
    %v2892 = vor.u32 %v2890, %v2891
    %v2893 = vshll.u32 2131351028, %v2884
    %v2894 = vshrl.u32 2102212464, %v2885
    %v2895 = vor.u32 %v2893, %v2894
    %v2896 = vshll.u32 2102212464, %v2884
    %v2897 = vshrl.u32 920167782, %v2885
    %v2898 = vor.u32 %v2896, %v2897
    %v2899 = vshll.u32 920167782, %v2884
    %v2900 = vshrl.u32 1326507024, %v2885
    %v2901 = vor.u32 %v2899, %v2900
    %vm2902 = vcmp.lt.s32.totalorder %v2883, 1
    %vm2903 = vcmp.lt.s32.totalorder %v2883, 2
    %vm2904 = vcmp.lt.s32.totalorder %v2883, 3
    %vm2905 = vcmp.lt.s32.totalorder %v2883, 4
    %v2906 = vsel %vm2902, %v2886, %v2889
    %v2907 = vsel %vm2905, %v2895, 2102212464
    %v2908 = vsel %vm2904, %v2892, %v2907
    %v2909 = vsel %vm2903, %v2906, %v2908
    %v2910 = vsel %vm2902, %v2889, %v2892
    %v2911 = vsel %vm2905, %v2898, 920167782
    %v2912 = vsel %vm2904, %v2895, %v2911
    %v2913 = vsel %vm2903, %v2910, %v2912
    %v2914 = vsel %vm2902, %v2892, %v2895
    %v2915 = vsel %vm2905, %v2901, 1326507024
    %v2916 = vsel %vm2904, %v2898, %v2915
    %v2917 = vsel %vm2903, %v2914, %v2916
    %v2918 = vshll.u32 %v2878, 8
    %v2919 = vmul.u32.u64.compose %v2918, %v2917
    %v2920 = vextract.low.u32 %v2919
    %v2921 = vextract.high.u32 %v2919
    %v2922 = vmul.u32.u64.compose %v2918, %v2913
    %v2923 = vextract.low.u32 %v2922
    %v2924 = vextract.high.u32 %v2922
    %v2925 = vmul.u32 %v2918, %v2909
    %v2926 = vadd.s32 %v2921, %v2923
    %vm2927 = vc.u32 %v2921, %v2923
    %v2928 = vadd.s32 %v2924, 1
    %v2929 = vsel %vm2927, %v2928, %v2924
    %v2930 = vadd.s32 %v2925, %v2929
    %v2931 = vadd.s32 %v2930, 536870912
    %v2932 = vshrl.u32 %v2931, 30
    %v2933 = vshll.u32 %v2932, 30
    %v2934 = vsub.s32 %v2930, %v2933
    %vm2935 = vcmp.lt.s32.totalorder %v2934, 0
    %v2936 = vsub.s32 0, %v2934
    %v2937 = vsel %vm2935, %v2936, %v2934
    %v2938 = vclz %v2937
    %v2939 = vsub.s32 %v2938, 2
    %vm2940 = vcmp.gt.s32.totalorder 0, %v2939
    %v2941 = vsel %vm2940, 0, %v2939
    %v2942 = vsub.s32 32, %v2941
    %v2943 = vshll.u32 %v2934, %v2941
    %v2944 = vshrl.u32 %v2926, %v2942
    %v2945 = vor.u32 %v2943, %v2944
    %v2946 = vsub.s32 4294967266, %v2941
    %v2947 = vadd.s32 %v2946, 127
    %v2948 = vshll.u32 %v2947, 23
    %v2949 = vor.u32 4788187, %v2948
    %v2950 = vand.u32 2147483647, %v2949
    %v2952 = vcvt.s32.f32 %v2945
    %v2953 = vmul.f32 %v2952, %v2950
    %v2954 = vxor.u32 %v2953, 2147483648
    %v2955 = vsel %vm2872, %v2954, %v2953
    %v2956 = vsub.s32 4, %v2932
    %v2957 = vsel %vm2872, %v2956, %v2932
    %v2958 = vsel %vm2871, %v263, %v2955
    %v2959 = vsel %vm2871, 0, %v2957
    %v2960 = vcosq.f32.pop %v2958
    %v2961 = vsinq.f32.pop %v2958
    %vm2962 = vweird.f32 %v263
    %v2963 = vadd.s32 %v2959, 3
    %v2964 = vand.u32 %v2963, 3
    %vm2965 = vcmp.lt.s32.totalorder %v2964, 2
    %vm2966 = vcmp.eq.s32.totalorder %v2964, 0
    %v2967 = vxor.u32 %v2961, 2147483648
    %v2968 = vsel %vm2966, %v2960, %v2967
    %vm2969 = vcmp.eq.s32.totalorder %v2964, 2
    %v2970 = vxor.u32 %v2960, 2147483648
    %v2971 = vsel %vm2969, %v2970, %v2961
    %v2972 = vsel %vm2965, %v2968, %v2971
    %v2973 = vsel %vm2962, nan, %v2972
    %v2974 = vand.u32 2147483647, %v264
    %vm2975 = vcmp.le.f32.partialorder %v2974, 0.7853982
    %vm2976 = vcmp.lt.s32.totalorder %v264, 0
    %v2977 = vand.u32 %v264, 2139095040
    %v2978 = vshrl.u32 %v2977, 23
    %v2979 = vsub.s32 %v2978, 127
    %v2980 = vand.u32 2147483647, %v264
    %v2981 = vand.u32 %v2980, 8388607
    %v2982 = vor.u32 %v2981, 8388608
    %v2983 = vsub.s32 0, %v2982
    %v2984 = vadd.s32 %v2979, 1
    %vm2985 = vcmp.gt.s32.totalorder %v2984, 0
    %v2986 = vsel %vm2985, %v2984, 0
    %v2987 = vshrl.u32 %v2986, 5
    %v2988 = vand.u32 %v2986, 31
    %v2989 = vsub.s32 32, %v2988
    %v2990 = vshrl.u32 683565275, %v2989
    %v2991 = vshll.u32 683565275, %v2988
    %v2992 = vshrl.u32 2475754826, %v2989
    %v2993 = vor.u32 %v2991, %v2992
    %v2994 = vshll.u32 2475754826, %v2988
    %v2995 = vshrl.u32 2131351028, %v2989
    %v2996 = vor.u32 %v2994, %v2995
    %v2997 = vshll.u32 2131351028, %v2988
    %v2998 = vshrl.u32 2102212464, %v2989
    %v2999 = vor.u32 %v2997, %v2998
    %v3000 = vshll.u32 2102212464, %v2988
    %v3001 = vshrl.u32 920167782, %v2989
    %v3002 = vor.u32 %v3000, %v3001
    %v3003 = vshll.u32 920167782, %v2988
    %v3004 = vshrl.u32 1326507024, %v2989
    %v3005 = vor.u32 %v3003, %v3004
    %vm3006 = vcmp.lt.s32.totalorder %v2987, 1
    %vm3007 = vcmp.lt.s32.totalorder %v2987, 2
    %vm3008 = vcmp.lt.s32.totalorder %v2987, 3
    %vm3009 = vcmp.lt.s32.totalorder %v2987, 4
    %v3010 = vsel %vm3006, %v2990, %v2993
    %v3011 = vsel %vm3009, %v2999, 2102212464
    %v3012 = vsel %vm3008, %v2996, %v3011
    %v3013 = vsel %vm3007, %v3010, %v3012
    %v3014 = vsel %vm3006, %v2993, %v2996
    %v3015 = vsel %vm3009, %v3002, 920167782
    %v3016 = vsel %vm3008, %v2999, %v3015
    %v3017 = vsel %vm3007, %v3014, %v3016
    %v3018 = vsel %vm3006, %v2996, %v2999
    %v3019 = vsel %vm3009, %v3005, 1326507024
    %v3020 = vsel %vm3008, %v3002, %v3019
    %v3021 = vsel %vm3007, %v3018, %v3020
    %v3022 = vshll.u32 %v2982, 8
    %v3023 = vmul.u32.u64.compose %v3022, %v3021
    %v3024 = vextract.low.u32 %v3023
    %v3025 = vextract.high.u32 %v3023
    %v3026 = vmul.u32.u64.compose %v3022, %v3017
    %v3027 = vextract.low.u32 %v3026
    %v3028 = vextract.high.u32 %v3026
    %v3029 = vmul.u32 %v3022, %v3013
    %v3030 = vadd.s32 %v3025, %v3027
    %vm3031 = vc.u32 %v3025, %v3027
    %v3032 = vadd.s32 %v3028, 1
    %v3033 = vsel %vm3031, %v3032, %v3028
    %v3034 = vadd.s32 %v3029, %v3033
    %v3035 = vadd.s32 %v3034, 536870912
    %v3036 = vshrl.u32 %v3035, 30
    %v3037 = vshll.u32 %v3036, 30
    %v3038 = vsub.s32 %v3034, %v3037
    %vm3039 = vcmp.lt.s32.totalorder %v3038, 0
    %v3040 = vsub.s32 0, %v3038
    %v3041 = vsel %vm3039, %v3040, %v3038
    %v3042 = vclz %v3041
    %v3043 = vsub.s32 %v3042, 2
    %vm3044 = vcmp.gt.s32.totalorder 0, %v3043
    %v3045 = vsel %vm3044, 0, %v3043
    %v3046 = vsub.s32 32, %v3045
    %v3047 = vshll.u32 %v3038, %v3045
    %v3048 = vshrl.u32 %v3030, %v3046
    %v3049 = vor.u32 %v3047, %v3048
    %v3050 = vsub.s32 4294967266, %v3045
    %v3051 = vadd.s32 %v3050, 127
    %v3052 = vshll.u32 %v3051, 23
    %v3053 = vor.u32 4788187, %v3052
    %v3054 = vand.u32 2147483647, %v3053
    %v3056 = vcvt.s32.f32 %v3049
    %v3057 = vmul.f32 %v3056, %v3054
    %v3058 = vxor.u32 %v3057, 2147483648
    %v3059 = vsel %vm2976, %v3058, %v3057
    %v3060 = vsub.s32 4, %v3036
    %v3061 = vsel %vm2976, %v3060, %v3036
    %v3062 = vsel %vm2975, %v264, %v3059
    %v3063 = vsel %vm2975, 0, %v3061
    %v3064 = vcosq.f32.pop %v3062
    %v3065 = vsinq.f32.pop %v3062
    %vm3066 = vweird.f32 %v264
    %v3067 = vadd.s32 %v3063, 3
    %v3068 = vand.u32 %v3067, 3
    %vm3069 = vcmp.lt.s32.totalorder %v3068, 2
    %vm3070 = vcmp.eq.s32.totalorder %v3068, 0
    %v3071 = vxor.u32 %v3065, 2147483648
    %v3072 = vsel %vm3070, %v3064, %v3071
    %vm3073 = vcmp.eq.s32.totalorder %v3068, 2
    %v3074 = vxor.u32 %v3064, 2147483648
    %v3075 = vsel %vm3073, %v3074, %v3065
    %v3076 = vsel %vm3069, %v3072, %v3075
    %v3077 = vsel %vm3066, nan, %v3076
    %v3078 = vand.u32 2147483647, %v265
    %vm3079 = vcmp.le.f32.partialorder %v3078, 0.7853982
    %vm3080 = vcmp.lt.s32.totalorder %v265, 0
    %v3081 = vand.u32 %v265, 2139095040
    %v3082 = vshrl.u32 %v3081, 23
    %v3083 = vsub.s32 %v3082, 127
    %v3084 = vand.u32 2147483647, %v265
    %v3085 = vand.u32 %v3084, 8388607
    %v3086 = vor.u32 %v3085, 8388608
    %v3087 = vsub.s32 0, %v3086
    %v3088 = vadd.s32 %v3083, 1
    %vm3089 = vcmp.gt.s32.totalorder %v3088, 0
    %v3090 = vsel %vm3089, %v3088, 0
    %v3091 = vshrl.u32 %v3090, 5
    %v3092 = vand.u32 %v3090, 31
    %v3093 = vsub.s32 32, %v3092
    %v3094 = vshrl.u32 683565275, %v3093
    %v3095 = vshll.u32 683565275, %v3092
    %v3096 = vshrl.u32 2475754826, %v3093
    %v3097 = vor.u32 %v3095, %v3096
    %v3098 = vshll.u32 2475754826, %v3092
    %v3099 = vshrl.u32 2131351028, %v3093
    %v3100 = vor.u32 %v3098, %v3099
    %v3101 = vshll.u32 2131351028, %v3092
    %v3102 = vshrl.u32 2102212464, %v3093
    %v3103 = vor.u32 %v3101, %v3102
    %v3104 = vshll.u32 2102212464, %v3092
    %v3105 = vshrl.u32 920167782, %v3093
    %v3106 = vor.u32 %v3104, %v3105
    %v3107 = vshll.u32 920167782, %v3092
    %v3108 = vshrl.u32 1326507024, %v3093
    %v3109 = vor.u32 %v3107, %v3108
    %vm3110 = vcmp.lt.s32.totalorder %v3091, 1
    %vm3111 = vcmp.lt.s32.totalorder %v3091, 2
    %vm3112 = vcmp.lt.s32.totalorder %v3091, 3
    %vm3113 = vcmp.lt.s32.totalorder %v3091, 4
    %v3114 = vsel %vm3110, %v3094, %v3097
    %v3115 = vsel %vm3113, %v3103, 2102212464
    %v3116 = vsel %vm3112, %v3100, %v3115
    %v3117 = vsel %vm3111, %v3114, %v3116
    %v3118 = vsel %vm3110, %v3097, %v3100
    %v3119 = vsel %vm3113, %v3106, 920167782
    %v3120 = vsel %vm3112, %v3103, %v3119
    %v3121 = vsel %vm3111, %v3118, %v3120
    %v3122 = vsel %vm3110, %v3100, %v3103
    %v3123 = vsel %vm3113, %v3109, 1326507024
    %v3124 = vsel %vm3112, %v3106, %v3123
    %v3125 = vsel %vm3111, %v3122, %v3124
    %v3126 = vshll.u32 %v3086, 8
    %v3127 = vmul.u32.u64.compose %v3126, %v3125
    %v3128 = vextract.low.u32 %v3127
    %v3129 = vextract.high.u32 %v3127
    %v3130 = vmul.u32.u64.compose %v3126, %v3121
    %v3131 = vextract.low.u32 %v3130
    %v3132 = vextract.high.u32 %v3130
    %v3133 = vmul.u32 %v3126, %v3117
    %v3134 = vadd.s32 %v3129, %v3131
    %vm3135 = vc.u32 %v3129, %v3131
    %v3136 = vadd.s32 %v3132, 1
    %v3137 = vsel %vm3135, %v3136, %v3132
    %v3138 = vadd.s32 %v3133, %v3137
    %v3139 = vadd.s32 %v3138, 536870912
    %v3140 = vshrl.u32 %v3139, 30
    %v3141 = vshll.u32 %v3140, 30
    %v3142 = vsub.s32 %v3138, %v3141
    %vm3143 = vcmp.lt.s32.totalorder %v3142, 0
    %v3144 = vsub.s32 0, %v3142
    %v3145 = vsel %vm3143, %v3144, %v3142
    %v3146 = vclz %v3145
    %v3147 = vsub.s32 %v3146, 2
    %vm3148 = vcmp.gt.s32.totalorder 0, %v3147
    %v3149 = vsel %vm3148, 0, %v3147
    %v3150 = vsub.s32 32, %v3149
    %v3151 = vshll.u32 %v3142, %v3149
    %v3152 = vshrl.u32 %v3134, %v3150
    %v3153 = vor.u32 %v3151, %v3152
    %v3154 = vsub.s32 4294967266, %v3149
    %v3155 = vadd.s32 %v3154, 127
    %v3156 = vshll.u32 %v3155, 23
    %v3157 = vor.u32 4788187, %v3156
    %v3158 = vand.u32 2147483647, %v3157
    %v3160 = vcvt.s32.f32 %v3153
    %v3161 = vmul.f32 %v3160, %v3158
    %v3162 = vxor.u32 %v3161, 2147483648
    %v3163 = vsel %vm3080, %v3162, %v3161
    %v3164 = vsub.s32 4, %v3140
    %v3165 = vsel %vm3080, %v3164, %v3140
    %v3166 = vsel %vm3079, %v265, %v3163
    %v3167 = vsel %vm3079, 0, %v3165
    %v3168 = vcosq.f32.pop %v3166
    %v3169 = vsinq.f32.pop %v3166
    %vm3170 = vweird.f32 %v265
    %v3171 = vadd.s32 %v3167, 3
    %v3172 = vand.u32 %v3171, 3
    %vm3173 = vcmp.lt.s32.totalorder %v3172, 2
    %vm3174 = vcmp.eq.s32.totalorder %v3172, 0
    %v3175 = vxor.u32 %v3169, 2147483648
    %v3176 = vsel %vm3174, %v3168, %v3175
    %vm3177 = vcmp.eq.s32.totalorder %v3172, 2
    %v3178 = vxor.u32 %v3168, 2147483648
    %v3179 = vsel %vm3177, %v3178, %v3169
    %v3180 = vsel %vm3173, %v3176, %v3179
    %v3181 = vsel %vm3170, nan, %v3180
    %v3182 = vand.u32 2147483647, %v266
    %vm3183 = vcmp.le.f32.partialorder %v3182, 0.7853982
    %vm3184 = vcmp.lt.s32.totalorder %v266, 0
    %v3185 = vand.u32 %v266, 2139095040
    %v3186 = vshrl.u32 %v3185, 23
    %v3187 = vsub.s32 %v3186, 127
    %v3188 = vand.u32 2147483647, %v266
    %v3189 = vand.u32 %v3188, 8388607
    %v3190 = vor.u32 %v3189, 8388608
    %v3191 = vsub.s32 0, %v3190
    %v3192 = vadd.s32 %v3187, 1
    %vm3193 = vcmp.gt.s32.totalorder %v3192, 0
    %v3194 = vsel %vm3193, %v3192, 0
    %v3195 = vshrl.u32 %v3194, 5
    %v3196 = vand.u32 %v3194, 31
    %v3197 = vsub.s32 32, %v3196
    %v3198 = vshrl.u32 683565275, %v3197
    %v3199 = vshll.u32 683565275, %v3196
    %v3200 = vshrl.u32 2475754826, %v3197
    %v3201 = vor.u32 %v3199, %v3200
    %v3202 = vshll.u32 2475754826, %v3196
    %v3203 = vshrl.u32 2131351028, %v3197
    %v3204 = vor.u32 %v3202, %v3203
    %v3205 = vshll.u32 2131351028, %v3196
    %v3206 = vshrl.u32 2102212464, %v3197
    %v3207 = vor.u32 %v3205, %v3206
    %v3208 = vshll.u32 2102212464, %v3196
    %v3209 = vshrl.u32 920167782, %v3197
    %v3210 = vor.u32 %v3208, %v3209
    %v3211 = vshll.u32 920167782, %v3196
    %v3212 = vshrl.u32 1326507024, %v3197
    %v3213 = vor.u32 %v3211, %v3212
    %vm3214 = vcmp.lt.s32.totalorder %v3195, 1
    %vm3215 = vcmp.lt.s32.totalorder %v3195, 2
    %vm3216 = vcmp.lt.s32.totalorder %v3195, 3
    %vm3217 = vcmp.lt.s32.totalorder %v3195, 4
    %v3218 = vsel %vm3214, %v3198, %v3201
    %v3219 = vsel %vm3217, %v3207, 2102212464
    %v3220 = vsel %vm3216, %v3204, %v3219
    %v3221 = vsel %vm3215, %v3218, %v3220
    %v3222 = vsel %vm3214, %v3201, %v3204
    %v3223 = vsel %vm3217, %v3210, 920167782
    %v3224 = vsel %vm3216, %v3207, %v3223
    %v3225 = vsel %vm3215, %v3222, %v3224
    %v3226 = vsel %vm3214, %v3204, %v3207
    %v3227 = vsel %vm3217, %v3213, 1326507024
    %v3228 = vsel %vm3216, %v3210, %v3227
    %v3229 = vsel %vm3215, %v3226, %v3228
    %v3230 = vshll.u32 %v3190, 8
    %v3231 = vmul.u32.u64.compose %v3230, %v3229
    %v3232 = vextract.low.u32 %v3231
    %v3233 = vextract.high.u32 %v3231
    %v3234 = vmul.u32.u64.compose %v3230, %v3225
    %v3235 = vextract.low.u32 %v3234
    %v3236 = vextract.high.u32 %v3234
    %v3237 = vmul.u32 %v3230, %v3221
    %v3238 = vadd.s32 %v3233, %v3235
    %vm3239 = vc.u32 %v3233, %v3235
    %v3240 = vadd.s32 %v3236, 1
    %v3241 = vsel %vm3239, %v3240, %v3236
    %v3242 = vadd.s32 %v3237, %v3241
    %v3243 = vadd.s32 %v3242, 536870912
    %v3244 = vshrl.u32 %v3243, 30
    %v3245 = vshll.u32 %v3244, 30
    %v3246 = vsub.s32 %v3242, %v3245
    %vm3247 = vcmp.lt.s32.totalorder %v3246, 0
    %v3248 = vsub.s32 0, %v3246
    %v3249 = vsel %vm3247, %v3248, %v3246
    %v3250 = vclz %v3249
    %v3251 = vsub.s32 %v3250, 2
    %vm3252 = vcmp.gt.s32.totalorder 0, %v3251
    %v3253 = vsel %vm3252, 0, %v3251
    %v3254 = vsub.s32 32, %v3253
    %v3255 = vshll.u32 %v3246, %v3253
    %v3256 = vshrl.u32 %v3238, %v3254
    %v3257 = vor.u32 %v3255, %v3256
    %v3258 = vsub.s32 4294967266, %v3253
    %v3259 = vadd.s32 %v3258, 127
    %v3260 = vshll.u32 %v3259, 23
    %v3261 = vor.u32 4788187, %v3260
    %v3262 = vand.u32 2147483647, %v3261
    %v3264 = vcvt.s32.f32 %v3257
    %v3265 = vmul.f32 %v3264, %v3262
    %v3266 = vxor.u32 %v3265, 2147483648
    %v3267 = vsel %vm3184, %v3266, %v3265
    %v3268 = vsub.s32 4, %v3244
    %v3269 = vsel %vm3184, %v3268, %v3244
    %v3270 = vsel %vm3183, %v266, %v3267
    %v3271 = vsel %vm3183, 0, %v3269
    %v3272 = vcosq.f32.pop %v3270
    %v3273 = vsinq.f32.pop %v3270
    %vm3274 = vweird.f32 %v266
    %v3275 = vadd.s32 %v3271, 3
    %v3276 = vand.u32 %v3275, 3
    %vm3277 = vcmp.lt.s32.totalorder %v3276, 2
    %vm3278 = vcmp.eq.s32.totalorder %v3276, 0
    %v3279 = vxor.u32 %v3273, 2147483648
    %v3280 = vsel %vm3278, %v3272, %v3279
    %vm3281 = vcmp.eq.s32.totalorder %v3276, 2
    %v3282 = vxor.u32 %v3272, 2147483648
    %v3283 = vsel %vm3281, %v3282, %v3273
    %v3284 = vsel %vm3277, %v3280, %v3283
    %v3285 = vsel %vm3274, nan, %v3284
    %v3286 = vand.u32 2147483647, %v267
    %vm3287 = vcmp.le.f32.partialorder %v3286, 0.7853982
    %vm3288 = vcmp.lt.s32.totalorder %v267, 0
    %v3289 = vand.u32 %v267, 2139095040
    %v3290 = vshrl.u32 %v3289, 23
    %v3291 = vsub.s32 %v3290, 127
    %v3292 = vand.u32 2147483647, %v267
    %v3293 = vand.u32 %v3292, 8388607
    %v3294 = vor.u32 %v3293, 8388608
    %v3295 = vsub.s32 0, %v3294
    %v3296 = vadd.s32 %v3291, 1
    %vm3297 = vcmp.gt.s32.totalorder %v3296, 0
    %v3298 = vsel %vm3297, %v3296, 0
    %v3299 = vshrl.u32 %v3298, 5
    %v3300 = vand.u32 %v3298, 31
    %v3301 = vsub.s32 32, %v3300
    %v3302 = vshrl.u32 683565275, %v3301
    %v3303 = vshll.u32 683565275, %v3300
    %v3304 = vshrl.u32 2475754826, %v3301
    %v3305 = vor.u32 %v3303, %v3304
    %v3306 = vshll.u32 2475754826, %v3300
    %v3307 = vshrl.u32 2131351028, %v3301
    %v3308 = vor.u32 %v3306, %v3307
    %v3309 = vshll.u32 2131351028, %v3300
    %v3310 = vshrl.u32 2102212464, %v3301
    %v3311 = vor.u32 %v3309, %v3310
    %v3312 = vshll.u32 2102212464, %v3300
    %v3313 = vshrl.u32 920167782, %v3301
    %v3314 = vor.u32 %v3312, %v3313
    %v3315 = vshll.u32 920167782, %v3300
    %v3316 = vshrl.u32 1326507024, %v3301
    %v3317 = vor.u32 %v3315, %v3316
    %vm3318 = vcmp.lt.s32.totalorder %v3299, 1
    %vm3319 = vcmp.lt.s32.totalorder %v3299, 2
    %vm3320 = vcmp.lt.s32.totalorder %v3299, 3
    %vm3321 = vcmp.lt.s32.totalorder %v3299, 4
    %v3322 = vsel %vm3318, %v3302, %v3305
    %v3323 = vsel %vm3321, %v3311, 2102212464
    %v3324 = vsel %vm3320, %v3308, %v3323
    %v3325 = vsel %vm3319, %v3322, %v3324
    %v3326 = vsel %vm3318, %v3305, %v3308
    %v3327 = vsel %vm3321, %v3314, 920167782
    %v3328 = vsel %vm3320, %v3311, %v3327
    %v3329 = vsel %vm3319, %v3326, %v3328
    %v3330 = vsel %vm3318, %v3308, %v3311
    %v3331 = vsel %vm3321, %v3317, 1326507024
    %v3332 = vsel %vm3320, %v3314, %v3331
    %v3333 = vsel %vm3319, %v3330, %v3332
    %v3334 = vshll.u32 %v3294, 8
    %v3335 = vmul.u32.u64.compose %v3334, %v3333
    %v3336 = vextract.low.u32 %v3335
    %v3337 = vextract.high.u32 %v3335
    %v3338 = vmul.u32.u64.compose %v3334, %v3329
    %v3339 = vextract.low.u32 %v3338
    %v3340 = vextract.high.u32 %v3338
    %v3341 = vmul.u32 %v3334, %v3325
    %v3342 = vadd.s32 %v3337, %v3339
    %vm3343 = vc.u32 %v3337, %v3339
    %v3344 = vadd.s32 %v3340, 1
    %v3345 = vsel %vm3343, %v3344, %v3340
    %v3346 = vadd.s32 %v3341, %v3345
    %v3347 = vadd.s32 %v3346, 536870912
    %v3348 = vshrl.u32 %v3347, 30
    %v3349 = vshll.u32 %v3348, 30
    %v3350 = vsub.s32 %v3346, %v3349
    %vm3351 = vcmp.lt.s32.totalorder %v3350, 0
    %v3352 = vsub.s32 0, %v3350
    %v3353 = vsel %vm3351, %v3352, %v3350
    %v3354 = vclz %v3353
    %v3355 = vsub.s32 %v3354, 2
    %vm3356 = vcmp.gt.s32.totalorder 0, %v3355
    %v3357 = vsel %vm3356, 0, %v3355
    %v3358 = vsub.s32 32, %v3357
    %v3359 = vshll.u32 %v3350, %v3357
    %v3360 = vshrl.u32 %v3342, %v3358
    %v3361 = vor.u32 %v3359, %v3360
    %v3362 = vsub.s32 4294967266, %v3357
    %v3363 = vadd.s32 %v3362, 127
    %v3364 = vshll.u32 %v3363, 23
    %v3365 = vor.u32 4788187, %v3364
    %v3366 = vand.u32 2147483647, %v3365
    %v3368 = vcvt.s32.f32 %v3361
    %v3369 = vmul.f32 %v3368, %v3366
    %v3370 = vxor.u32 %v3369, 2147483648
    %v3371 = vsel %vm3288, %v3370, %v3369
    %v3372 = vsub.s32 4, %v3348
    %v3373 = vsel %vm3288, %v3372, %v3348
    %v3374 = vsel %vm3287, %v267, %v3371
    %v3375 = vsel %vm3287, 0, %v3373
    %v3376 = vcosq.f32.pop %v3374
    %v3377 = vsinq.f32.pop %v3374
    %vm3378 = vweird.f32 %v267
    %v3379 = vadd.s32 %v3375, 3
    %v3380 = vand.u32 %v3379, 3
    %vm3381 = vcmp.lt.s32.totalorder %v3380, 2
    %vm3382 = vcmp.eq.s32.totalorder %v3380, 0
    %v3383 = vxor.u32 %v3377, 2147483648
    %v3384 = vsel %vm3382, %v3376, %v3383
    %vm3385 = vcmp.eq.s32.totalorder %v3380, 2
    %v3386 = vxor.u32 %v3376, 2147483648
    %v3387 = vsel %vm3385, %v3386, %v3377
    %v3388 = vsel %vm3381, %v3384, %v3387
    %v3389 = vsel %vm3378, nan, %v3388
    %v3390 = vand.u32 2147483647, %v268
    %vm3391 = vcmp.le.f32.partialorder %v3390, 0.7853982
    %vm3392 = vcmp.lt.s32.totalorder %v268, 0
    %v3393 = vand.u32 %v268, 2139095040
    %v3394 = vshrl.u32 %v3393, 23
    %v3395 = vsub.s32 %v3394, 127
    %v3396 = vand.u32 2147483647, %v268
    %v3397 = vand.u32 %v3396, 8388607
    %v3398 = vor.u32 %v3397, 8388608
    %v3399 = vsub.s32 0, %v3398
    %v3400 = vadd.s32 %v3395, 1
    %vm3401 = vcmp.gt.s32.totalorder %v3400, 0
    %v3402 = vsel %vm3401, %v3400, 0
    %v3403 = vshrl.u32 %v3402, 5
    %v3404 = vand.u32 %v3402, 31
    %v3405 = vsub.s32 32, %v3404
    %v3406 = vshrl.u32 683565275, %v3405
    %v3407 = vshll.u32 683565275, %v3404
    %v3408 = vshrl.u32 2475754826, %v3405
    %v3409 = vor.u32 %v3407, %v3408
    %v3410 = vshll.u32 2475754826, %v3404
    %v3411 = vshrl.u32 2131351028, %v3405
    %v3412 = vor.u32 %v3410, %v3411
    %v3413 = vshll.u32 2131351028, %v3404
    %v3414 = vshrl.u32 2102212464, %v3405
    %v3415 = vor.u32 %v3413, %v3414
    %v3416 = vshll.u32 2102212464, %v3404
    %v3417 = vshrl.u32 920167782, %v3405
    %v3418 = vor.u32 %v3416, %v3417
    %v3419 = vshll.u32 920167782, %v3404
    %v3420 = vshrl.u32 1326507024, %v3405
    %v3421 = vor.u32 %v3419, %v3420
    %vm3422 = vcmp.lt.s32.totalorder %v3403, 1
    %vm3423 = vcmp.lt.s32.totalorder %v3403, 2
    %vm3424 = vcmp.lt.s32.totalorder %v3403, 3
    %vm3425 = vcmp.lt.s32.totalorder %v3403, 4
    %v3426 = vsel %vm3422, %v3406, %v3409
    %v3427 = vsel %vm3425, %v3415, 2102212464
    %v3428 = vsel %vm3424, %v3412, %v3427
    %v3429 = vsel %vm3423, %v3426, %v3428
    %v3430 = vsel %vm3422, %v3409, %v3412
    %v3431 = vsel %vm3425, %v3418, 920167782
    %v3432 = vsel %vm3424, %v3415, %v3431
    %v3433 = vsel %vm3423, %v3430, %v3432
    %v3434 = vsel %vm3422, %v3412, %v3415
    %v3435 = vsel %vm3425, %v3421, 1326507024
    %v3436 = vsel %vm3424, %v3418, %v3435
    %v3437 = vsel %vm3423, %v3434, %v3436
    %v3438 = vshll.u32 %v3398, 8
    %v3439 = vmul.u32.u64.compose %v3438, %v3437
    %v3440 = vextract.low.u32 %v3439
    %v3441 = vextract.high.u32 %v3439
    %v3442 = vmul.u32.u64.compose %v3438, %v3433
    %v3443 = vextract.low.u32 %v3442
    %v3444 = vextract.high.u32 %v3442
    %v3445 = vmul.u32 %v3438, %v3429
    %v3446 = vadd.s32 %v3441, %v3443
    %vm3447 = vc.u32 %v3441, %v3443
    %v3448 = vadd.s32 %v3444, 1
    %v3449 = vsel %vm3447, %v3448, %v3444
    %v3450 = vadd.s32 %v3445, %v3449
    %v3451 = vadd.s32 %v3450, 536870912
    %v3452 = vshrl.u32 %v3451, 30
    %v3453 = vshll.u32 %v3452, 30
    %v3454 = vsub.s32 %v3450, %v3453
    %vm3455 = vcmp.lt.s32.totalorder %v3454, 0
    %v3456 = vsub.s32 0, %v3454
    %v3457 = vsel %vm3455, %v3456, %v3454
    %v3458 = vclz %v3457
    %v3459 = vsub.s32 %v3458, 2
    %vm3460 = vcmp.gt.s32.totalorder 0, %v3459
    %v3461 = vsel %vm3460, 0, %v3459
    %v3462 = vsub.s32 32, %v3461
    %v3463 = vshll.u32 %v3454, %v3461
    %v3464 = vshrl.u32 %v3446, %v3462
    %v3465 = vor.u32 %v3463, %v3464
    %v3466 = vsub.s32 4294967266, %v3461
    %v3467 = vadd.s32 %v3466, 127
    %v3468 = vshll.u32 %v3467, 23
    %v3469 = vor.u32 4788187, %v3468
    %v3470 = vand.u32 2147483647, %v3469
    %v3472 = vcvt.s32.f32 %v3465
    %v3473 = vmul.f32 %v3472, %v3470
    %v3474 = vxor.u32 %v3473, 2147483648
    %v3475 = vsel %vm3392, %v3474, %v3473
    %v3476 = vsub.s32 4, %v3452
    %v3477 = vsel %vm3392, %v3476, %v3452
    %v3478 = vsel %vm3391, %v268, %v3475
    %v3479 = vsel %vm3391, 0, %v3477
    %v3480 = vcosq.f32.pop %v3478
    %v3481 = vsinq.f32.pop %v3478
    %vm3482 = vweird.f32 %v268
    %v3483 = vadd.s32 %v3479, 3
    %v3484 = vand.u32 %v3483, 3
    %vm3485 = vcmp.lt.s32.totalorder %v3484, 2
    %vm3486 = vcmp.eq.s32.totalorder %v3484, 0
    %v3487 = vxor.u32 %v3481, 2147483648
    %v3488 = vsel %vm3486, %v3480, %v3487
    %vm3489 = vcmp.eq.s32.totalorder %v3484, 2
    %v3490 = vxor.u32 %v3480, 2147483648
    %v3491 = vsel %vm3489, %v3490, %v3481
    %v3492 = vsel %vm3485, %v3488, %v3491
    %v3493 = vsel %vm3482, nan, %v3492
    %v3494 = vand.u32 2147483647, %v269
    %vm3495 = vcmp.le.f32.partialorder %v3494, 0.7853982
    %vm3496 = vcmp.lt.s32.totalorder %v269, 0
    %v3497 = vand.u32 %v269, 2139095040
    %v3498 = vshrl.u32 %v3497, 23
    %v3499 = vsub.s32 %v3498, 127
    %v3500 = vand.u32 2147483647, %v269
    %v3501 = vand.u32 %v3500, 8388607
    %v3502 = vor.u32 %v3501, 8388608
    %v3503 = vsub.s32 0, %v3502
    %v3504 = vadd.s32 %v3499, 1
    %vm3505 = vcmp.gt.s32.totalorder %v3504, 0
    %v3506 = vsel %vm3505, %v3504, 0
    %v3507 = vshrl.u32 %v3506, 5
    %v3508 = vand.u32 %v3506, 31
    %v3509 = vsub.s32 32, %v3508
    %v3510 = vshrl.u32 683565275, %v3509
    %v3511 = vshll.u32 683565275, %v3508
    %v3512 = vshrl.u32 2475754826, %v3509
    %v3513 = vor.u32 %v3511, %v3512
    %v3514 = vshll.u32 2475754826, %v3508
    %v3515 = vshrl.u32 2131351028, %v3509
    %v3516 = vor.u32 %v3514, %v3515
    %v3517 = vshll.u32 2131351028, %v3508
    %v3518 = vshrl.u32 2102212464, %v3509
    %v3519 = vor.u32 %v3517, %v3518
    %v3520 = vshll.u32 2102212464, %v3508
    %v3521 = vshrl.u32 920167782, %v3509
    %v3522 = vor.u32 %v3520, %v3521
    %v3523 = vshll.u32 920167782, %v3508
    %v3524 = vshrl.u32 1326507024, %v3509
    %v3525 = vor.u32 %v3523, %v3524
    %vm3526 = vcmp.lt.s32.totalorder %v3507, 1
    %vm3527 = vcmp.lt.s32.totalorder %v3507, 2
    %vm3528 = vcmp.lt.s32.totalorder %v3507, 3
    %vm3529 = vcmp.lt.s32.totalorder %v3507, 4
    %v3530 = vsel %vm3526, %v3510, %v3513
    %v3531 = vsel %vm3529, %v3519, 2102212464
    %v3532 = vsel %vm3528, %v3516, %v3531
    %v3533 = vsel %vm3527, %v3530, %v3532
    %v3534 = vsel %vm3526, %v3513, %v3516
    %v3535 = vsel %vm3529, %v3522, 920167782
    %v3536 = vsel %vm3528, %v3519, %v3535
    %v3537 = vsel %vm3527, %v3534, %v3536
    %v3538 = vsel %vm3526, %v3516, %v3519
    %v3539 = vsel %vm3529, %v3525, 1326507024
    %v3540 = vsel %vm3528, %v3522, %v3539
    %v3541 = vsel %vm3527, %v3538, %v3540
    %v3542 = vshll.u32 %v3502, 8
    %v3543 = vmul.u32.u64.compose %v3542, %v3541
    %v3544 = vextract.low.u32 %v3543
    %v3545 = vextract.high.u32 %v3543
    %v3546 = vmul.u32.u64.compose %v3542, %v3537
    %v3547 = vextract.low.u32 %v3546
    %v3548 = vextract.high.u32 %v3546
    %v3549 = vmul.u32 %v3542, %v3533
    %v3550 = vadd.s32 %v3545, %v3547
    %vm3551 = vc.u32 %v3545, %v3547
    %v3552 = vadd.s32 %v3548, 1
    %v3553 = vsel %vm3551, %v3552, %v3548
    %v3554 = vadd.s32 %v3549, %v3553
    %v3555 = vadd.s32 %v3554, 536870912
    %v3556 = vshrl.u32 %v3555, 30
    %v3557 = vshll.u32 %v3556, 30
    %v3558 = vsub.s32 %v3554, %v3557
    %vm3559 = vcmp.lt.s32.totalorder %v3558, 0
    %v3560 = vsub.s32 0, %v3558
    %v3561 = vsel %vm3559, %v3560, %v3558
    %v3562 = vclz %v3561
    %v3563 = vsub.s32 %v3562, 2
    %vm3564 = vcmp.gt.s32.totalorder 0, %v3563
    %v3565 = vsel %vm3564, 0, %v3563
    %v3566 = vsub.s32 32, %v3565
    %v3567 = vshll.u32 %v3558, %v3565
    %v3568 = vshrl.u32 %v3550, %v3566
    %v3569 = vor.u32 %v3567, %v3568
    %v3570 = vsub.s32 4294967266, %v3565
    %v3571 = vadd.s32 %v3570, 127
    %v3572 = vshll.u32 %v3571, 23
    %v3573 = vor.u32 4788187, %v3572
    %v3574 = vand.u32 2147483647, %v3573
    %v3576 = vcvt.s32.f32 %v3569
    %v3577 = vmul.f32 %v3576, %v3574
    %v3578 = vxor.u32 %v3577, 2147483648
    %v3579 = vsel %vm3496, %v3578, %v3577
    %v3580 = vsub.s32 4, %v3556
    %v3581 = vsel %vm3496, %v3580, %v3556
    %v3582 = vsel %vm3495, %v269, %v3579
    %v3583 = vsel %vm3495, 0, %v3581
    %v3584 = vcosq.f32.pop %v3582
    %v3585 = vsinq.f32.pop %v3582
    %vm3586 = vweird.f32 %v269
    %v3587 = vadd.s32 %v3583, 3
    %v3588 = vand.u32 %v3587, 3
    %vm3589 = vcmp.lt.s32.totalorder %v3588, 2
    %vm3590 = vcmp.eq.s32.totalorder %v3588, 0
    %v3591 = vxor.u32 %v3585, 2147483648
    %v3592 = vsel %vm3590, %v3584, %v3591
    %vm3593 = vcmp.eq.s32.totalorder %v3588, 2
    %v3594 = vxor.u32 %v3584, 2147483648
    %v3595 = vsel %vm3593, %v3594, %v3585
    %v3596 = vsel %vm3589, %v3592, %v3595
    %v3597 = vsel %vm3586, nan, %v3596
    %v3598 = vmul.f32 %v373, %v373
    %v3599 = vmul.f32 %v477, %v477
    %v3600 = vmul.f32 %v581, %v581
    %v3601 = vmul.f32 %v685, %v685
    %v3602 = vmul.f32 %v789, %v789
    %v3603 = vmul.f32 %v893, %v893
    %v3604 = vmul.f32 %v997, %v997
    %v3605 = vmul.f32 %v1101, %v1101
    %v3606 = vmul.f32 %v1205, %v1205
    %v3607 = vmul.f32 %v1309, %v1309
    %v3608 = vmul.f32 %v1413, %v1413
    %v3609 = vmul.f32 %v1517, %v1517
    %v3610 = vmul.f32 %v1621, %v1621
    %v3611 = vmul.f32 %v1725, %v1725
    %v3612 = vmul.f32 %v1829, %v1829
    %v3613 = vmul.f32 %v1933, %v1933
    %v3614 = vmul.f32 %v2037, %v2037
    %v3615 = vmul.f32 %v2141, %v2141
    %v3616 = vmul.f32 %v2245, %v2245
    %v3617 = vmul.f32 %v2349, %v2349
    %v3618 = vmul.f32 %v2453, %v2453
    %v3619 = vmul.f32 %v2557, %v2557
    %v3620 = vmul.f32 %v2661, %v2661
    %v3621 = vmul.f32 %v2765, %v2765
    %v3622 = vmul.f32 %v2869, %v2869
    %v3623 = vmul.f32 %v2973, %v2973
    %v3624 = vmul.f32 %v3077, %v3077
    %v3625 = vmul.f32 %v3181, %v3181
    %v3626 = vmul.f32 %v3285, %v3285
    %v3627 = vmul.f32 %v3389, %v3389
    %v3628 = vmul.f32 %v3493, %v3493
    %v3629 = vmul.f32 %v3597, %v3597
    %3630 = vset.pattern.permute.xlu0 3
    %3631 = vperm.xlu0 %3630, %v41
    %v3632 = vpop.permute.xlu0 %3631
    %3634 = vset.pattern.permute.xlu0 3
    %3635 = vperm.xlu0 %3634, %v42
    %v3636 = vpop.permute.xlu0 %3635
    %3638 = vset.pattern.permute.xlu0 3
    %3639 = vperm.xlu0 %3638, %v43
    %v3640 = vpop.permute.xlu0 %3639
    %3642 = vset.pattern.permute.xlu0 3
    %3643 = vperm.xlu0 %3642, %v44
    %v3644 = vpop.permute.xlu0 %3643
    %3646 = vset.pattern.permute.xlu0 3
    %3647 = vperm.xlu0 %3646, %v45
    %v3648 = vpop.permute.xlu0 %3647
    %3650 = vset.pattern.permute.xlu0 3
    %3651 = vperm.xlu0 %3650, %v46
    %v3652 = vpop.permute.xlu0 %3651
    %3654 = vset.pattern.permute.xlu0 3
    %3655 = vperm.xlu0 %3654, %v47
    %v3656 = vpop.permute.xlu0 %3655
    %3658 = vset.pattern.permute.xlu0 3
    %3659 = vperm.xlu0 %3658, %v48
    %v3660 = vpop.permute.xlu0 %3659
    %v3662 = vmul.f32 %v3598, %v3632
    %v3663 = vmul.f32 %v3599, %v3632
    %v3664 = vmul.f32 %v3600, %v3632
    %v3665 = vmul.f32 %v3601, %v3632
    %v3666 = vmul.f32 %v3602, %v3636
    %v3667 = vmul.f32 %v3603, %v3636
    %v3668 = vmul.f32 %v3604, %v3636
    %v3669 = vmul.f32 %v3605, %v3636
    %v3670 = vmul.f32 %v3606, %v3640
    %v3671 = vmul.f32 %v3607, %v3640
    %v3672 = vmul.f32 %v3608, %v3640
    %v3673 = vmul.f32 %v3609, %v3640
    %v3674 = vmul.f32 %v3610, %v3644
    %v3675 = vmul.f32 %v3611, %v3644
    %v3676 = vmul.f32 %v3612, %v3644
    %v3677 = vmul.f32 %v3613, %v3644
    %v3678 = vmul.f32 %v3614, %v3648
    %v3679 = vmul.f32 %v3615, %v3648
    %v3680 = vmul.f32 %v3616, %v3648
    %v3681 = vmul.f32 %v3617, %v3648
    %v3682 = vmul.f32 %v3618, %v3652
    %v3683 = vmul.f32 %v3619, %v3652
    %v3684 = vmul.f32 %v3620, %v3652
    %v3685 = vmul.f32 %v3621, %v3652
    %v3686 = vmul.f32 %v3622, %v3656
    %v3687 = vmul.f32 %v3623, %v3656
    %v3688 = vmul.f32 %v3624, %v3656
    %v3689 = vmul.f32 %v3625, %v3656
    %v3690 = vmul.f32 %v3626, %v3660
    %v3691 = vmul.f32 %v3627, %v3660
    %v3692 = vmul.f32 %v3628, %v3660
    %v3693 = vmul.f32 %v3629, %v3660
    %v3694 = vadd.f32 %v174, %v3662
    %v3695 = vadd.f32 %v175, %v3663
    %v3696 = vadd.f32 %v176, %v3664
    %v3697 = vadd.f32 %v177, %v3665
    %v3698 = vadd.f32 %v178, %v3666
    %v3699 = vadd.f32 %v179, %v3667
    %v3700 = vadd.f32 %v180, %v3668
    %v3701 = vadd.f32 %v181, %v3669
    %v3702 = vadd.f32 %v182, %v3670
    %v3703 = vadd.f32 %v183, %v3671
    %v3704 = vadd.f32 %v184, %v3672
    %v3705 = vadd.f32 %v185, %v3673
    %v3706 = vadd.f32 %v186, %v3674
    %v3707 = vadd.f32 %v187, %v3675
    %v3708 = vadd.f32 %v188, %v3676
    %v3709 = vadd.f32 %v189, %v3677
    %v3710 = vadd.f32 %v190, %v3678
    %v3711 = vadd.f32 %v191, %v3679
    %v3712 = vadd.f32 %v192, %v3680
    %v3713 = vadd.f32 %v193, %v3681
    %v3714 = vadd.f32 %v194, %v3682
    %v3715 = vadd.f32 %v195, %v3683
    %v3716 = vadd.f32 %v196, %v3684
    %v3717 = vadd.f32 %v197, %v3685
    %v3718 = vadd.f32 %v198, %v3686
    %v3719 = vadd.f32 %v199, %v3687
    %v3720 = vadd.f32 %v200, %v3688
    %v3721 = vadd.f32 %v201, %v3689
    %v3722 = vadd.f32 %v202, %v3690
    %v3723 = vadd.f32 %v203, %v3691
    %v3724 = vadd.f32 %v204, %v3692
    %v3725 = vadd.f32 %v205, %v3693
    %v3726 = vld [vmem:[%s2] sm:$0xff]
    %v3727 = vld [vmem:[%s2 + $0x8] sm:$0xff]
    %v3728 = vld [vmem:[%s2 + $0x10] sm:$0xff]
    %v3729 = vld [vmem:[%s2 + $0x18] sm:$0xff]
    %v3730 = vld [vmem:[%s2 + $0x20] sm:$0xff]
    %v3731 = vld [vmem:[%s2 + $0x28] sm:$0xff]
    %v3732 = vld [vmem:[%s2 + $0x30] sm:$0xff]
    %v3733 = vld [vmem:[%s2 + $0x38] sm:$0xff]
    %3734 = vset.pattern.permute.xlu0 4
    %3735 = vperm.xlu0 %3734, %v41
    %v3736 = vpop.permute.xlu0 %3735
    %3738 = vset.pattern.permute.xlu0 4
    %3739 = vperm.xlu0 %3738, %v42
    %v3740 = vpop.permute.xlu0 %3739
    %3742 = vset.pattern.permute.xlu0 4
    %3743 = vperm.xlu0 %3742, %v43
    %v3744 = vpop.permute.xlu0 %3743
    %3746 = vset.pattern.permute.xlu0 4
    %3747 = vperm.xlu0 %3746, %v44
    %v3748 = vpop.permute.xlu0 %3747
    %3750 = vset.pattern.permute.xlu0 4
    %3751 = vperm.xlu0 %3750, %v45
    %v3752 = vpop.permute.xlu0 %3751
    %3754 = vset.pattern.permute.xlu0 4
    %3755 = vperm.xlu0 %3754, %v46
    %v3756 = vpop.permute.xlu0 %3755
    %3758 = vset.pattern.permute.xlu0 4
    %3759 = vperm.xlu0 %3758, %v47
    %v3760 = vpop.permute.xlu0 %3759
    %3762 = vset.pattern.permute.xlu0 4
    %3763 = vperm.xlu0 %3762, %v48
    %v3764 = vpop.permute.xlu0 %3763
    %vm3766 = vcmask 523264
    %v3768 = vsel %vm3766, %v3726, 0
    %v3771 = vsel %vm3766, %v3727, 0
    %v3774 = vsel %vm3766, %v3728, 0
    %v3777 = vsel %vm3766, %v3729, 0
    %v3780 = vsel %vm3766, %v3730, 0
    %v3783 = vsel %vm3766, %v3731, 0
    %v3786 = vsel %vm3766, %v3732, 0
    %v3789 = vsel %vm3766, %v3733, 0
    %3791 = vmatprep.subr.mxu0 %v3695
    %3792 = vmatpush1.msra.mxu0 %v3694
    %3793 = vmatprep.subr.mxu0 %v3699
    %3794 = vmatpush1.msra.mxu0 %v3698
    %3795 = vmatprep.subr.mxu0 %v3703
    %3796 = vmatpush1.msra.mxu0 %v3702
    %3797 = vmatprep.subr.mxu0 %v3707
    %3798 = vmatpush1.msra.mxu0 %v3706
    %3799 = vmatprep.subr.mxu0 %v3711
    %3800 = vmatpush1.msra.mxu0 %v3710
    %3801 = vmatprep.subr.mxu0 %v3715
    %3802 = vmatpush1.msra.mxu0 %v3714
    %3803 = vmatprep.subr.mxu0 %v3719
    %3804 = vmatpush1.msra.mxu0 %v3718
    %3805 = vmatprep.subr.mxu0 %v3723
    %3806 = vmatpush1.msra.mxu0 %v3722
    %3807 = vmatprep.subr.mxu0 0.0
    %3808 = vmatpush1.msra.mxu0 0.0
    %3809 = vmatprep.subr.mxu0 0.0
    %3810 = vmatpush1.msra.mxu0 0.0
    %3811 = vmatprep.subr.mxu0 0.0
    %3812 = vmatpush1.msra.mxu0 0.0
    %3813 = vmatprep.subr.mxu0 0.0
    %3814 = vmatpush1.msra.mxu0 0.0
    %3815 = vmatprep.subr.mxu0 0.0
    %3816 = vmatpush1.msra.mxu0 0.0
    %3817 = vmatprep.subr.mxu0 0.0
    %3818 = vmatpush1.msra.mxu0 0.0
    %3819 = vmatprep.subr.mxu0 0.0
    %3820 = vmatpush1.msra.mxu0 0.0
    %3821 = vmatprep.subr.mxu0 0.0
    %3822 = vmatpush1.msra.mxu0 0.0
    %3823 = vmatprep.subr.mxu0 0.0
    %3824 = vmatpush1.msra.mxu0 0.0
    %3825 = vmatprep.subr.mxu0 0.0
    %3826 = vmatpush1.msra.mxu0 0.0
    %3827 = vmatprep.subr.mxu0 0.0
    %3828 = vmatpush1.msra.mxu0 0.0
    %3829 = vmatprep.subr.mxu0 0.0
    %3830 = vmatpush1.msra.mxu0 0.0
    %3831 = vmatprep.subr.mxu0 0.0
    %3832 = vmatpush1.msra.mxu0 0.0
    %3833 = vmatprep.subr.mxu0 0.0
    %3834 = vmatpush1.msra.mxu0 0.0
    %3835 = vmatprep.subr.mxu0 0.0
    %3836 = vmatpush1.msra.mxu0 0.0
    %3837 = vmatprep.subr.mxu0 0.0
    %3838 = vmatpush1.msra.mxu0 0.0
    %3839 = vmatprep.subr.mxu0 0.0
    %3840 = vmatpush1.msra.mxu0 0.0
    %3841 = vmatprep.subr.mxu0 0.0
    %3842 = vmatpush1.msra.mxu0 0.0
    %3843 = vmatprep.subr.mxu0 0.0
    %3844 = vmatpush1.msra.mxu0 0.0
    %3845 = vmatprep.subr.mxu0 0.0
    %3846 = vmatpush1.msra.mxu0 0.0
    %3847 = vmatprep.subr.mxu0 0.0
    %3848 = vmatpush1.msra.mxu0 0.0
    %3849 = vmatprep.subr.mxu0 0.0
    %3850 = vmatpush1.msra.mxu0 0.0
    %3851 = vmatprep.subr.mxu0 0.0
    %3852 = vmatpush1.msra.mxu0 0.0
    %3853 = vmatprep.subr.mxu0 0.0
    %3854 = vmatpush1.msra.mxu0 0.0
    %3855 = vmatprep.mubr.f32.mxu0 0.0
    %3856 = vmatmul.mubr.f32.gmra.mrb[0].mxu0 %v3768
    %v3857 = vpop.f32.mrb[0].mxu0
    %v3858 = vadd.f32 %v3736, %v3857
    %v3859 = vpop.f32.mrb[0].mxu0
    %v3860 = vadd.f32 %v3736, %v3859
    %3861 = vmatprep.mubr.f32.mxu0 0.0
    %3862 = vmatmul.mubr.f32.gmra.mrb[0].mxu0 %v3771
    %v3863 = vpop.f32.mrb[0].mxu0
    %v3864 = vadd.f32 %v3740, %v3863
    %v3865 = vpop.f32.mrb[0].mxu0
    %v3866 = vadd.f32 %v3740, %v3865
    %3867 = vmatprep.mubr.f32.mxu0 0.0
    %3868 = vmatmul.mubr.f32.gmra.mrb[0].mxu0 %v3774
    %v3869 = vpop.f32.mrb[0].mxu0
    %v3870 = vadd.f32 %v3744, %v3869
    %v3871 = vpop.f32.mrb[0].mxu0
    %v3872 = vadd.f32 %v3744, %v3871
    %3873 = vmatprep.mubr.f32.mxu0 0.0
    %3874 = vmatmul.mubr.f32.gmra.mrb[0].mxu0 %v3777
    %v3875 = vpop.f32.mrb[0].mxu0
    %v3876 = vadd.f32 %v3748, %v3875
    %v3877 = vpop.f32.mrb[0].mxu0
    %v3878 = vadd.f32 %v3748, %v3877
    %3879 = vmatprep.mubr.f32.mxu0 0.0
    %3880 = vmatmul.mubr.f32.gmra.mrb[0].mxu0 %v3780
    %v3881 = vpop.f32.mrb[0].mxu0
    %v3882 = vadd.f32 %v3752, %v3881
    %v3883 = vpop.f32.mrb[0].mxu0
    %v3884 = vadd.f32 %v3752, %v3883
    %3885 = vmatprep.mubr.f32.mxu0 0.0
    %3886 = vmatmul.mubr.f32.gmra.mrb[0].mxu0 %v3783
    %v3887 = vpop.f32.mrb[0].mxu0
    %v3888 = vadd.f32 %v3756, %v3887
    %v3889 = vpop.f32.mrb[0].mxu0
    %v3890 = vadd.f32 %v3756, %v3889
    %3891 = vmatprep.mubr.f32.mxu0 0.0
    %3892 = vmatmul.mubr.f32.gmra.mrb[0].mxu0 %v3786
    %v3893 = vpop.f32.mrb[0].mxu0
    %v3894 = vadd.f32 %v3760, %v3893
    %v3895 = vpop.f32.mrb[0].mxu0
    %v3896 = vadd.f32 %v3760, %v3895
    %3897 = vmatprep.mubr.f32.mxu0 0.0
    %3898 = vmatmul.mubr.f32.gmra.mrb[0].mxu0 %v3789
    %v3899 = vpop.f32.mrb[0].mxu0
    %v3900 = vadd.f32 %v3764, %v3899
    %v3901 = vpop.f32.mrb[0].mxu0
    %v3902 = vadd.f32 %v3764, %v3901
    %3903 = vdwg.mxu0
    %3904 = vmatprep.subr.mxu0 %v3697
    %3905 = vmatpush1.msra.mxu0 %v3696
    %3906 = vmatprep.subr.mxu0 %v3701
    %3907 = vmatpush1.msra.mxu0 %v3700
    %3908 = vmatprep.subr.mxu0 %v3705
    %3909 = vmatpush1.msra.mxu0 %v3704
    %3910 = vmatprep.subr.mxu0 %v3709
    %3911 = vmatpush1.msra.mxu0 %v3708
    %3912 = vmatprep.subr.mxu0 %v3713
    %3913 = vmatpush1.msra.mxu0 %v3712
    %3914 = vmatprep.subr.mxu0 %v3717
    %3915 = vmatpush1.msra.mxu0 %v3716
    %3916 = vmatprep.subr.mxu0 %v3721
    %3917 = vmatpush1.msra.mxu0 %v3720
    %3918 = vmatprep.subr.mxu0 %v3725
    %3919 = vmatpush1.msra.mxu0 %v3724
    %3920 = vmatprep.subr.mxu0 0.0
    %3921 = vmatpush1.msra.mxu0 0.0
    %3922 = vmatprep.subr.mxu0 0.0
    %3923 = vmatpush1.msra.mxu0 0.0
    %3924 = vmatprep.subr.mxu0 0.0
    %3925 = vmatpush1.msra.mxu0 0.0
    %3926 = vmatprep.subr.mxu0 0.0
    %3927 = vmatpush1.msra.mxu0 0.0
    %3928 = vmatprep.subr.mxu0 0.0
    %3929 = vmatpush1.msra.mxu0 0.0
    %3930 = vmatprep.subr.mxu0 0.0
    %3931 = vmatpush1.msra.mxu0 0.0
    %3932 = vmatprep.subr.mxu0 0.0
    %3933 = vmatpush1.msra.mxu0 0.0
    %3934 = vmatprep.subr.mxu0 0.0
    %3935 = vmatpush1.msra.mxu0 0.0
    %3936 = vmatprep.subr.mxu0 0.0
    %3937 = vmatpush1.msra.mxu0 0.0
    %3938 = vmatprep.subr.mxu0 0.0
    %3939 = vmatpush1.msra.mxu0 0.0
    %3940 = vmatprep.subr.mxu0 0.0
    %3941 = vmatpush1.msra.mxu0 0.0
    %3942 = vmatprep.subr.mxu0 0.0
    %3943 = vmatpush1.msra.mxu0 0.0
    %3944 = vmatprep.subr.mxu0 0.0
    %3945 = vmatpush1.msra.mxu0 0.0
    %3946 = vmatprep.subr.mxu0 0.0
    %3947 = vmatpush1.msra.mxu0 0.0
    %3948 = vmatprep.subr.mxu0 0.0
    %3949 = vmatpush1.msra.mxu0 0.0
    %3950 = vmatprep.subr.mxu0 0.0
    %3951 = vmatpush1.msra.mxu0 0.0
    %3952 = vmatprep.subr.mxu0 0.0
    %3953 = vmatpush1.msra.mxu0 0.0
    %3954 = vmatprep.subr.mxu0 0.0
    %3955 = vmatpush1.msra.mxu0 0.0
    %3956 = vmatprep.subr.mxu0 0.0
    %3957 = vmatpush1.msra.mxu0 0.0
    %3958 = vmatprep.subr.mxu0 0.0
    %3959 = vmatpush1.msra.mxu0 0.0
    %3960 = vmatprep.subr.mxu0 0.0
    %3961 = vmatpush1.msra.mxu0 0.0
    %3962 = vmatprep.subr.mxu0 0.0
    %3963 = vmatpush1.msra.mxu0 0.0
    %3964 = vmatprep.subr.mxu0 0.0
    %3965 = vmatpush1.msra.mxu0 0.0
    %3966 = vmatprep.subr.mxu0 0.0
    %3967 = vmatpush1.msra.mxu0 0.0
    %3968 = vmatprep.mubr.f32.mxu0 0.0
    %3969 = vmatmul.mubr.f32.gmra.mrb[0].mxu0 %v3768
    %v3970 = vpop.f32.mrb[0].mxu0
    %v3971 = vadd.f32 %v3736, %v3970
    %v3972 = vpop.f32.mrb[0].mxu0
    %v3973 = vadd.f32 %v3736, %v3972
    %3974 = vmatprep.mubr.f32.mxu0 0.0
    %3975 = vmatmul.mubr.f32.gmra.mrb[0].mxu0 %v3771
    %v3976 = vpop.f32.mrb[0].mxu0
    %v3977 = vadd.f32 %v3740, %v3976
    %v3978 = vpop.f32.mrb[0].mxu0
    %v3979 = vadd.f32 %v3740, %v3978
    %3980 = vmatprep.mubr.f32.mxu0 0.0
    %3981 = vmatmul.mubr.f32.gmra.mrb[0].mxu0 %v3774
    %v3982 = vpop.f32.mrb[0].mxu0
    %v3983 = vadd.f32 %v3744, %v3982
    %v3984 = vpop.f32.mrb[0].mxu0
    %v3985 = vadd.f32 %v3744, %v3984
    %3986 = vmatprep.mubr.f32.mxu0 0.0
    %3987 = vmatmul.mubr.f32.gmra.mrb[0].mxu0 %v3777
    %v3988 = vpop.f32.mrb[0].mxu0
    %v3989 = vadd.f32 %v3748, %v3988
    %v3990 = vpop.f32.mrb[0].mxu0
    %v3991 = vadd.f32 %v3748, %v3990
    %3992 = vmatprep.mubr.f32.mxu0 0.0
    %3993 = vmatmul.mubr.f32.gmra.mrb[0].mxu0 %v3780
    %v3994 = vpop.f32.mrb[0].mxu0
    %v3995 = vadd.f32 %v3752, %v3994
    %v3996 = vpop.f32.mrb[0].mxu0
    %v3997 = vadd.f32 %v3752, %v3996
    %3998 = vmatprep.mubr.f32.mxu0 0.0
    %3999 = vmatmul.mubr.f32.gmra.mrb[0].mxu0 %v3783
    %v4000 = vpop.f32.mrb[0].mxu0
    %v4001 = vadd.f32 %v3756, %v4000
    %v4002 = vpop.f32.mrb[0].mxu0
    %v4003 = vadd.f32 %v3756, %v4002
    %4004 = vmatprep.mubr.f32.mxu0 0.0
    %4005 = vmatmul.mubr.f32.gmra.mrb[0].mxu0 %v3786
    %v4006 = vpop.f32.mrb[0].mxu0
    %v4007 = vadd.f32 %v3760, %v4006
    %v4008 = vpop.f32.mrb[0].mxu0
    %v4009 = vadd.f32 %v3760, %v4008
    %4010 = vmatprep.mubr.f32.mxu0 0.0
    %4011 = vmatmul.mubr.f32.gmra.mrb[0].mxu0 %v3789
    %v4012 = vpop.f32.mrb[0].mxu0
    %v4013 = vadd.f32 %v3764, %v4012
    %v4014 = vpop.f32.mrb[0].mxu0
    %v4015 = vadd.f32 %v3764, %v4014
    %4016 = vdwg.mxu0
    %4017 = vset.pattern.permute.xlu0 5
    %4018 = vperm.xlu0 %4017, %v41
    %v4019 = vpop.permute.xlu0 %4018
    %4021 = vset.pattern.permute.xlu0 5
    %4022 = vperm.xlu0 %4021, %v42
    %v4023 = vpop.permute.xlu0 %4022
    %4025 = vset.pattern.permute.xlu0 5
    %4026 = vperm.xlu0 %4025, %v43
    %v4027 = vpop.permute.xlu0 %4026
    %4029 = vset.pattern.permute.xlu0 5
    %4030 = vperm.xlu0 %4029, %v44
    %v4031 = vpop.permute.xlu0 %4030
    %4033 = vset.pattern.permute.xlu0 5
    %4034 = vperm.xlu0 %4033, %v45
    %v4035 = vpop.permute.xlu0 %4034
    %4037 = vset.pattern.permute.xlu0 5
    %4038 = vperm.xlu0 %4037, %v46
    %v4039 = vpop.permute.xlu0 %4038
    %4041 = vset.pattern.permute.xlu0 5
    %4042 = vperm.xlu0 %4041, %v47
    %v4043 = vpop.permute.xlu0 %4042
    %4045 = vset.pattern.permute.xlu0 5
    %4046 = vperm.xlu0 %4045, %v48
    %v4047 = vpop.permute.xlu0 %4046
    %v4049 = vmul.f32 %v4019, %v3858
    %v4050 = vmul.f32 %v4019, %v3860
    %v4051 = vmul.f32 %v4019, %v3971
    %v4052 = vmul.f32 %v4019, %v3973
    %v4053 = vmul.f32 %v4023, %v3864
    %v4054 = vmul.f32 %v4023, %v3866
    %v4055 = vmul.f32 %v4023, %v3977
    %v4056 = vmul.f32 %v4023, %v3979
    %v4057 = vmul.f32 %v4027, %v3870
    %v4058 = vmul.f32 %v4027, %v3872
    %v4059 = vmul.f32 %v4027, %v3983
    %v4060 = vmul.f32 %v4027, %v3985
    %v4061 = vmul.f32 %v4031, %v3876
    %v4062 = vmul.f32 %v4031, %v3878
    %v4063 = vmul.f32 %v4031, %v3989
    %v4064 = vmul.f32 %v4031, %v3991
    %v4065 = vmul.f32 %v4035, %v3882
    %v4066 = vmul.f32 %v4035, %v3884
    %v4067 = vmul.f32 %v4035, %v3995
    %v4068 = vmul.f32 %v4035, %v3997
    %v4069 = vmul.f32 %v4039, %v3888
    %v4070 = vmul.f32 %v4039, %v3890
    %v4071 = vmul.f32 %v4039, %v4001
    %v4072 = vmul.f32 %v4039, %v4003
    %v4073 = vmul.f32 %v4043, %v3894
    %v4074 = vmul.f32 %v4043, %v3896
    %v4075 = vmul.f32 %v4043, %v4007
    %v4076 = vmul.f32 %v4043, %v4009
    %v4077 = vmul.f32 %v4047, %v3900
    %v4078 = vmul.f32 %v4047, %v3902
    %v4079 = vmul.f32 %v4047, %v4013
    %v4080 = vmul.f32 %v4047, %v4015
    %v4081 = vand.u32 2147483647, %v4049
    %vm4082 = vcmp.le.f32.partialorder %v4081, 0.7853982
    %vm4083 = vcmp.lt.s32.totalorder %v4049, 0
    %v4084 = vand.u32 %v4049, 2139095040
    %v4085 = vshrl.u32 %v4084, 23
    %v4086 = vsub.s32 %v4085, 127
    %v4087 = vand.u32 2147483647, %v4049
    %v4088 = vand.u32 %v4087, 8388607
    %v4089 = vor.u32 %v4088, 8388608
    %v4090 = vsub.s32 0, %v4089
    %v4091 = vadd.s32 %v4086, 1
    %vm4092 = vcmp.gt.s32.totalorder %v4091, 0
    %v4093 = vsel %vm4092, %v4091, 0
    %v4094 = vshrl.u32 %v4093, 5
    %v4095 = vand.u32 %v4093, 31
    %v4096 = vsub.s32 32, %v4095
    %v4097 = vshrl.u32 683565275, %v4096
    %v4098 = vshll.u32 683565275, %v4095
    %v4099 = vshrl.u32 2475754826, %v4096
    %v4100 = vor.u32 %v4098, %v4099
    %v4101 = vshll.u32 2475754826, %v4095
    %v4102 = vshrl.u32 2131351028, %v4096
    %v4103 = vor.u32 %v4101, %v4102
    %v4104 = vshll.u32 2131351028, %v4095
    %v4105 = vshrl.u32 2102212464, %v4096
    %v4106 = vor.u32 %v4104, %v4105
    %v4107 = vshll.u32 2102212464, %v4095
    %v4108 = vshrl.u32 920167782, %v4096
    %v4109 = vor.u32 %v4107, %v4108
    %v4110 = vshll.u32 920167782, %v4095
    %v4111 = vshrl.u32 1326507024, %v4096
    %v4112 = vor.u32 %v4110, %v4111
    %vm4113 = vcmp.lt.s32.totalorder %v4094, 1
    %vm4114 = vcmp.lt.s32.totalorder %v4094, 2
    %vm4115 = vcmp.lt.s32.totalorder %v4094, 3
    %vm4116 = vcmp.lt.s32.totalorder %v4094, 4
    %v4117 = vsel %vm4113, %v4097, %v4100
    %v4118 = vsel %vm4116, %v4106, 2102212464
    %v4119 = vsel %vm4115, %v4103, %v4118
    %v4120 = vsel %vm4114, %v4117, %v4119
    %v4121 = vsel %vm4113, %v4100, %v4103
    %v4122 = vsel %vm4116, %v4109, 920167782
    %v4123 = vsel %vm4115, %v4106, %v4122
    %v4124 = vsel %vm4114, %v4121, %v4123
    %v4125 = vsel %vm4113, %v4103, %v4106
    %v4126 = vsel %vm4116, %v4112, 1326507024
    %v4127 = vsel %vm4115, %v4109, %v4126
    %v4128 = vsel %vm4114, %v4125, %v4127
    %v4129 = vshll.u32 %v4089, 8
    %v4130 = vmul.u32.u64.compose %v4129, %v4128
    %v4131 = vextract.low.u32 %v4130
    %v4132 = vextract.high.u32 %v4130
    %v4133 = vmul.u32.u64.compose %v4129, %v4124
    %v4134 = vextract.low.u32 %v4133
    %v4135 = vextract.high.u32 %v4133
    %v4136 = vmul.u32 %v4129, %v4120
    %v4137 = vadd.s32 %v4132, %v4134
    %vm4138 = vc.u32 %v4132, %v4134
    %v4139 = vadd.s32 %v4135, 1
    %v4140 = vsel %vm4138, %v4139, %v4135
    %v4141 = vadd.s32 %v4136, %v4140
    %v4142 = vadd.s32 %v4141, 536870912
    %v4143 = vshrl.u32 %v4142, 30
    %v4144 = vshll.u32 %v4143, 30
    %v4145 = vsub.s32 %v4141, %v4144
    %vm4146 = vcmp.lt.s32.totalorder %v4145, 0
    %v4147 = vsub.s32 0, %v4145
    %v4148 = vsel %vm4146, %v4147, %v4145
    %v4149 = vclz %v4148
    %v4150 = vsub.s32 %v4149, 2
    %vm4151 = vcmp.gt.s32.totalorder 0, %v4150
    %v4152 = vsel %vm4151, 0, %v4150
    %v4153 = vsub.s32 32, %v4152
    %v4154 = vshll.u32 %v4145, %v4152
    %v4155 = vshrl.u32 %v4137, %v4153
    %v4156 = vor.u32 %v4154, %v4155
    %v4157 = vsub.s32 4294967266, %v4152
    %v4158 = vadd.s32 %v4157, 127
    %v4159 = vshll.u32 %v4158, 23
    %v4160 = vor.u32 4788187, %v4159
    %v4161 = vand.u32 2147483647, %v4160
    %v4163 = vcvt.s32.f32 %v4156
    %v4164 = vmul.f32 %v4163, %v4161
    %v4165 = vxor.u32 %v4164, 2147483648
    %v4166 = vsel %vm4083, %v4165, %v4164
    %v4167 = vsub.s32 4, %v4143
    %v4168 = vsel %vm4083, %v4167, %v4143
    %v4169 = vsel %vm4082, %v4049, %v4166
    %v4170 = vsel %vm4082, 0, %v4168
    %v4171 = vcosq.f32.pop %v4169
    %v4172 = vsinq.f32.pop %v4169
    %vm4173 = vweird.f32 %v4049
    %v4174 = vadd.s32 %v4170, 3
    %v4175 = vand.u32 %v4174, 3
    %vm4176 = vcmp.lt.s32.totalorder %v4175, 2
    %vm4177 = vcmp.eq.s32.totalorder %v4175, 0
    %v4178 = vxor.u32 %v4172, 2147483648
    %v4179 = vsel %vm4177, %v4171, %v4178
    %vm4180 = vcmp.eq.s32.totalorder %v4175, 2
    %v4181 = vxor.u32 %v4171, 2147483648
    %v4182 = vsel %vm4180, %v4181, %v4172
    %v4183 = vsel %vm4176, %v4179, %v4182
    %v4184 = vsel %vm4173, nan, %v4183
    %v4185 = vand.u32 2147483647, %v4050
    %vm4186 = vcmp.le.f32.partialorder %v4185, 0.7853982
    %vm4187 = vcmp.lt.s32.totalorder %v4050, 0
    %v4188 = vand.u32 %v4050, 2139095040
    %v4189 = vshrl.u32 %v4188, 23
    %v4190 = vsub.s32 %v4189, 127
    %v4191 = vand.u32 2147483647, %v4050
    %v4192 = vand.u32 %v4191, 8388607
    %v4193 = vor.u32 %v4192, 8388608
    %v4194 = vsub.s32 0, %v4193
    %v4195 = vadd.s32 %v4190, 1
    %vm4196 = vcmp.gt.s32.totalorder %v4195, 0
    %v4197 = vsel %vm4196, %v4195, 0
    %v4198 = vshrl.u32 %v4197, 5
    %v4199 = vand.u32 %v4197, 31
    %v4200 = vsub.s32 32, %v4199
    %v4201 = vshrl.u32 683565275, %v4200
    %v4202 = vshll.u32 683565275, %v4199
    %v4203 = vshrl.u32 2475754826, %v4200
    %v4204 = vor.u32 %v4202, %v4203
    %v4205 = vshll.u32 2475754826, %v4199
    %v4206 = vshrl.u32 2131351028, %v4200
    %v4207 = vor.u32 %v4205, %v4206
    %v4208 = vshll.u32 2131351028, %v4199
    %v4209 = vshrl.u32 2102212464, %v4200
    %v4210 = vor.u32 %v4208, %v4209
    %v4211 = vshll.u32 2102212464, %v4199
    %v4212 = vshrl.u32 920167782, %v4200
    %v4213 = vor.u32 %v4211, %v4212
    %v4214 = vshll.u32 920167782, %v4199
    %v4215 = vshrl.u32 1326507024, %v4200
    %v4216 = vor.u32 %v4214, %v4215
    %vm4217 = vcmp.lt.s32.totalorder %v4198, 1
    %vm4218 = vcmp.lt.s32.totalorder %v4198, 2
    %vm4219 = vcmp.lt.s32.totalorder %v4198, 3
    %vm4220 = vcmp.lt.s32.totalorder %v4198, 4
    %v4221 = vsel %vm4217, %v4201, %v4204
    %v4222 = vsel %vm4220, %v4210, 2102212464
    %v4223 = vsel %vm4219, %v4207, %v4222
    %v4224 = vsel %vm4218, %v4221, %v4223
    %v4225 = vsel %vm4217, %v4204, %v4207
    %v4226 = vsel %vm4220, %v4213, 920167782
    %v4227 = vsel %vm4219, %v4210, %v4226
    %v4228 = vsel %vm4218, %v4225, %v4227
    %v4229 = vsel %vm4217, %v4207, %v4210
    %v4230 = vsel %vm4220, %v4216, 1326507024
    %v4231 = vsel %vm4219, %v4213, %v4230
    %v4232 = vsel %vm4218, %v4229, %v4231
    %v4233 = vshll.u32 %v4193, 8
    %v4234 = vmul.u32.u64.compose %v4233, %v4232
    %v4235 = vextract.low.u32 %v4234
    %v4236 = vextract.high.u32 %v4234
    %v4237 = vmul.u32.u64.compose %v4233, %v4228
    %v4238 = vextract.low.u32 %v4237
    %v4239 = vextract.high.u32 %v4237
    %v4240 = vmul.u32 %v4233, %v4224
    %v4241 = vadd.s32 %v4236, %v4238
    %vm4242 = vc.u32 %v4236, %v4238
    %v4243 = vadd.s32 %v4239, 1
    %v4244 = vsel %vm4242, %v4243, %v4239
    %v4245 = vadd.s32 %v4240, %v4244
    %v4246 = vadd.s32 %v4245, 536870912
    %v4247 = vshrl.u32 %v4246, 30
    %v4248 = vshll.u32 %v4247, 30
    %v4249 = vsub.s32 %v4245, %v4248
    %vm4250 = vcmp.lt.s32.totalorder %v4249, 0
    %v4251 = vsub.s32 0, %v4249
    %v4252 = vsel %vm4250, %v4251, %v4249
    %v4253 = vclz %v4252
    %v4254 = vsub.s32 %v4253, 2
    %vm4255 = vcmp.gt.s32.totalorder 0, %v4254
    %v4256 = vsel %vm4255, 0, %v4254
    %v4257 = vsub.s32 32, %v4256
    %v4258 = vshll.u32 %v4249, %v4256
    %v4259 = vshrl.u32 %v4241, %v4257
    %v4260 = vor.u32 %v4258, %v4259
    %v4261 = vsub.s32 4294967266, %v4256
    %v4262 = vadd.s32 %v4261, 127
    %v4263 = vshll.u32 %v4262, 23
    %v4264 = vor.u32 4788187, %v4263
    %v4265 = vand.u32 2147483647, %v4264
    %v4267 = vcvt.s32.f32 %v4260
    %v4268 = vmul.f32 %v4267, %v4265
    %v4269 = vxor.u32 %v4268, 2147483648
    %v4270 = vsel %vm4187, %v4269, %v4268
    %v4271 = vsub.s32 4, %v4247
    %v4272 = vsel %vm4187, %v4271, %v4247
    %v4273 = vsel %vm4186, %v4050, %v4270
    %v4274 = vsel %vm4186, 0, %v4272
    %v4275 = vcosq.f32.pop %v4273
    %v4276 = vsinq.f32.pop %v4273
    %vm4277 = vweird.f32 %v4050
    %v4278 = vadd.s32 %v4274, 3
    %v4279 = vand.u32 %v4278, 3
    %vm4280 = vcmp.lt.s32.totalorder %v4279, 2
    %vm4281 = vcmp.eq.s32.totalorder %v4279, 0
    %v4282 = vxor.u32 %v4276, 2147483648
    %v4283 = vsel %vm4281, %v4275, %v4282
    %vm4284 = vcmp.eq.s32.totalorder %v4279, 2
    %v4285 = vxor.u32 %v4275, 2147483648
    %v4286 = vsel %vm4284, %v4285, %v4276
    %v4287 = vsel %vm4280, %v4283, %v4286
    %v4288 = vsel %vm4277, nan, %v4287
    %v4289 = vand.u32 2147483647, %v4051
    %vm4290 = vcmp.le.f32.partialorder %v4289, 0.7853982
    %vm4291 = vcmp.lt.s32.totalorder %v4051, 0
    %v4292 = vand.u32 %v4051, 2139095040
    %v4293 = vshrl.u32 %v4292, 23
    %v4294 = vsub.s32 %v4293, 127
    %v4295 = vand.u32 2147483647, %v4051
    %v4296 = vand.u32 %v4295, 8388607
    %v4297 = vor.u32 %v4296, 8388608
    %v4298 = vsub.s32 0, %v4297
    %v4299 = vadd.s32 %v4294, 1
    %vm4300 = vcmp.gt.s32.totalorder %v4299, 0
    %v4301 = vsel %vm4300, %v4299, 0
    %v4302 = vshrl.u32 %v4301, 5
    %v4303 = vand.u32 %v4301, 31
    %v4304 = vsub.s32 32, %v4303
    %v4305 = vshrl.u32 683565275, %v4304
    %v4306 = vshll.u32 683565275, %v4303
    %v4307 = vshrl.u32 2475754826, %v4304
    %v4308 = vor.u32 %v4306, %v4307
    %v4309 = vshll.u32 2475754826, %v4303
    %v4310 = vshrl.u32 2131351028, %v4304
    %v4311 = vor.u32 %v4309, %v4310
    %v4312 = vshll.u32 2131351028, %v4303
    %v4313 = vshrl.u32 2102212464, %v4304
    %v4314 = vor.u32 %v4312, %v4313
    %v4315 = vshll.u32 2102212464, %v4303
    %v4316 = vshrl.u32 920167782, %v4304
    %v4317 = vor.u32 %v4315, %v4316
    %v4318 = vshll.u32 920167782, %v4303
    %v4319 = vshrl.u32 1326507024, %v4304
    %v4320 = vor.u32 %v4318, %v4319
    %vm4321 = vcmp.lt.s32.totalorder %v4302, 1
    %vm4322 = vcmp.lt.s32.totalorder %v4302, 2
    %vm4323 = vcmp.lt.s32.totalorder %v4302, 3
    %vm4324 = vcmp.lt.s32.totalorder %v4302, 4
    %v4325 = vsel %vm4321, %v4305, %v4308
    %v4326 = vsel %vm4324, %v4314, 2102212464
    %v4327 = vsel %vm4323, %v4311, %v4326
    %v4328 = vsel %vm4322, %v4325, %v4327
    %v4329 = vsel %vm4321, %v4308, %v4311
    %v4330 = vsel %vm4324, %v4317, 920167782
    %v4331 = vsel %vm4323, %v4314, %v4330
    %v4332 = vsel %vm4322, %v4329, %v4331
    %v4333 = vsel %vm4321, %v4311, %v4314
    %v4334 = vsel %vm4324, %v4320, 1326507024
    %v4335 = vsel %vm4323, %v4317, %v4334
    %v4336 = vsel %vm4322, %v4333, %v4335
    %v4337 = vshll.u32 %v4297, 8
    %v4338 = vmul.u32.u64.compose %v4337, %v4336
    %v4339 = vextract.low.u32 %v4338
    %v4340 = vextract.high.u32 %v4338
    %v4341 = vmul.u32.u64.compose %v4337, %v4332
    %v4342 = vextract.low.u32 %v4341
    %v4343 = vextract.high.u32 %v4341
    %v4344 = vmul.u32 %v4337, %v4328
    %v4345 = vadd.s32 %v4340, %v4342
    %vm4346 = vc.u32 %v4340, %v4342
    %v4347 = vadd.s32 %v4343, 1
    %v4348 = vsel %vm4346, %v4347, %v4343
    %v4349 = vadd.s32 %v4344, %v4348
    %v4350 = vadd.s32 %v4349, 536870912
    %v4351 = vshrl.u32 %v4350, 30
    %v4352 = vshll.u32 %v4351, 30
    %v4353 = vsub.s32 %v4349, %v4352
    %vm4354 = vcmp.lt.s32.totalorder %v4353, 0
    %v4355 = vsub.s32 0, %v4353
    %v4356 = vsel %vm4354, %v4355, %v4353
    %v4357 = vclz %v4356
    %v4358 = vsub.s32 %v4357, 2
    %vm4359 = vcmp.gt.s32.totalorder 0, %v4358
    %v4360 = vsel %vm4359, 0, %v4358
    %v4361 = vsub.s32 32, %v4360
    %v4362 = vshll.u32 %v4353, %v4360
    %v4363 = vshrl.u32 %v4345, %v4361
    %v4364 = vor.u32 %v4362, %v4363
    %v4365 = vsub.s32 4294967266, %v4360
    %v4366 = vadd.s32 %v4365, 127
    %v4367 = vshll.u32 %v4366, 23
    %v4368 = vor.u32 4788187, %v4367
    %v4369 = vand.u32 2147483647, %v4368
    %v4371 = vcvt.s32.f32 %v4364
    %v4372 = vmul.f32 %v4371, %v4369
    %v4373 = vxor.u32 %v4372, 2147483648
    %v4374 = vsel %vm4291, %v4373, %v4372
    %v4375 = vsub.s32 4, %v4351
    %v4376 = vsel %vm4291, %v4375, %v4351
    %v4377 = vsel %vm4290, %v4051, %v4374
    %v4378 = vsel %vm4290, 0, %v4376
    %v4379 = vcosq.f32.pop %v4377
    %v4380 = vsinq.f32.pop %v4377
    %vm4381 = vweird.f32 %v4051
    %v4382 = vadd.s32 %v4378, 3
    %v4383 = vand.u32 %v4382, 3
    %vm4384 = vcmp.lt.s32.totalorder %v4383, 2
    %vm4385 = vcmp.eq.s32.totalorder %v4383, 0
    %v4386 = vxor.u32 %v4380, 2147483648
    %v4387 = vsel %vm4385, %v4379, %v4386
    %vm4388 = vcmp.eq.s32.totalorder %v4383, 2
    %v4389 = vxor.u32 %v4379, 2147483648
    %v4390 = vsel %vm4388, %v4389, %v4380
    %v4391 = vsel %vm4384, %v4387, %v4390
    %v4392 = vsel %vm4381, nan, %v4391
    %v4393 = vand.u32 2147483647, %v4052
    %vm4394 = vcmp.le.f32.partialorder %v4393, 0.7853982
    %vm4395 = vcmp.lt.s32.totalorder %v4052, 0
    %v4396 = vand.u32 %v4052, 2139095040
    %v4397 = vshrl.u32 %v4396, 23
    %v4398 = vsub.s32 %v4397, 127
    %v4399 = vand.u32 2147483647, %v4052
    %v4400 = vand.u32 %v4399, 8388607
    %v4401 = vor.u32 %v4400, 8388608
    %v4402 = vsub.s32 0, %v4401
    %v4403 = vadd.s32 %v4398, 1
    %vm4404 = vcmp.gt.s32.totalorder %v4403, 0
    %v4405 = vsel %vm4404, %v4403, 0
    %v4406 = vshrl.u32 %v4405, 5
    %v4407 = vand.u32 %v4405, 31
    %v4408 = vsub.s32 32, %v4407
    %v4409 = vshrl.u32 683565275, %v4408
    %v4410 = vshll.u32 683565275, %v4407
    %v4411 = vshrl.u32 2475754826, %v4408
    %v4412 = vor.u32 %v4410, %v4411
    %v4413 = vshll.u32 2475754826, %v4407
    %v4414 = vshrl.u32 2131351028, %v4408
    %v4415 = vor.u32 %v4413, %v4414
    %v4416 = vshll.u32 2131351028, %v4407
    %v4417 = vshrl.u32 2102212464, %v4408
    %v4418 = vor.u32 %v4416, %v4417
    %v4419 = vshll.u32 2102212464, %v4407
    %v4420 = vshrl.u32 920167782, %v4408
    %v4421 = vor.u32 %v4419, %v4420
    %v4422 = vshll.u32 920167782, %v4407
    %v4423 = vshrl.u32 1326507024, %v4408
    %v4424 = vor.u32 %v4422, %v4423
    %vm4425 = vcmp.lt.s32.totalorder %v4406, 1
    %vm4426 = vcmp.lt.s32.totalorder %v4406, 2
    %vm4427 = vcmp.lt.s32.totalorder %v4406, 3
    %vm4428 = vcmp.lt.s32.totalorder %v4406, 4
    %v4429 = vsel %vm4425, %v4409, %v4412
    %v4430 = vsel %vm4428, %v4418, 2102212464
    %v4431 = vsel %vm4427, %v4415, %v4430
    %v4432 = vsel %vm4426, %v4429, %v4431
    %v4433 = vsel %vm4425, %v4412, %v4415
    %v4434 = vsel %vm4428, %v4421, 920167782
    %v4435 = vsel %vm4427, %v4418, %v4434
    %v4436 = vsel %vm4426, %v4433, %v4435
    %v4437 = vsel %vm4425, %v4415, %v4418
    %v4438 = vsel %vm4428, %v4424, 1326507024
    %v4439 = vsel %vm4427, %v4421, %v4438
    %v4440 = vsel %vm4426, %v4437, %v4439
    %v4441 = vshll.u32 %v4401, 8
    %v4442 = vmul.u32.u64.compose %v4441, %v4440
    %v4443 = vextract.low.u32 %v4442
    %v4444 = vextract.high.u32 %v4442
    %v4445 = vmul.u32.u64.compose %v4441, %v4436
    %v4446 = vextract.low.u32 %v4445
    %v4447 = vextract.high.u32 %v4445
    %v4448 = vmul.u32 %v4441, %v4432
    %v4449 = vadd.s32 %v4444, %v4446
    %vm4450 = vc.u32 %v4444, %v4446
    %v4451 = vadd.s32 %v4447, 1
    %v4452 = vsel %vm4450, %v4451, %v4447
    %v4453 = vadd.s32 %v4448, %v4452
    %v4454 = vadd.s32 %v4453, 536870912
    %v4455 = vshrl.u32 %v4454, 30
    %v4456 = vshll.u32 %v4455, 30
    %v4457 = vsub.s32 %v4453, %v4456
    %vm4458 = vcmp.lt.s32.totalorder %v4457, 0
    %v4459 = vsub.s32 0, %v4457
    %v4460 = vsel %vm4458, %v4459, %v4457
    %v4461 = vclz %v4460
    %v4462 = vsub.s32 %v4461, 2
    %vm4463 = vcmp.gt.s32.totalorder 0, %v4462
    %v4464 = vsel %vm4463, 0, %v4462
    %v4465 = vsub.s32 32, %v4464
    %v4466 = vshll.u32 %v4457, %v4464
    %v4467 = vshrl.u32 %v4449, %v4465
    %v4468 = vor.u32 %v4466, %v4467
    %v4469 = vsub.s32 4294967266, %v4464
    %v4470 = vadd.s32 %v4469, 127
    %v4471 = vshll.u32 %v4470, 23
    %v4472 = vor.u32 4788187, %v4471
    %v4473 = vand.u32 2147483647, %v4472
    %v4475 = vcvt.s32.f32 %v4468
    %v4476 = vmul.f32 %v4475, %v4473
    %v4477 = vxor.u32 %v4476, 2147483648
    %v4478 = vsel %vm4395, %v4477, %v4476
    %v4479 = vsub.s32 4, %v4455
    %v4480 = vsel %vm4395, %v4479, %v4455
    %v4481 = vsel %vm4394, %v4052, %v4478
    %v4482 = vsel %vm4394, 0, %v4480
    %v4483 = vcosq.f32.pop %v4481
    %v4484 = vsinq.f32.pop %v4481
    %vm4485 = vweird.f32 %v4052
    %v4486 = vadd.s32 %v4482, 3
    %v4487 = vand.u32 %v4486, 3
    %vm4488 = vcmp.lt.s32.totalorder %v4487, 2
    %vm4489 = vcmp.eq.s32.totalorder %v4487, 0
    %v4490 = vxor.u32 %v4484, 2147483648
    %v4491 = vsel %vm4489, %v4483, %v4490
    %vm4492 = vcmp.eq.s32.totalorder %v4487, 2
    %v4493 = vxor.u32 %v4483, 2147483648
    %v4494 = vsel %vm4492, %v4493, %v4484
    %v4495 = vsel %vm4488, %v4491, %v4494
    %v4496 = vsel %vm4485, nan, %v4495
    %v4497 = vand.u32 2147483647, %v4053
    %vm4498 = vcmp.le.f32.partialorder %v4497, 0.7853982
    %vm4499 = vcmp.lt.s32.totalorder %v4053, 0
    %v4500 = vand.u32 %v4053, 2139095040
    %v4501 = vshrl.u32 %v4500, 23
    %v4502 = vsub.s32 %v4501, 127
    %v4503 = vand.u32 2147483647, %v4053
    %v4504 = vand.u32 %v4503, 8388607
    %v4505 = vor.u32 %v4504, 8388608
    %v4506 = vsub.s32 0, %v4505
    %v4507 = vadd.s32 %v4502, 1
    %vm4508 = vcmp.gt.s32.totalorder %v4507, 0
    %v4509 = vsel %vm4508, %v4507, 0
    %v4510 = vshrl.u32 %v4509, 5
    %v4511 = vand.u32 %v4509, 31
    %v4512 = vsub.s32 32, %v4511
    %v4513 = vshrl.u32 683565275, %v4512
    %v4514 = vshll.u32 683565275, %v4511
    %v4515 = vshrl.u32 2475754826, %v4512
    %v4516 = vor.u32 %v4514, %v4515
    %v4517 = vshll.u32 2475754826, %v4511
    %v4518 = vshrl.u32 2131351028, %v4512
    %v4519 = vor.u32 %v4517, %v4518
    %v4520 = vshll.u32 2131351028, %v4511
    %v4521 = vshrl.u32 2102212464, %v4512
    %v4522 = vor.u32 %v4520, %v4521
    %v4523 = vshll.u32 2102212464, %v4511
    %v4524 = vshrl.u32 920167782, %v4512
    %v4525 = vor.u32 %v4523, %v4524
    %v4526 = vshll.u32 920167782, %v4511
    %v4527 = vshrl.u32 1326507024, %v4512
    %v4528 = vor.u32 %v4526, %v4527
    %vm4529 = vcmp.lt.s32.totalorder %v4510, 1
    %vm4530 = vcmp.lt.s32.totalorder %v4510, 2
    %vm4531 = vcmp.lt.s32.totalorder %v4510, 3
    %vm4532 = vcmp.lt.s32.totalorder %v4510, 4
    %v4533 = vsel %vm4529, %v4513, %v4516
    %v4534 = vsel %vm4532, %v4522, 2102212464
    %v4535 = vsel %vm4531, %v4519, %v4534
    %v4536 = vsel %vm4530, %v4533, %v4535
    %v4537 = vsel %vm4529, %v4516, %v4519
    %v4538 = vsel %vm4532, %v4525, 920167782
    %v4539 = vsel %vm4531, %v4522, %v4538
    %v4540 = vsel %vm4530, %v4537, %v4539
    %v4541 = vsel %vm4529, %v4519, %v4522
    %v4542 = vsel %vm4532, %v4528, 1326507024
    %v4543 = vsel %vm4531, %v4525, %v4542
    %v4544 = vsel %vm4530, %v4541, %v4543
    %v4545 = vshll.u32 %v4505, 8
    %v4546 = vmul.u32.u64.compose %v4545, %v4544
    %v4547 = vextract.low.u32 %v4546
    %v4548 = vextract.high.u32 %v4546
    %v4549 = vmul.u32.u64.compose %v4545, %v4540
    %v4550 = vextract.low.u32 %v4549
    %v4551 = vextract.high.u32 %v4549
    %v4552 = vmul.u32 %v4545, %v4536
    %v4553 = vadd.s32 %v4548, %v4550
    %vm4554 = vc.u32 %v4548, %v4550
    %v4555 = vadd.s32 %v4551, 1
    %v4556 = vsel %vm4554, %v4555, %v4551
    %v4557 = vadd.s32 %v4552, %v4556
    %v4558 = vadd.s32 %v4557, 536870912
    %v4559 = vshrl.u32 %v4558, 30
    %v4560 = vshll.u32 %v4559, 30
    %v4561 = vsub.s32 %v4557, %v4560
    %vm4562 = vcmp.lt.s32.totalorder %v4561, 0
    %v4563 = vsub.s32 0, %v4561
    %v4564 = vsel %vm4562, %v4563, %v4561
    %v4565 = vclz %v4564
    %v4566 = vsub.s32 %v4565, 2
    %vm4567 = vcmp.gt.s32.totalorder 0, %v4566
    %v4568 = vsel %vm4567, 0, %v4566
    %v4569 = vsub.s32 32, %v4568
    %v4570 = vshll.u32 %v4561, %v4568
    %v4571 = vshrl.u32 %v4553, %v4569
    %v4572 = vor.u32 %v4570, %v4571
    %v4573 = vsub.s32 4294967266, %v4568
    %v4574 = vadd.s32 %v4573, 127
    %v4575 = vshll.u32 %v4574, 23
    %v4576 = vor.u32 4788187, %v4575
    %v4577 = vand.u32 2147483647, %v4576
    %v4579 = vcvt.s32.f32 %v4572
    %v4580 = vmul.f32 %v4579, %v4577
    %v4581 = vxor.u32 %v4580, 2147483648
    %v4582 = vsel %vm4499, %v4581, %v4580
    %v4583 = vsub.s32 4, %v4559
    %v4584 = vsel %vm4499, %v4583, %v4559
    %v4585 = vsel %vm4498, %v4053, %v4582
    %v4586 = vsel %vm4498, 0, %v4584
    %v4587 = vcosq.f32.pop %v4585
    %v4588 = vsinq.f32.pop %v4585
    %vm4589 = vweird.f32 %v4053
    %v4590 = vadd.s32 %v4586, 3
    %v4591 = vand.u32 %v4590, 3
    %vm4592 = vcmp.lt.s32.totalorder %v4591, 2
    %vm4593 = vcmp.eq.s32.totalorder %v4591, 0
    %v4594 = vxor.u32 %v4588, 2147483648
    %v4595 = vsel %vm4593, %v4587, %v4594
    %vm4596 = vcmp.eq.s32.totalorder %v4591, 2
    %v4597 = vxor.u32 %v4587, 2147483648
    %v4598 = vsel %vm4596, %v4597, %v4588
    %v4599 = vsel %vm4592, %v4595, %v4598
    %v4600 = vsel %vm4589, nan, %v4599
    %v4601 = vand.u32 2147483647, %v4054
    %vm4602 = vcmp.le.f32.partialorder %v4601, 0.7853982
    %vm4603 = vcmp.lt.s32.totalorder %v4054, 0
    %v4604 = vand.u32 %v4054, 2139095040
    %v4605 = vshrl.u32 %v4604, 23
    %v4606 = vsub.s32 %v4605, 127
    %v4607 = vand.u32 2147483647, %v4054
    %v4608 = vand.u32 %v4607, 8388607
    %v4609 = vor.u32 %v4608, 8388608
    %v4610 = vsub.s32 0, %v4609
    %v4611 = vadd.s32 %v4606, 1
    %vm4612 = vcmp.gt.s32.totalorder %v4611, 0
    %v4613 = vsel %vm4612, %v4611, 0
    %v4614 = vshrl.u32 %v4613, 5
    %v4615 = vand.u32 %v4613, 31
    %v4616 = vsub.s32 32, %v4615
    %v4617 = vshrl.u32 683565275, %v4616
    %v4618 = vshll.u32 683565275, %v4615
    %v4619 = vshrl.u32 2475754826, %v4616
    %v4620 = vor.u32 %v4618, %v4619
    %v4621 = vshll.u32 2475754826, %v4615
    %v4622 = vshrl.u32 2131351028, %v4616
    %v4623 = vor.u32 %v4621, %v4622
    %v4624 = vshll.u32 2131351028, %v4615
    %v4625 = vshrl.u32 2102212464, %v4616
    %v4626 = vor.u32 %v4624, %v4625
    %v4627 = vshll.u32 2102212464, %v4615
    %v4628 = vshrl.u32 920167782, %v4616
    %v4629 = vor.u32 %v4627, %v4628
    %v4630 = vshll.u32 920167782, %v4615
    %v4631 = vshrl.u32 1326507024, %v4616
    %v4632 = vor.u32 %v4630, %v4631
    %vm4633 = vcmp.lt.s32.totalorder %v4614, 1
    %vm4634 = vcmp.lt.s32.totalorder %v4614, 2
    %vm4635 = vcmp.lt.s32.totalorder %v4614, 3
    %vm4636 = vcmp.lt.s32.totalorder %v4614, 4
    %v4637 = vsel %vm4633, %v4617, %v4620
    %v4638 = vsel %vm4636, %v4626, 2102212464
    %v4639 = vsel %vm4635, %v4623, %v4638
    %v4640 = vsel %vm4634, %v4637, %v4639
    %v4641 = vsel %vm4633, %v4620, %v4623
    %v4642 = vsel %vm4636, %v4629, 920167782
    %v4643 = vsel %vm4635, %v4626, %v4642
    %v4644 = vsel %vm4634, %v4641, %v4643
    %v4645 = vsel %vm4633, %v4623, %v4626
    %v4646 = vsel %vm4636, %v4632, 1326507024
    %v4647 = vsel %vm4635, %v4629, %v4646
    %v4648 = vsel %vm4634, %v4645, %v4647
    %v4649 = vshll.u32 %v4609, 8
    %v4650 = vmul.u32.u64.compose %v4649, %v4648
    %v4651 = vextract.low.u32 %v4650
    %v4652 = vextract.high.u32 %v4650
    %v4653 = vmul.u32.u64.compose %v4649, %v4644
    %v4654 = vextract.low.u32 %v4653
    %v4655 = vextract.high.u32 %v4653
    %v4656 = vmul.u32 %v4649, %v4640
    %v4657 = vadd.s32 %v4652, %v4654
    %vm4658 = vc.u32 %v4652, %v4654
    %v4659 = vadd.s32 %v4655, 1
    %v4660 = vsel %vm4658, %v4659, %v4655
    %v4661 = vadd.s32 %v4656, %v4660
    %v4662 = vadd.s32 %v4661, 536870912
    %v4663 = vshrl.u32 %v4662, 30
    %v4664 = vshll.u32 %v4663, 30
    %v4665 = vsub.s32 %v4661, %v4664
    %vm4666 = vcmp.lt.s32.totalorder %v4665, 0
    %v4667 = vsub.s32 0, %v4665
    %v4668 = vsel %vm4666, %v4667, %v4665
    %v4669 = vclz %v4668
    %v4670 = vsub.s32 %v4669, 2
    %vm4671 = vcmp.gt.s32.totalorder 0, %v4670
    %v4672 = vsel %vm4671, 0, %v4670
    %v4673 = vsub.s32 32, %v4672
    %v4674 = vshll.u32 %v4665, %v4672
    %v4675 = vshrl.u32 %v4657, %v4673
    %v4676 = vor.u32 %v4674, %v4675
    %v4677 = vsub.s32 4294967266, %v4672
    %v4678 = vadd.s32 %v4677, 127
    %v4679 = vshll.u32 %v4678, 23
    %v4680 = vor.u32 4788187, %v4679
    %v4681 = vand.u32 2147483647, %v4680
    %v4683 = vcvt.s32.f32 %v4676
    %v4684 = vmul.f32 %v4683, %v4681
    %v4685 = vxor.u32 %v4684, 2147483648
    %v4686 = vsel %vm4603, %v4685, %v4684
    %v4687 = vsub.s32 4, %v4663
    %v4688 = vsel %vm4603, %v4687, %v4663
    %v4689 = vsel %vm4602, %v4054, %v4686
    %v4690 = vsel %vm4602, 0, %v4688
    %v4691 = vcosq.f32.pop %v4689
    %v4692 = vsinq.f32.pop %v4689
    %vm4693 = vweird.f32 %v4054
    %v4694 = vadd.s32 %v4690, 3
    %v4695 = vand.u32 %v4694, 3
    %vm4696 = vcmp.lt.s32.totalorder %v4695, 2
    %vm4697 = vcmp.eq.s32.totalorder %v4695, 0
    %v4698 = vxor.u32 %v4692, 2147483648
    %v4699 = vsel %vm4697, %v4691, %v4698
    %vm4700 = vcmp.eq.s32.totalorder %v4695, 2
    %v4701 = vxor.u32 %v4691, 2147483648
    %v4702 = vsel %vm4700, %v4701, %v4692
    %v4703 = vsel %vm4696, %v4699, %v4702
    %v4704 = vsel %vm4693, nan, %v4703
    %v4705 = vand.u32 2147483647, %v4055
    %vm4706 = vcmp.le.f32.partialorder %v4705, 0.7853982
    %vm4707 = vcmp.lt.s32.totalorder %v4055, 0
    %v4708 = vand.u32 %v4055, 2139095040
    %v4709 = vshrl.u32 %v4708, 23
    %v4710 = vsub.s32 %v4709, 127
    %v4711 = vand.u32 2147483647, %v4055
    %v4712 = vand.u32 %v4711, 8388607
    %v4713 = vor.u32 %v4712, 8388608
    %v4714 = vsub.s32 0, %v4713
    %v4715 = vadd.s32 %v4710, 1
    %vm4716 = vcmp.gt.s32.totalorder %v4715, 0
    %v4717 = vsel %vm4716, %v4715, 0
    %v4718 = vshrl.u32 %v4717, 5
    %v4719 = vand.u32 %v4717, 31
    %v4720 = vsub.s32 32, %v4719
    %v4721 = vshrl.u32 683565275, %v4720
    %v4722 = vshll.u32 683565275, %v4719
    %v4723 = vshrl.u32 2475754826, %v4720
    %v4724 = vor.u32 %v4722, %v4723
    %v4725 = vshll.u32 2475754826, %v4719
    %v4726 = vshrl.u32 2131351028, %v4720
    %v4727 = vor.u32 %v4725, %v4726
    %v4728 = vshll.u32 2131351028, %v4719
    %v4729 = vshrl.u32 2102212464, %v4720
    %v4730 = vor.u32 %v4728, %v4729
    %v4731 = vshll.u32 2102212464, %v4719
    %v4732 = vshrl.u32 920167782, %v4720
    %v4733 = vor.u32 %v4731, %v4732
    %v4734 = vshll.u32 920167782, %v4719
    %v4735 = vshrl.u32 1326507024, %v4720
    %v4736 = vor.u32 %v4734, %v4735
    %vm4737 = vcmp.lt.s32.totalorder %v4718, 1
    %vm4738 = vcmp.lt.s32.totalorder %v4718, 2
    %vm4739 = vcmp.lt.s32.totalorder %v4718, 3
    %vm4740 = vcmp.lt.s32.totalorder %v4718, 4
    %v4741 = vsel %vm4737, %v4721, %v4724
    %v4742 = vsel %vm4740, %v4730, 2102212464
    %v4743 = vsel %vm4739, %v4727, %v4742
    %v4744 = vsel %vm4738, %v4741, %v4743
    %v4745 = vsel %vm4737, %v4724, %v4727
    %v4746 = vsel %vm4740, %v4733, 920167782
    %v4747 = vsel %vm4739, %v4730, %v4746
    %v4748 = vsel %vm4738, %v4745, %v4747
    %v4749 = vsel %vm4737, %v4727, %v4730
    %v4750 = vsel %vm4740, %v4736, 1326507024
    %v4751 = vsel %vm4739, %v4733, %v4750
    %v4752 = vsel %vm4738, %v4749, %v4751
    %v4753 = vshll.u32 %v4713, 8
    %v4754 = vmul.u32.u64.compose %v4753, %v4752
    %v4755 = vextract.low.u32 %v4754
    %v4756 = vextract.high.u32 %v4754
    %v4757 = vmul.u32.u64.compose %v4753, %v4748
    %v4758 = vextract.low.u32 %v4757
    %v4759 = vextract.high.u32 %v4757
    %v4760 = vmul.u32 %v4753, %v4744
    %v4761 = vadd.s32 %v4756, %v4758
    %vm4762 = vc.u32 %v4756, %v4758
    %v4763 = vadd.s32 %v4759, 1
    %v4764 = vsel %vm4762, %v4763, %v4759
    %v4765 = vadd.s32 %v4760, %v4764
    %v4766 = vadd.s32 %v4765, 536870912
    %v4767 = vshrl.u32 %v4766, 30
    %v4768 = vshll.u32 %v4767, 30
    %v4769 = vsub.s32 %v4765, %v4768
    %vm4770 = vcmp.lt.s32.totalorder %v4769, 0
    %v4771 = vsub.s32 0, %v4769
    %v4772 = vsel %vm4770, %v4771, %v4769
    %v4773 = vclz %v4772
    %v4774 = vsub.s32 %v4773, 2
    %vm4775 = vcmp.gt.s32.totalorder 0, %v4774
    %v4776 = vsel %vm4775, 0, %v4774
    %v4777 = vsub.s32 32, %v4776
    %v4778 = vshll.u32 %v4769, %v4776
    %v4779 = vshrl.u32 %v4761, %v4777
    %v4780 = vor.u32 %v4778, %v4779
    %v4781 = vsub.s32 4294967266, %v4776
    %v4782 = vadd.s32 %v4781, 127
    %v4783 = vshll.u32 %v4782, 23
    %v4784 = vor.u32 4788187, %v4783
    %v4785 = vand.u32 2147483647, %v4784
    %v4787 = vcvt.s32.f32 %v4780
    %v4788 = vmul.f32 %v4787, %v4785
    %v4789 = vxor.u32 %v4788, 2147483648
    %v4790 = vsel %vm4707, %v4789, %v4788
    %v4791 = vsub.s32 4, %v4767
    %v4792 = vsel %vm4707, %v4791, %v4767
    %v4793 = vsel %vm4706, %v4055, %v4790
    %v4794 = vsel %vm4706, 0, %v4792
    %v4795 = vcosq.f32.pop %v4793
    %v4796 = vsinq.f32.pop %v4793
    %vm4797 = vweird.f32 %v4055
    %v4798 = vadd.s32 %v4794, 3
    %v4799 = vand.u32 %v4798, 3
    %vm4800 = vcmp.lt.s32.totalorder %v4799, 2
    %vm4801 = vcmp.eq.s32.totalorder %v4799, 0
    %v4802 = vxor.u32 %v4796, 2147483648
    %v4803 = vsel %vm4801, %v4795, %v4802
    %vm4804 = vcmp.eq.s32.totalorder %v4799, 2
    %v4805 = vxor.u32 %v4795, 2147483648
    %v4806 = vsel %vm4804, %v4805, %v4796
    %v4807 = vsel %vm4800, %v4803, %v4806
    %v4808 = vsel %vm4797, nan, %v4807
    %v4809 = vand.u32 2147483647, %v4056
    %vm4810 = vcmp.le.f32.partialorder %v4809, 0.7853982
    %vm4811 = vcmp.lt.s32.totalorder %v4056, 0
    %v4812 = vand.u32 %v4056, 2139095040
    %v4813 = vshrl.u32 %v4812, 23
    %v4814 = vsub.s32 %v4813, 127
    %v4815 = vand.u32 2147483647, %v4056
    %v4816 = vand.u32 %v4815, 8388607
    %v4817 = vor.u32 %v4816, 8388608
    %v4818 = vsub.s32 0, %v4817
    %v4819 = vadd.s32 %v4814, 1
    %vm4820 = vcmp.gt.s32.totalorder %v4819, 0
    %v4821 = vsel %vm4820, %v4819, 0
    %v4822 = vshrl.u32 %v4821, 5
    %v4823 = vand.u32 %v4821, 31
    %v4824 = vsub.s32 32, %v4823
    %v4825 = vshrl.u32 683565275, %v4824
    %v4826 = vshll.u32 683565275, %v4823
    %v4827 = vshrl.u32 2475754826, %v4824
    %v4828 = vor.u32 %v4826, %v4827
    %v4829 = vshll.u32 2475754826, %v4823
    %v4830 = vshrl.u32 2131351028, %v4824
    %v4831 = vor.u32 %v4829, %v4830
    %v4832 = vshll.u32 2131351028, %v4823
    %v4833 = vshrl.u32 2102212464, %v4824
    %v4834 = vor.u32 %v4832, %v4833
    %v4835 = vshll.u32 2102212464, %v4823
    %v4836 = vshrl.u32 920167782, %v4824
    %v4837 = vor.u32 %v4835, %v4836
    %v4838 = vshll.u32 920167782, %v4823
    %v4839 = vshrl.u32 1326507024, %v4824
    %v4840 = vor.u32 %v4838, %v4839
    %vm4841 = vcmp.lt.s32.totalorder %v4822, 1
    %vm4842 = vcmp.lt.s32.totalorder %v4822, 2
    %vm4843 = vcmp.lt.s32.totalorder %v4822, 3
    %vm4844 = vcmp.lt.s32.totalorder %v4822, 4
    %v4845 = vsel %vm4841, %v4825, %v4828
    %v4846 = vsel %vm4844, %v4834, 2102212464
    %v4847 = vsel %vm4843, %v4831, %v4846
    %v4848 = vsel %vm4842, %v4845, %v4847
    %v4849 = vsel %vm4841, %v4828, %v4831
    %v4850 = vsel %vm4844, %v4837, 920167782
    %v4851 = vsel %vm4843, %v4834, %v4850
    %v4852 = vsel %vm4842, %v4849, %v4851
    %v4853 = vsel %vm4841, %v4831, %v4834
    %v4854 = vsel %vm4844, %v4840, 1326507024
    %v4855 = vsel %vm4843, %v4837, %v4854
    %v4856 = vsel %vm4842, %v4853, %v4855
    %v4857 = vshll.u32 %v4817, 8
    %v4858 = vmul.u32.u64.compose %v4857, %v4856
    %v4859 = vextract.low.u32 %v4858
    %v4860 = vextract.high.u32 %v4858
    %v4861 = vmul.u32.u64.compose %v4857, %v4852
    %v4862 = vextract.low.u32 %v4861
    %v4863 = vextract.high.u32 %v4861
    %v4864 = vmul.u32 %v4857, %v4848
    %v4865 = vadd.s32 %v4860, %v4862
    %vm4866 = vc.u32 %v4860, %v4862
    %v4867 = vadd.s32 %v4863, 1
    %v4868 = vsel %vm4866, %v4867, %v4863
    %v4869 = vadd.s32 %v4864, %v4868
    %v4870 = vadd.s32 %v4869, 536870912
    %v4871 = vshrl.u32 %v4870, 30
    %v4872 = vshll.u32 %v4871, 30
    %v4873 = vsub.s32 %v4869, %v4872
    %vm4874 = vcmp.lt.s32.totalorder %v4873, 0
    %v4875 = vsub.s32 0, %v4873
    %v4876 = vsel %vm4874, %v4875, %v4873
    %v4877 = vclz %v4876
    %v4878 = vsub.s32 %v4877, 2
    %vm4879 = vcmp.gt.s32.totalorder 0, %v4878
    %v4880 = vsel %vm4879, 0, %v4878
    %v4881 = vsub.s32 32, %v4880
    %v4882 = vshll.u32 %v4873, %v4880
    %v4883 = vshrl.u32 %v4865, %v4881
    %v4884 = vor.u32 %v4882, %v4883
    %v4885 = vsub.s32 4294967266, %v4880
    %v4886 = vadd.s32 %v4885, 127
    %v4887 = vshll.u32 %v4886, 23
    %v4888 = vor.u32 4788187, %v4887
    %v4889 = vand.u32 2147483647, %v4888
    %v4891 = vcvt.s32.f32 %v4884
    %v4892 = vmul.f32 %v4891, %v4889
    %v4893 = vxor.u32 %v4892, 2147483648
    %v4894 = vsel %vm4811, %v4893, %v4892
    %v4895 = vsub.s32 4, %v4871
    %v4896 = vsel %vm4811, %v4895, %v4871
    %v4897 = vsel %vm4810, %v4056, %v4894
    %v4898 = vsel %vm4810, 0, %v4896
    %v4899 = vcosq.f32.pop %v4897
    %v4900 = vsinq.f32.pop %v4897
    %vm4901 = vweird.f32 %v4056
    %v4902 = vadd.s32 %v4898, 3
    %v4903 = vand.u32 %v4902, 3
    %vm4904 = vcmp.lt.s32.totalorder %v4903, 2
    %vm4905 = vcmp.eq.s32.totalorder %v4903, 0
    %v4906 = vxor.u32 %v4900, 2147483648
    %v4907 = vsel %vm4905, %v4899, %v4906
    %vm4908 = vcmp.eq.s32.totalorder %v4903, 2
    %v4909 = vxor.u32 %v4899, 2147483648
    %v4910 = vsel %vm4908, %v4909, %v4900
    %v4911 = vsel %vm4904, %v4907, %v4910
    %v4912 = vsel %vm4901, nan, %v4911
    %v4913 = vand.u32 2147483647, %v4057
    %vm4914 = vcmp.le.f32.partialorder %v4913, 0.7853982
    %vm4915 = vcmp.lt.s32.totalorder %v4057, 0
    %v4916 = vand.u32 %v4057, 2139095040
    %v4917 = vshrl.u32 %v4916, 23
    %v4918 = vsub.s32 %v4917, 127
    %v4919 = vand.u32 2147483647, %v4057
    %v4920 = vand.u32 %v4919, 8388607
    %v4921 = vor.u32 %v4920, 8388608
    %v4922 = vsub.s32 0, %v4921
    %v4923 = vadd.s32 %v4918, 1
    %vm4924 = vcmp.gt.s32.totalorder %v4923, 0
    %v4925 = vsel %vm4924, %v4923, 0
    %v4926 = vshrl.u32 %v4925, 5
    %v4927 = vand.u32 %v4925, 31
    %v4928 = vsub.s32 32, %v4927
    %v4929 = vshrl.u32 683565275, %v4928
    %v4930 = vshll.u32 683565275, %v4927
    %v4931 = vshrl.u32 2475754826, %v4928
    %v4932 = vor.u32 %v4930, %v4931
    %v4933 = vshll.u32 2475754826, %v4927
    %v4934 = vshrl.u32 2131351028, %v4928
    %v4935 = vor.u32 %v4933, %v4934
    %v4936 = vshll.u32 2131351028, %v4927
    %v4937 = vshrl.u32 2102212464, %v4928
    %v4938 = vor.u32 %v4936, %v4937
    %v4939 = vshll.u32 2102212464, %v4927
    %v4940 = vshrl.u32 920167782, %v4928
    %v4941 = vor.u32 %v4939, %v4940
    %v4942 = vshll.u32 920167782, %v4927
    %v4943 = vshrl.u32 1326507024, %v4928
    %v4944 = vor.u32 %v4942, %v4943
    %vm4945 = vcmp.lt.s32.totalorder %v4926, 1
    %vm4946 = vcmp.lt.s32.totalorder %v4926, 2
    %vm4947 = vcmp.lt.s32.totalorder %v4926, 3
    %vm4948 = vcmp.lt.s32.totalorder %v4926, 4
    %v4949 = vsel %vm4945, %v4929, %v4932
    %v4950 = vsel %vm4948, %v4938, 2102212464
    %v4951 = vsel %vm4947, %v4935, %v4950
    %v4952 = vsel %vm4946, %v4949, %v4951
    %v4953 = vsel %vm4945, %v4932, %v4935
    %v4954 = vsel %vm4948, %v4941, 920167782
    %v4955 = vsel %vm4947, %v4938, %v4954
    %v4956 = vsel %vm4946, %v4953, %v4955
    %v4957 = vsel %vm4945, %v4935, %v4938
    %v4958 = vsel %vm4948, %v4944, 1326507024
    %v4959 = vsel %vm4947, %v4941, %v4958
    %v4960 = vsel %vm4946, %v4957, %v4959
    %v4961 = vshll.u32 %v4921, 8
    %v4962 = vmul.u32.u64.compose %v4961, %v4960
    %v4963 = vextract.low.u32 %v4962
    %v4964 = vextract.high.u32 %v4962
    %v4965 = vmul.u32.u64.compose %v4961, %v4956
    %v4966 = vextract.low.u32 %v4965
    %v4967 = vextract.high.u32 %v4965
    %v4968 = vmul.u32 %v4961, %v4952
    %v4969 = vadd.s32 %v4964, %v4966
    %vm4970 = vc.u32 %v4964, %v4966
    %v4971 = vadd.s32 %v4967, 1
    %v4972 = vsel %vm4970, %v4971, %v4967
    %v4973 = vadd.s32 %v4968, %v4972
    %v4974 = vadd.s32 %v4973, 536870912
    %v4975 = vshrl.u32 %v4974, 30
    %v4976 = vshll.u32 %v4975, 30
    %v4977 = vsub.s32 %v4973, %v4976
    %vm4978 = vcmp.lt.s32.totalorder %v4977, 0
    %v4979 = vsub.s32 0, %v4977
    %v4980 = vsel %vm4978, %v4979, %v4977
    %v4981 = vclz %v4980
    %v4982 = vsub.s32 %v4981, 2
    %vm4983 = vcmp.gt.s32.totalorder 0, %v4982
    %v4984 = vsel %vm4983, 0, %v4982
    %v4985 = vsub.s32 32, %v4984
    %v4986 = vshll.u32 %v4977, %v4984
    %v4987 = vshrl.u32 %v4969, %v4985
    %v4988 = vor.u32 %v4986, %v4987
    %v4989 = vsub.s32 4294967266, %v4984
    %v4990 = vadd.s32 %v4989, 127
    %v4991 = vshll.u32 %v4990, 23
    %v4992 = vor.u32 4788187, %v4991
    %v4993 = vand.u32 2147483647, %v4992
    %v4995 = vcvt.s32.f32 %v4988
    %v4996 = vmul.f32 %v4995, %v4993
    %v4997 = vxor.u32 %v4996, 2147483648
    %v4998 = vsel %vm4915, %v4997, %v4996
    %v4999 = vsub.s32 4, %v4975
    %v5000 = vsel %vm4915, %v4999, %v4975
    %v5001 = vsel %vm4914, %v4057, %v4998
    %v5002 = vsel %vm4914, 0, %v5000
    %v5003 = vcosq.f32.pop %v5001
    %v5004 = vsinq.f32.pop %v5001
    %vm5005 = vweird.f32 %v4057
    %v5006 = vadd.s32 %v5002, 3
    %v5007 = vand.u32 %v5006, 3
    %vm5008 = vcmp.lt.s32.totalorder %v5007, 2
    %vm5009 = vcmp.eq.s32.totalorder %v5007, 0
    %v5010 = vxor.u32 %v5004, 2147483648
    %v5011 = vsel %vm5009, %v5003, %v5010
    %vm5012 = vcmp.eq.s32.totalorder %v5007, 2
    %v5013 = vxor.u32 %v5003, 2147483648
    %v5014 = vsel %vm5012, %v5013, %v5004
    %v5015 = vsel %vm5008, %v5011, %v5014
    %v5016 = vsel %vm5005, nan, %v5015
    %v5017 = vand.u32 2147483647, %v4058
    %vm5018 = vcmp.le.f32.partialorder %v5017, 0.7853982
    %vm5019 = vcmp.lt.s32.totalorder %v4058, 0
    %v5020 = vand.u32 %v4058, 2139095040
    %v5021 = vshrl.u32 %v5020, 23
    %v5022 = vsub.s32 %v5021, 127
    %v5023 = vand.u32 2147483647, %v4058
    %v5024 = vand.u32 %v5023, 8388607
    %v5025 = vor.u32 %v5024, 8388608
    %v5026 = vsub.s32 0, %v5025
    %v5027 = vadd.s32 %v5022, 1
    %vm5028 = vcmp.gt.s32.totalorder %v5027, 0
    %v5029 = vsel %vm5028, %v5027, 0
    %v5030 = vshrl.u32 %v5029, 5
    %v5031 = vand.u32 %v5029, 31
    %v5032 = vsub.s32 32, %v5031
    %v5033 = vshrl.u32 683565275, %v5032
    %v5034 = vshll.u32 683565275, %v5031
    %v5035 = vshrl.u32 2475754826, %v5032
    %v5036 = vor.u32 %v5034, %v5035
    %v5037 = vshll.u32 2475754826, %v5031
    %v5038 = vshrl.u32 2131351028, %v5032
    %v5039 = vor.u32 %v5037, %v5038
    %v5040 = vshll.u32 2131351028, %v5031
    %v5041 = vshrl.u32 2102212464, %v5032
    %v5042 = vor.u32 %v5040, %v5041
    %v5043 = vshll.u32 2102212464, %v5031
    %v5044 = vshrl.u32 920167782, %v5032
    %v5045 = vor.u32 %v5043, %v5044
    %v5046 = vshll.u32 920167782, %v5031
    %v5047 = vshrl.u32 1326507024, %v5032
    %v5048 = vor.u32 %v5046, %v5047
    %vm5049 = vcmp.lt.s32.totalorder %v5030, 1
    %vm5050 = vcmp.lt.s32.totalorder %v5030, 2
    %vm5051 = vcmp.lt.s32.totalorder %v5030, 3
    %vm5052 = vcmp.lt.s32.totalorder %v5030, 4
    %v5053 = vsel %vm5049, %v5033, %v5036
    %v5054 = vsel %vm5052, %v5042, 2102212464
    %v5055 = vsel %vm5051, %v5039, %v5054
    %v5056 = vsel %vm5050, %v5053, %v5055
    %v5057 = vsel %vm5049, %v5036, %v5039
    %v5058 = vsel %vm5052, %v5045, 920167782
    %v5059 = vsel %vm5051, %v5042, %v5058
    %v5060 = vsel %vm5050, %v5057, %v5059
    %v5061 = vsel %vm5049, %v5039, %v5042
    %v5062 = vsel %vm5052, %v5048, 1326507024
    %v5063 = vsel %vm5051, %v5045, %v5062
    %v5064 = vsel %vm5050, %v5061, %v5063
    %v5065 = vshll.u32 %v5025, 8
    %v5066 = vmul.u32.u64.compose %v5065, %v5064
    %v5067 = vextract.low.u32 %v5066
    %v5068 = vextract.high.u32 %v5066
    %v5069 = vmul.u32.u64.compose %v5065, %v5060
    %v5070 = vextract.low.u32 %v5069
    %v5071 = vextract.high.u32 %v5069
    %v5072 = vmul.u32 %v5065, %v5056
    %v5073 = vadd.s32 %v5068, %v5070
    %vm5074 = vc.u32 %v5068, %v5070
    %v5075 = vadd.s32 %v5071, 1
    %v5076 = vsel %vm5074, %v5075, %v5071
    %v5077 = vadd.s32 %v5072, %v5076
    %v5078 = vadd.s32 %v5077, 536870912
    %v5079 = vshrl.u32 %v5078, 30
    %v5080 = vshll.u32 %v5079, 30
    %v5081 = vsub.s32 %v5077, %v5080
    %vm5082 = vcmp.lt.s32.totalorder %v5081, 0
    %v5083 = vsub.s32 0, %v5081
    %v5084 = vsel %vm5082, %v5083, %v5081
    %v5085 = vclz %v5084
    %v5086 = vsub.s32 %v5085, 2
    %vm5087 = vcmp.gt.s32.totalorder 0, %v5086
    %v5088 = vsel %vm5087, 0, %v5086
    %v5089 = vsub.s32 32, %v5088
    %v5090 = vshll.u32 %v5081, %v5088
    %v5091 = vshrl.u32 %v5073, %v5089
    %v5092 = vor.u32 %v5090, %v5091
    %v5093 = vsub.s32 4294967266, %v5088
    %v5094 = vadd.s32 %v5093, 127
    %v5095 = vshll.u32 %v5094, 23
    %v5096 = vor.u32 4788187, %v5095
    %v5097 = vand.u32 2147483647, %v5096
    %v5099 = vcvt.s32.f32 %v5092
    %v5100 = vmul.f32 %v5099, %v5097
    %v5101 = vxor.u32 %v5100, 2147483648
    %v5102 = vsel %vm5019, %v5101, %v5100
    %v5103 = vsub.s32 4, %v5079
    %v5104 = vsel %vm5019, %v5103, %v5079
    %v5105 = vsel %vm5018, %v4058, %v5102
    %v5106 = vsel %vm5018, 0, %v5104
    %v5107 = vcosq.f32.pop %v5105
    %v5108 = vsinq.f32.pop %v5105
    %vm5109 = vweird.f32 %v4058
    %v5110 = vadd.s32 %v5106, 3
    %v5111 = vand.u32 %v5110, 3
    %vm5112 = vcmp.lt.s32.totalorder %v5111, 2
    %vm5113 = vcmp.eq.s32.totalorder %v5111, 0
    %v5114 = vxor.u32 %v5108, 2147483648
    %v5115 = vsel %vm5113, %v5107, %v5114
    %vm5116 = vcmp.eq.s32.totalorder %v5111, 2
    %v5117 = vxor.u32 %v5107, 2147483648
    %v5118 = vsel %vm5116, %v5117, %v5108
    %v5119 = vsel %vm5112, %v5115, %v5118
    %v5120 = vsel %vm5109, nan, %v5119
    %v5121 = vand.u32 2147483647, %v4059
    %vm5122 = vcmp.le.f32.partialorder %v5121, 0.7853982
    %vm5123 = vcmp.lt.s32.totalorder %v4059, 0
    %v5124 = vand.u32 %v4059, 2139095040
    %v5125 = vshrl.u32 %v5124, 23
    %v5126 = vsub.s32 %v5125, 127
    %v5127 = vand.u32 2147483647, %v4059
    %v5128 = vand.u32 %v5127, 8388607
    %v5129 = vor.u32 %v5128, 8388608
    %v5130 = vsub.s32 0, %v5129
    %v5131 = vadd.s32 %v5126, 1
    %vm5132 = vcmp.gt.s32.totalorder %v5131, 0
    %v5133 = vsel %vm5132, %v5131, 0
    %v5134 = vshrl.u32 %v5133, 5
    %v5135 = vand.u32 %v5133, 31
    %v5136 = vsub.s32 32, %v5135
    %v5137 = vshrl.u32 683565275, %v5136
    %v5138 = vshll.u32 683565275, %v5135
    %v5139 = vshrl.u32 2475754826, %v5136
    %v5140 = vor.u32 %v5138, %v5139
    %v5141 = vshll.u32 2475754826, %v5135
    %v5142 = vshrl.u32 2131351028, %v5136
    %v5143 = vor.u32 %v5141, %v5142
    %v5144 = vshll.u32 2131351028, %v5135
    %v5145 = vshrl.u32 2102212464, %v5136
    %v5146 = vor.u32 %v5144, %v5145
    %v5147 = vshll.u32 2102212464, %v5135
    %v5148 = vshrl.u32 920167782, %v5136
    %v5149 = vor.u32 %v5147, %v5148
    %v5150 = vshll.u32 920167782, %v5135
    %v5151 = vshrl.u32 1326507024, %v5136
    %v5152 = vor.u32 %v5150, %v5151
    %vm5153 = vcmp.lt.s32.totalorder %v5134, 1
    %vm5154 = vcmp.lt.s32.totalorder %v5134, 2
    %vm5155 = vcmp.lt.s32.totalorder %v5134, 3
    %vm5156 = vcmp.lt.s32.totalorder %v5134, 4
    %v5157 = vsel %vm5153, %v5137, %v5140
    %v5158 = vsel %vm5156, %v5146, 2102212464
    %v5159 = vsel %vm5155, %v5143, %v5158
    %v5160 = vsel %vm5154, %v5157, %v5159
    %v5161 = vsel %vm5153, %v5140, %v5143
    %v5162 = vsel %vm5156, %v5149, 920167782
    %v5163 = vsel %vm5155, %v5146, %v5162
    %v5164 = vsel %vm5154, %v5161, %v5163
    %v5165 = vsel %vm5153, %v5143, %v5146
    %v5166 = vsel %vm5156, %v5152, 1326507024
    %v5167 = vsel %vm5155, %v5149, %v5166
    %v5168 = vsel %vm5154, %v5165, %v5167
    %v5169 = vshll.u32 %v5129, 8
    %v5170 = vmul.u32.u64.compose %v5169, %v5168
    %v5171 = vextract.low.u32 %v5170
    %v5172 = vextract.high.u32 %v5170
    %v5173 = vmul.u32.u64.compose %v5169, %v5164
    %v5174 = vextract.low.u32 %v5173
    %v5175 = vextract.high.u32 %v5173
    %v5176 = vmul.u32 %v5169, %v5160
    %v5177 = vadd.s32 %v5172, %v5174
    %vm5178 = vc.u32 %v5172, %v5174
    %v5179 = vadd.s32 %v5175, 1
    %v5180 = vsel %vm5178, %v5179, %v5175
    %v5181 = vadd.s32 %v5176, %v5180
    %v5182 = vadd.s32 %v5181, 536870912
    %v5183 = vshrl.u32 %v5182, 30
    %v5184 = vshll.u32 %v5183, 30
    %v5185 = vsub.s32 %v5181, %v5184
    %vm5186 = vcmp.lt.s32.totalorder %v5185, 0
    %v5187 = vsub.s32 0, %v5185
    %v5188 = vsel %vm5186, %v5187, %v5185
    %v5189 = vclz %v5188
    %v5190 = vsub.s32 %v5189, 2
    %vm5191 = vcmp.gt.s32.totalorder 0, %v5190
    %v5192 = vsel %vm5191, 0, %v5190
    %v5193 = vsub.s32 32, %v5192
    %v5194 = vshll.u32 %v5185, %v5192
    %v5195 = vshrl.u32 %v5177, %v5193
    %v5196 = vor.u32 %v5194, %v5195
    %v5197 = vsub.s32 4294967266, %v5192
    %v5198 = vadd.s32 %v5197, 127
    %v5199 = vshll.u32 %v5198, 23
    %v5200 = vor.u32 4788187, %v5199
    %v5201 = vand.u32 2147483647, %v5200
    %v5203 = vcvt.s32.f32 %v5196
    %v5204 = vmul.f32 %v5203, %v5201
    %v5205 = vxor.u32 %v5204, 2147483648
    %v5206 = vsel %vm5123, %v5205, %v5204
    %v5207 = vsub.s32 4, %v5183
    %v5208 = vsel %vm5123, %v5207, %v5183
    %v5209 = vsel %vm5122, %v4059, %v5206
    %v5210 = vsel %vm5122, 0, %v5208
    %v5211 = vcosq.f32.pop %v5209
    %v5212 = vsinq.f32.pop %v5209
    %vm5213 = vweird.f32 %v4059
    %v5214 = vadd.s32 %v5210, 3
    %v5215 = vand.u32 %v5214, 3
    %vm5216 = vcmp.lt.s32.totalorder %v5215, 2
    %vm5217 = vcmp.eq.s32.totalorder %v5215, 0
    %v5218 = vxor.u32 %v5212, 2147483648
    %v5219 = vsel %vm5217, %v5211, %v5218
    %vm5220 = vcmp.eq.s32.totalorder %v5215, 2
    %v5221 = vxor.u32 %v5211, 2147483648
    %v5222 = vsel %vm5220, %v5221, %v5212
    %v5223 = vsel %vm5216, %v5219, %v5222
    %v5224 = vsel %vm5213, nan, %v5223
    %v5225 = vand.u32 2147483647, %v4060
    %vm5226 = vcmp.le.f32.partialorder %v5225, 0.7853982
    %vm5227 = vcmp.lt.s32.totalorder %v4060, 0
    %v5228 = vand.u32 %v4060, 2139095040
    %v5229 = vshrl.u32 %v5228, 23
    %v5230 = vsub.s32 %v5229, 127
    %v5231 = vand.u32 2147483647, %v4060
    %v5232 = vand.u32 %v5231, 8388607
    %v5233 = vor.u32 %v5232, 8388608
    %v5234 = vsub.s32 0, %v5233
    %v5235 = vadd.s32 %v5230, 1
    %vm5236 = vcmp.gt.s32.totalorder %v5235, 0
    %v5237 = vsel %vm5236, %v5235, 0
    %v5238 = vshrl.u32 %v5237, 5
    %v5239 = vand.u32 %v5237, 31
    %v5240 = vsub.s32 32, %v5239
    %v5241 = vshrl.u32 683565275, %v5240
    %v5242 = vshll.u32 683565275, %v5239
    %v5243 = vshrl.u32 2475754826, %v5240
    %v5244 = vor.u32 %v5242, %v5243
    %v5245 = vshll.u32 2475754826, %v5239
    %v5246 = vshrl.u32 2131351028, %v5240
    %v5247 = vor.u32 %v5245, %v5246
    %v5248 = vshll.u32 2131351028, %v5239
    %v5249 = vshrl.u32 2102212464, %v5240
    %v5250 = vor.u32 %v5248, %v5249
    %v5251 = vshll.u32 2102212464, %v5239
    %v5252 = vshrl.u32 920167782, %v5240
    %v5253 = vor.u32 %v5251, %v5252
    %v5254 = vshll.u32 920167782, %v5239
    %v5255 = vshrl.u32 1326507024, %v5240
    %v5256 = vor.u32 %v5254, %v5255
    %vm5257 = vcmp.lt.s32.totalorder %v5238, 1
    %vm5258 = vcmp.lt.s32.totalorder %v5238, 2
    %vm5259 = vcmp.lt.s32.totalorder %v5238, 3
    %vm5260 = vcmp.lt.s32.totalorder %v5238, 4
    %v5261 = vsel %vm5257, %v5241, %v5244
    %v5262 = vsel %vm5260, %v5250, 2102212464
    %v5263 = vsel %vm5259, %v5247, %v5262
    %v5264 = vsel %vm5258, %v5261, %v5263
    %v5265 = vsel %vm5257, %v5244, %v5247
    %v5266 = vsel %vm5260, %v5253, 920167782
    %v5267 = vsel %vm5259, %v5250, %v5266
    %v5268 = vsel %vm5258, %v5265, %v5267
    %v5269 = vsel %vm5257, %v5247, %v5250
    %v5270 = vsel %vm5260, %v5256, 1326507024
    %v5271 = vsel %vm5259, %v5253, %v5270
    %v5272 = vsel %vm5258, %v5269, %v5271
    %v5273 = vshll.u32 %v5233, 8
    %v5274 = vmul.u32.u64.compose %v5273, %v5272
    %v5275 = vextract.low.u32 %v5274
    %v5276 = vextract.high.u32 %v5274
    %v5277 = vmul.u32.u64.compose %v5273, %v5268
    %v5278 = vextract.low.u32 %v5277
    %v5279 = vextract.high.u32 %v5277
    %v5280 = vmul.u32 %v5273, %v5264
    %v5281 = vadd.s32 %v5276, %v5278
    %vm5282 = vc.u32 %v5276, %v5278
    %v5283 = vadd.s32 %v5279, 1
    %v5284 = vsel %vm5282, %v5283, %v5279
    %v5285 = vadd.s32 %v5280, %v5284
    %v5286 = vadd.s32 %v5285, 536870912
    %v5287 = vshrl.u32 %v5286, 30
    %v5288 = vshll.u32 %v5287, 30
    %v5289 = vsub.s32 %v5285, %v5288
    %vm5290 = vcmp.lt.s32.totalorder %v5289, 0
    %v5291 = vsub.s32 0, %v5289
    %v5292 = vsel %vm5290, %v5291, %v5289
    %v5293 = vclz %v5292
    %v5294 = vsub.s32 %v5293, 2
    %vm5295 = vcmp.gt.s32.totalorder 0, %v5294
    %v5296 = vsel %vm5295, 0, %v5294
    %v5297 = vsub.s32 32, %v5296
    %v5298 = vshll.u32 %v5289, %v5296
    %v5299 = vshrl.u32 %v5281, %v5297
    %v5300 = vor.u32 %v5298, %v5299
    %v5301 = vsub.s32 4294967266, %v5296
    %v5302 = vadd.s32 %v5301, 127
    %v5303 = vshll.u32 %v5302, 23
    %v5304 = vor.u32 4788187, %v5303
    %v5305 = vand.u32 2147483647, %v5304
    %v5307 = vcvt.s32.f32 %v5300
    %v5308 = vmul.f32 %v5307, %v5305
    %v5309 = vxor.u32 %v5308, 2147483648
    %v5310 = vsel %vm5227, %v5309, %v5308
    %v5311 = vsub.s32 4, %v5287
    %v5312 = vsel %vm5227, %v5311, %v5287
    %v5313 = vsel %vm5226, %v4060, %v5310
    %v5314 = vsel %vm5226, 0, %v5312
    %v5315 = vcosq.f32.pop %v5313
    %v5316 = vsinq.f32.pop %v5313
    %vm5317 = vweird.f32 %v4060
    %v5318 = vadd.s32 %v5314, 3
    %v5319 = vand.u32 %v5318, 3
    %vm5320 = vcmp.lt.s32.totalorder %v5319, 2
    %vm5321 = vcmp.eq.s32.totalorder %v5319, 0
    %v5322 = vxor.u32 %v5316, 2147483648
    %v5323 = vsel %vm5321, %v5315, %v5322
    %vm5324 = vcmp.eq.s32.totalorder %v5319, 2
    %v5325 = vxor.u32 %v5315, 2147483648
    %v5326 = vsel %vm5324, %v5325, %v5316
    %v5327 = vsel %vm5320, %v5323, %v5326
    %v5328 = vsel %vm5317, nan, %v5327
    %v5329 = vand.u32 2147483647, %v4061
    %vm5330 = vcmp.le.f32.partialorder %v5329, 0.7853982
    %vm5331 = vcmp.lt.s32.totalorder %v4061, 0
    %v5332 = vand.u32 %v4061, 2139095040
    %v5333 = vshrl.u32 %v5332, 23
    %v5334 = vsub.s32 %v5333, 127
    %v5335 = vand.u32 2147483647, %v4061
    %v5336 = vand.u32 %v5335, 8388607
    %v5337 = vor.u32 %v5336, 8388608
    %v5338 = vsub.s32 0, %v5337
    %v5339 = vadd.s32 %v5334, 1
    %vm5340 = vcmp.gt.s32.totalorder %v5339, 0
    %v5341 = vsel %vm5340, %v5339, 0
    %v5342 = vshrl.u32 %v5341, 5
    %v5343 = vand.u32 %v5341, 31
    %v5344 = vsub.s32 32, %v5343
    %v5345 = vshrl.u32 683565275, %v5344
    %v5346 = vshll.u32 683565275, %v5343
    %v5347 = vshrl.u32 2475754826, %v5344
    %v5348 = vor.u32 %v5346, %v5347
    %v5349 = vshll.u32 2475754826, %v5343
    %v5350 = vshrl.u32 2131351028, %v5344
    %v5351 = vor.u32 %v5349, %v5350
    %v5352 = vshll.u32 2131351028, %v5343
    %v5353 = vshrl.u32 2102212464, %v5344
    %v5354 = vor.u32 %v5352, %v5353
    %v5355 = vshll.u32 2102212464, %v5343
    %v5356 = vshrl.u32 920167782, %v5344
    %v5357 = vor.u32 %v5355, %v5356
    %v5358 = vshll.u32 920167782, %v5343
    %v5359 = vshrl.u32 1326507024, %v5344
    %v5360 = vor.u32 %v5358, %v5359
    %vm5361 = vcmp.lt.s32.totalorder %v5342, 1
    %vm5362 = vcmp.lt.s32.totalorder %v5342, 2
    %vm5363 = vcmp.lt.s32.totalorder %v5342, 3
    %vm5364 = vcmp.lt.s32.totalorder %v5342, 4
    %v5365 = vsel %vm5361, %v5345, %v5348
    %v5366 = vsel %vm5364, %v5354, 2102212464
    %v5367 = vsel %vm5363, %v5351, %v5366
    %v5368 = vsel %vm5362, %v5365, %v5367
    %v5369 = vsel %vm5361, %v5348, %v5351
    %v5370 = vsel %vm5364, %v5357, 920167782
    %v5371 = vsel %vm5363, %v5354, %v5370
    %v5372 = vsel %vm5362, %v5369, %v5371
    %v5373 = vsel %vm5361, %v5351, %v5354
    %v5374 = vsel %vm5364, %v5360, 1326507024
    %v5375 = vsel %vm5363, %v5357, %v5374
    %v5376 = vsel %vm5362, %v5373, %v5375
    %v5377 = vshll.u32 %v5337, 8
    %v5378 = vmul.u32.u64.compose %v5377, %v5376
    %v5379 = vextract.low.u32 %v5378
    %v5380 = vextract.high.u32 %v5378
    %v5381 = vmul.u32.u64.compose %v5377, %v5372
    %v5382 = vextract.low.u32 %v5381
    %v5383 = vextract.high.u32 %v5381
    %v5384 = vmul.u32 %v5377, %v5368
    %v5385 = vadd.s32 %v5380, %v5382
    %vm5386 = vc.u32 %v5380, %v5382
    %v5387 = vadd.s32 %v5383, 1
    %v5388 = vsel %vm5386, %v5387, %v5383
    %v5389 = vadd.s32 %v5384, %v5388
    %v5390 = vadd.s32 %v5389, 536870912
    %v5391 = vshrl.u32 %v5390, 30
    %v5392 = vshll.u32 %v5391, 30
    %v5393 = vsub.s32 %v5389, %v5392
    %vm5394 = vcmp.lt.s32.totalorder %v5393, 0
    %v5395 = vsub.s32 0, %v5393
    %v5396 = vsel %vm5394, %v5395, %v5393
    %v5397 = vclz %v5396
    %v5398 = vsub.s32 %v5397, 2
    %vm5399 = vcmp.gt.s32.totalorder 0, %v5398
    %v5400 = vsel %vm5399, 0, %v5398
    %v5401 = vsub.s32 32, %v5400
    %v5402 = vshll.u32 %v5393, %v5400
    %v5403 = vshrl.u32 %v5385, %v5401
    %v5404 = vor.u32 %v5402, %v5403
    %v5405 = vsub.s32 4294967266, %v5400
    %v5406 = vadd.s32 %v5405, 127
    %v5407 = vshll.u32 %v5406, 23
    %v5408 = vor.u32 4788187, %v5407
    %v5409 = vand.u32 2147483647, %v5408
    %v5411 = vcvt.s32.f32 %v5404
    %v5412 = vmul.f32 %v5411, %v5409
    %v5413 = vxor.u32 %v5412, 2147483648
    %v5414 = vsel %vm5331, %v5413, %v5412
    %v5415 = vsub.s32 4, %v5391
    %v5416 = vsel %vm5331, %v5415, %v5391
    %v5417 = vsel %vm5330, %v4061, %v5414
    %v5418 = vsel %vm5330, 0, %v5416
    %v5419 = vcosq.f32.pop %v5417
    %v5420 = vsinq.f32.pop %v5417
    %vm5421 = vweird.f32 %v4061
    %v5422 = vadd.s32 %v5418, 3
    %v5423 = vand.u32 %v5422, 3
    %vm5424 = vcmp.lt.s32.totalorder %v5423, 2
    %vm5425 = vcmp.eq.s32.totalorder %v5423, 0
    %v5426 = vxor.u32 %v5420, 2147483648
    %v5427 = vsel %vm5425, %v5419, %v5426
    %vm5428 = vcmp.eq.s32.totalorder %v5423, 2
    %v5429 = vxor.u32 %v5419, 2147483648
    %v5430 = vsel %vm5428, %v5429, %v5420
    %v5431 = vsel %vm5424, %v5427, %v5430
    %v5432 = vsel %vm5421, nan, %v5431
    %v5433 = vand.u32 2147483647, %v4062
    %vm5434 = vcmp.le.f32.partialorder %v5433, 0.7853982
    %vm5435 = vcmp.lt.s32.totalorder %v4062, 0
    %v5436 = vand.u32 %v4062, 2139095040
    %v5437 = vshrl.u32 %v5436, 23
    %v5438 = vsub.s32 %v5437, 127
    %v5439 = vand.u32 2147483647, %v4062
    %v5440 = vand.u32 %v5439, 8388607
    %v5441 = vor.u32 %v5440, 8388608
    %v5442 = vsub.s32 0, %v5441
    %v5443 = vadd.s32 %v5438, 1
    %vm5444 = vcmp.gt.s32.totalorder %v5443, 0
    %v5445 = vsel %vm5444, %v5443, 0
    %v5446 = vshrl.u32 %v5445, 5
    %v5447 = vand.u32 %v5445, 31
    %v5448 = vsub.s32 32, %v5447
    %v5449 = vshrl.u32 683565275, %v5448
    %v5450 = vshll.u32 683565275, %v5447
    %v5451 = vshrl.u32 2475754826, %v5448
    %v5452 = vor.u32 %v5450, %v5451
    %v5453 = vshll.u32 2475754826, %v5447
    %v5454 = vshrl.u32 2131351028, %v5448
    %v5455 = vor.u32 %v5453, %v5454
    %v5456 = vshll.u32 2131351028, %v5447
    %v5457 = vshrl.u32 2102212464, %v5448
    %v5458 = vor.u32 %v5456, %v5457
    %v5459 = vshll.u32 2102212464, %v5447
    %v5460 = vshrl.u32 920167782, %v5448
    %v5461 = vor.u32 %v5459, %v5460
    %v5462 = vshll.u32 920167782, %v5447
    %v5463 = vshrl.u32 1326507024, %v5448
    %v5464 = vor.u32 %v5462, %v5463
    %vm5465 = vcmp.lt.s32.totalorder %v5446, 1
    %vm5466 = vcmp.lt.s32.totalorder %v5446, 2
    %vm5467 = vcmp.lt.s32.totalorder %v5446, 3
    %vm5468 = vcmp.lt.s32.totalorder %v5446, 4
    %v5469 = vsel %vm5465, %v5449, %v5452
    %v5470 = vsel %vm5468, %v5458, 2102212464
    %v5471 = vsel %vm5467, %v5455, %v5470
    %v5472 = vsel %vm5466, %v5469, %v5471
    %v5473 = vsel %vm5465, %v5452, %v5455
    %v5474 = vsel %vm5468, %v5461, 920167782
    %v5475 = vsel %vm5467, %v5458, %v5474
    %v5476 = vsel %vm5466, %v5473, %v5475
    %v5477 = vsel %vm5465, %v5455, %v5458
    %v5478 = vsel %vm5468, %v5464, 1326507024
    %v5479 = vsel %vm5467, %v5461, %v5478
    %v5480 = vsel %vm5466, %v5477, %v5479
    %v5481 = vshll.u32 %v5441, 8
    %v5482 = vmul.u32.u64.compose %v5481, %v5480
    %v5483 = vextract.low.u32 %v5482
    %v5484 = vextract.high.u32 %v5482
    %v5485 = vmul.u32.u64.compose %v5481, %v5476
    %v5486 = vextract.low.u32 %v5485
    %v5487 = vextract.high.u32 %v5485
    %v5488 = vmul.u32 %v5481, %v5472
    %v5489 = vadd.s32 %v5484, %v5486
    %vm5490 = vc.u32 %v5484, %v5486
    %v5491 = vadd.s32 %v5487, 1
    %v5492 = vsel %vm5490, %v5491, %v5487
    %v5493 = vadd.s32 %v5488, %v5492
    %v5494 = vadd.s32 %v5493, 536870912
    %v5495 = vshrl.u32 %v5494, 30
    %v5496 = vshll.u32 %v5495, 30
    %v5497 = vsub.s32 %v5493, %v5496
    %vm5498 = vcmp.lt.s32.totalorder %v5497, 0
    %v5499 = vsub.s32 0, %v5497
    %v5500 = vsel %vm5498, %v5499, %v5497
    %v5501 = vclz %v5500
    %v5502 = vsub.s32 %v5501, 2
    %vm5503 = vcmp.gt.s32.totalorder 0, %v5502
    %v5504 = vsel %vm5503, 0, %v5502
    %v5505 = vsub.s32 32, %v5504
    %v5506 = vshll.u32 %v5497, %v5504
    %v5507 = vshrl.u32 %v5489, %v5505
    %v5508 = vor.u32 %v5506, %v5507
    %v5509 = vsub.s32 4294967266, %v5504
    %v5510 = vadd.s32 %v5509, 127
    %v5511 = vshll.u32 %v5510, 23
    %v5512 = vor.u32 4788187, %v5511
    %v5513 = vand.u32 2147483647, %v5512
    %v5515 = vcvt.s32.f32 %v5508
    %v5516 = vmul.f32 %v5515, %v5513
    %v5517 = vxor.u32 %v5516, 2147483648
    %v5518 = vsel %vm5435, %v5517, %v5516
    %v5519 = vsub.s32 4, %v5495
    %v5520 = vsel %vm5435, %v5519, %v5495
    %v5521 = vsel %vm5434, %v4062, %v5518
    %v5522 = vsel %vm5434, 0, %v5520
    %v5523 = vcosq.f32.pop %v5521
    %v5524 = vsinq.f32.pop %v5521
    %vm5525 = vweird.f32 %v4062
    %v5526 = vadd.s32 %v5522, 3
    %v5527 = vand.u32 %v5526, 3
    %vm5528 = vcmp.lt.s32.totalorder %v5527, 2
    %vm5529 = vcmp.eq.s32.totalorder %v5527, 0
    %v5530 = vxor.u32 %v5524, 2147483648
    %v5531 = vsel %vm5529, %v5523, %v5530
    %vm5532 = vcmp.eq.s32.totalorder %v5527, 2
    %v5533 = vxor.u32 %v5523, 2147483648
    %v5534 = vsel %vm5532, %v5533, %v5524
    %v5535 = vsel %vm5528, %v5531, %v5534
    %v5536 = vsel %vm5525, nan, %v5535
    %v5537 = vand.u32 2147483647, %v4063
    %vm5538 = vcmp.le.f32.partialorder %v5537, 0.7853982
    %vm5539 = vcmp.lt.s32.totalorder %v4063, 0
    %v5540 = vand.u32 %v4063, 2139095040
    %v5541 = vshrl.u32 %v5540, 23
    %v5542 = vsub.s32 %v5541, 127
    %v5543 = vand.u32 2147483647, %v4063
    %v5544 = vand.u32 %v5543, 8388607
    %v5545 = vor.u32 %v5544, 8388608
    %v5546 = vsub.s32 0, %v5545
    %v5547 = vadd.s32 %v5542, 1
    %vm5548 = vcmp.gt.s32.totalorder %v5547, 0
    %v5549 = vsel %vm5548, %v5547, 0
    %v5550 = vshrl.u32 %v5549, 5
    %v5551 = vand.u32 %v5549, 31
    %v5552 = vsub.s32 32, %v5551
    %v5553 = vshrl.u32 683565275, %v5552
    %v5554 = vshll.u32 683565275, %v5551
    %v5555 = vshrl.u32 2475754826, %v5552
    %v5556 = vor.u32 %v5554, %v5555
    %v5557 = vshll.u32 2475754826, %v5551
    %v5558 = vshrl.u32 2131351028, %v5552
    %v5559 = vor.u32 %v5557, %v5558
    %v5560 = vshll.u32 2131351028, %v5551
    %v5561 = vshrl.u32 2102212464, %v5552
    %v5562 = vor.u32 %v5560, %v5561
    %v5563 = vshll.u32 2102212464, %v5551
    %v5564 = vshrl.u32 920167782, %v5552
    %v5565 = vor.u32 %v5563, %v5564
    %v5566 = vshll.u32 920167782, %v5551
    %v5567 = vshrl.u32 1326507024, %v5552
    %v5568 = vor.u32 %v5566, %v5567
    %vm5569 = vcmp.lt.s32.totalorder %v5550, 1
    %vm5570 = vcmp.lt.s32.totalorder %v5550, 2
    %vm5571 = vcmp.lt.s32.totalorder %v5550, 3
    %vm5572 = vcmp.lt.s32.totalorder %v5550, 4
    %v5573 = vsel %vm5569, %v5553, %v5556
    %v5574 = vsel %vm5572, %v5562, 2102212464
    %v5575 = vsel %vm5571, %v5559, %v5574
    %v5576 = vsel %vm5570, %v5573, %v5575
    %v5577 = vsel %vm5569, %v5556, %v5559
    %v5578 = vsel %vm5572, %v5565, 920167782
    %v5579 = vsel %vm5571, %v5562, %v5578
    %v5580 = vsel %vm5570, %v5577, %v5579
    %v5581 = vsel %vm5569, %v5559, %v5562
    %v5582 = vsel %vm5572, %v5568, 1326507024
    %v5583 = vsel %vm5571, %v5565, %v5582
    %v5584 = vsel %vm5570, %v5581, %v5583
    %v5585 = vshll.u32 %v5545, 8
    %v5586 = vmul.u32.u64.compose %v5585, %v5584
    %v5587 = vextract.low.u32 %v5586
    %v5588 = vextract.high.u32 %v5586
    %v5589 = vmul.u32.u64.compose %v5585, %v5580
    %v5590 = vextract.low.u32 %v5589
    %v5591 = vextract.high.u32 %v5589
    %v5592 = vmul.u32 %v5585, %v5576
    %v5593 = vadd.s32 %v5588, %v5590
    %vm5594 = vc.u32 %v5588, %v5590
    %v5595 = vadd.s32 %v5591, 1
    %v5596 = vsel %vm5594, %v5595, %v5591
    %v5597 = vadd.s32 %v5592, %v5596
    %v5598 = vadd.s32 %v5597, 536870912
    %v5599 = vshrl.u32 %v5598, 30
    %v5600 = vshll.u32 %v5599, 30
    %v5601 = vsub.s32 %v5597, %v5600
    %vm5602 = vcmp.lt.s32.totalorder %v5601, 0
    %v5603 = vsub.s32 0, %v5601
    %v5604 = vsel %vm5602, %v5603, %v5601
    %v5605 = vclz %v5604
    %v5606 = vsub.s32 %v5605, 2
    %vm5607 = vcmp.gt.s32.totalorder 0, %v5606
    %v5608 = vsel %vm5607, 0, %v5606
    %v5609 = vsub.s32 32, %v5608
    %v5610 = vshll.u32 %v5601, %v5608
    %v5611 = vshrl.u32 %v5593, %v5609
    %v5612 = vor.u32 %v5610, %v5611
    %v5613 = vsub.s32 4294967266, %v5608
    %v5614 = vadd.s32 %v5613, 127
    %v5615 = vshll.u32 %v5614, 23
    %v5616 = vor.u32 4788187, %v5615
    %v5617 = vand.u32 2147483647, %v5616
    %v5619 = vcvt.s32.f32 %v5612
    %v5620 = vmul.f32 %v5619, %v5617
    %v5621 = vxor.u32 %v5620, 2147483648
    %v5622 = vsel %vm5539, %v5621, %v5620
    %v5623 = vsub.s32 4, %v5599
    %v5624 = vsel %vm5539, %v5623, %v5599
    %v5625 = vsel %vm5538, %v4063, %v5622
    %v5626 = vsel %vm5538, 0, %v5624
    %v5627 = vcosq.f32.pop %v5625
    %v5628 = vsinq.f32.pop %v5625
    %vm5629 = vweird.f32 %v4063
    %v5630 = vadd.s32 %v5626, 3
    %v5631 = vand.u32 %v5630, 3
    %vm5632 = vcmp.lt.s32.totalorder %v5631, 2
    %vm5633 = vcmp.eq.s32.totalorder %v5631, 0
    %v5634 = vxor.u32 %v5628, 2147483648
    %v5635 = vsel %vm5633, %v5627, %v5634
    %vm5636 = vcmp.eq.s32.totalorder %v5631, 2
    %v5637 = vxor.u32 %v5627, 2147483648
    %v5638 = vsel %vm5636, %v5637, %v5628
    %v5639 = vsel %vm5632, %v5635, %v5638
    %v5640 = vsel %vm5629, nan, %v5639
    %v5641 = vand.u32 2147483647, %v4064
    %vm5642 = vcmp.le.f32.partialorder %v5641, 0.7853982
    %vm5643 = vcmp.lt.s32.totalorder %v4064, 0
    %v5644 = vand.u32 %v4064, 2139095040
    %v5645 = vshrl.u32 %v5644, 23
    %v5646 = vsub.s32 %v5645, 127
    %v5647 = vand.u32 2147483647, %v4064
    %v5648 = vand.u32 %v5647, 8388607
    %v5649 = vor.u32 %v5648, 8388608
    %v5650 = vsub.s32 0, %v5649
    %v5651 = vadd.s32 %v5646, 1
    %vm5652 = vcmp.gt.s32.totalorder %v5651, 0
    %v5653 = vsel %vm5652, %v5651, 0
    %v5654 = vshrl.u32 %v5653, 5
    %v5655 = vand.u32 %v5653, 31
    %v5656 = vsub.s32 32, %v5655
    %v5657 = vshrl.u32 683565275, %v5656
    %v5658 = vshll.u32 683565275, %v5655
    %v5659 = vshrl.u32 2475754826, %v5656
    %v5660 = vor.u32 %v5658, %v5659
    %v5661 = vshll.u32 2475754826, %v5655
    %v5662 = vshrl.u32 2131351028, %v5656
    %v5663 = vor.u32 %v5661, %v5662
    %v5664 = vshll.u32 2131351028, %v5655
    %v5665 = vshrl.u32 2102212464, %v5656
    %v5666 = vor.u32 %v5664, %v5665
    %v5667 = vshll.u32 2102212464, %v5655
    %v5668 = vshrl.u32 920167782, %v5656
    %v5669 = vor.u32 %v5667, %v5668
    %v5670 = vshll.u32 920167782, %v5655
    %v5671 = vshrl.u32 1326507024, %v5656
    %v5672 = vor.u32 %v5670, %v5671
    %vm5673 = vcmp.lt.s32.totalorder %v5654, 1
    %vm5674 = vcmp.lt.s32.totalorder %v5654, 2
    %vm5675 = vcmp.lt.s32.totalorder %v5654, 3
    %vm5676 = vcmp.lt.s32.totalorder %v5654, 4
    %v5677 = vsel %vm5673, %v5657, %v5660
    %v5678 = vsel %vm5676, %v5666, 2102212464
    %v5679 = vsel %vm5675, %v5663, %v5678
    %v5680 = vsel %vm5674, %v5677, %v5679
    %v5681 = vsel %vm5673, %v5660, %v5663
    %v5682 = vsel %vm5676, %v5669, 920167782
    %v5683 = vsel %vm5675, %v5666, %v5682
    %v5684 = vsel %vm5674, %v5681, %v5683
    %v5685 = vsel %vm5673, %v5663, %v5666
    %v5686 = vsel %vm5676, %v5672, 1326507024
    %v5687 = vsel %vm5675, %v5669, %v5686
    %v5688 = vsel %vm5674, %v5685, %v5687
    %v5689 = vshll.u32 %v5649, 8
    %v5690 = vmul.u32.u64.compose %v5689, %v5688
    %v5691 = vextract.low.u32 %v5690
    %v5692 = vextract.high.u32 %v5690
    %v5693 = vmul.u32.u64.compose %v5689, %v5684
    %v5694 = vextract.low.u32 %v5693
    %v5695 = vextract.high.u32 %v5693
    %v5696 = vmul.u32 %v5689, %v5680
    %v5697 = vadd.s32 %v5692, %v5694
    %vm5698 = vc.u32 %v5692, %v5694
    %v5699 = vadd.s32 %v5695, 1
    %v5700 = vsel %vm5698, %v5699, %v5695
    %v5701 = vadd.s32 %v5696, %v5700
    %v5702 = vadd.s32 %v5701, 536870912
    %v5703 = vshrl.u32 %v5702, 30
    %v5704 = vshll.u32 %v5703, 30
    %v5705 = vsub.s32 %v5701, %v5704
    %vm5706 = vcmp.lt.s32.totalorder %v5705, 0
    %v5707 = vsub.s32 0, %v5705
    %v5708 = vsel %vm5706, %v5707, %v5705
    %v5709 = vclz %v5708
    %v5710 = vsub.s32 %v5709, 2
    %vm5711 = vcmp.gt.s32.totalorder 0, %v5710
    %v5712 = vsel %vm5711, 0, %v5710
    %v5713 = vsub.s32 32, %v5712
    %v5714 = vshll.u32 %v5705, %v5712
    %v5715 = vshrl.u32 %v5697, %v5713
    %v5716 = vor.u32 %v5714, %v5715
    %v5717 = vsub.s32 4294967266, %v5712
    %v5718 = vadd.s32 %v5717, 127
    %v5719 = vshll.u32 %v5718, 23
    %v5720 = vor.u32 4788187, %v5719
    %v5721 = vand.u32 2147483647, %v5720
    %v5723 = vcvt.s32.f32 %v5716
    %v5724 = vmul.f32 %v5723, %v5721
    %v5725 = vxor.u32 %v5724, 2147483648
    %v5726 = vsel %vm5643, %v5725, %v5724
    %v5727 = vsub.s32 4, %v5703
    %v5728 = vsel %vm5643, %v5727, %v5703
    %v5729 = vsel %vm5642, %v4064, %v5726
    %v5730 = vsel %vm5642, 0, %v5728
    %v5731 = vcosq.f32.pop %v5729
    %v5732 = vsinq.f32.pop %v5729
    %vm5733 = vweird.f32 %v4064
    %v5734 = vadd.s32 %v5730, 3
    %v5735 = vand.u32 %v5734, 3
    %vm5736 = vcmp.lt.s32.totalorder %v5735, 2
    %vm5737 = vcmp.eq.s32.totalorder %v5735, 0
    %v5738 = vxor.u32 %v5732, 2147483648
    %v5739 = vsel %vm5737, %v5731, %v5738
    %vm5740 = vcmp.eq.s32.totalorder %v5735, 2
    %v5741 = vxor.u32 %v5731, 2147483648
    %v5742 = vsel %vm5740, %v5741, %v5732
    %v5743 = vsel %vm5736, %v5739, %v5742
    %v5744 = vsel %vm5733, nan, %v5743
    %v5745 = vand.u32 2147483647, %v4065
    %vm5746 = vcmp.le.f32.partialorder %v5745, 0.7853982
    %vm5747 = vcmp.lt.s32.totalorder %v4065, 0
    %v5748 = vand.u32 %v4065, 2139095040
    %v5749 = vshrl.u32 %v5748, 23
    %v5750 = vsub.s32 %v5749, 127
    %v5751 = vand.u32 2147483647, %v4065
    %v5752 = vand.u32 %v5751, 8388607
    %v5753 = vor.u32 %v5752, 8388608
    %v5754 = vsub.s32 0, %v5753
    %v5755 = vadd.s32 %v5750, 1
    %vm5756 = vcmp.gt.s32.totalorder %v5755, 0
    %v5757 = vsel %vm5756, %v5755, 0
    %v5758 = vshrl.u32 %v5757, 5
    %v5759 = vand.u32 %v5757, 31
    %v5760 = vsub.s32 32, %v5759
    %v5761 = vshrl.u32 683565275, %v5760
    %v5762 = vshll.u32 683565275, %v5759
    %v5763 = vshrl.u32 2475754826, %v5760
    %v5764 = vor.u32 %v5762, %v5763
    %v5765 = vshll.u32 2475754826, %v5759
    %v5766 = vshrl.u32 2131351028, %v5760
    %v5767 = vor.u32 %v5765, %v5766
    %v5768 = vshll.u32 2131351028, %v5759
    %v5769 = vshrl.u32 2102212464, %v5760
    %v5770 = vor.u32 %v5768, %v5769
    %v5771 = vshll.u32 2102212464, %v5759
    %v5772 = vshrl.u32 920167782, %v5760
    %v5773 = vor.u32 %v5771, %v5772
    %v5774 = vshll.u32 920167782, %v5759
    %v5775 = vshrl.u32 1326507024, %v5760
    %v5776 = vor.u32 %v5774, %v5775
    %vm5777 = vcmp.lt.s32.totalorder %v5758, 1
    %vm5778 = vcmp.lt.s32.totalorder %v5758, 2
    %vm5779 = vcmp.lt.s32.totalorder %v5758, 3
    %vm5780 = vcmp.lt.s32.totalorder %v5758, 4
    %v5781 = vsel %vm5777, %v5761, %v5764
    %v5782 = vsel %vm5780, %v5770, 2102212464
    %v5783 = vsel %vm5779, %v5767, %v5782
    %v5784 = vsel %vm5778, %v5781, %v5783
    %v5785 = vsel %vm5777, %v5764, %v5767
    %v5786 = vsel %vm5780, %v5773, 920167782
    %v5787 = vsel %vm5779, %v5770, %v5786
    %v5788 = vsel %vm5778, %v5785, %v5787
    %v5789 = vsel %vm5777, %v5767, %v5770
    %v5790 = vsel %vm5780, %v5776, 1326507024
    %v5791 = vsel %vm5779, %v5773, %v5790
    %v5792 = vsel %vm5778, %v5789, %v5791
    %v5793 = vshll.u32 %v5753, 8
    %v5794 = vmul.u32.u64.compose %v5793, %v5792
    %v5795 = vextract.low.u32 %v5794
    %v5796 = vextract.high.u32 %v5794
    %v5797 = vmul.u32.u64.compose %v5793, %v5788
    %v5798 = vextract.low.u32 %v5797
    %v5799 = vextract.high.u32 %v5797
    %v5800 = vmul.u32 %v5793, %v5784
    %v5801 = vadd.s32 %v5796, %v5798
    %vm5802 = vc.u32 %v5796, %v5798
    %v5803 = vadd.s32 %v5799, 1
    %v5804 = vsel %vm5802, %v5803, %v5799
    %v5805 = vadd.s32 %v5800, %v5804
    %v5806 = vadd.s32 %v5805, 536870912
    %v5807 = vshrl.u32 %v5806, 30
    %v5808 = vshll.u32 %v5807, 30
    %v5809 = vsub.s32 %v5805, %v5808
    %vm5810 = vcmp.lt.s32.totalorder %v5809, 0
    %v5811 = vsub.s32 0, %v5809
    %v5812 = vsel %vm5810, %v5811, %v5809
    %v5813 = vclz %v5812
    %v5814 = vsub.s32 %v5813, 2
    %vm5815 = vcmp.gt.s32.totalorder 0, %v5814
    %v5816 = vsel %vm5815, 0, %v5814
    %v5817 = vsub.s32 32, %v5816
    %v5818 = vshll.u32 %v5809, %v5816
    %v5819 = vshrl.u32 %v5801, %v5817
    %v5820 = vor.u32 %v5818, %v5819
    %v5821 = vsub.s32 4294967266, %v5816
    %v5822 = vadd.s32 %v5821, 127
    %v5823 = vshll.u32 %v5822, 23
    %v5824 = vor.u32 4788187, %v5823
    %v5825 = vand.u32 2147483647, %v5824
    %v5827 = vcvt.s32.f32 %v5820
    %v5828 = vmul.f32 %v5827, %v5825
    %v5829 = vxor.u32 %v5828, 2147483648
    %v5830 = vsel %vm5747, %v5829, %v5828
    %v5831 = vsub.s32 4, %v5807
    %v5832 = vsel %vm5747, %v5831, %v5807
    %v5833 = vsel %vm5746, %v4065, %v5830
    %v5834 = vsel %vm5746, 0, %v5832
    %v5835 = vcosq.f32.pop %v5833
    %v5836 = vsinq.f32.pop %v5833
    %vm5837 = vweird.f32 %v4065
    %v5838 = vadd.s32 %v5834, 3
    %v5839 = vand.u32 %v5838, 3
    %vm5840 = vcmp.lt.s32.totalorder %v5839, 2
    %vm5841 = vcmp.eq.s32.totalorder %v5839, 0
    %v5842 = vxor.u32 %v5836, 2147483648
    %v5843 = vsel %vm5841, %v5835, %v5842
    %vm5844 = vcmp.eq.s32.totalorder %v5839, 2
    %v5845 = vxor.u32 %v5835, 2147483648
    %v5846 = vsel %vm5844, %v5845, %v5836
    %v5847 = vsel %vm5840, %v5843, %v5846
    %v5848 = vsel %vm5837, nan, %v5847
    %v5849 = vand.u32 2147483647, %v4066
    %vm5850 = vcmp.le.f32.partialorder %v5849, 0.7853982
    %vm5851 = vcmp.lt.s32.totalorder %v4066, 0
    %v5852 = vand.u32 %v4066, 2139095040
    %v5853 = vshrl.u32 %v5852, 23
    %v5854 = vsub.s32 %v5853, 127
    %v5855 = vand.u32 2147483647, %v4066
    %v5856 = vand.u32 %v5855, 8388607
    %v5857 = vor.u32 %v5856, 8388608
    %v5858 = vsub.s32 0, %v5857
    %v5859 = vadd.s32 %v5854, 1
    %vm5860 = vcmp.gt.s32.totalorder %v5859, 0
    %v5861 = vsel %vm5860, %v5859, 0
    %v5862 = vshrl.u32 %v5861, 5
    %v5863 = vand.u32 %v5861, 31
    %v5864 = vsub.s32 32, %v5863
    %v5865 = vshrl.u32 683565275, %v5864
    %v5866 = vshll.u32 683565275, %v5863
    %v5867 = vshrl.u32 2475754826, %v5864
    %v5868 = vor.u32 %v5866, %v5867
    %v5869 = vshll.u32 2475754826, %v5863
    %v5870 = vshrl.u32 2131351028, %v5864
    %v5871 = vor.u32 %v5869, %v5870
    %v5872 = vshll.u32 2131351028, %v5863
    %v5873 = vshrl.u32 2102212464, %v5864
    %v5874 = vor.u32 %v5872, %v5873
    %v5875 = vshll.u32 2102212464, %v5863
    %v5876 = vshrl.u32 920167782, %v5864
    %v5877 = vor.u32 %v5875, %v5876
    %v5878 = vshll.u32 920167782, %v5863
    %v5879 = vshrl.u32 1326507024, %v5864
    %v5880 = vor.u32 %v5878, %v5879
    %vm5881 = vcmp.lt.s32.totalorder %v5862, 1
    %vm5882 = vcmp.lt.s32.totalorder %v5862, 2
    %vm5883 = vcmp.lt.s32.totalorder %v5862, 3
    %vm5884 = vcmp.lt.s32.totalorder %v5862, 4
    %v5885 = vsel %vm5881, %v5865, %v5868
    %v5886 = vsel %vm5884, %v5874, 2102212464
    %v5887 = vsel %vm5883, %v5871, %v5886
    %v5888 = vsel %vm5882, %v5885, %v5887
    %v5889 = vsel %vm5881, %v5868, %v5871
    %v5890 = vsel %vm5884, %v5877, 920167782
    %v5891 = vsel %vm5883, %v5874, %v5890
    %v5892 = vsel %vm5882, %v5889, %v5891
    %v5893 = vsel %vm5881, %v5871, %v5874
    %v5894 = vsel %vm5884, %v5880, 1326507024
    %v5895 = vsel %vm5883, %v5877, %v5894
    %v5896 = vsel %vm5882, %v5893, %v5895
    %v5897 = vshll.u32 %v5857, 8
    %v5898 = vmul.u32.u64.compose %v5897, %v5896
    %v5899 = vextract.low.u32 %v5898
    %v5900 = vextract.high.u32 %v5898
    %v5901 = vmul.u32.u64.compose %v5897, %v5892
    %v5902 = vextract.low.u32 %v5901
    %v5903 = vextract.high.u32 %v5901
    %v5904 = vmul.u32 %v5897, %v5888
    %v5905 = vadd.s32 %v5900, %v5902
    %vm5906 = vc.u32 %v5900, %v5902
    %v5907 = vadd.s32 %v5903, 1
    %v5908 = vsel %vm5906, %v5907, %v5903
    %v5909 = vadd.s32 %v5904, %v5908
    %v5910 = vadd.s32 %v5909, 536870912
    %v5911 = vshrl.u32 %v5910, 30
    %v5912 = vshll.u32 %v5911, 30
    %v5913 = vsub.s32 %v5909, %v5912
    %vm5914 = vcmp.lt.s32.totalorder %v5913, 0
    %v5915 = vsub.s32 0, %v5913
    %v5916 = vsel %vm5914, %v5915, %v5913
    %v5917 = vclz %v5916
    %v5918 = vsub.s32 %v5917, 2
    %vm5919 = vcmp.gt.s32.totalorder 0, %v5918
    %v5920 = vsel %vm5919, 0, %v5918
    %v5921 = vsub.s32 32, %v5920
    %v5922 = vshll.u32 %v5913, %v5920
    %v5923 = vshrl.u32 %v5905, %v5921
    %v5924 = vor.u32 %v5922, %v5923
    %v5925 = vsub.s32 4294967266, %v5920
    %v5926 = vadd.s32 %v5925, 127
    %v5927 = vshll.u32 %v5926, 23
    %v5928 = vor.u32 4788187, %v5927
    %v5929 = vand.u32 2147483647, %v5928
    %v5931 = vcvt.s32.f32 %v5924
    %v5932 = vmul.f32 %v5931, %v5929
    %v5933 = vxor.u32 %v5932, 2147483648
    %v5934 = vsel %vm5851, %v5933, %v5932
    %v5935 = vsub.s32 4, %v5911
    %v5936 = vsel %vm5851, %v5935, %v5911
    %v5937 = vsel %vm5850, %v4066, %v5934
    %v5938 = vsel %vm5850, 0, %v5936
    %v5939 = vcosq.f32.pop %v5937
    %v5940 = vsinq.f32.pop %v5937
    %vm5941 = vweird.f32 %v4066
    %v5942 = vadd.s32 %v5938, 3
    %v5943 = vand.u32 %v5942, 3
    %vm5944 = vcmp.lt.s32.totalorder %v5943, 2
    %vm5945 = vcmp.eq.s32.totalorder %v5943, 0
    %v5946 = vxor.u32 %v5940, 2147483648
    %v5947 = vsel %vm5945, %v5939, %v5946
    %vm5948 = vcmp.eq.s32.totalorder %v5943, 2
    %v5949 = vxor.u32 %v5939, 2147483648
    %v5950 = vsel %vm5948, %v5949, %v5940
    %v5951 = vsel %vm5944, %v5947, %v5950
    %v5952 = vsel %vm5941, nan, %v5951
    %v5953 = vand.u32 2147483647, %v4067
    %vm5954 = vcmp.le.f32.partialorder %v5953, 0.7853982
    %vm5955 = vcmp.lt.s32.totalorder %v4067, 0
    %v5956 = vand.u32 %v4067, 2139095040
    %v5957 = vshrl.u32 %v5956, 23
    %v5958 = vsub.s32 %v5957, 127
    %v5959 = vand.u32 2147483647, %v4067
    %v5960 = vand.u32 %v5959, 8388607
    %v5961 = vor.u32 %v5960, 8388608
    %v5962 = vsub.s32 0, %v5961
    %v5963 = vadd.s32 %v5958, 1
    %vm5964 = vcmp.gt.s32.totalorder %v5963, 0
    %v5965 = vsel %vm5964, %v5963, 0
    %v5966 = vshrl.u32 %v5965, 5
    %v5967 = vand.u32 %v5965, 31
    %v5968 = vsub.s32 32, %v5967
    %v5969 = vshrl.u32 683565275, %v5968
    %v5970 = vshll.u32 683565275, %v5967
    %v5971 = vshrl.u32 2475754826, %v5968
    %v5972 = vor.u32 %v5970, %v5971
    %v5973 = vshll.u32 2475754826, %v5967
    %v5974 = vshrl.u32 2131351028, %v5968
    %v5975 = vor.u32 %v5973, %v5974
    %v5976 = vshll.u32 2131351028, %v5967
    %v5977 = vshrl.u32 2102212464, %v5968
    %v5978 = vor.u32 %v5976, %v5977
    %v5979 = vshll.u32 2102212464, %v5967
    %v5980 = vshrl.u32 920167782, %v5968
    %v5981 = vor.u32 %v5979, %v5980
    %v5982 = vshll.u32 920167782, %v5967
    %v5983 = vshrl.u32 1326507024, %v5968
    %v5984 = vor.u32 %v5982, %v5983
    %vm5985 = vcmp.lt.s32.totalorder %v5966, 1
    %vm5986 = vcmp.lt.s32.totalorder %v5966, 2
    %vm5987 = vcmp.lt.s32.totalorder %v5966, 3
    %vm5988 = vcmp.lt.s32.totalorder %v5966, 4
    %v5989 = vsel %vm5985, %v5969, %v5972
    %v5990 = vsel %vm5988, %v5978, 2102212464
    %v5991 = vsel %vm5987, %v5975, %v5990
    %v5992 = vsel %vm5986, %v5989, %v5991
    %v5993 = vsel %vm5985, %v5972, %v5975
    %v5994 = vsel %vm5988, %v5981, 920167782
    %v5995 = vsel %vm5987, %v5978, %v5994
    %v5996 = vsel %vm5986, %v5993, %v5995
    %v5997 = vsel %vm5985, %v5975, %v5978
    %v5998 = vsel %vm5988, %v5984, 1326507024
    %v5999 = vsel %vm5987, %v5981, %v5998
    %v6000 = vsel %vm5986, %v5997, %v5999
    %v6001 = vshll.u32 %v5961, 8
    %v6002 = vmul.u32.u64.compose %v6001, %v6000
    %v6003 = vextract.low.u32 %v6002
    %v6004 = vextract.high.u32 %v6002
    %v6005 = vmul.u32.u64.compose %v6001, %v5996
    %v6006 = vextract.low.u32 %v6005
    %v6007 = vextract.high.u32 %v6005
    %v6008 = vmul.u32 %v6001, %v5992
    %v6009 = vadd.s32 %v6004, %v6006
    %vm6010 = vc.u32 %v6004, %v6006
    %v6011 = vadd.s32 %v6007, 1
    %v6012 = vsel %vm6010, %v6011, %v6007
    %v6013 = vadd.s32 %v6008, %v6012
    %v6014 = vadd.s32 %v6013, 536870912
    %v6015 = vshrl.u32 %v6014, 30
    %v6016 = vshll.u32 %v6015, 30
    %v6017 = vsub.s32 %v6013, %v6016
    %vm6018 = vcmp.lt.s32.totalorder %v6017, 0
    %v6019 = vsub.s32 0, %v6017
    %v6020 = vsel %vm6018, %v6019, %v6017
    %v6021 = vclz %v6020
    %v6022 = vsub.s32 %v6021, 2
    %vm6023 = vcmp.gt.s32.totalorder 0, %v6022
    %v6024 = vsel %vm6023, 0, %v6022
    %v6025 = vsub.s32 32, %v6024
    %v6026 = vshll.u32 %v6017, %v6024
    %v6027 = vshrl.u32 %v6009, %v6025
    %v6028 = vor.u32 %v6026, %v6027
    %v6029 = vsub.s32 4294967266, %v6024
    %v6030 = vadd.s32 %v6029, 127
    %v6031 = vshll.u32 %v6030, 23
    %v6032 = vor.u32 4788187, %v6031
    %v6033 = vand.u32 2147483647, %v6032
    %v6035 = vcvt.s32.f32 %v6028
    %v6036 = vmul.f32 %v6035, %v6033
    %v6037 = vxor.u32 %v6036, 2147483648
    %v6038 = vsel %vm5955, %v6037, %v6036
    %v6039 = vsub.s32 4, %v6015
    %v6040 = vsel %vm5955, %v6039, %v6015
    %v6041 = vsel %vm5954, %v4067, %v6038
    %v6042 = vsel %vm5954, 0, %v6040
    %v6043 = vcosq.f32.pop %v6041
    %v6044 = vsinq.f32.pop %v6041
    %vm6045 = vweird.f32 %v4067
    %v6046 = vadd.s32 %v6042, 3
    %v6047 = vand.u32 %v6046, 3
    %vm6048 = vcmp.lt.s32.totalorder %v6047, 2
    %vm6049 = vcmp.eq.s32.totalorder %v6047, 0
    %v6050 = vxor.u32 %v6044, 2147483648
    %v6051 = vsel %vm6049, %v6043, %v6050
    %vm6052 = vcmp.eq.s32.totalorder %v6047, 2
    %v6053 = vxor.u32 %v6043, 2147483648
    %v6054 = vsel %vm6052, %v6053, %v6044
    %v6055 = vsel %vm6048, %v6051, %v6054
    %v6056 = vsel %vm6045, nan, %v6055
    %v6057 = vand.u32 2147483647, %v4068
    %vm6058 = vcmp.le.f32.partialorder %v6057, 0.7853982
    %vm6059 = vcmp.lt.s32.totalorder %v4068, 0
    %v6060 = vand.u32 %v4068, 2139095040
    %v6061 = vshrl.u32 %v6060, 23
    %v6062 = vsub.s32 %v6061, 127
    %v6063 = vand.u32 2147483647, %v4068
    %v6064 = vand.u32 %v6063, 8388607
    %v6065 = vor.u32 %v6064, 8388608
    %v6066 = vsub.s32 0, %v6065
    %v6067 = vadd.s32 %v6062, 1
    %vm6068 = vcmp.gt.s32.totalorder %v6067, 0
    %v6069 = vsel %vm6068, %v6067, 0
    %v6070 = vshrl.u32 %v6069, 5
    %v6071 = vand.u32 %v6069, 31
    %v6072 = vsub.s32 32, %v6071
    %v6073 = vshrl.u32 683565275, %v6072
    %v6074 = vshll.u32 683565275, %v6071
    %v6075 = vshrl.u32 2475754826, %v6072
    %v6076 = vor.u32 %v6074, %v6075
    %v6077 = vshll.u32 2475754826, %v6071
    %v6078 = vshrl.u32 2131351028, %v6072
    %v6079 = vor.u32 %v6077, %v6078
    %v6080 = vshll.u32 2131351028, %v6071
    %v6081 = vshrl.u32 2102212464, %v6072
    %v6082 = vor.u32 %v6080, %v6081
    %v6083 = vshll.u32 2102212464, %v6071
    %v6084 = vshrl.u32 920167782, %v6072
    %v6085 = vor.u32 %v6083, %v6084
    %v6086 = vshll.u32 920167782, %v6071
    %v6087 = vshrl.u32 1326507024, %v6072
    %v6088 = vor.u32 %v6086, %v6087
    %vm6089 = vcmp.lt.s32.totalorder %v6070, 1
    %vm6090 = vcmp.lt.s32.totalorder %v6070, 2
    %vm6091 = vcmp.lt.s32.totalorder %v6070, 3
    %vm6092 = vcmp.lt.s32.totalorder %v6070, 4
    %v6093 = vsel %vm6089, %v6073, %v6076
    %v6094 = vsel %vm6092, %v6082, 2102212464
    %v6095 = vsel %vm6091, %v6079, %v6094
    %v6096 = vsel %vm6090, %v6093, %v6095
    %v6097 = vsel %vm6089, %v6076, %v6079
    %v6098 = vsel %vm6092, %v6085, 920167782
    %v6099 = vsel %vm6091, %v6082, %v6098
    %v6100 = vsel %vm6090, %v6097, %v6099
    %v6101 = vsel %vm6089, %v6079, %v6082
    %v6102 = vsel %vm6092, %v6088, 1326507024
    %v6103 = vsel %vm6091, %v6085, %v6102
    %v6104 = vsel %vm6090, %v6101, %v6103
    %v6105 = vshll.u32 %v6065, 8
    %v6106 = vmul.u32.u64.compose %v6105, %v6104
    %v6107 = vextract.low.u32 %v6106
    %v6108 = vextract.high.u32 %v6106
    %v6109 = vmul.u32.u64.compose %v6105, %v6100
    %v6110 = vextract.low.u32 %v6109
    %v6111 = vextract.high.u32 %v6109
    %v6112 = vmul.u32 %v6105, %v6096
    %v6113 = vadd.s32 %v6108, %v6110
    %vm6114 = vc.u32 %v6108, %v6110
    %v6115 = vadd.s32 %v6111, 1
    %v6116 = vsel %vm6114, %v6115, %v6111
    %v6117 = vadd.s32 %v6112, %v6116
    %v6118 = vadd.s32 %v6117, 536870912
    %v6119 = vshrl.u32 %v6118, 30
    %v6120 = vshll.u32 %v6119, 30
    %v6121 = vsub.s32 %v6117, %v6120
    %vm6122 = vcmp.lt.s32.totalorder %v6121, 0
    %v6123 = vsub.s32 0, %v6121
    %v6124 = vsel %vm6122, %v6123, %v6121
    %v6125 = vclz %v6124
    %v6126 = vsub.s32 %v6125, 2
    %vm6127 = vcmp.gt.s32.totalorder 0, %v6126
    %v6128 = vsel %vm6127, 0, %v6126
    %v6129 = vsub.s32 32, %v6128
    %v6130 = vshll.u32 %v6121, %v6128
    %v6131 = vshrl.u32 %v6113, %v6129
    %v6132 = vor.u32 %v6130, %v6131
    %v6133 = vsub.s32 4294967266, %v6128
    %v6134 = vadd.s32 %v6133, 127
    %v6135 = vshll.u32 %v6134, 23
    %v6136 = vor.u32 4788187, %v6135
    %v6137 = vand.u32 2147483647, %v6136
    %v6139 = vcvt.s32.f32 %v6132
    %v6140 = vmul.f32 %v6139, %v6137
    %v6141 = vxor.u32 %v6140, 2147483648
    %v6142 = vsel %vm6059, %v6141, %v6140
    %v6143 = vsub.s32 4, %v6119
    %v6144 = vsel %vm6059, %v6143, %v6119
    %v6145 = vsel %vm6058, %v4068, %v6142
    %v6146 = vsel %vm6058, 0, %v6144
    %v6147 = vcosq.f32.pop %v6145
    %v6148 = vsinq.f32.pop %v6145
    %vm6149 = vweird.f32 %v4068
    %v6150 = vadd.s32 %v6146, 3
    %v6151 = vand.u32 %v6150, 3
    %vm6152 = vcmp.lt.s32.totalorder %v6151, 2
    %vm6153 = vcmp.eq.s32.totalorder %v6151, 0
    %v6154 = vxor.u32 %v6148, 2147483648
    %v6155 = vsel %vm6153, %v6147, %v6154
    %vm6156 = vcmp.eq.s32.totalorder %v6151, 2
    %v6157 = vxor.u32 %v6147, 2147483648
    %v6158 = vsel %vm6156, %v6157, %v6148
    %v6159 = vsel %vm6152, %v6155, %v6158
    %v6160 = vsel %vm6149, nan, %v6159
    %v6161 = vand.u32 2147483647, %v4069
    %vm6162 = vcmp.le.f32.partialorder %v6161, 0.7853982
    %vm6163 = vcmp.lt.s32.totalorder %v4069, 0
    %v6164 = vand.u32 %v4069, 2139095040
    %v6165 = vshrl.u32 %v6164, 23
    %v6166 = vsub.s32 %v6165, 127
    %v6167 = vand.u32 2147483647, %v4069
    %v6168 = vand.u32 %v6167, 8388607
    %v6169 = vor.u32 %v6168, 8388608
    %v6170 = vsub.s32 0, %v6169
    %v6171 = vadd.s32 %v6166, 1
    %vm6172 = vcmp.gt.s32.totalorder %v6171, 0
    %v6173 = vsel %vm6172, %v6171, 0
    %v6174 = vshrl.u32 %v6173, 5
    %v6175 = vand.u32 %v6173, 31
    %v6176 = vsub.s32 32, %v6175
    %v6177 = vshrl.u32 683565275, %v6176
    %v6178 = vshll.u32 683565275, %v6175
    %v6179 = vshrl.u32 2475754826, %v6176
    %v6180 = vor.u32 %v6178, %v6179
    %v6181 = vshll.u32 2475754826, %v6175
    %v6182 = vshrl.u32 2131351028, %v6176
    %v6183 = vor.u32 %v6181, %v6182
    %v6184 = vshll.u32 2131351028, %v6175
    %v6185 = vshrl.u32 2102212464, %v6176
    %v6186 = vor.u32 %v6184, %v6185
    %v6187 = vshll.u32 2102212464, %v6175
    %v6188 = vshrl.u32 920167782, %v6176
    %v6189 = vor.u32 %v6187, %v6188
    %v6190 = vshll.u32 920167782, %v6175
    %v6191 = vshrl.u32 1326507024, %v6176
    %v6192 = vor.u32 %v6190, %v6191
    %vm6193 = vcmp.lt.s32.totalorder %v6174, 1
    %vm6194 = vcmp.lt.s32.totalorder %v6174, 2
    %vm6195 = vcmp.lt.s32.totalorder %v6174, 3
    %vm6196 = vcmp.lt.s32.totalorder %v6174, 4
    %v6197 = vsel %vm6193, %v6177, %v6180
    %v6198 = vsel %vm6196, %v6186, 2102212464
    %v6199 = vsel %vm6195, %v6183, %v6198
    %v6200 = vsel %vm6194, %v6197, %v6199
    %v6201 = vsel %vm6193, %v6180, %v6183
    %v6202 = vsel %vm6196, %v6189, 920167782
    %v6203 = vsel %vm6195, %v6186, %v6202
    %v6204 = vsel %vm6194, %v6201, %v6203
    %v6205 = vsel %vm6193, %v6183, %v6186
    %v6206 = vsel %vm6196, %v6192, 1326507024
    %v6207 = vsel %vm6195, %v6189, %v6206
    %v6208 = vsel %vm6194, %v6205, %v6207
    %v6209 = vshll.u32 %v6169, 8
    %v6210 = vmul.u32.u64.compose %v6209, %v6208
    %v6211 = vextract.low.u32 %v6210
    %v6212 = vextract.high.u32 %v6210
    %v6213 = vmul.u32.u64.compose %v6209, %v6204
    %v6214 = vextract.low.u32 %v6213
    %v6215 = vextract.high.u32 %v6213
    %v6216 = vmul.u32 %v6209, %v6200
    %v6217 = vadd.s32 %v6212, %v6214
    %vm6218 = vc.u32 %v6212, %v6214
    %v6219 = vadd.s32 %v6215, 1
    %v6220 = vsel %vm6218, %v6219, %v6215
    %v6221 = vadd.s32 %v6216, %v6220
    %v6222 = vadd.s32 %v6221, 536870912
    %v6223 = vshrl.u32 %v6222, 30
    %v6224 = vshll.u32 %v6223, 30
    %v6225 = vsub.s32 %v6221, %v6224
    %vm6226 = vcmp.lt.s32.totalorder %v6225, 0
    %v6227 = vsub.s32 0, %v6225
    %v6228 = vsel %vm6226, %v6227, %v6225
    %v6229 = vclz %v6228
    %v6230 = vsub.s32 %v6229, 2
    %vm6231 = vcmp.gt.s32.totalorder 0, %v6230
    %v6232 = vsel %vm6231, 0, %v6230
    %v6233 = vsub.s32 32, %v6232
    %v6234 = vshll.u32 %v6225, %v6232
    %v6235 = vshrl.u32 %v6217, %v6233
    %v6236 = vor.u32 %v6234, %v6235
    %v6237 = vsub.s32 4294967266, %v6232
    %v6238 = vadd.s32 %v6237, 127
    %v6239 = vshll.u32 %v6238, 23
    %v6240 = vor.u32 4788187, %v6239
    %v6241 = vand.u32 2147483647, %v6240
    %v6243 = vcvt.s32.f32 %v6236
    %v6244 = vmul.f32 %v6243, %v6241
    %v6245 = vxor.u32 %v6244, 2147483648
    %v6246 = vsel %vm6163, %v6245, %v6244
    %v6247 = vsub.s32 4, %v6223
    %v6248 = vsel %vm6163, %v6247, %v6223
    %v6249 = vsel %vm6162, %v4069, %v6246
    %v6250 = vsel %vm6162, 0, %v6248
    %v6251 = vcosq.f32.pop %v6249
    %v6252 = vsinq.f32.pop %v6249
    %vm6253 = vweird.f32 %v4069
    %v6254 = vadd.s32 %v6250, 3
    %v6255 = vand.u32 %v6254, 3
    %vm6256 = vcmp.lt.s32.totalorder %v6255, 2
    %vm6257 = vcmp.eq.s32.totalorder %v6255, 0
    %v6258 = vxor.u32 %v6252, 2147483648
    %v6259 = vsel %vm6257, %v6251, %v6258
    %vm6260 = vcmp.eq.s32.totalorder %v6255, 2
    %v6261 = vxor.u32 %v6251, 2147483648
    %v6262 = vsel %vm6260, %v6261, %v6252
    %v6263 = vsel %vm6256, %v6259, %v6262
    %v6264 = vsel %vm6253, nan, %v6263
    %v6265 = vand.u32 2147483647, %v4070
    %vm6266 = vcmp.le.f32.partialorder %v6265, 0.7853982
    %vm6267 = vcmp.lt.s32.totalorder %v4070, 0
    %v6268 = vand.u32 %v4070, 2139095040
    %v6269 = vshrl.u32 %v6268, 23
    %v6270 = vsub.s32 %v6269, 127
    %v6271 = vand.u32 2147483647, %v4070
    %v6272 = vand.u32 %v6271, 8388607
    %v6273 = vor.u32 %v6272, 8388608
    %v6274 = vsub.s32 0, %v6273
    %v6275 = vadd.s32 %v6270, 1
    %vm6276 = vcmp.gt.s32.totalorder %v6275, 0
    %v6277 = vsel %vm6276, %v6275, 0
    %v6278 = vshrl.u32 %v6277, 5
    %v6279 = vand.u32 %v6277, 31
    %v6280 = vsub.s32 32, %v6279
    %v6281 = vshrl.u32 683565275, %v6280
    %v6282 = vshll.u32 683565275, %v6279
    %v6283 = vshrl.u32 2475754826, %v6280
    %v6284 = vor.u32 %v6282, %v6283
    %v6285 = vshll.u32 2475754826, %v6279
    %v6286 = vshrl.u32 2131351028, %v6280
    %v6287 = vor.u32 %v6285, %v6286
    %v6288 = vshll.u32 2131351028, %v6279
    %v6289 = vshrl.u32 2102212464, %v6280
    %v6290 = vor.u32 %v6288, %v6289
    %v6291 = vshll.u32 2102212464, %v6279
    %v6292 = vshrl.u32 920167782, %v6280
    %v6293 = vor.u32 %v6291, %v6292
    %v6294 = vshll.u32 920167782, %v6279
    %v6295 = vshrl.u32 1326507024, %v6280
    %v6296 = vor.u32 %v6294, %v6295
    %vm6297 = vcmp.lt.s32.totalorder %v6278, 1
    %vm6298 = vcmp.lt.s32.totalorder %v6278, 2
    %vm6299 = vcmp.lt.s32.totalorder %v6278, 3
    %vm6300 = vcmp.lt.s32.totalorder %v6278, 4
    %v6301 = vsel %vm6297, %v6281, %v6284
    %v6302 = vsel %vm6300, %v6290, 2102212464
    %v6303 = vsel %vm6299, %v6287, %v6302
    %v6304 = vsel %vm6298, %v6301, %v6303
    %v6305 = vsel %vm6297, %v6284, %v6287
    %v6306 = vsel %vm6300, %v6293, 920167782
    %v6307 = vsel %vm6299, %v6290, %v6306
    %v6308 = vsel %vm6298, %v6305, %v6307
    %v6309 = vsel %vm6297, %v6287, %v6290
    %v6310 = vsel %vm6300, %v6296, 1326507024
    %v6311 = vsel %vm6299, %v6293, %v6310
    %v6312 = vsel %vm6298, %v6309, %v6311
    %v6313 = vshll.u32 %v6273, 8
    %v6314 = vmul.u32.u64.compose %v6313, %v6312
    %v6315 = vextract.low.u32 %v6314
    %v6316 = vextract.high.u32 %v6314
    %v6317 = vmul.u32.u64.compose %v6313, %v6308
    %v6318 = vextract.low.u32 %v6317
    %v6319 = vextract.high.u32 %v6317
    %v6320 = vmul.u32 %v6313, %v6304
    %v6321 = vadd.s32 %v6316, %v6318
    %vm6322 = vc.u32 %v6316, %v6318
    %v6323 = vadd.s32 %v6319, 1
    %v6324 = vsel %vm6322, %v6323, %v6319
    %v6325 = vadd.s32 %v6320, %v6324
    %v6326 = vadd.s32 %v6325, 536870912
    %v6327 = vshrl.u32 %v6326, 30
    %v6328 = vshll.u32 %v6327, 30
    %v6329 = vsub.s32 %v6325, %v6328
    %vm6330 = vcmp.lt.s32.totalorder %v6329, 0
    %v6331 = vsub.s32 0, %v6329
    %v6332 = vsel %vm6330, %v6331, %v6329
    %v6333 = vclz %v6332
    %v6334 = vsub.s32 %v6333, 2
    %vm6335 = vcmp.gt.s32.totalorder 0, %v6334
    %v6336 = vsel %vm6335, 0, %v6334
    %v6337 = vsub.s32 32, %v6336
    %v6338 = vshll.u32 %v6329, %v6336
    %v6339 = vshrl.u32 %v6321, %v6337
    %v6340 = vor.u32 %v6338, %v6339
    %v6341 = vsub.s32 4294967266, %v6336
    %v6342 = vadd.s32 %v6341, 127
    %v6343 = vshll.u32 %v6342, 23
    %v6344 = vor.u32 4788187, %v6343
    %v6345 = vand.u32 2147483647, %v6344
    %v6347 = vcvt.s32.f32 %v6340
    %v6348 = vmul.f32 %v6347, %v6345
    %v6349 = vxor.u32 %v6348, 2147483648
    %v6350 = vsel %vm6267, %v6349, %v6348
    %v6351 = vsub.s32 4, %v6327
    %v6352 = vsel %vm6267, %v6351, %v6327
    %v6353 = vsel %vm6266, %v4070, %v6350
    %v6354 = vsel %vm6266, 0, %v6352
    %v6355 = vcosq.f32.pop %v6353
    %v6356 = vsinq.f32.pop %v6353
    %vm6357 = vweird.f32 %v4070
    %v6358 = vadd.s32 %v6354, 3
    %v6359 = vand.u32 %v6358, 3
    %vm6360 = vcmp.lt.s32.totalorder %v6359, 2
    %vm6361 = vcmp.eq.s32.totalorder %v6359, 0
    %v6362 = vxor.u32 %v6356, 2147483648
    %v6363 = vsel %vm6361, %v6355, %v6362
    %vm6364 = vcmp.eq.s32.totalorder %v6359, 2
    %v6365 = vxor.u32 %v6355, 2147483648
    %v6366 = vsel %vm6364, %v6365, %v6356
    %v6367 = vsel %vm6360, %v6363, %v6366
    %v6368 = vsel %vm6357, nan, %v6367
    %v6369 = vand.u32 2147483647, %v4071
    %vm6370 = vcmp.le.f32.partialorder %v6369, 0.7853982
    %vm6371 = vcmp.lt.s32.totalorder %v4071, 0
    %v6372 = vand.u32 %v4071, 2139095040
    %v6373 = vshrl.u32 %v6372, 23
    %v6374 = vsub.s32 %v6373, 127
    %v6375 = vand.u32 2147483647, %v4071
    %v6376 = vand.u32 %v6375, 8388607
    %v6377 = vor.u32 %v6376, 8388608
    %v6378 = vsub.s32 0, %v6377
    %v6379 = vadd.s32 %v6374, 1
    %vm6380 = vcmp.gt.s32.totalorder %v6379, 0
    %v6381 = vsel %vm6380, %v6379, 0
    %v6382 = vshrl.u32 %v6381, 5
    %v6383 = vand.u32 %v6381, 31
    %v6384 = vsub.s32 32, %v6383
    %v6385 = vshrl.u32 683565275, %v6384
    %v6386 = vshll.u32 683565275, %v6383
    %v6387 = vshrl.u32 2475754826, %v6384
    %v6388 = vor.u32 %v6386, %v6387
    %v6389 = vshll.u32 2475754826, %v6383
    %v6390 = vshrl.u32 2131351028, %v6384
    %v6391 = vor.u32 %v6389, %v6390
    %v6392 = vshll.u32 2131351028, %v6383
    %v6393 = vshrl.u32 2102212464, %v6384
    %v6394 = vor.u32 %v6392, %v6393
    %v6395 = vshll.u32 2102212464, %v6383
    %v6396 = vshrl.u32 920167782, %v6384
    %v6397 = vor.u32 %v6395, %v6396
    %v6398 = vshll.u32 920167782, %v6383
    %v6399 = vshrl.u32 1326507024, %v6384
    %v6400 = vor.u32 %v6398, %v6399
    %vm6401 = vcmp.lt.s32.totalorder %v6382, 1
    %vm6402 = vcmp.lt.s32.totalorder %v6382, 2
    %vm6403 = vcmp.lt.s32.totalorder %v6382, 3
    %vm6404 = vcmp.lt.s32.totalorder %v6382, 4
    %v6405 = vsel %vm6401, %v6385, %v6388
    %v6406 = vsel %vm6404, %v6394, 2102212464
    %v6407 = vsel %vm6403, %v6391, %v6406
    %v6408 = vsel %vm6402, %v6405, %v6407
    %v6409 = vsel %vm6401, %v6388, %v6391
    %v6410 = vsel %vm6404, %v6397, 920167782
    %v6411 = vsel %vm6403, %v6394, %v6410
    %v6412 = vsel %vm6402, %v6409, %v6411
    %v6413 = vsel %vm6401, %v6391, %v6394
    %v6414 = vsel %vm6404, %v6400, 1326507024
    %v6415 = vsel %vm6403, %v6397, %v6414
    %v6416 = vsel %vm6402, %v6413, %v6415
    %v6417 = vshll.u32 %v6377, 8
    %v6418 = vmul.u32.u64.compose %v6417, %v6416
    %v6419 = vextract.low.u32 %v6418
    %v6420 = vextract.high.u32 %v6418
    %v6421 = vmul.u32.u64.compose %v6417, %v6412
    %v6422 = vextract.low.u32 %v6421
    %v6423 = vextract.high.u32 %v6421
    %v6424 = vmul.u32 %v6417, %v6408
    %v6425 = vadd.s32 %v6420, %v6422
    %vm6426 = vc.u32 %v6420, %v6422
    %v6427 = vadd.s32 %v6423, 1
    %v6428 = vsel %vm6426, %v6427, %v6423
    %v6429 = vadd.s32 %v6424, %v6428
    %v6430 = vadd.s32 %v6429, 536870912
    %v6431 = vshrl.u32 %v6430, 30
    %v6432 = vshll.u32 %v6431, 30
    %v6433 = vsub.s32 %v6429, %v6432
    %vm6434 = vcmp.lt.s32.totalorder %v6433, 0
    %v6435 = vsub.s32 0, %v6433
    %v6436 = vsel %vm6434, %v6435, %v6433
    %v6437 = vclz %v6436
    %v6438 = vsub.s32 %v6437, 2
    %vm6439 = vcmp.gt.s32.totalorder 0, %v6438
    %v6440 = vsel %vm6439, 0, %v6438
    %v6441 = vsub.s32 32, %v6440
    %v6442 = vshll.u32 %v6433, %v6440
    %v6443 = vshrl.u32 %v6425, %v6441
    %v6444 = vor.u32 %v6442, %v6443
    %v6445 = vsub.s32 4294967266, %v6440
    %v6446 = vadd.s32 %v6445, 127
    %v6447 = vshll.u32 %v6446, 23
    %v6448 = vor.u32 4788187, %v6447
    %v6449 = vand.u32 2147483647, %v6448
    %v6451 = vcvt.s32.f32 %v6444
    %v6452 = vmul.f32 %v6451, %v6449
    %v6453 = vxor.u32 %v6452, 2147483648
    %v6454 = vsel %vm6371, %v6453, %v6452
    %v6455 = vsub.s32 4, %v6431
    %v6456 = vsel %vm6371, %v6455, %v6431
    %v6457 = vsel %vm6370, %v4071, %v6454
    %v6458 = vsel %vm6370, 0, %v6456
    %v6459 = vcosq.f32.pop %v6457
    %v6460 = vsinq.f32.pop %v6457
    %vm6461 = vweird.f32 %v4071
    %v6462 = vadd.s32 %v6458, 3
    %v6463 = vand.u32 %v6462, 3
    %vm6464 = vcmp.lt.s32.totalorder %v6463, 2
    %vm6465 = vcmp.eq.s32.totalorder %v6463, 0
    %v6466 = vxor.u32 %v6460, 2147483648
    %v6467 = vsel %vm6465, %v6459, %v6466
    %vm6468 = vcmp.eq.s32.totalorder %v6463, 2
    %v6469 = vxor.u32 %v6459, 2147483648
    %v6470 = vsel %vm6468, %v6469, %v6460
    %v6471 = vsel %vm6464, %v6467, %v6470
    %v6472 = vsel %vm6461, nan, %v6471
    %v6473 = vand.u32 2147483647, %v4072
    %vm6474 = vcmp.le.f32.partialorder %v6473, 0.7853982
    %vm6475 = vcmp.lt.s32.totalorder %v4072, 0
    %v6476 = vand.u32 %v4072, 2139095040
    %v6477 = vshrl.u32 %v6476, 23
    %v6478 = vsub.s32 %v6477, 127
    %v6479 = vand.u32 2147483647, %v4072
    %v6480 = vand.u32 %v6479, 8388607
    %v6481 = vor.u32 %v6480, 8388608
    %v6482 = vsub.s32 0, %v6481
    %v6483 = vadd.s32 %v6478, 1
    %vm6484 = vcmp.gt.s32.totalorder %v6483, 0
    %v6485 = vsel %vm6484, %v6483, 0
    %v6486 = vshrl.u32 %v6485, 5
    %v6487 = vand.u32 %v6485, 31
    %v6488 = vsub.s32 32, %v6487
    %v6489 = vshrl.u32 683565275, %v6488
    %v6490 = vshll.u32 683565275, %v6487
    %v6491 = vshrl.u32 2475754826, %v6488
    %v6492 = vor.u32 %v6490, %v6491
    %v6493 = vshll.u32 2475754826, %v6487
    %v6494 = vshrl.u32 2131351028, %v6488
    %v6495 = vor.u32 %v6493, %v6494
    %v6496 = vshll.u32 2131351028, %v6487
    %v6497 = vshrl.u32 2102212464, %v6488
    %v6498 = vor.u32 %v6496, %v6497
    %v6499 = vshll.u32 2102212464, %v6487
    %v6500 = vshrl.u32 920167782, %v6488
    %v6501 = vor.u32 %v6499, %v6500
    %v6502 = vshll.u32 920167782, %v6487
    %v6503 = vshrl.u32 1326507024, %v6488
    %v6504 = vor.u32 %v6502, %v6503
    %vm6505 = vcmp.lt.s32.totalorder %v6486, 1
    %vm6506 = vcmp.lt.s32.totalorder %v6486, 2
    %vm6507 = vcmp.lt.s32.totalorder %v6486, 3
    %vm6508 = vcmp.lt.s32.totalorder %v6486, 4
    %v6509 = vsel %vm6505, %v6489, %v6492
    %v6510 = vsel %vm6508, %v6498, 2102212464
    %v6511 = vsel %vm6507, %v6495, %v6510
    %v6512 = vsel %vm6506, %v6509, %v6511
    %v6513 = vsel %vm6505, %v6492, %v6495
    %v6514 = vsel %vm6508, %v6501, 920167782
    %v6515 = vsel %vm6507, %v6498, %v6514
    %v6516 = vsel %vm6506, %v6513, %v6515
    %v6517 = vsel %vm6505, %v6495, %v6498
    %v6518 = vsel %vm6508, %v6504, 1326507024
    %v6519 = vsel %vm6507, %v6501, %v6518
    %v6520 = vsel %vm6506, %v6517, %v6519
    %v6521 = vshll.u32 %v6481, 8
    %v6522 = vmul.u32.u64.compose %v6521, %v6520
    %v6523 = vextract.low.u32 %v6522
    %v6524 = vextract.high.u32 %v6522
    %v6525 = vmul.u32.u64.compose %v6521, %v6516
    %v6526 = vextract.low.u32 %v6525
    %v6527 = vextract.high.u32 %v6525
    %v6528 = vmul.u32 %v6521, %v6512
    %v6529 = vadd.s32 %v6524, %v6526
    %vm6530 = vc.u32 %v6524, %v6526
    %v6531 = vadd.s32 %v6527, 1
    %v6532 = vsel %vm6530, %v6531, %v6527
    %v6533 = vadd.s32 %v6528, %v6532
    %v6534 = vadd.s32 %v6533, 536870912
    %v6535 = vshrl.u32 %v6534, 30
    %v6536 = vshll.u32 %v6535, 30
    %v6537 = vsub.s32 %v6533, %v6536
    %vm6538 = vcmp.lt.s32.totalorder %v6537, 0
    %v6539 = vsub.s32 0, %v6537
    %v6540 = vsel %vm6538, %v6539, %v6537
    %v6541 = vclz %v6540
    %v6542 = vsub.s32 %v6541, 2
    %vm6543 = vcmp.gt.s32.totalorder 0, %v6542
    %v6544 = vsel %vm6543, 0, %v6542
    %v6545 = vsub.s32 32, %v6544
    %v6546 = vshll.u32 %v6537, %v6544
    %v6547 = vshrl.u32 %v6529, %v6545
    %v6548 = vor.u32 %v6546, %v6547
    %v6549 = vsub.s32 4294967266, %v6544
    %v6550 = vadd.s32 %v6549, 127
    %v6551 = vshll.u32 %v6550, 23
    %v6552 = vor.u32 4788187, %v6551
    %v6553 = vand.u32 2147483647, %v6552
    %v6555 = vcvt.s32.f32 %v6548
    %v6556 = vmul.f32 %v6555, %v6553
    %v6557 = vxor.u32 %v6556, 2147483648
    %v6558 = vsel %vm6475, %v6557, %v6556
    %v6559 = vsub.s32 4, %v6535
    %v6560 = vsel %vm6475, %v6559, %v6535
    %v6561 = vsel %vm6474, %v4072, %v6558
    %v6562 = vsel %vm6474, 0, %v6560
    %v6563 = vcosq.f32.pop %v6561
    %v6564 = vsinq.f32.pop %v6561
    %vm6565 = vweird.f32 %v4072
    %v6566 = vadd.s32 %v6562, 3
    %v6567 = vand.u32 %v6566, 3
    %vm6568 = vcmp.lt.s32.totalorder %v6567, 2
    %vm6569 = vcmp.eq.s32.totalorder %v6567, 0
    %v6570 = vxor.u32 %v6564, 2147483648
    %v6571 = vsel %vm6569, %v6563, %v6570
    %vm6572 = vcmp.eq.s32.totalorder %v6567, 2
    %v6573 = vxor.u32 %v6563, 2147483648
    %v6574 = vsel %vm6572, %v6573, %v6564
    %v6575 = vsel %vm6568, %v6571, %v6574
    %v6576 = vsel %vm6565, nan, %v6575
    %v6577 = vand.u32 2147483647, %v4073
    %vm6578 = vcmp.le.f32.partialorder %v6577, 0.7853982
    %vm6579 = vcmp.lt.s32.totalorder %v4073, 0
    %v6580 = vand.u32 %v4073, 2139095040
    %v6581 = vshrl.u32 %v6580, 23
    %v6582 = vsub.s32 %v6581, 127
    %v6583 = vand.u32 2147483647, %v4073
    %v6584 = vand.u32 %v6583, 8388607
    %v6585 = vor.u32 %v6584, 8388608
    %v6586 = vsub.s32 0, %v6585
    %v6587 = vadd.s32 %v6582, 1
    %vm6588 = vcmp.gt.s32.totalorder %v6587, 0
    %v6589 = vsel %vm6588, %v6587, 0
    %v6590 = vshrl.u32 %v6589, 5
    %v6591 = vand.u32 %v6589, 31
    %v6592 = vsub.s32 32, %v6591
    %v6593 = vshrl.u32 683565275, %v6592
    %v6594 = vshll.u32 683565275, %v6591
    %v6595 = vshrl.u32 2475754826, %v6592
    %v6596 = vor.u32 %v6594, %v6595
    %v6597 = vshll.u32 2475754826, %v6591
    %v6598 = vshrl.u32 2131351028, %v6592
    %v6599 = vor.u32 %v6597, %v6598
    %v6600 = vshll.u32 2131351028, %v6591
    %v6601 = vshrl.u32 2102212464, %v6592
    %v6602 = vor.u32 %v6600, %v6601
    %v6603 = vshll.u32 2102212464, %v6591
    %v6604 = vshrl.u32 920167782, %v6592
    %v6605 = vor.u32 %v6603, %v6604
    %v6606 = vshll.u32 920167782, %v6591
    %v6607 = vshrl.u32 1326507024, %v6592
    %v6608 = vor.u32 %v6606, %v6607
    %vm6609 = vcmp.lt.s32.totalorder %v6590, 1
    %vm6610 = vcmp.lt.s32.totalorder %v6590, 2
    %vm6611 = vcmp.lt.s32.totalorder %v6590, 3
    %vm6612 = vcmp.lt.s32.totalorder %v6590, 4
    %v6613 = vsel %vm6609, %v6593, %v6596
    %v6614 = vsel %vm6612, %v6602, 2102212464
    %v6615 = vsel %vm6611, %v6599, %v6614
    %v6616 = vsel %vm6610, %v6613, %v6615
    %v6617 = vsel %vm6609, %v6596, %v6599
    %v6618 = vsel %vm6612, %v6605, 920167782
    %v6619 = vsel %vm6611, %v6602, %v6618
    %v6620 = vsel %vm6610, %v6617, %v6619
    %v6621 = vsel %vm6609, %v6599, %v6602
    %v6622 = vsel %vm6612, %v6608, 1326507024
    %v6623 = vsel %vm6611, %v6605, %v6622
    %v6624 = vsel %vm6610, %v6621, %v6623
    %v6625 = vshll.u32 %v6585, 8
    %v6626 = vmul.u32.u64.compose %v6625, %v6624
    %v6627 = vextract.low.u32 %v6626
    %v6628 = vextract.high.u32 %v6626
    %v6629 = vmul.u32.u64.compose %v6625, %v6620
    %v6630 = vextract.low.u32 %v6629
    %v6631 = vextract.high.u32 %v6629
    %v6632 = vmul.u32 %v6625, %v6616
    %v6633 = vadd.s32 %v6628, %v6630
    %vm6634 = vc.u32 %v6628, %v6630
    %v6635 = vadd.s32 %v6631, 1
    %v6636 = vsel %vm6634, %v6635, %v6631
    %v6637 = vadd.s32 %v6632, %v6636
    %v6638 = vadd.s32 %v6637, 536870912
    %v6639 = vshrl.u32 %v6638, 30
    %v6640 = vshll.u32 %v6639, 30
    %v6641 = vsub.s32 %v6637, %v6640
    %vm6642 = vcmp.lt.s32.totalorder %v6641, 0
    %v6643 = vsub.s32 0, %v6641
    %v6644 = vsel %vm6642, %v6643, %v6641
    %v6645 = vclz %v6644
    %v6646 = vsub.s32 %v6645, 2
    %vm6647 = vcmp.gt.s32.totalorder 0, %v6646
    %v6648 = vsel %vm6647, 0, %v6646
    %v6649 = vsub.s32 32, %v6648
    %v6650 = vshll.u32 %v6641, %v6648
    %v6651 = vshrl.u32 %v6633, %v6649
    %v6652 = vor.u32 %v6650, %v6651
    %v6653 = vsub.s32 4294967266, %v6648
    %v6654 = vadd.s32 %v6653, 127
    %v6655 = vshll.u32 %v6654, 23
    %v6656 = vor.u32 4788187, %v6655
    %v6657 = vand.u32 2147483647, %v6656
    %v6659 = vcvt.s32.f32 %v6652
    %v6660 = vmul.f32 %v6659, %v6657
    %v6661 = vxor.u32 %v6660, 2147483648
    %v6662 = vsel %vm6579, %v6661, %v6660
    %v6663 = vsub.s32 4, %v6639
    %v6664 = vsel %vm6579, %v6663, %v6639
    %v6665 = vsel %vm6578, %v4073, %v6662
    %v6666 = vsel %vm6578, 0, %v6664
    %v6667 = vcosq.f32.pop %v6665
    %v6668 = vsinq.f32.pop %v6665
    %vm6669 = vweird.f32 %v4073
    %v6670 = vadd.s32 %v6666, 3
    %v6671 = vand.u32 %v6670, 3
    %vm6672 = vcmp.lt.s32.totalorder %v6671, 2
    %vm6673 = vcmp.eq.s32.totalorder %v6671, 0
    %v6674 = vxor.u32 %v6668, 2147483648
    %v6675 = vsel %vm6673, %v6667, %v6674
    %vm6676 = vcmp.eq.s32.totalorder %v6671, 2
    %v6677 = vxor.u32 %v6667, 2147483648
    %v6678 = vsel %vm6676, %v6677, %v6668
    %v6679 = vsel %vm6672, %v6675, %v6678
    %v6680 = vsel %vm6669, nan, %v6679
    %v6681 = vand.u32 2147483647, %v4074
    %vm6682 = vcmp.le.f32.partialorder %v6681, 0.7853982
    %vm6683 = vcmp.lt.s32.totalorder %v4074, 0
    %v6684 = vand.u32 %v4074, 2139095040
    %v6685 = vshrl.u32 %v6684, 23
    %v6686 = vsub.s32 %v6685, 127
    %v6687 = vand.u32 2147483647, %v4074
    %v6688 = vand.u32 %v6687, 8388607
    %v6689 = vor.u32 %v6688, 8388608
    %v6690 = vsub.s32 0, %v6689
    %v6691 = vadd.s32 %v6686, 1
    %vm6692 = vcmp.gt.s32.totalorder %v6691, 0
    %v6693 = vsel %vm6692, %v6691, 0
    %v6694 = vshrl.u32 %v6693, 5
    %v6695 = vand.u32 %v6693, 31
    %v6696 = vsub.s32 32, %v6695
    %v6697 = vshrl.u32 683565275, %v6696
    %v6698 = vshll.u32 683565275, %v6695
    %v6699 = vshrl.u32 2475754826, %v6696
    %v6700 = vor.u32 %v6698, %v6699
    %v6701 = vshll.u32 2475754826, %v6695
    %v6702 = vshrl.u32 2131351028, %v6696
    %v6703 = vor.u32 %v6701, %v6702
    %v6704 = vshll.u32 2131351028, %v6695
    %v6705 = vshrl.u32 2102212464, %v6696
    %v6706 = vor.u32 %v6704, %v6705
    %v6707 = vshll.u32 2102212464, %v6695
    %v6708 = vshrl.u32 920167782, %v6696
    %v6709 = vor.u32 %v6707, %v6708
    %v6710 = vshll.u32 920167782, %v6695
    %v6711 = vshrl.u32 1326507024, %v6696
    %v6712 = vor.u32 %v6710, %v6711
    %vm6713 = vcmp.lt.s32.totalorder %v6694, 1
    %vm6714 = vcmp.lt.s32.totalorder %v6694, 2
    %vm6715 = vcmp.lt.s32.totalorder %v6694, 3
    %vm6716 = vcmp.lt.s32.totalorder %v6694, 4
    %v6717 = vsel %vm6713, %v6697, %v6700
    %v6718 = vsel %vm6716, %v6706, 2102212464
    %v6719 = vsel %vm6715, %v6703, %v6718
    %v6720 = vsel %vm6714, %v6717, %v6719
    %v6721 = vsel %vm6713, %v6700, %v6703
    %v6722 = vsel %vm6716, %v6709, 920167782
    %v6723 = vsel %vm6715, %v6706, %v6722
    %v6724 = vsel %vm6714, %v6721, %v6723
    %v6725 = vsel %vm6713, %v6703, %v6706
    %v6726 = vsel %vm6716, %v6712, 1326507024
    %v6727 = vsel %vm6715, %v6709, %v6726
    %v6728 = vsel %vm6714, %v6725, %v6727
    %v6729 = vshll.u32 %v6689, 8
    %v6730 = vmul.u32.u64.compose %v6729, %v6728
    %v6731 = vextract.low.u32 %v6730
    %v6732 = vextract.high.u32 %v6730
    %v6733 = vmul.u32.u64.compose %v6729, %v6724
    %v6734 = vextract.low.u32 %v6733
    %v6735 = vextract.high.u32 %v6733
    %v6736 = vmul.u32 %v6729, %v6720
    %v6737 = vadd.s32 %v6732, %v6734
    %vm6738 = vc.u32 %v6732, %v6734
    %v6739 = vadd.s32 %v6735, 1
    %v6740 = vsel %vm6738, %v6739, %v6735
    %v6741 = vadd.s32 %v6736, %v6740
    %v6742 = vadd.s32 %v6741, 536870912
    %v6743 = vshrl.u32 %v6742, 30
    %v6744 = vshll.u32 %v6743, 30
    %v6745 = vsub.s32 %v6741, %v6744
    %vm6746 = vcmp.lt.s32.totalorder %v6745, 0
    %v6747 = vsub.s32 0, %v6745
    %v6748 = vsel %vm6746, %v6747, %v6745
    %v6749 = vclz %v6748
    %v6750 = vsub.s32 %v6749, 2
    %vm6751 = vcmp.gt.s32.totalorder 0, %v6750
    %v6752 = vsel %vm6751, 0, %v6750
    %v6753 = vsub.s32 32, %v6752
    %v6754 = vshll.u32 %v6745, %v6752
    %v6755 = vshrl.u32 %v6737, %v6753
    %v6756 = vor.u32 %v6754, %v6755
    %v6757 = vsub.s32 4294967266, %v6752
    %v6758 = vadd.s32 %v6757, 127
    %v6759 = vshll.u32 %v6758, 23
    %v6760 = vor.u32 4788187, %v6759
    %v6761 = vand.u32 2147483647, %v6760
    %v6763 = vcvt.s32.f32 %v6756
    %v6764 = vmul.f32 %v6763, %v6761
    %v6765 = vxor.u32 %v6764, 2147483648
    %v6766 = vsel %vm6683, %v6765, %v6764
    %v6767 = vsub.s32 4, %v6743
    %v6768 = vsel %vm6683, %v6767, %v6743
    %v6769 = vsel %vm6682, %v4074, %v6766
    %v6770 = vsel %vm6682, 0, %v6768
    %v6771 = vcosq.f32.pop %v6769
    %v6772 = vsinq.f32.pop %v6769
    %vm6773 = vweird.f32 %v4074
    %v6774 = vadd.s32 %v6770, 3
    %v6775 = vand.u32 %v6774, 3
    %vm6776 = vcmp.lt.s32.totalorder %v6775, 2
    %vm6777 = vcmp.eq.s32.totalorder %v6775, 0
    %v6778 = vxor.u32 %v6772, 2147483648
    %v6779 = vsel %vm6777, %v6771, %v6778
    %vm6780 = vcmp.eq.s32.totalorder %v6775, 2
    %v6781 = vxor.u32 %v6771, 2147483648
    %v6782 = vsel %vm6780, %v6781, %v6772
    %v6783 = vsel %vm6776, %v6779, %v6782
    %v6784 = vsel %vm6773, nan, %v6783
    %v6785 = vand.u32 2147483647, %v4075
    %vm6786 = vcmp.le.f32.partialorder %v6785, 0.7853982
    %vm6787 = vcmp.lt.s32.totalorder %v4075, 0
    %v6788 = vand.u32 %v4075, 2139095040
    %v6789 = vshrl.u32 %v6788, 23
    %v6790 = vsub.s32 %v6789, 127
    %v6791 = vand.u32 2147483647, %v4075
    %v6792 = vand.u32 %v6791, 8388607
    %v6793 = vor.u32 %v6792, 8388608
    %v6794 = vsub.s32 0, %v6793
    %v6795 = vadd.s32 %v6790, 1
    %vm6796 = vcmp.gt.s32.totalorder %v6795, 0
    %v6797 = vsel %vm6796, %v6795, 0
    %v6798 = vshrl.u32 %v6797, 5
    %v6799 = vand.u32 %v6797, 31
    %v6800 = vsub.s32 32, %v6799
    %v6801 = vshrl.u32 683565275, %v6800
    %v6802 = vshll.u32 683565275, %v6799
    %v6803 = vshrl.u32 2475754826, %v6800
    %v6804 = vor.u32 %v6802, %v6803
    %v6805 = vshll.u32 2475754826, %v6799
    %v6806 = vshrl.u32 2131351028, %v6800
    %v6807 = vor.u32 %v6805, %v6806
    %v6808 = vshll.u32 2131351028, %v6799
    %v6809 = vshrl.u32 2102212464, %v6800
    %v6810 = vor.u32 %v6808, %v6809
    %v6811 = vshll.u32 2102212464, %v6799
    %v6812 = vshrl.u32 920167782, %v6800
    %v6813 = vor.u32 %v6811, %v6812
    %v6814 = vshll.u32 920167782, %v6799
    %v6815 = vshrl.u32 1326507024, %v6800
    %v6816 = vor.u32 %v6814, %v6815
    %vm6817 = vcmp.lt.s32.totalorder %v6798, 1
    %vm6818 = vcmp.lt.s32.totalorder %v6798, 2
    %vm6819 = vcmp.lt.s32.totalorder %v6798, 3
    %vm6820 = vcmp.lt.s32.totalorder %v6798, 4
    %v6821 = vsel %vm6817, %v6801, %v6804
    %v6822 = vsel %vm6820, %v6810, 2102212464
    %v6823 = vsel %vm6819, %v6807, %v6822
    %v6824 = vsel %vm6818, %v6821, %v6823
    %v6825 = vsel %vm6817, %v6804, %v6807
    %v6826 = vsel %vm6820, %v6813, 920167782
    %v6827 = vsel %vm6819, %v6810, %v6826
    %v6828 = vsel %vm6818, %v6825, %v6827
    %v6829 = vsel %vm6817, %v6807, %v6810
    %v6830 = vsel %vm6820, %v6816, 1326507024
    %v6831 = vsel %vm6819, %v6813, %v6830
    %v6832 = vsel %vm6818, %v6829, %v6831
    %v6833 = vshll.u32 %v6793, 8
    %v6834 = vmul.u32.u64.compose %v6833, %v6832
    %v6835 = vextract.low.u32 %v6834
    %v6836 = vextract.high.u32 %v6834
    %v6837 = vmul.u32.u64.compose %v6833, %v6828
    %v6838 = vextract.low.u32 %v6837
    %v6839 = vextract.high.u32 %v6837
    %v6840 = vmul.u32 %v6833, %v6824
    %v6841 = vadd.s32 %v6836, %v6838
    %vm6842 = vc.u32 %v6836, %v6838
    %v6843 = vadd.s32 %v6839, 1
    %v6844 = vsel %vm6842, %v6843, %v6839
    %v6845 = vadd.s32 %v6840, %v6844
    %v6846 = vadd.s32 %v6845, 536870912
    %v6847 = vshrl.u32 %v6846, 30
    %v6848 = vshll.u32 %v6847, 30
    %v6849 = vsub.s32 %v6845, %v6848
    %vm6850 = vcmp.lt.s32.totalorder %v6849, 0
    %v6851 = vsub.s32 0, %v6849
    %v6852 = vsel %vm6850, %v6851, %v6849
    %v6853 = vclz %v6852
    %v6854 = vsub.s32 %v6853, 2
    %vm6855 = vcmp.gt.s32.totalorder 0, %v6854
    %v6856 = vsel %vm6855, 0, %v6854
    %v6857 = vsub.s32 32, %v6856
    %v6858 = vshll.u32 %v6849, %v6856
    %v6859 = vshrl.u32 %v6841, %v6857
    %v6860 = vor.u32 %v6858, %v6859
    %v6861 = vsub.s32 4294967266, %v6856
    %v6862 = vadd.s32 %v6861, 127
    %v6863 = vshll.u32 %v6862, 23
    %v6864 = vor.u32 4788187, %v6863
    %v6865 = vand.u32 2147483647, %v6864
    %v6867 = vcvt.s32.f32 %v6860
    %v6868 = vmul.f32 %v6867, %v6865
    %v6869 = vxor.u32 %v6868, 2147483648
    %v6870 = vsel %vm6787, %v6869, %v6868
    %v6871 = vsub.s32 4, %v6847
    %v6872 = vsel %vm6787, %v6871, %v6847
    %v6873 = vsel %vm6786, %v4075, %v6870
    %v6874 = vsel %vm6786, 0, %v6872
    %v6875 = vcosq.f32.pop %v6873
    %v6876 = vsinq.f32.pop %v6873
    %vm6877 = vweird.f32 %v4075
    %v6878 = vadd.s32 %v6874, 3
    %v6879 = vand.u32 %v6878, 3
    %vm6880 = vcmp.lt.s32.totalorder %v6879, 2
    %vm6881 = vcmp.eq.s32.totalorder %v6879, 0
    %v6882 = vxor.u32 %v6876, 2147483648
    %v6883 = vsel %vm6881, %v6875, %v6882
    %vm6884 = vcmp.eq.s32.totalorder %v6879, 2
    %v6885 = vxor.u32 %v6875, 2147483648
    %v6886 = vsel %vm6884, %v6885, %v6876
    %v6887 = vsel %vm6880, %v6883, %v6886
    %v6888 = vsel %vm6877, nan, %v6887
    %v6889 = vand.u32 2147483647, %v4076
    %vm6890 = vcmp.le.f32.partialorder %v6889, 0.7853982
    %vm6891 = vcmp.lt.s32.totalorder %v4076, 0
    %v6892 = vand.u32 %v4076, 2139095040
    %v6893 = vshrl.u32 %v6892, 23
    %v6894 = vsub.s32 %v6893, 127
    %v6895 = vand.u32 2147483647, %v4076
    %v6896 = vand.u32 %v6895, 8388607
    %v6897 = vor.u32 %v6896, 8388608
    %v6898 = vsub.s32 0, %v6897
    %v6899 = vadd.s32 %v6894, 1
    %vm6900 = vcmp.gt.s32.totalorder %v6899, 0
    %v6901 = vsel %vm6900, %v6899, 0
    %v6902 = vshrl.u32 %v6901, 5
    %v6903 = vand.u32 %v6901, 31
    %v6904 = vsub.s32 32, %v6903
    %v6905 = vshrl.u32 683565275, %v6904
    %v6906 = vshll.u32 683565275, %v6903
    %v6907 = vshrl.u32 2475754826, %v6904
    %v6908 = vor.u32 %v6906, %v6907
    %v6909 = vshll.u32 2475754826, %v6903
    %v6910 = vshrl.u32 2131351028, %v6904
    %v6911 = vor.u32 %v6909, %v6910
    %v6912 = vshll.u32 2131351028, %v6903
    %v6913 = vshrl.u32 2102212464, %v6904
    %v6914 = vor.u32 %v6912, %v6913
    %v6915 = vshll.u32 2102212464, %v6903
    %v6916 = vshrl.u32 920167782, %v6904
    %v6917 = vor.u32 %v6915, %v6916
    %v6918 = vshll.u32 920167782, %v6903
    %v6919 = vshrl.u32 1326507024, %v6904
    %v6920 = vor.u32 %v6918, %v6919
    %vm6921 = vcmp.lt.s32.totalorder %v6902, 1
    %vm6922 = vcmp.lt.s32.totalorder %v6902, 2
    %vm6923 = vcmp.lt.s32.totalorder %v6902, 3
    %vm6924 = vcmp.lt.s32.totalorder %v6902, 4
    %v6925 = vsel %vm6921, %v6905, %v6908
    %v6926 = vsel %vm6924, %v6914, 2102212464
    %v6927 = vsel %vm6923, %v6911, %v6926
    %v6928 = vsel %vm6922, %v6925, %v6927
    %v6929 = vsel %vm6921, %v6908, %v6911
    %v6930 = vsel %vm6924, %v6917, 920167782
    %v6931 = vsel %vm6923, %v6914, %v6930
    %v6932 = vsel %vm6922, %v6929, %v6931
    %v6933 = vsel %vm6921, %v6911, %v6914
    %v6934 = vsel %vm6924, %v6920, 1326507024
    %v6935 = vsel %vm6923, %v6917, %v6934
    %v6936 = vsel %vm6922, %v6933, %v6935
    %v6937 = vshll.u32 %v6897, 8
    %v6938 = vmul.u32.u64.compose %v6937, %v6936
    %v6939 = vextract.low.u32 %v6938
    %v6940 = vextract.high.u32 %v6938
    %v6941 = vmul.u32.u64.compose %v6937, %v6932
    %v6942 = vextract.low.u32 %v6941
    %v6943 = vextract.high.u32 %v6941
    %v6944 = vmul.u32 %v6937, %v6928
    %v6945 = vadd.s32 %v6940, %v6942
    %vm6946 = vc.u32 %v6940, %v6942
    %v6947 = vadd.s32 %v6943, 1
    %v6948 = vsel %vm6946, %v6947, %v6943
    %v6949 = vadd.s32 %v6944, %v6948
    %v6950 = vadd.s32 %v6949, 536870912
    %v6951 = vshrl.u32 %v6950, 30
    %v6952 = vshll.u32 %v6951, 30
    %v6953 = vsub.s32 %v6949, %v6952
    %vm6954 = vcmp.lt.s32.totalorder %v6953, 0
    %v6955 = vsub.s32 0, %v6953
    %v6956 = vsel %vm6954, %v6955, %v6953
    %v6957 = vclz %v6956
    %v6958 = vsub.s32 %v6957, 2
    %vm6959 = vcmp.gt.s32.totalorder 0, %v6958
    %v6960 = vsel %vm6959, 0, %v6958
    %v6961 = vsub.s32 32, %v6960
    %v6962 = vshll.u32 %v6953, %v6960
    %v6963 = vshrl.u32 %v6945, %v6961
    %v6964 = vor.u32 %v6962, %v6963
    %v6965 = vsub.s32 4294967266, %v6960
    %v6966 = vadd.s32 %v6965, 127
    %v6967 = vshll.u32 %v6966, 23
    %v6968 = vor.u32 4788187, %v6967
    %v6969 = vand.u32 2147483647, %v6968
    %v6971 = vcvt.s32.f32 %v6964
    %v6972 = vmul.f32 %v6971, %v6969
    %v6973 = vxor.u32 %v6972, 2147483648
    %v6974 = vsel %vm6891, %v6973, %v6972
    %v6975 = vsub.s32 4, %v6951
    %v6976 = vsel %vm6891, %v6975, %v6951
    %v6977 = vsel %vm6890, %v4076, %v6974
    %v6978 = vsel %vm6890, 0, %v6976
    %v6979 = vcosq.f32.pop %v6977
    %v6980 = vsinq.f32.pop %v6977
    %vm6981 = vweird.f32 %v4076
    %v6982 = vadd.s32 %v6978, 3
    %v6983 = vand.u32 %v6982, 3
    %vm6984 = vcmp.lt.s32.totalorder %v6983, 2
    %vm6985 = vcmp.eq.s32.totalorder %v6983, 0
    %v6986 = vxor.u32 %v6980, 2147483648
    %v6987 = vsel %vm6985, %v6979, %v6986
    %vm6988 = vcmp.eq.s32.totalorder %v6983, 2
    %v6989 = vxor.u32 %v6979, 2147483648
    %v6990 = vsel %vm6988, %v6989, %v6980
    %v6991 = vsel %vm6984, %v6987, %v6990
    %v6992 = vsel %vm6981, nan, %v6991
    %v6993 = vand.u32 2147483647, %v4077
    %vm6994 = vcmp.le.f32.partialorder %v6993, 0.7853982
    %vm6995 = vcmp.lt.s32.totalorder %v4077, 0
    %v6996 = vand.u32 %v4077, 2139095040
    %v6997 = vshrl.u32 %v6996, 23
    %v6998 = vsub.s32 %v6997, 127
    %v6999 = vand.u32 2147483647, %v4077
    %v7000 = vand.u32 %v6999, 8388607
    %v7001 = vor.u32 %v7000, 8388608
    %v7002 = vsub.s32 0, %v7001
    %v7003 = vadd.s32 %v6998, 1
    %vm7004 = vcmp.gt.s32.totalorder %v7003, 0
    %v7005 = vsel %vm7004, %v7003, 0
    %v7006 = vshrl.u32 %v7005, 5
    %v7007 = vand.u32 %v7005, 31
    %v7008 = vsub.s32 32, %v7007
    %v7009 = vshrl.u32 683565275, %v7008
    %v7010 = vshll.u32 683565275, %v7007
    %v7011 = vshrl.u32 2475754826, %v7008
    %v7012 = vor.u32 %v7010, %v7011
    %v7013 = vshll.u32 2475754826, %v7007
    %v7014 = vshrl.u32 2131351028, %v7008
    %v7015 = vor.u32 %v7013, %v7014
    %v7016 = vshll.u32 2131351028, %v7007
    %v7017 = vshrl.u32 2102212464, %v7008
    %v7018 = vor.u32 %v7016, %v7017
    %v7019 = vshll.u32 2102212464, %v7007
    %v7020 = vshrl.u32 920167782, %v7008
    %v7021 = vor.u32 %v7019, %v7020
    %v7022 = vshll.u32 920167782, %v7007
    %v7023 = vshrl.u32 1326507024, %v7008
    %v7024 = vor.u32 %v7022, %v7023
    %vm7025 = vcmp.lt.s32.totalorder %v7006, 1
    %vm7026 = vcmp.lt.s32.totalorder %v7006, 2
    %vm7027 = vcmp.lt.s32.totalorder %v7006, 3
    %vm7028 = vcmp.lt.s32.totalorder %v7006, 4
    %v7029 = vsel %vm7025, %v7009, %v7012
    %v7030 = vsel %vm7028, %v7018, 2102212464
    %v7031 = vsel %vm7027, %v7015, %v7030
    %v7032 = vsel %vm7026, %v7029, %v7031
    %v7033 = vsel %vm7025, %v7012, %v7015
    %v7034 = vsel %vm7028, %v7021, 920167782
    %v7035 = vsel %vm7027, %v7018, %v7034
    %v7036 = vsel %vm7026, %v7033, %v7035
    %v7037 = vsel %vm7025, %v7015, %v7018
    %v7038 = vsel %vm7028, %v7024, 1326507024
    %v7039 = vsel %vm7027, %v7021, %v7038
    %v7040 = vsel %vm7026, %v7037, %v7039
    %v7041 = vshll.u32 %v7001, 8
    %v7042 = vmul.u32.u64.compose %v7041, %v7040
    %v7043 = vextract.low.u32 %v7042
    %v7044 = vextract.high.u32 %v7042
    %v7045 = vmul.u32.u64.compose %v7041, %v7036
    %v7046 = vextract.low.u32 %v7045
    %v7047 = vextract.high.u32 %v7045
    %v7048 = vmul.u32 %v7041, %v7032
    %v7049 = vadd.s32 %v7044, %v7046
    %vm7050 = vc.u32 %v7044, %v7046
    %v7051 = vadd.s32 %v7047, 1
    %v7052 = vsel %vm7050, %v7051, %v7047
    %v7053 = vadd.s32 %v7048, %v7052
    %v7054 = vadd.s32 %v7053, 536870912
    %v7055 = vshrl.u32 %v7054, 30
    %v7056 = vshll.u32 %v7055, 30
    %v7057 = vsub.s32 %v7053, %v7056
    %vm7058 = vcmp.lt.s32.totalorder %v7057, 0
    %v7059 = vsub.s32 0, %v7057
    %v7060 = vsel %vm7058, %v7059, %v7057
    %v7061 = vclz %v7060
    %v7062 = vsub.s32 %v7061, 2
    %vm7063 = vcmp.gt.s32.totalorder 0, %v7062
    %v7064 = vsel %vm7063, 0, %v7062
    %v7065 = vsub.s32 32, %v7064
    %v7066 = vshll.u32 %v7057, %v7064
    %v7067 = vshrl.u32 %v7049, %v7065
    %v7068 = vor.u32 %v7066, %v7067
    %v7069 = vsub.s32 4294967266, %v7064
    %v7070 = vadd.s32 %v7069, 127
    %v7071 = vshll.u32 %v7070, 23
    %v7072 = vor.u32 4788187, %v7071
    %v7073 = vand.u32 2147483647, %v7072
    %v7075 = vcvt.s32.f32 %v7068
    %v7076 = vmul.f32 %v7075, %v7073
    %v7077 = vxor.u32 %v7076, 2147483648
    %v7078 = vsel %vm6995, %v7077, %v7076
    %v7079 = vsub.s32 4, %v7055
    %v7080 = vsel %vm6995, %v7079, %v7055
    %v7081 = vsel %vm6994, %v4077, %v7078
    %v7082 = vsel %vm6994, 0, %v7080
    %v7083 = vcosq.f32.pop %v7081
    %v7084 = vsinq.f32.pop %v7081
    %vm7085 = vweird.f32 %v4077
    %v7086 = vadd.s32 %v7082, 3
    %v7087 = vand.u32 %v7086, 3
    %vm7088 = vcmp.lt.s32.totalorder %v7087, 2
    %vm7089 = vcmp.eq.s32.totalorder %v7087, 0
    %v7090 = vxor.u32 %v7084, 2147483648
    %v7091 = vsel %vm7089, %v7083, %v7090
    %vm7092 = vcmp.eq.s32.totalorder %v7087, 2
    %v7093 = vxor.u32 %v7083, 2147483648
    %v7094 = vsel %vm7092, %v7093, %v7084
    %v7095 = vsel %vm7088, %v7091, %v7094
    %v7096 = vsel %vm7085, nan, %v7095
    %v7097 = vand.u32 2147483647, %v4078
    %vm7098 = vcmp.le.f32.partialorder %v7097, 0.7853982
    %vm7099 = vcmp.lt.s32.totalorder %v4078, 0
    %v7100 = vand.u32 %v4078, 2139095040
    %v7101 = vshrl.u32 %v7100, 23
    %v7102 = vsub.s32 %v7101, 127
    %v7103 = vand.u32 2147483647, %v4078
    %v7104 = vand.u32 %v7103, 8388607
    %v7105 = vor.u32 %v7104, 8388608
    %v7106 = vsub.s32 0, %v7105
    %v7107 = vadd.s32 %v7102, 1
    %vm7108 = vcmp.gt.s32.totalorder %v7107, 0
    %v7109 = vsel %vm7108, %v7107, 0
    %v7110 = vshrl.u32 %v7109, 5
    %v7111 = vand.u32 %v7109, 31
    %v7112 = vsub.s32 32, %v7111
    %v7113 = vshrl.u32 683565275, %v7112
    %v7114 = vshll.u32 683565275, %v7111
    %v7115 = vshrl.u32 2475754826, %v7112
    %v7116 = vor.u32 %v7114, %v7115
    %v7117 = vshll.u32 2475754826, %v7111
    %v7118 = vshrl.u32 2131351028, %v7112
    %v7119 = vor.u32 %v7117, %v7118
    %v7120 = vshll.u32 2131351028, %v7111
    %v7121 = vshrl.u32 2102212464, %v7112
    %v7122 = vor.u32 %v7120, %v7121
    %v7123 = vshll.u32 2102212464, %v7111
    %v7124 = vshrl.u32 920167782, %v7112
    %v7125 = vor.u32 %v7123, %v7124
    %v7126 = vshll.u32 920167782, %v7111
    %v7127 = vshrl.u32 1326507024, %v7112
    %v7128 = vor.u32 %v7126, %v7127
    %vm7129 = vcmp.lt.s32.totalorder %v7110, 1
    %vm7130 = vcmp.lt.s32.totalorder %v7110, 2
    %vm7131 = vcmp.lt.s32.totalorder %v7110, 3
    %vm7132 = vcmp.lt.s32.totalorder %v7110, 4
    %v7133 = vsel %vm7129, %v7113, %v7116
    %v7134 = vsel %vm7132, %v7122, 2102212464
    %v7135 = vsel %vm7131, %v7119, %v7134
    %v7136 = vsel %vm7130, %v7133, %v7135
    %v7137 = vsel %vm7129, %v7116, %v7119
    %v7138 = vsel %vm7132, %v7125, 920167782
    %v7139 = vsel %vm7131, %v7122, %v7138
    %v7140 = vsel %vm7130, %v7137, %v7139
    %v7141 = vsel %vm7129, %v7119, %v7122
    %v7142 = vsel %vm7132, %v7128, 1326507024
    %v7143 = vsel %vm7131, %v7125, %v7142
    %v7144 = vsel %vm7130, %v7141, %v7143
    %v7145 = vshll.u32 %v7105, 8
    %v7146 = vmul.u32.u64.compose %v7145, %v7144
    %v7147 = vextract.low.u32 %v7146
    %v7148 = vextract.high.u32 %v7146
    %v7149 = vmul.u32.u64.compose %v7145, %v7140
    %v7150 = vextract.low.u32 %v7149
    %v7151 = vextract.high.u32 %v7149
    %v7152 = vmul.u32 %v7145, %v7136
    %v7153 = vadd.s32 %v7148, %v7150
    %vm7154 = vc.u32 %v7148, %v7150
    %v7155 = vadd.s32 %v7151, 1
    %v7156 = vsel %vm7154, %v7155, %v7151
    %v7157 = vadd.s32 %v7152, %v7156
    %v7158 = vadd.s32 %v7157, 536870912
    %v7159 = vshrl.u32 %v7158, 30
    %v7160 = vshll.u32 %v7159, 30
    %v7161 = vsub.s32 %v7157, %v7160
    %vm7162 = vcmp.lt.s32.totalorder %v7161, 0
    %v7163 = vsub.s32 0, %v7161
    %v7164 = vsel %vm7162, %v7163, %v7161
    %v7165 = vclz %v7164
    %v7166 = vsub.s32 %v7165, 2
    %vm7167 = vcmp.gt.s32.totalorder 0, %v7166
    %v7168 = vsel %vm7167, 0, %v7166
    %v7169 = vsub.s32 32, %v7168
    %v7170 = vshll.u32 %v7161, %v7168
    %v7171 = vshrl.u32 %v7153, %v7169
    %v7172 = vor.u32 %v7170, %v7171
    %v7173 = vsub.s32 4294967266, %v7168
    %v7174 = vadd.s32 %v7173, 127
    %v7175 = vshll.u32 %v7174, 23
    %v7176 = vor.u32 4788187, %v7175
    %v7177 = vand.u32 2147483647, %v7176
    %v7179 = vcvt.s32.f32 %v7172
    %v7180 = vmul.f32 %v7179, %v7177
    %v7181 = vxor.u32 %v7180, 2147483648
    %v7182 = vsel %vm7099, %v7181, %v7180
    %v7183 = vsub.s32 4, %v7159
    %v7184 = vsel %vm7099, %v7183, %v7159
    %v7185 = vsel %vm7098, %v4078, %v7182
    %v7186 = vsel %vm7098, 0, %v7184
    %v7187 = vcosq.f32.pop %v7185
    %v7188 = vsinq.f32.pop %v7185
    %vm7189 = vweird.f32 %v4078
    %v7190 = vadd.s32 %v7186, 3
    %v7191 = vand.u32 %v7190, 3
    %vm7192 = vcmp.lt.s32.totalorder %v7191, 2
    %vm7193 = vcmp.eq.s32.totalorder %v7191, 0
    %v7194 = vxor.u32 %v7188, 2147483648
    %v7195 = vsel %vm7193, %v7187, %v7194
    %vm7196 = vcmp.eq.s32.totalorder %v7191, 2
    %v7197 = vxor.u32 %v7187, 2147483648
    %v7198 = vsel %vm7196, %v7197, %v7188
    %v7199 = vsel %vm7192, %v7195, %v7198
    %v7200 = vsel %vm7189, nan, %v7199
    %v7201 = vand.u32 2147483647, %v4079
    %vm7202 = vcmp.le.f32.partialorder %v7201, 0.7853982
    %vm7203 = vcmp.lt.s32.totalorder %v4079, 0
    %v7204 = vand.u32 %v4079, 2139095040
    %v7205 = vshrl.u32 %v7204, 23
    %v7206 = vsub.s32 %v7205, 127
    %v7207 = vand.u32 2147483647, %v4079
    %v7208 = vand.u32 %v7207, 8388607
    %v7209 = vor.u32 %v7208, 8388608
    %v7210 = vsub.s32 0, %v7209
    %v7211 = vadd.s32 %v7206, 1
    %vm7212 = vcmp.gt.s32.totalorder %v7211, 0
    %v7213 = vsel %vm7212, %v7211, 0
    %v7214 = vshrl.u32 %v7213, 5
    %v7215 = vand.u32 %v7213, 31
    %v7216 = vsub.s32 32, %v7215
    %v7217 = vshrl.u32 683565275, %v7216
    %v7218 = vshll.u32 683565275, %v7215
    %v7219 = vshrl.u32 2475754826, %v7216
    %v7220 = vor.u32 %v7218, %v7219
    %v7221 = vshll.u32 2475754826, %v7215
    %v7222 = vshrl.u32 2131351028, %v7216
    %v7223 = vor.u32 %v7221, %v7222
    %v7224 = vshll.u32 2131351028, %v7215
    %v7225 = vshrl.u32 2102212464, %v7216
    %v7226 = vor.u32 %v7224, %v7225
    %v7227 = vshll.u32 2102212464, %v7215
    %v7228 = vshrl.u32 920167782, %v7216
    %v7229 = vor.u32 %v7227, %v7228
    %v7230 = vshll.u32 920167782, %v7215
    %v7231 = vshrl.u32 1326507024, %v7216
    %v7232 = vor.u32 %v7230, %v7231
    %vm7233 = vcmp.lt.s32.totalorder %v7214, 1
    %vm7234 = vcmp.lt.s32.totalorder %v7214, 2
    %vm7235 = vcmp.lt.s32.totalorder %v7214, 3
    %vm7236 = vcmp.lt.s32.totalorder %v7214, 4
    %v7237 = vsel %vm7233, %v7217, %v7220
    %v7238 = vsel %vm7236, %v7226, 2102212464
    %v7239 = vsel %vm7235, %v7223, %v7238
    %v7240 = vsel %vm7234, %v7237, %v7239
    %v7241 = vsel %vm7233, %v7220, %v7223
    %v7242 = vsel %vm7236, %v7229, 920167782
    %v7243 = vsel %vm7235, %v7226, %v7242
    %v7244 = vsel %vm7234, %v7241, %v7243
    %v7245 = vsel %vm7233, %v7223, %v7226
    %v7246 = vsel %vm7236, %v7232, 1326507024
    %v7247 = vsel %vm7235, %v7229, %v7246
    %v7248 = vsel %vm7234, %v7245, %v7247
    %v7249 = vshll.u32 %v7209, 8
    %v7250 = vmul.u32.u64.compose %v7249, %v7248
    %v7251 = vextract.low.u32 %v7250
    %v7252 = vextract.high.u32 %v7250
    %v7253 = vmul.u32.u64.compose %v7249, %v7244
    %v7254 = vextract.low.u32 %v7253
    %v7255 = vextract.high.u32 %v7253
    %v7256 = vmul.u32 %v7249, %v7240
    %v7257 = vadd.s32 %v7252, %v7254
    %vm7258 = vc.u32 %v7252, %v7254
    %v7259 = vadd.s32 %v7255, 1
    %v7260 = vsel %vm7258, %v7259, %v7255
    %v7261 = vadd.s32 %v7256, %v7260
    %v7262 = vadd.s32 %v7261, 536870912
    %v7263 = vshrl.u32 %v7262, 30
    %v7264 = vshll.u32 %v7263, 30
    %v7265 = vsub.s32 %v7261, %v7264
    %vm7266 = vcmp.lt.s32.totalorder %v7265, 0
    %v7267 = vsub.s32 0, %v7265
    %v7268 = vsel %vm7266, %v7267, %v7265
    %v7269 = vclz %v7268
    %v7270 = vsub.s32 %v7269, 2
    %vm7271 = vcmp.gt.s32.totalorder 0, %v7270
    %v7272 = vsel %vm7271, 0, %v7270
    %v7273 = vsub.s32 32, %v7272
    %v7274 = vshll.u32 %v7265, %v7272
    %v7275 = vshrl.u32 %v7257, %v7273
    %v7276 = vor.u32 %v7274, %v7275
    %v7277 = vsub.s32 4294967266, %v7272
    %v7278 = vadd.s32 %v7277, 127
    %v7279 = vshll.u32 %v7278, 23
    %v7280 = vor.u32 4788187, %v7279
    %v7281 = vand.u32 2147483647, %v7280
    %v7283 = vcvt.s32.f32 %v7276
    %v7284 = vmul.f32 %v7283, %v7281
    %v7285 = vxor.u32 %v7284, 2147483648
    %v7286 = vsel %vm7203, %v7285, %v7284
    %v7287 = vsub.s32 4, %v7263
    %v7288 = vsel %vm7203, %v7287, %v7263
    %v7289 = vsel %vm7202, %v4079, %v7286
    %v7290 = vsel %vm7202, 0, %v7288
    %v7291 = vcosq.f32.pop %v7289
    %v7292 = vsinq.f32.pop %v7289
    %vm7293 = vweird.f32 %v4079
    %v7294 = vadd.s32 %v7290, 3
    %v7295 = vand.u32 %v7294, 3
    %vm7296 = vcmp.lt.s32.totalorder %v7295, 2
    %vm7297 = vcmp.eq.s32.totalorder %v7295, 0
    %v7298 = vxor.u32 %v7292, 2147483648
    %v7299 = vsel %vm7297, %v7291, %v7298
    %vm7300 = vcmp.eq.s32.totalorder %v7295, 2
    %v7301 = vxor.u32 %v7291, 2147483648
    %v7302 = vsel %vm7300, %v7301, %v7292
    %v7303 = vsel %vm7296, %v7299, %v7302
    %v7304 = vsel %vm7293, nan, %v7303
    %v7305 = vand.u32 2147483647, %v4080
    %vm7306 = vcmp.le.f32.partialorder %v7305, 0.7853982
    %vm7307 = vcmp.lt.s32.totalorder %v4080, 0
    %v7308 = vand.u32 %v4080, 2139095040
    %v7309 = vshrl.u32 %v7308, 23
    %v7310 = vsub.s32 %v7309, 127
    %v7311 = vand.u32 2147483647, %v4080
    %v7312 = vand.u32 %v7311, 8388607
    %v7313 = vor.u32 %v7312, 8388608
    %v7314 = vsub.s32 0, %v7313
    %v7315 = vadd.s32 %v7310, 1
    %vm7316 = vcmp.gt.s32.totalorder %v7315, 0
    %v7317 = vsel %vm7316, %v7315, 0
    %v7318 = vshrl.u32 %v7317, 5
    %v7319 = vand.u32 %v7317, 31
    %v7320 = vsub.s32 32, %v7319
    %v7321 = vshrl.u32 683565275, %v7320
    %v7322 = vshll.u32 683565275, %v7319
    %v7323 = vshrl.u32 2475754826, %v7320
    %v7324 = vor.u32 %v7322, %v7323
    %v7325 = vshll.u32 2475754826, %v7319
    %v7326 = vshrl.u32 2131351028, %v7320
    %v7327 = vor.u32 %v7325, %v7326
    %v7328 = vshll.u32 2131351028, %v7319
    %v7329 = vshrl.u32 2102212464, %v7320
    %v7330 = vor.u32 %v7328, %v7329
    %v7331 = vshll.u32 2102212464, %v7319
    %v7332 = vshrl.u32 920167782, %v7320
    %v7333 = vor.u32 %v7331, %v7332
    %v7334 = vshll.u32 920167782, %v7319
    %v7335 = vshrl.u32 1326507024, %v7320
    %v7336 = vor.u32 %v7334, %v7335
    %vm7337 = vcmp.lt.s32.totalorder %v7318, 1
    %vm7338 = vcmp.lt.s32.totalorder %v7318, 2
    %vm7339 = vcmp.lt.s32.totalorder %v7318, 3
    %vm7340 = vcmp.lt.s32.totalorder %v7318, 4
    %v7341 = vsel %vm7337, %v7321, %v7324
    %v7342 = vsel %vm7340, %v7330, 2102212464
    %v7343 = vsel %vm7339, %v7327, %v7342
    %v7344 = vsel %vm7338, %v7341, %v7343
    %v7345 = vsel %vm7337, %v7324, %v7327
    %v7346 = vsel %vm7340, %v7333, 920167782
    %v7347 = vsel %vm7339, %v7330, %v7346
    %v7348 = vsel %vm7338, %v7345, %v7347
    %v7349 = vsel %vm7337, %v7327, %v7330
    %v7350 = vsel %vm7340, %v7336, 1326507024
    %v7351 = vsel %vm7339, %v7333, %v7350
    %v7352 = vsel %vm7338, %v7349, %v7351
    %v7353 = vshll.u32 %v7313, 8
    %v7354 = vmul.u32.u64.compose %v7353, %v7352
    %v7355 = vextract.low.u32 %v7354
    %v7356 = vextract.high.u32 %v7354
    %v7357 = vmul.u32.u64.compose %v7353, %v7348
    %v7358 = vextract.low.u32 %v7357
    %v7359 = vextract.high.u32 %v7357
    %v7360 = vmul.u32 %v7353, %v7344
    %v7361 = vadd.s32 %v7356, %v7358
    %vm7362 = vc.u32 %v7356, %v7358
    %v7363 = vadd.s32 %v7359, 1
    %v7364 = vsel %vm7362, %v7363, %v7359
    %v7365 = vadd.s32 %v7360, %v7364
    %v7366 = vadd.s32 %v7365, 536870912
    %v7367 = vshrl.u32 %v7366, 30
    %v7368 = vshll.u32 %v7367, 30
    %v7369 = vsub.s32 %v7365, %v7368
    %vm7370 = vcmp.lt.s32.totalorder %v7369, 0
    %v7371 = vsub.s32 0, %v7369
    %v7372 = vsel %vm7370, %v7371, %v7369
    %v7373 = vclz %v7372
    %v7374 = vsub.s32 %v7373, 2
    %vm7375 = vcmp.gt.s32.totalorder 0, %v7374
    %v7376 = vsel %vm7375, 0, %v7374
    %v7377 = vsub.s32 32, %v7376
    %v7378 = vshll.u32 %v7369, %v7376
    %v7379 = vshrl.u32 %v7361, %v7377
    %v7380 = vor.u32 %v7378, %v7379
    %v7381 = vsub.s32 4294967266, %v7376
    %v7382 = vadd.s32 %v7381, 127
    %v7383 = vshll.u32 %v7382, 23
    %v7384 = vor.u32 4788187, %v7383
    %v7385 = vand.u32 2147483647, %v7384
    %v7387 = vcvt.s32.f32 %v7380
    %v7388 = vmul.f32 %v7387, %v7385
    %v7389 = vxor.u32 %v7388, 2147483648
    %v7390 = vsel %vm7307, %v7389, %v7388
    %v7391 = vsub.s32 4, %v7367
    %v7392 = vsel %vm7307, %v7391, %v7367
    %v7393 = vsel %vm7306, %v4080, %v7390
    %v7394 = vsel %vm7306, 0, %v7392
    %v7395 = vcosq.f32.pop %v7393
    %v7396 = vsinq.f32.pop %v7393
    %vm7397 = vweird.f32 %v4080
    %v7398 = vadd.s32 %v7394, 3
    %v7399 = vand.u32 %v7398, 3
    %vm7400 = vcmp.lt.s32.totalorder %v7399, 2
    %vm7401 = vcmp.eq.s32.totalorder %v7399, 0
    %v7402 = vxor.u32 %v7396, 2147483648
    %v7403 = vsel %vm7401, %v7395, %v7402
    %vm7404 = vcmp.eq.s32.totalorder %v7399, 2
    %v7405 = vxor.u32 %v7395, 2147483648
    %v7406 = vsel %vm7404, %v7405, %v7396
    %v7407 = vsel %vm7400, %v7403, %v7406
    %v7408 = vsel %vm7397, nan, %v7407
    %v7409 = vmul.f32 %v4184, %v4184
    %v7410 = vmul.f32 %v4288, %v4288
    %v7411 = vmul.f32 %v4392, %v4392
    %v7412 = vmul.f32 %v4496, %v4496
    %v7413 = vmul.f32 %v4600, %v4600
    %v7414 = vmul.f32 %v4704, %v4704
    %v7415 = vmul.f32 %v4808, %v4808
    %v7416 = vmul.f32 %v4912, %v4912
    %v7417 = vmul.f32 %v5016, %v5016
    %v7418 = vmul.f32 %v5120, %v5120
    %v7419 = vmul.f32 %v5224, %v5224
    %v7420 = vmul.f32 %v5328, %v5328
    %v7421 = vmul.f32 %v5432, %v5432
    %v7422 = vmul.f32 %v5536, %v5536
    %v7423 = vmul.f32 %v5640, %v5640
    %v7424 = vmul.f32 %v5744, %v5744
    %v7425 = vmul.f32 %v5848, %v5848
    %v7426 = vmul.f32 %v5952, %v5952
    %v7427 = vmul.f32 %v6056, %v6056
    %v7428 = vmul.f32 %v6160, %v6160
    %v7429 = vmul.f32 %v6264, %v6264
    %v7430 = vmul.f32 %v6368, %v6368
    %v7431 = vmul.f32 %v6472, %v6472
    %v7432 = vmul.f32 %v6576, %v6576
    %v7433 = vmul.f32 %v6680, %v6680
    %v7434 = vmul.f32 %v6784, %v6784
    %v7435 = vmul.f32 %v6888, %v6888
    %v7436 = vmul.f32 %v6992, %v6992
    %v7437 = vmul.f32 %v7096, %v7096
    %v7438 = vmul.f32 %v7200, %v7200
    %v7439 = vmul.f32 %v7304, %v7304
    %v7440 = vmul.f32 %v7408, %v7408
    %7441 = vset.pattern.permute.xlu0 6
    %7442 = vperm.xlu0 %7441, %v41
    %v7443 = vpop.permute.xlu0 %7442
    %7445 = vset.pattern.permute.xlu0 6
    %7446 = vperm.xlu0 %7445, %v42
    %v7447 = vpop.permute.xlu0 %7446
    %7449 = vset.pattern.permute.xlu0 6
    %7450 = vperm.xlu0 %7449, %v43
    %v7451 = vpop.permute.xlu0 %7450
    %7453 = vset.pattern.permute.xlu0 6
    %7454 = vperm.xlu0 %7453, %v44
    %v7455 = vpop.permute.xlu0 %7454
    %7457 = vset.pattern.permute.xlu0 6
    %7458 = vperm.xlu0 %7457, %v45
    %v7459 = vpop.permute.xlu0 %7458
    %7461 = vset.pattern.permute.xlu0 6
    %7462 = vperm.xlu0 %7461, %v46
    %v7463 = vpop.permute.xlu0 %7462
    %7465 = vset.pattern.permute.xlu0 6
    %7466 = vperm.xlu0 %7465, %v47
    %v7467 = vpop.permute.xlu0 %7466
    %7469 = vset.pattern.permute.xlu0 6
    %7470 = vperm.xlu0 %7469, %v48
    %v7471 = vpop.permute.xlu0 %7470
    %v7473 = vmul.f32 %v7409, %v7443
    %v7474 = vmul.f32 %v7410, %v7443
    %v7475 = vmul.f32 %v7411, %v7443
    %v7476 = vmul.f32 %v7412, %v7443
    %v7477 = vmul.f32 %v7413, %v7447
    %v7478 = vmul.f32 %v7414, %v7447
    %v7479 = vmul.f32 %v7415, %v7447
    %v7480 = vmul.f32 %v7416, %v7447
    %v7481 = vmul.f32 %v7417, %v7451
    %v7482 = vmul.f32 %v7418, %v7451
    %v7483 = vmul.f32 %v7419, %v7451
    %v7484 = vmul.f32 %v7420, %v7451
    %v7485 = vmul.f32 %v7421, %v7455
    %v7486 = vmul.f32 %v7422, %v7455
    %v7487 = vmul.f32 %v7423, %v7455
    %v7488 = vmul.f32 %v7424, %v7455
    %v7489 = vmul.f32 %v7425, %v7459
    %v7490 = vmul.f32 %v7426, %v7459
    %v7491 = vmul.f32 %v7427, %v7459
    %v7492 = vmul.f32 %v7428, %v7459
    %v7493 = vmul.f32 %v7429, %v7463
    %v7494 = vmul.f32 %v7430, %v7463
    %v7495 = vmul.f32 %v7431, %v7463
    %v7496 = vmul.f32 %v7432, %v7463
    %v7497 = vmul.f32 %v7433, %v7467
    %v7498 = vmul.f32 %v7434, %v7467
    %v7499 = vmul.f32 %v7435, %v7467
    %v7500 = vmul.f32 %v7436, %v7467
    %v7501 = vmul.f32 %v7437, %v7471
    %v7502 = vmul.f32 %v7438, %v7471
    %v7503 = vmul.f32 %v7439, %v7471
    %v7504 = vmul.f32 %v7440, %v7471
    %v7505 = vadd.f32 %v3858, %v7473
    %v7506 = vadd.f32 %v3860, %v7474
    %v7507 = vadd.f32 %v3971, %v7475
    %v7508 = vadd.f32 %v3973, %v7476
    %v7509 = vadd.f32 %v3864, %v7477
    %v7510 = vadd.f32 %v3866, %v7478
    %v7511 = vadd.f32 %v3977, %v7479
    %v7512 = vadd.f32 %v3979, %v7480
    %v7513 = vadd.f32 %v3870, %v7481
    %v7514 = vadd.f32 %v3872, %v7482
    %v7515 = vadd.f32 %v3983, %v7483
    %v7516 = vadd.f32 %v3985, %v7484
    %v7517 = vadd.f32 %v3876, %v7485
    %v7518 = vadd.f32 %v3878, %v7486
    %v7519 = vadd.f32 %v3989, %v7487
    %v7520 = vadd.f32 %v3991, %v7488
    %v7521 = vadd.f32 %v3882, %v7489
    %v7522 = vadd.f32 %v3884, %v7490
    %v7523 = vadd.f32 %v3995, %v7491
    %v7524 = vadd.f32 %v3997, %v7492
    %v7525 = vadd.f32 %v3888, %v7493
    %v7526 = vadd.f32 %v3890, %v7494
    %v7527 = vadd.f32 %v4001, %v7495
    %v7528 = vadd.f32 %v4003, %v7496
    %v7529 = vadd.f32 %v3894, %v7497
    %v7530 = vadd.f32 %v3896, %v7498
    %v7531 = vadd.f32 %v4007, %v7499
    %v7532 = vadd.f32 %v4009, %v7500
    %v7533 = vadd.f32 %v3900, %v7501
    %v7534 = vadd.f32 %v3902, %v7502
    %v7535 = vadd.f32 %v4013, %v7503
    %v7536 = vadd.f32 %v4015, %v7504
    %v7537 = vld [vmem:[#allocation3] sm:$0xff]
    %v7538 = vld [vmem:[#allocation3 + $0x8] sm:$0xff]
    %v7539 = vld [vmem:[#allocation3 + $0x10] sm:$0xff]
    %v7540 = vld [vmem:[#allocation3 + $0x18] sm:$0xff]
    %v7541 = vld [vmem:[#allocation3 + $0x20] sm:$0xff]
    %v7542 = vld [vmem:[#allocation3 + $0x28] sm:$0xff]
    %v7543 = vld [vmem:[#allocation3 + $0x30] sm:$0xff]
    %v7544 = vld [vmem:[#allocation3 + $0x38] sm:$0xff]
    %7545 = vset.pattern.permute.xlu0 7
    %7546 = vperm.xlu0 %7545, %v41
    %v7547 = vpop.permute.xlu0 %7546
    %7549 = vset.pattern.permute.xlu0 7
    %7550 = vperm.xlu0 %7549, %v42
    %v7551 = vpop.permute.xlu0 %7550
    %7553 = vset.pattern.permute.xlu0 7
    %7554 = vperm.xlu0 %7553, %v43
    %v7555 = vpop.permute.xlu0 %7554
    %7557 = vset.pattern.permute.xlu0 7
    %7558 = vperm.xlu0 %7557, %v44
    %v7559 = vpop.permute.xlu0 %7558
    %7561 = vset.pattern.permute.xlu0 7
    %7562 = vperm.xlu0 %7561, %v45
    %v7563 = vpop.permute.xlu0 %7562
    %7565 = vset.pattern.permute.xlu0 7
    %7566 = vperm.xlu0 %7565, %v46
    %v7567 = vpop.permute.xlu0 %7566
    %7569 = vset.pattern.permute.xlu0 7
    %7570 = vperm.xlu0 %7569, %v47
    %v7571 = vpop.permute.xlu0 %7570
    %7573 = vset.pattern.permute.xlu0 7
    %7574 = vperm.xlu0 %7573, %v48
    %v7575 = vpop.permute.xlu0 %7574
    %v7578 = vsel %vm3766, %v7537, 0
    %v7581 = vsel %vm3766, %v7538, 0
    %v7584 = vsel %vm3766, %v7539, 0
    %v7587 = vsel %vm3766, %v7540, 0
    %v7590 = vsel %vm3766, %v7541, 0
    %v7593 = vsel %vm3766, %v7542, 0
    %v7596 = vsel %vm3766, %v7543, 0
    %v7599 = vsel %vm3766, %v7544, 0
    %7601 = vmatprep.subr.mxu0 %v7506
    %7602 = vmatpush1.msra.mxu0 %v7505
    %7603 = vmatprep.subr.mxu0 %v7510
    %7604 = vmatpush1.msra.mxu0 %v7509
    %7605 = vmatprep.subr.mxu0 %v7514
    %7606 = vmatpush1.msra.mxu0 %v7513
    %7607 = vmatprep.subr.mxu0 %v7518
    %7608 = vmatpush1.msra.mxu0 %v7517
    %7609 = vmatprep.subr.mxu0 %v7522
    %7610 = vmatpush1.msra.mxu0 %v7521
    %7611 = vmatprep.subr.mxu0 %v7526
    %7612 = vmatpush1.msra.mxu0 %v7525
    %7613 = vmatprep.subr.mxu0 %v7530
    %7614 = vmatpush1.msra.mxu0 %v7529
    %7615 = vmatprep.subr.mxu0 %v7534
    %7616 = vmatpush1.msra.mxu0 %v7533
    %7617 = vmatprep.subr.mxu0 0.0
    %7618 = vmatpush1.msra.mxu0 0.0
    %7619 = vmatprep.subr.mxu0 0.0
    %7620 = vmatpush1.msra.mxu0 0.0
    %7621 = vmatprep.subr.mxu0 0.0
    %7622 = vmatpush1.msra.mxu0 0.0
    %7623 = vmatprep.subr.mxu0 0.0
    %7624 = vmatpush1.msra.mxu0 0.0
    %7625 = vmatprep.subr.mxu0 0.0
    %7626 = vmatpush1.msra.mxu0 0.0
    %7627 = vmatprep.subr.mxu0 0.0
    %7628 = vmatpush1.msra.mxu0 0.0
    %7629 = vmatprep.subr.mxu0 0.0
    %7630 = vmatpush1.msra.mxu0 0.0
    %7631 = vmatprep.subr.mxu0 0.0
    %7632 = vmatpush1.msra.mxu0 0.0
    %7633 = vmatprep.subr.mxu0 0.0
    %7634 = vmatpush1.msra.mxu0 0.0
    %7635 = vmatprep.subr.mxu0 0.0
    %7636 = vmatpush1.msra.mxu0 0.0
    %7637 = vmatprep.subr.mxu0 0.0
    %7638 = vmatpush1.msra.mxu0 0.0
    %7639 = vmatprep.subr.mxu0 0.0
    %7640 = vmatpush1.msra.mxu0 0.0
    %7641 = vmatprep.subr.mxu0 0.0
    %7642 = vmatpush1.msra.mxu0 0.0
    %7643 = vmatprep.subr.mxu0 0.0
    %7644 = vmatpush1.msra.mxu0 0.0
    %7645 = vmatprep.subr.mxu0 0.0
    %7646 = vmatpush1.msra.mxu0 0.0
    %7647 = vmatprep.subr.mxu0 0.0
    %7648 = vmatpush1.msra.mxu0 0.0
    %7649 = vmatprep.subr.mxu0 0.0
    %7650 = vmatpush1.msra.mxu0 0.0
    %7651 = vmatprep.subr.mxu0 0.0
    %7652 = vmatpush1.msra.mxu0 0.0
    %7653 = vmatprep.subr.mxu0 0.0
    %7654 = vmatpush1.msra.mxu0 0.0
    %7655 = vmatprep.subr.mxu0 0.0
    %7656 = vmatpush1.msra.mxu0 0.0
    %7657 = vmatprep.subr.mxu0 0.0
    %7658 = vmatpush1.msra.mxu0 0.0
    %7659 = vmatprep.subr.mxu0 0.0
    %7660 = vmatpush1.msra.mxu0 0.0
    %7661 = vmatprep.subr.mxu0 0.0
    %7662 = vmatpush1.msra.mxu0 0.0
    %7663 = vmatprep.subr.mxu0 0.0
    %7664 = vmatpush1.msra.mxu0 0.0
    %7665 = vmatprep.mubr.f32.mxu0 0.0
    %7666 = vmatmul.mubr.f32.gmra.mrb[0].mxu0 %v7578
    %v7667 = vpop.f32.mrb[0].mxu0
    %v7668 = vadd.f32 %v7547, %v7667
    %v7669 = vpop.f32.mrb[0].mxu0
    %v7670 = vadd.f32 %v7547, %v7669
    %7671 = vmatprep.mubr.f32.mxu0 0.0
    %7672 = vmatmul.mubr.f32.gmra.mrb[0].mxu0 %v7581
    %v7673 = vpop.f32.mrb[0].mxu0
    %v7674 = vadd.f32 %v7551, %v7673
    %v7675 = vpop.f32.mrb[0].mxu0
    %v7676 = vadd.f32 %v7551, %v7675
    %7677 = vmatprep.mubr.f32.mxu0 0.0
    %7678 = vmatmul.mubr.f32.gmra.mrb[0].mxu0 %v7584
    %v7679 = vpop.f32.mrb[0].mxu0
    %v7680 = vadd.f32 %v7555, %v7679
    %v7681 = vpop.f32.mrb[0].mxu0
    %v7682 = vadd.f32 %v7555, %v7681
    %7683 = vmatprep.mubr.f32.mxu0 0.0
    %7684 = vmatmul.mubr.f32.gmra.mrb[0].mxu0 %v7587
    %v7685 = vpop.f32.mrb[0].mxu0
    %v7686 = vadd.f32 %v7559, %v7685
    %v7687 = vpop.f32.mrb[0].mxu0
    %v7688 = vadd.f32 %v7559, %v7687
    %7689 = vmatprep.mubr.f32.mxu0 0.0
    %7690 = vmatmul.mubr.f32.gmra.mrb[0].mxu0 %v7590
    %v7691 = vpop.f32.mrb[0].mxu0
    %v7692 = vadd.f32 %v7563, %v7691
    %v7693 = vpop.f32.mrb[0].mxu0
    %v7694 = vadd.f32 %v7563, %v7693
    %7695 = vmatprep.mubr.f32.mxu0 0.0
    %7696 = vmatmul.mubr.f32.gmra.mrb[0].mxu0 %v7593
    %v7697 = vpop.f32.mrb[0].mxu0
    %v7698 = vadd.f32 %v7567, %v7697
    %v7699 = vpop.f32.mrb[0].mxu0
    %v7700 = vadd.f32 %v7567, %v7699
    %7701 = vmatprep.mubr.f32.mxu0 0.0
    %7702 = vmatmul.mubr.f32.gmra.mrb[0].mxu0 %v7596
    %v7703 = vpop.f32.mrb[0].mxu0
    %v7704 = vadd.f32 %v7571, %v7703
    %v7705 = vpop.f32.mrb[0].mxu0
    %v7706 = vadd.f32 %v7571, %v7705
    %7707 = vmatprep.mubr.f32.mxu0 0.0
    %7708 = vmatmul.mubr.f32.gmra.mrb[0].mxu0 %v7599
    %v7709 = vpop.f32.mrb[0].mxu0
    %v7710 = vadd.f32 %v7575, %v7709
    %v7711 = vpop.f32.mrb[0].mxu0
    %v7712 = vadd.f32 %v7575, %v7711
    %7713 = vdwg.mxu0
    %7714 = vmatprep.subr.mxu0 %v7508
    %7715 = vmatpush1.msra.mxu0 %v7507
    %7716 = vmatprep.subr.mxu0 %v7512
    %7717 = vmatpush1.msra.mxu0 %v7511
    %7718 = vmatprep.subr.mxu0 %v7516
    %7719 = vmatpush1.msra.mxu0 %v7515
    %7720 = vmatprep.subr.mxu0 %v7520
    %7721 = vmatpush1.msra.mxu0 %v7519
    %7722 = vmatprep.subr.mxu0 %v7524
    %7723 = vmatpush1.msra.mxu0 %v7523
    %7724 = vmatprep.subr.mxu0 %v7528
    %7725 = vmatpush1.msra.mxu0 %v7527
    %7726 = vmatprep.subr.mxu0 %v7532
    %7727 = vmatpush1.msra.mxu0 %v7531
    %7728 = vmatprep.subr.mxu0 %v7536
    %7729 = vmatpush1.msra.mxu0 %v7535
    %7730 = vmatprep.subr.mxu0 0.0
    %7731 = vmatpush1.msra.mxu0 0.0
    %7732 = vmatprep.subr.mxu0 0.0
    %7733 = vmatpush1.msra.mxu0 0.0
    %7734 = vmatprep.subr.mxu0 0.0
    %7735 = vmatpush1.msra.mxu0 0.0
    %7736 = vmatprep.subr.mxu0 0.0
    %7737 = vmatpush1.msra.mxu0 0.0
    %7738 = vmatprep.subr.mxu0 0.0
    %7739 = vmatpush1.msra.mxu0 0.0
    %7740 = vmatprep.subr.mxu0 0.0
    %7741 = vmatpush1.msra.mxu0 0.0
    %7742 = vmatprep.subr.mxu0 0.0
    %7743 = vmatpush1.msra.mxu0 0.0
    %7744 = vmatprep.subr.mxu0 0.0
    %7745 = vmatpush1.msra.mxu0 0.0
    %7746 = vmatprep.subr.mxu0 0.0
    %7747 = vmatpush1.msra.mxu0 0.0
    %7748 = vmatprep.subr.mxu0 0.0
    %7749 = vmatpush1.msra.mxu0 0.0
    %7750 = vmatprep.subr.mxu0 0.0
    %7751 = vmatpush1.msra.mxu0 0.0
    %7752 = vmatprep.subr.mxu0 0.0
    %7753 = vmatpush1.msra.mxu0 0.0
    %7754 = vmatprep.subr.mxu0 0.0
    %7755 = vmatpush1.msra.mxu0 0.0
    %7756 = vmatprep.subr.mxu0 0.0
    %7757 = vmatpush1.msra.mxu0 0.0
    %7758 = vmatprep.subr.mxu0 0.0
    %7759 = vmatpush1.msra.mxu0 0.0
    %7760 = vmatprep.subr.mxu0 0.0
    %7761 = vmatpush1.msra.mxu0 0.0
    %7762 = vmatprep.subr.mxu0 0.0
    %7763 = vmatpush1.msra.mxu0 0.0
    %7764 = vmatprep.subr.mxu0 0.0
    %7765 = vmatpush1.msra.mxu0 0.0
    %7766 = vmatprep.subr.mxu0 0.0
    %7767 = vmatpush1.msra.mxu0 0.0
    %7768 = vmatprep.subr.mxu0 0.0
    %7769 = vmatpush1.msra.mxu0 0.0
    %7770 = vmatprep.subr.mxu0 0.0
    %7771 = vmatpush1.msra.mxu0 0.0
    %7772 = vmatprep.subr.mxu0 0.0
    %7773 = vmatpush1.msra.mxu0 0.0
    %7774 = vmatprep.subr.mxu0 0.0
    %7775 = vmatpush1.msra.mxu0 0.0
    %7776 = vmatprep.subr.mxu0 0.0
    %7777 = vmatpush1.msra.mxu0 0.0
    %7778 = vmatprep.mubr.f32.mxu0 0.0
    %7779 = vmatmul.mubr.f32.gmra.mrb[0].mxu0 %v7578
    %v7780 = vpop.f32.mrb[0].mxu0
    %v7781 = vadd.f32 %v7547, %v7780
    %v7782 = vpop.f32.mrb[0].mxu0
    %v7783 = vadd.f32 %v7547, %v7782
    %7784 = vmatprep.mubr.f32.mxu0 0.0
    %7785 = vmatmul.mubr.f32.gmra.mrb[0].mxu0 %v7581
    %v7786 = vpop.f32.mrb[0].mxu0
    %v7787 = vadd.f32 %v7551, %v7786
    %v7788 = vpop.f32.mrb[0].mxu0
    %v7789 = vadd.f32 %v7551, %v7788
    %7790 = vmatprep.mubr.f32.mxu0 0.0
    %7791 = vmatmul.mubr.f32.gmra.mrb[0].mxu0 %v7584
    %v7792 = vpop.f32.mrb[0].mxu0
    %v7793 = vadd.f32 %v7555, %v7792
    %v7794 = vpop.f32.mrb[0].mxu0
    %v7795 = vadd.f32 %v7555, %v7794
    %7796 = vmatprep.mubr.f32.mxu0 0.0
    %7797 = vmatmul.mubr.f32.gmra.mrb[0].mxu0 %v7587
    %v7798 = vpop.f32.mrb[0].mxu0
    %v7799 = vadd.f32 %v7559, %v7798
    %v7800 = vpop.f32.mrb[0].mxu0
    %v7801 = vadd.f32 %v7559, %v7800
    %7802 = vmatprep.mubr.f32.mxu0 0.0
    %7803 = vmatmul.mubr.f32.gmra.mrb[0].mxu0 %v7590
    %v7804 = vpop.f32.mrb[0].mxu0
    %v7805 = vadd.f32 %v7563, %v7804
    %v7806 = vpop.f32.mrb[0].mxu0
    %v7807 = vadd.f32 %v7563, %v7806
    %7808 = vmatprep.mubr.f32.mxu0 0.0
    %7809 = vmatmul.mubr.f32.gmra.mrb[0].mxu0 %v7593
    %v7810 = vpop.f32.mrb[0].mxu0
    %v7811 = vadd.f32 %v7567, %v7810
    %v7812 = vpop.f32.mrb[0].mxu0
    %v7813 = vadd.f32 %v7567, %v7812
    %7814 = vmatprep.mubr.f32.mxu0 0.0
    %7815 = vmatmul.mubr.f32.gmra.mrb[0].mxu0 %v7596
    %v7816 = vpop.f32.mrb[0].mxu0
    %v7817 = vadd.f32 %v7571, %v7816
    %v7818 = vpop.f32.mrb[0].mxu0
    %v7819 = vadd.f32 %v7571, %v7818
    %7820 = vmatprep.mubr.f32.mxu0 0.0
    %7821 = vmatmul.mubr.f32.gmra.mrb[0].mxu0 %v7599
    %v7822 = vpop.f32.mrb[0].mxu0
    %v7823 = vadd.f32 %v7575, %v7822
    %v7824 = vpop.f32.mrb[0].mxu0
    %v7825 = vadd.f32 %v7575, %v7824
    %7826 = vdwg.mxu0
    %7827 = vset.pattern.permute.xlu0 8
    %7828 = vperm.xlu0 %7827, %v41
    %v7829 = vpop.permute.xlu0 %7828
    %7831 = vset.pattern.permute.xlu0 8
    %7832 = vperm.xlu0 %7831, %v42
    %v7833 = vpop.permute.xlu0 %7832
    %7835 = vset.pattern.permute.xlu0 8
    %7836 = vperm.xlu0 %7835, %v43
    %v7837 = vpop.permute.xlu0 %7836
    %7839 = vset.pattern.permute.xlu0 8
    %7840 = vperm.xlu0 %7839, %v44
    %v7841 = vpop.permute.xlu0 %7840
    %7843 = vset.pattern.permute.xlu0 8
    %7844 = vperm.xlu0 %7843, %v45
    %v7845 = vpop.permute.xlu0 %7844
    %7847 = vset.pattern.permute.xlu0 8
    %7848 = vperm.xlu0 %7847, %v46
    %v7849 = vpop.permute.xlu0 %7848
    %7851 = vset.pattern.permute.xlu0 8
    %7852 = vperm.xlu0 %7851, %v47
    %v7853 = vpop.permute.xlu0 %7852
    %7855 = vset.pattern.permute.xlu0 8
    %7856 = vperm.xlu0 %7855, %v48
    %v7857 = vpop.permute.xlu0 %7856
    %v7859 = vmul.f32 %v7829, %v7668
    %v7860 = vmul.f32 %v7829, %v7670
    %v7861 = vmul.f32 %v7829, %v7781
    %v7862 = vmul.f32 %v7829, %v7783
    %v7863 = vmul.f32 %v7833, %v7674
    %v7864 = vmul.f32 %v7833, %v7676
    %v7865 = vmul.f32 %v7833, %v7787
    %v7866 = vmul.f32 %v7833, %v7789
    %v7867 = vmul.f32 %v7837, %v7680
    %v7868 = vmul.f32 %v7837, %v7682
    %v7869 = vmul.f32 %v7837, %v7793
    %v7870 = vmul.f32 %v7837, %v7795
    %v7871 = vmul.f32 %v7841, %v7686
    %v7872 = vmul.f32 %v7841, %v7688
    %v7873 = vmul.f32 %v7841, %v7799
    %v7874 = vmul.f32 %v7841, %v7801
    %v7875 = vmul.f32 %v7845, %v7692
    %v7876 = vmul.f32 %v7845, %v7694
    %v7877 = vmul.f32 %v7845, %v7805
    %v7878 = vmul.f32 %v7845, %v7807
    %v7879 = vmul.f32 %v7849, %v7698
    %v7880 = vmul.f32 %v7849, %v7700
    %v7881 = vmul.f32 %v7849, %v7811
    %v7882 = vmul.f32 %v7849, %v7813
    %v7883 = vmul.f32 %v7853, %v7704
    %v7884 = vmul.f32 %v7853, %v7706
    %v7885 = vmul.f32 %v7853, %v7817
    %v7886 = vmul.f32 %v7853, %v7819
    %v7887 = vmul.f32 %v7857, %v7710
    %v7888 = vmul.f32 %v7857, %v7712
    %v7889 = vmul.f32 %v7857, %v7823
    %v7890 = vmul.f32 %v7857, %v7825
    %v7891 = vand.u32 2147483647, %v7859
    %vm7892 = vcmp.le.f32.partialorder %v7891, 0.7853982
    %vm7893 = vcmp.lt.s32.totalorder %v7859, 0
    %v7894 = vand.u32 %v7859, 2139095040
    %v7895 = vshrl.u32 %v7894, 23
    %v7896 = vsub.s32 %v7895, 127
    %v7897 = vand.u32 2147483647, %v7859
    %v7898 = vand.u32 %v7897, 8388607
    %v7899 = vor.u32 %v7898, 8388608
    %v7900 = vsub.s32 0, %v7899
    %v7901 = vadd.s32 %v7896, 1
    %vm7902 = vcmp.gt.s32.totalorder %v7901, 0
    %v7903 = vsel %vm7902, %v7901, 0
    %v7904 = vshrl.u32 %v7903, 5
    %v7905 = vand.u32 %v7903, 31
    %v7906 = vsub.s32 32, %v7905
    %v7907 = vshrl.u32 683565275, %v7906
    %v7908 = vshll.u32 683565275, %v7905
    %v7909 = vshrl.u32 2475754826, %v7906
    %v7910 = vor.u32 %v7908, %v7909
    %v7911 = vshll.u32 2475754826, %v7905
    %v7912 = vshrl.u32 2131351028, %v7906
    %v7913 = vor.u32 %v7911, %v7912
    %v7914 = vshll.u32 2131351028, %v7905
    %v7915 = vshrl.u32 2102212464, %v7906
    %v7916 = vor.u32 %v7914, %v7915
    %v7917 = vshll.u32 2102212464, %v7905
    %v7918 = vshrl.u32 920167782, %v7906
    %v7919 = vor.u32 %v7917, %v7918
    %v7920 = vshll.u32 920167782, %v7905
    %v7921 = vshrl.u32 1326507024, %v7906
    %v7922 = vor.u32 %v7920, %v7921
    %vm7923 = vcmp.lt.s32.totalorder %v7904, 1
    %vm7924 = vcmp.lt.s32.totalorder %v7904, 2
    %vm7925 = vcmp.lt.s32.totalorder %v7904, 3
    %vm7926 = vcmp.lt.s32.totalorder %v7904, 4
    %v7927 = vsel %vm7923, %v7907, %v7910
    %v7928 = vsel %vm7926, %v7916, 2102212464
    %v7929 = vsel %vm7925, %v7913, %v7928
    %v7930 = vsel %vm7924, %v7927, %v7929
    %v7931 = vsel %vm7923, %v7910, %v7913
    %v7932 = vsel %vm7926, %v7919, 920167782
    %v7933 = vsel %vm7925, %v7916, %v7932
    %v7934 = vsel %vm7924, %v7931, %v7933
    %v7935 = vsel %vm7923, %v7913, %v7916
    %v7936 = vsel %vm7926, %v7922, 1326507024
    %v7937 = vsel %vm7925, %v7919, %v7936
    %v7938 = vsel %vm7924, %v7935, %v7937
    %v7939 = vshll.u32 %v7899, 8
    %v7940 = vmul.u32.u64.compose %v7939, %v7938
    %v7941 = vextract.low.u32 %v7940
    %v7942 = vextract.high.u32 %v7940
    %v7943 = vmul.u32.u64.compose %v7939, %v7934
    %v7944 = vextract.low.u32 %v7943
    %v7945 = vextract.high.u32 %v7943
    %v7946 = vmul.u32 %v7939, %v7930
    %v7947 = vadd.s32 %v7942, %v7944
    %vm7948 = vc.u32 %v7942, %v7944
    %v7949 = vadd.s32 %v7945, 1
    %v7950 = vsel %vm7948, %v7949, %v7945
    %v7951 = vadd.s32 %v7946, %v7950
    %v7952 = vadd.s32 %v7951, 536870912
    %v7953 = vshrl.u32 %v7952, 30
    %v7954 = vshll.u32 %v7953, 30
    %v7955 = vsub.s32 %v7951, %v7954
    %vm7956 = vcmp.lt.s32.totalorder %v7955, 0
    %v7957 = vsub.s32 0, %v7955
    %v7958 = vsel %vm7956, %v7957, %v7955
    %v7959 = vclz %v7958
    %v7960 = vsub.s32 %v7959, 2
    %vm7961 = vcmp.gt.s32.totalorder 0, %v7960
    %v7962 = vsel %vm7961, 0, %v7960
    %v7963 = vsub.s32 32, %v7962
    %v7964 = vshll.u32 %v7955, %v7962
    %v7965 = vshrl.u32 %v7947, %v7963
    %v7966 = vor.u32 %v7964, %v7965
    %v7967 = vsub.s32 4294967266, %v7962
    %v7968 = vadd.s32 %v7967, 127
    %v7969 = vshll.u32 %v7968, 23
    %v7970 = vor.u32 4788187, %v7969
    %v7971 = vand.u32 2147483647, %v7970
    %v7973 = vcvt.s32.f32 %v7966
    %v7974 = vmul.f32 %v7973, %v7971
    %v7975 = vxor.u32 %v7974, 2147483648
    %v7976 = vsel %vm7893, %v7975, %v7974
    %v7977 = vsub.s32 4, %v7953
    %v7978 = vsel %vm7893, %v7977, %v7953
    %v7979 = vsel %vm7892, %v7859, %v7976
    %v7980 = vsel %vm7892, 0, %v7978
    %v7981 = vcosq.f32.pop %v7979
    %v7982 = vsinq.f32.pop %v7979
    %vm7983 = vweird.f32 %v7859
    %v7984 = vadd.s32 %v7980, 3
    %v7985 = vand.u32 %v7984, 3
    %vm7986 = vcmp.lt.s32.totalorder %v7985, 2
    %vm7987 = vcmp.eq.s32.totalorder %v7985, 0
    %v7988 = vxor.u32 %v7982, 2147483648
    %v7989 = vsel %vm7987, %v7981, %v7988
    %vm7990 = vcmp.eq.s32.totalorder %v7985, 2
    %v7991 = vxor.u32 %v7981, 2147483648
    %v7992 = vsel %vm7990, %v7991, %v7982
    %v7993 = vsel %vm7986, %v7989, %v7992
    %v7994 = vsel %vm7983, nan, %v7993
    %v7995 = vand.u32 2147483647, %v7860
    %vm7996 = vcmp.le.f32.partialorder %v7995, 0.7853982
    %vm7997 = vcmp.lt.s32.totalorder %v7860, 0
    %v7998 = vand.u32 %v7860, 2139095040
    %v7999 = vshrl.u32 %v7998, 23
    %v8000 = vsub.s32 %v7999, 127
    %v8001 = vand.u32 2147483647, %v7860
    %v8002 = vand.u32 %v8001, 8388607
    %v8003 = vor.u32 %v8002, 8388608
    %v8004 = vsub.s32 0, %v8003
    %v8005 = vadd.s32 %v8000, 1
    %vm8006 = vcmp.gt.s32.totalorder %v8005, 0
    %v8007 = vsel %vm8006, %v8005, 0
    %v8008 = vshrl.u32 %v8007, 5
    %v8009 = vand.u32 %v8007, 31
    %v8010 = vsub.s32 32, %v8009
    %v8011 = vshrl.u32 683565275, %v8010
    %v8012 = vshll.u32 683565275, %v8009
    %v8013 = vshrl.u32 2475754826, %v8010
    %v8014 = vor.u32 %v8012, %v8013
    %v8015 = vshll.u32 2475754826, %v8009
    %v8016 = vshrl.u32 2131351028, %v8010
    %v8017 = vor.u32 %v8015, %v8016
    %v8018 = vshll.u32 2131351028, %v8009
    %v8019 = vshrl.u32 2102212464, %v8010
    %v8020 = vor.u32 %v8018, %v8019
    %v8021 = vshll.u32 2102212464, %v8009
    %v8022 = vshrl.u32 920167782, %v8010
    %v8023 = vor.u32 %v8021, %v8022
    %v8024 = vshll.u32 920167782, %v8009
    %v8025 = vshrl.u32 1326507024, %v8010
    %v8026 = vor.u32 %v8024, %v8025
    %vm8027 = vcmp.lt.s32.totalorder %v8008, 1
    %vm8028 = vcmp.lt.s32.totalorder %v8008, 2
    %vm8029 = vcmp.lt.s32.totalorder %v8008, 3
    %vm8030 = vcmp.lt.s32.totalorder %v8008, 4
    %v8031 = vsel %vm8027, %v8011, %v8014
    %v8032 = vsel %vm8030, %v8020, 2102212464
    %v8033 = vsel %vm8029, %v8017, %v8032
    %v8034 = vsel %vm8028, %v8031, %v8033
    %v8035 = vsel %vm8027, %v8014, %v8017
    %v8036 = vsel %vm8030, %v8023, 920167782
    %v8037 = vsel %vm8029, %v8020, %v8036
    %v8038 = vsel %vm8028, %v8035, %v8037
    %v8039 = vsel %vm8027, %v8017, %v8020
    %v8040 = vsel %vm8030, %v8026, 1326507024
    %v8041 = vsel %vm8029, %v8023, %v8040
    %v8042 = vsel %vm8028, %v8039, %v8041
    %v8043 = vshll.u32 %v8003, 8
    %v8044 = vmul.u32.u64.compose %v8043, %v8042
    %v8045 = vextract.low.u32 %v8044
    %v8046 = vextract.high.u32 %v8044
    %v8047 = vmul.u32.u64.compose %v8043, %v8038
    %v8048 = vextract.low.u32 %v8047
    %v8049 = vextract.high.u32 %v8047
    %v8050 = vmul.u32 %v8043, %v8034
    %v8051 = vadd.s32 %v8046, %v8048
    %vm8052 = vc.u32 %v8046, %v8048
    %v8053 = vadd.s32 %v8049, 1
    %v8054 = vsel %vm8052, %v8053, %v8049
    %v8055 = vadd.s32 %v8050, %v8054
    %v8056 = vadd.s32 %v8055, 536870912
    %v8057 = vshrl.u32 %v8056, 30
    %v8058 = vshll.u32 %v8057, 30
    %v8059 = vsub.s32 %v8055, %v8058
    %vm8060 = vcmp.lt.s32.totalorder %v8059, 0
    %v8061 = vsub.s32 0, %v8059
    %v8062 = vsel %vm8060, %v8061, %v8059
    %v8063 = vclz %v8062
    %v8064 = vsub.s32 %v8063, 2
    %vm8065 = vcmp.gt.s32.totalorder 0, %v8064
    %v8066 = vsel %vm8065, 0, %v8064
    %v8067 = vsub.s32 32, %v8066
    %v8068 = vshll.u32 %v8059, %v8066
    %v8069 = vshrl.u32 %v8051, %v8067
    %v8070 = vor.u32 %v8068, %v8069
    %v8071 = vsub.s32 4294967266, %v8066
    %v8072 = vadd.s32 %v8071, 127
    %v8073 = vshll.u32 %v8072, 23
    %v8074 = vor.u32 4788187, %v8073
    %v8075 = vand.u32 2147483647, %v8074
    %v8077 = vcvt.s32.f32 %v8070
    %v8078 = vmul.f32 %v8077, %v8075
    %v8079 = vxor.u32 %v8078, 2147483648
    %v8080 = vsel %vm7997, %v8079, %v8078
    %v8081 = vsub.s32 4, %v8057
    %v8082 = vsel %vm7997, %v8081, %v8057
    %v8083 = vsel %vm7996, %v7860, %v8080
    %v8084 = vsel %vm7996, 0, %v8082
    %v8085 = vcosq.f32.pop %v8083
    %v8086 = vsinq.f32.pop %v8083
    %vm8087 = vweird.f32 %v7860
    %v8088 = vadd.s32 %v8084, 3
    %v8089 = vand.u32 %v8088, 3
    %vm8090 = vcmp.lt.s32.totalorder %v8089, 2
    %vm8091 = vcmp.eq.s32.totalorder %v8089, 0
    %v8092 = vxor.u32 %v8086, 2147483648
    %v8093 = vsel %vm8091, %v8085, %v8092
    %vm8094 = vcmp.eq.s32.totalorder %v8089, 2
    %v8095 = vxor.u32 %v8085, 2147483648
    %v8096 = vsel %vm8094, %v8095, %v8086
    %v8097 = vsel %vm8090, %v8093, %v8096
    %v8098 = vsel %vm8087, nan, %v8097
    %v8099 = vand.u32 2147483647, %v7861
    %vm8100 = vcmp.le.f32.partialorder %v8099, 0.7853982
    %vm8101 = vcmp.lt.s32.totalorder %v7861, 0
    %v8102 = vand.u32 %v7861, 2139095040
    %v8103 = vshrl.u32 %v8102, 23
    %v8104 = vsub.s32 %v8103, 127
    %v8105 = vand.u32 2147483647, %v7861
    %v8106 = vand.u32 %v8105, 8388607
    %v8107 = vor.u32 %v8106, 8388608
    %v8108 = vsub.s32 0, %v8107
    %v8109 = vadd.s32 %v8104, 1
    %vm8110 = vcmp.gt.s32.totalorder %v8109, 0
    %v8111 = vsel %vm8110, %v8109, 0
    %v8112 = vshrl.u32 %v8111, 5
    %v8113 = vand.u32 %v8111, 31
    %v8114 = vsub.s32 32, %v8113
    %v8115 = vshrl.u32 683565275, %v8114
    %v8116 = vshll.u32 683565275, %v8113
    %v8117 = vshrl.u32 2475754826, %v8114
    %v8118 = vor.u32 %v8116, %v8117
    %v8119 = vshll.u32 2475754826, %v8113
    %v8120 = vshrl.u32 2131351028, %v8114
    %v8121 = vor.u32 %v8119, %v8120
    %v8122 = vshll.u32 2131351028, %v8113
    %v8123 = vshrl.u32 2102212464, %v8114
    %v8124 = vor.u32 %v8122, %v8123
    %v8125 = vshll.u32 2102212464, %v8113
    %v8126 = vshrl.u32 920167782, %v8114
    %v8127 = vor.u32 %v8125, %v8126
    %v8128 = vshll.u32 920167782, %v8113
    %v8129 = vshrl.u32 1326507024, %v8114
    %v8130 = vor.u32 %v8128, %v8129
    %vm8131 = vcmp.lt.s32.totalorder %v8112, 1
    %vm8132 = vcmp.lt.s32.totalorder %v8112, 2
    %vm8133 = vcmp.lt.s32.totalorder %v8112, 3
    %vm8134 = vcmp.lt.s32.totalorder %v8112, 4
    %v8135 = vsel %vm8131, %v8115, %v8118
    %v8136 = vsel %vm8134, %v8124, 2102212464
    %v8137 = vsel %vm8133, %v8121, %v8136
    %v8138 = vsel %vm8132, %v8135, %v8137
    %v8139 = vsel %vm8131, %v8118, %v8121
    %v8140 = vsel %vm8134, %v8127, 920167782
    %v8141 = vsel %vm8133, %v8124, %v8140
    %v8142 = vsel %vm8132, %v8139, %v8141
    %v8143 = vsel %vm8131, %v8121, %v8124
    %v8144 = vsel %vm8134, %v8130, 1326507024
    %v8145 = vsel %vm8133, %v8127, %v8144
    %v8146 = vsel %vm8132, %v8143, %v8145
    %v8147 = vshll.u32 %v8107, 8
    %v8148 = vmul.u32.u64.compose %v8147, %v8146
    %v8149 = vextract.low.u32 %v8148
    %v8150 = vextract.high.u32 %v8148
    %v8151 = vmul.u32.u64.compose %v8147, %v8142
    %v8152 = vextract.low.u32 %v8151
    %v8153 = vextract.high.u32 %v8151
    %v8154 = vmul.u32 %v8147, %v8138
    %v8155 = vadd.s32 %v8150, %v8152
    %vm8156 = vc.u32 %v8150, %v8152
    %v8157 = vadd.s32 %v8153, 1
    %v8158 = vsel %vm8156, %v8157, %v8153
    %v8159 = vadd.s32 %v8154, %v8158
    %v8160 = vadd.s32 %v8159, 536870912
    %v8161 = vshrl.u32 %v8160, 30
    %v8162 = vshll.u32 %v8161, 30
    %v8163 = vsub.s32 %v8159, %v8162
    %vm8164 = vcmp.lt.s32.totalorder %v8163, 0
    %v8165 = vsub.s32 0, %v8163
    %v8166 = vsel %vm8164, %v8165, %v8163
    %v8167 = vclz %v8166
    %v8168 = vsub.s32 %v8167, 2
    %vm8169 = vcmp.gt.s32.totalorder 0, %v8168
    %v8170 = vsel %vm8169, 0, %v8168
    %v8171 = vsub.s32 32, %v8170
    %v8172 = vshll.u32 %v8163, %v8170
    %v8173 = vshrl.u32 %v8155, %v8171
    %v8174 = vor.u32 %v8172, %v8173
    %v8175 = vsub.s32 4294967266, %v8170
    %v8176 = vadd.s32 %v8175, 127
    %v8177 = vshll.u32 %v8176, 23
    %v8178 = vor.u32 4788187, %v8177
    %v8179 = vand.u32 2147483647, %v8178
    %v8181 = vcvt.s32.f32 %v8174
    %v8182 = vmul.f32 %v8181, %v8179
    %v8183 = vxor.u32 %v8182, 2147483648
    %v8184 = vsel %vm8101, %v8183, %v8182
    %v8185 = vsub.s32 4, %v8161
    %v8186 = vsel %vm8101, %v8185, %v8161
    %v8187 = vsel %vm8100, %v7861, %v8184
    %v8188 = vsel %vm8100, 0, %v8186
    %v8189 = vcosq.f32.pop %v8187
    %v8190 = vsinq.f32.pop %v8187
    %vm8191 = vweird.f32 %v7861
    %v8192 = vadd.s32 %v8188, 3
    %v8193 = vand.u32 %v8192, 3
    %vm8194 = vcmp.lt.s32.totalorder %v8193, 2
    %vm8195 = vcmp.eq.s32.totalorder %v8193, 0
    %v8196 = vxor.u32 %v8190, 2147483648
    %v8197 = vsel %vm8195, %v8189, %v8196
    %vm8198 = vcmp.eq.s32.totalorder %v8193, 2
    %v8199 = vxor.u32 %v8189, 2147483648
    %v8200 = vsel %vm8198, %v8199, %v8190
    %v8201 = vsel %vm8194, %v8197, %v8200
    %v8202 = vsel %vm8191, nan, %v8201
    %v8203 = vand.u32 2147483647, %v7862
    %vm8204 = vcmp.le.f32.partialorder %v8203, 0.7853982
    %vm8205 = vcmp.lt.s32.totalorder %v7862, 0
    %v8206 = vand.u32 %v7862, 2139095040
    %v8207 = vshrl.u32 %v8206, 23
    %v8208 = vsub.s32 %v8207, 127
    %v8209 = vand.u32 2147483647, %v7862
    %v8210 = vand.u32 %v8209, 8388607
    %v8211 = vor.u32 %v8210, 8388608
    %v8212 = vsub.s32 0, %v8211
    %v8213 = vadd.s32 %v8208, 1
    %vm8214 = vcmp.gt.s32.totalorder %v8213, 0
    %v8215 = vsel %vm8214, %v8213, 0
    %v8216 = vshrl.u32 %v8215, 5
    %v8217 = vand.u32 %v8215, 31
    %v8218 = vsub.s32 32, %v8217
    %v8219 = vshrl.u32 683565275, %v8218
    %v8220 = vshll.u32 683565275, %v8217
    %v8221 = vshrl.u32 2475754826, %v8218
    %v8222 = vor.u32 %v8220, %v8221
    %v8223 = vshll.u32 2475754826, %v8217
    %v8224 = vshrl.u32 2131351028, %v8218
    %v8225 = vor.u32 %v8223, %v8224
    %v8226 = vshll.u32 2131351028, %v8217
    %v8227 = vshrl.u32 2102212464, %v8218
    %v8228 = vor.u32 %v8226, %v8227
    %v8229 = vshll.u32 2102212464, %v8217
    %v8230 = vshrl.u32 920167782, %v8218
    %v8231 = vor.u32 %v8229, %v8230
    %v8232 = vshll.u32 920167782, %v8217
    %v8233 = vshrl.u32 1326507024, %v8218
    %v8234 = vor.u32 %v8232, %v8233
    %vm8235 = vcmp.lt.s32.totalorder %v8216, 1
    %vm8236 = vcmp.lt.s32.totalorder %v8216, 2
    %vm8237 = vcmp.lt.s32.totalorder %v8216, 3
    %vm8238 = vcmp.lt.s32.totalorder %v8216, 4
    %v8239 = vsel %vm8235, %v8219, %v8222
    %v8240 = vsel %vm8238, %v8228, 2102212464
    %v8241 = vsel %vm8237, %v8225, %v8240
    %v8242 = vsel %vm8236, %v8239, %v8241
    %v8243 = vsel %vm8235, %v8222, %v8225
    %v8244 = vsel %vm8238, %v8231, 920167782
    %v8245 = vsel %vm8237, %v8228, %v8244
    %v8246 = vsel %vm8236, %v8243, %v8245
    %v8247 = vsel %vm8235, %v8225, %v8228
    %v8248 = vsel %vm8238, %v8234, 1326507024
    %v8249 = vsel %vm8237, %v8231, %v8248
    %v8250 = vsel %vm8236, %v8247, %v8249
    %v8251 = vshll.u32 %v8211, 8
    %v8252 = vmul.u32.u64.compose %v8251, %v8250
    %v8253 = vextract.low.u32 %v8252
    %v8254 = vextract.high.u32 %v8252
    %v8255 = vmul.u32.u64.compose %v8251, %v8246
    %v8256 = vextract.low.u32 %v8255
    %v8257 = vextract.high.u32 %v8255
    %v8258 = vmul.u32 %v8251, %v8242
    %v8259 = vadd.s32 %v8254, %v8256
    %vm8260 = vc.u32 %v8254, %v8256
    %v8261 = vadd.s32 %v8257, 1
    %v8262 = vsel %vm8260, %v8261, %v8257
    %v8263 = vadd.s32 %v8258, %v8262
    %v8264 = vadd.s32 %v8263, 536870912
    %v8265 = vshrl.u32 %v8264, 30
    %v8266 = vshll.u32 %v8265, 30
    %v8267 = vsub.s32 %v8263, %v8266
    %vm8268 = vcmp.lt.s32.totalorder %v8267, 0
    %v8269 = vsub.s32 0, %v8267
    %v8270 = vsel %vm8268, %v8269, %v8267
    %v8271 = vclz %v8270
    %v8272 = vsub.s32 %v8271, 2
    %vm8273 = vcmp.gt.s32.totalorder 0, %v8272
    %v8274 = vsel %vm8273, 0, %v8272
    %v8275 = vsub.s32 32, %v8274
    %v8276 = vshll.u32 %v8267, %v8274
    %v8277 = vshrl.u32 %v8259, %v8275
    %v8278 = vor.u32 %v8276, %v8277
    %v8279 = vsub.s32 4294967266, %v8274
    %v8280 = vadd.s32 %v8279, 127
    %v8281 = vshll.u32 %v8280, 23
    %v8282 = vor.u32 4788187, %v8281
    %v8283 = vand.u32 2147483647, %v8282
    %v8285 = vcvt.s32.f32 %v8278
    %v8286 = vmul.f32 %v8285, %v8283
    %v8287 = vxor.u32 %v8286, 2147483648
    %v8288 = vsel %vm8205, %v8287, %v8286
    %v8289 = vsub.s32 4, %v8265
    %v8290 = vsel %vm8205, %v8289, %v8265
    %v8291 = vsel %vm8204, %v7862, %v8288
    %v8292 = vsel %vm8204, 0, %v8290
    %v8293 = vcosq.f32.pop %v8291
    %v8294 = vsinq.f32.pop %v8291
    %vm8295 = vweird.f32 %v7862
    %v8296 = vadd.s32 %v8292, 3
    %v8297 = vand.u32 %v8296, 3
    %vm8298 = vcmp.lt.s32.totalorder %v8297, 2
    %vm8299 = vcmp.eq.s32.totalorder %v8297, 0
    %v8300 = vxor.u32 %v8294, 2147483648
    %v8301 = vsel %vm8299, %v8293, %v8300
    %vm8302 = vcmp.eq.s32.totalorder %v8297, 2
    %v8303 = vxor.u32 %v8293, 2147483648
    %v8304 = vsel %vm8302, %v8303, %v8294
    %v8305 = vsel %vm8298, %v8301, %v8304
    %v8306 = vsel %vm8295, nan, %v8305
    %v8307 = vand.u32 2147483647, %v7863
    %vm8308 = vcmp.le.f32.partialorder %v8307, 0.7853982
    %vm8309 = vcmp.lt.s32.totalorder %v7863, 0
    %v8310 = vand.u32 %v7863, 2139095040
    %v8311 = vshrl.u32 %v8310, 23
    %v8312 = vsub.s32 %v8311, 127
    %v8313 = vand.u32 2147483647, %v7863
    %v8314 = vand.u32 %v8313, 8388607
    %v8315 = vor.u32 %v8314, 8388608
    %v8316 = vsub.s32 0, %v8315
    %v8317 = vadd.s32 %v8312, 1
    %vm8318 = vcmp.gt.s32.totalorder %v8317, 0
    %v8319 = vsel %vm8318, %v8317, 0
    %v8320 = vshrl.u32 %v8319, 5
    %v8321 = vand.u32 %v8319, 31
    %v8322 = vsub.s32 32, %v8321
    %v8323 = vshrl.u32 683565275, %v8322
    %v8324 = vshll.u32 683565275, %v8321
    %v8325 = vshrl.u32 2475754826, %v8322
    %v8326 = vor.u32 %v8324, %v8325
    %v8327 = vshll.u32 2475754826, %v8321
    %v8328 = vshrl.u32 2131351028, %v8322
    %v8329 = vor.u32 %v8327, %v8328
    %v8330 = vshll.u32 2131351028, %v8321
    %v8331 = vshrl.u32 2102212464, %v8322
    %v8332 = vor.u32 %v8330, %v8331
    %v8333 = vshll.u32 2102212464, %v8321
    %v8334 = vshrl.u32 920167782, %v8322
    %v8335 = vor.u32 %v8333, %v8334
    %v8336 = vshll.u32 920167782, %v8321
    %v8337 = vshrl.u32 1326507024, %v8322
    %v8338 = vor.u32 %v8336, %v8337
    %vm8339 = vcmp.lt.s32.totalorder %v8320, 1
    %vm8340 = vcmp.lt.s32.totalorder %v8320, 2
    %vm8341 = vcmp.lt.s32.totalorder %v8320, 3
    %vm8342 = vcmp.lt.s32.totalorder %v8320, 4
    %v8343 = vsel %vm8339, %v8323, %v8326
    %v8344 = vsel %vm8342, %v8332, 2102212464
    %v8345 = vsel %vm8341, %v8329, %v8344
    %v8346 = vsel %vm8340, %v8343, %v8345
    %v8347 = vsel %vm8339, %v8326, %v8329
    %v8348 = vsel %vm8342, %v8335, 920167782
    %v8349 = vsel %vm8341, %v8332, %v8348
    %v8350 = vsel %vm8340, %v8347, %v8349
    %v8351 = vsel %vm8339, %v8329, %v8332
    %v8352 = vsel %vm8342, %v8338, 1326507024
    %v8353 = vsel %vm8341, %v8335, %v8352
    %v8354 = vsel %vm8340, %v8351, %v8353
    %v8355 = vshll.u32 %v8315, 8
    %v8356 = vmul.u32.u64.compose %v8355, %v8354
    %v8357 = vextract.low.u32 %v8356
    %v8358 = vextract.high.u32 %v8356
    %v8359 = vmul.u32.u64.compose %v8355, %v8350
    %v8360 = vextract.low.u32 %v8359
    %v8361 = vextract.high.u32 %v8359
    %v8362 = vmul.u32 %v8355, %v8346
    %v8363 = vadd.s32 %v8358, %v8360
    %vm8364 = vc.u32 %v8358, %v8360
    %v8365 = vadd.s32 %v8361, 1
    %v8366 = vsel %vm8364, %v8365, %v8361
    %v8367 = vadd.s32 %v8362, %v8366
    %v8368 = vadd.s32 %v8367, 536870912
    %v8369 = vshrl.u32 %v8368, 30
    %v8370 = vshll.u32 %v8369, 30
    %v8371 = vsub.s32 %v8367, %v8370
    %vm8372 = vcmp.lt.s32.totalorder %v8371, 0
    %v8373 = vsub.s32 0, %v8371
    %v8374 = vsel %vm8372, %v8373, %v8371
    %v8375 = vclz %v8374
    %v8376 = vsub.s32 %v8375, 2
    %vm8377 = vcmp.gt.s32.totalorder 0, %v8376
    %v8378 = vsel %vm8377, 0, %v8376
    %v8379 = vsub.s32 32, %v8378
    %v8380 = vshll.u32 %v8371, %v8378
    %v8381 = vshrl.u32 %v8363, %v8379
    %v8382 = vor.u32 %v8380, %v8381
    %v8383 = vsub.s32 4294967266, %v8378
    %v8384 = vadd.s32 %v8383, 127
    %v8385 = vshll.u32 %v8384, 23
    %v8386 = vor.u32 4788187, %v8385
    %v8387 = vand.u32 2147483647, %v8386
    %v8389 = vcvt.s32.f32 %v8382
    %v8390 = vmul.f32 %v8389, %v8387
    %v8391 = vxor.u32 %v8390, 2147483648
    %v8392 = vsel %vm8309, %v8391, %v8390
    %v8393 = vsub.s32 4, %v8369
    %v8394 = vsel %vm8309, %v8393, %v8369
    %v8395 = vsel %vm8308, %v7863, %v8392
    %v8396 = vsel %vm8308, 0, %v8394
    %v8397 = vcosq.f32.pop %v8395
    %v8398 = vsinq.f32.pop %v8395
    %vm8399 = vweird.f32 %v7863
    %v8400 = vadd.s32 %v8396, 3
    %v8401 = vand.u32 %v8400, 3
    %vm8402 = vcmp.lt.s32.totalorder %v8401, 2
    %vm8403 = vcmp.eq.s32.totalorder %v8401, 0
    %v8404 = vxor.u32 %v8398, 2147483648
    %v8405 = vsel %vm8403, %v8397, %v8404
    %vm8406 = vcmp.eq.s32.totalorder %v8401, 2
    %v8407 = vxor.u32 %v8397, 2147483648
    %v8408 = vsel %vm8406, %v8407, %v8398
    %v8409 = vsel %vm8402, %v8405, %v8408
    %v8410 = vsel %vm8399, nan, %v8409
    %v8411 = vand.u32 2147483647, %v7864
    %vm8412 = vcmp.le.f32.partialorder %v8411, 0.7853982
    %vm8413 = vcmp.lt.s32.totalorder %v7864, 0
    %v8414 = vand.u32 %v7864, 2139095040
    %v8415 = vshrl.u32 %v8414, 23
    %v8416 = vsub.s32 %v8415, 127
    %v8417 = vand.u32 2147483647, %v7864
    %v8418 = vand.u32 %v8417, 8388607
    %v8419 = vor.u32 %v8418, 8388608
    %v8420 = vsub.s32 0, %v8419
    %v8421 = vadd.s32 %v8416, 1
    %vm8422 = vcmp.gt.s32.totalorder %v8421, 0
    %v8423 = vsel %vm8422, %v8421, 0
    %v8424 = vshrl.u32 %v8423, 5
    %v8425 = vand.u32 %v8423, 31
    %v8426 = vsub.s32 32, %v8425
    %v8427 = vshrl.u32 683565275, %v8426
    %v8428 = vshll.u32 683565275, %v8425
    %v8429 = vshrl.u32 2475754826, %v8426
    %v8430 = vor.u32 %v8428, %v8429
    %v8431 = vshll.u32 2475754826, %v8425
    %v8432 = vshrl.u32 2131351028, %v8426
    %v8433 = vor.u32 %v8431, %v8432
    %v8434 = vshll.u32 2131351028, %v8425
    %v8435 = vshrl.u32 2102212464, %v8426
    %v8436 = vor.u32 %v8434, %v8435
    %v8437 = vshll.u32 2102212464, %v8425
    %v8438 = vshrl.u32 920167782, %v8426
    %v8439 = vor.u32 %v8437, %v8438
    %v8440 = vshll.u32 920167782, %v8425
    %v8441 = vshrl.u32 1326507024, %v8426
    %v8442 = vor.u32 %v8440, %v8441
    %vm8443 = vcmp.lt.s32.totalorder %v8424, 1
    %vm8444 = vcmp.lt.s32.totalorder %v8424, 2
    %vm8445 = vcmp.lt.s32.totalorder %v8424, 3
    %vm8446 = vcmp.lt.s32.totalorder %v8424, 4
    %v8447 = vsel %vm8443, %v8427, %v8430
    %v8448 = vsel %vm8446, %v8436, 2102212464
    %v8449 = vsel %vm8445, %v8433, %v8448
    %v8450 = vsel %vm8444, %v8447, %v8449
    %v8451 = vsel %vm8443, %v8430, %v8433
    %v8452 = vsel %vm8446, %v8439, 920167782
    %v8453 = vsel %vm8445, %v8436, %v8452
    %v8454 = vsel %vm8444, %v8451, %v8453
    %v8455 = vsel %vm8443, %v8433, %v8436
    %v8456 = vsel %vm8446, %v8442, 1326507024
    %v8457 = vsel %vm8445, %v8439, %v8456
    %v8458 = vsel %vm8444, %v8455, %v8457
    %v8459 = vshll.u32 %v8419, 8
    %v8460 = vmul.u32.u64.compose %v8459, %v8458
    %v8461 = vextract.low.u32 %v8460
    %v8462 = vextract.high.u32 %v8460
    %v8463 = vmul.u32.u64.compose %v8459, %v8454
    %v8464 = vextract.low.u32 %v8463
    %v8465 = vextract.high.u32 %v8463
    %v8466 = vmul.u32 %v8459, %v8450
    %v8467 = vadd.s32 %v8462, %v8464
    %vm8468 = vc.u32 %v8462, %v8464
    %v8469 = vadd.s32 %v8465, 1
    %v8470 = vsel %vm8468, %v8469, %v8465
    %v8471 = vadd.s32 %v8466, %v8470
    %v8472 = vadd.s32 %v8471, 536870912
    %v8473 = vshrl.u32 %v8472, 30
    %v8474 = vshll.u32 %v8473, 30
    %v8475 = vsub.s32 %v8471, %v8474
    %vm8476 = vcmp.lt.s32.totalorder %v8475, 0
    %v8477 = vsub.s32 0, %v8475
    %v8478 = vsel %vm8476, %v8477, %v8475
    %v8479 = vclz %v8478
    %v8480 = vsub.s32 %v8479, 2
    %vm8481 = vcmp.gt.s32.totalorder 0, %v8480
    %v8482 = vsel %vm8481, 0, %v8480
    %v8483 = vsub.s32 32, %v8482
    %v8484 = vshll.u32 %v8475, %v8482
    %v8485 = vshrl.u32 %v8467, %v8483
    %v8486 = vor.u32 %v8484, %v8485
    %v8487 = vsub.s32 4294967266, %v8482
    %v8488 = vadd.s32 %v8487, 127
    %v8489 = vshll.u32 %v8488, 23
    %v8490 = vor.u32 4788187, %v8489
    %v8491 = vand.u32 2147483647, %v8490
    %v8493 = vcvt.s32.f32 %v8486
    %v8494 = vmul.f32 %v8493, %v8491
    %v8495 = vxor.u32 %v8494, 2147483648
    %v8496 = vsel %vm8413, %v8495, %v8494
    %v8497 = vsub.s32 4, %v8473
    %v8498 = vsel %vm8413, %v8497, %v8473
    %v8499 = vsel %vm8412, %v7864, %v8496
    %v8500 = vsel %vm8412, 0, %v8498
    %v8501 = vcosq.f32.pop %v8499
    %v8502 = vsinq.f32.pop %v8499
    %vm8503 = vweird.f32 %v7864
    %v8504 = vadd.s32 %v8500, 3
    %v8505 = vand.u32 %v8504, 3
    %vm8506 = vcmp.lt.s32.totalorder %v8505, 2
    %vm8507 = vcmp.eq.s32.totalorder %v8505, 0
    %v8508 = vxor.u32 %v8502, 2147483648
    %v8509 = vsel %vm8507, %v8501, %v8508
    %vm8510 = vcmp.eq.s32.totalorder %v8505, 2
    %v8511 = vxor.u32 %v8501, 2147483648
    %v8512 = vsel %vm8510, %v8511, %v8502
    %v8513 = vsel %vm8506, %v8509, %v8512
    %v8514 = vsel %vm8503, nan, %v8513
    %v8515 = vand.u32 2147483647, %v7865
    %vm8516 = vcmp.le.f32.partialorder %v8515, 0.7853982
    %vm8517 = vcmp.lt.s32.totalorder %v7865, 0
    %v8518 = vand.u32 %v7865, 2139095040
    %v8519 = vshrl.u32 %v8518, 23
    %v8520 = vsub.s32 %v8519, 127
    %v8521 = vand.u32 2147483647, %v7865
    %v8522 = vand.u32 %v8521, 8388607
    %v8523 = vor.u32 %v8522, 8388608
    %v8524 = vsub.s32 0, %v8523
    %v8525 = vadd.s32 %v8520, 1
    %vm8526 = vcmp.gt.s32.totalorder %v8525, 0
    %v8527 = vsel %vm8526, %v8525, 0
    %v8528 = vshrl.u32 %v8527, 5
    %v8529 = vand.u32 %v8527, 31
    %v8530 = vsub.s32 32, %v8529
    %v8531 = vshrl.u32 683565275, %v8530
    %v8532 = vshll.u32 683565275, %v8529
    %v8533 = vshrl.u32 2475754826, %v8530
    %v8534 = vor.u32 %v8532, %v8533
    %v8535 = vshll.u32 2475754826, %v8529
    %v8536 = vshrl.u32 2131351028, %v8530
    %v8537 = vor.u32 %v8535, %v8536
    %v8538 = vshll.u32 2131351028, %v8529
    %v8539 = vshrl.u32 2102212464, %v8530
    %v8540 = vor.u32 %v8538, %v8539
    %v8541 = vshll.u32 2102212464, %v8529
    %v8542 = vshrl.u32 920167782, %v8530
    %v8543 = vor.u32 %v8541, %v8542
    %v8544 = vshll.u32 920167782, %v8529
    %v8545 = vshrl.u32 1326507024, %v8530
    %v8546 = vor.u32 %v8544, %v8545
    %vm8547 = vcmp.lt.s32.totalorder %v8528, 1
    %vm8548 = vcmp.lt.s32.totalorder %v8528, 2
    %vm8549 = vcmp.lt.s32.totalorder %v8528, 3
    %vm8550 = vcmp.lt.s32.totalorder %v8528, 4
    %v8551 = vsel %vm8547, %v8531, %v8534
    %v8552 = vsel %vm8550, %v8540, 2102212464
    %v8553 = vsel %vm8549, %v8537, %v8552
    %v8554 = vsel %vm8548, %v8551, %v8553
    %v8555 = vsel %vm8547, %v8534, %v8537
    %v8556 = vsel %vm8550, %v8543, 920167782
    %v8557 = vsel %vm8549, %v8540, %v8556
    %v8558 = vsel %vm8548, %v8555, %v8557
    %v8559 = vsel %vm8547, %v8537, %v8540
    %v8560 = vsel %vm8550, %v8546, 1326507024
    %v8561 = vsel %vm8549, %v8543, %v8560
    %v8562 = vsel %vm8548, %v8559, %v8561
    %v8563 = vshll.u32 %v8523, 8
    %v8564 = vmul.u32.u64.compose %v8563, %v8562
    %v8565 = vextract.low.u32 %v8564
    %v8566 = vextract.high.u32 %v8564
    %v8567 = vmul.u32.u64.compose %v8563, %v8558
    %v8568 = vextract.low.u32 %v8567
    %v8569 = vextract.high.u32 %v8567
    %v8570 = vmul.u32 %v8563, %v8554
    %v8571 = vadd.s32 %v8566, %v8568
    %vm8572 = vc.u32 %v8566, %v8568
    %v8573 = vadd.s32 %v8569, 1
    %v8574 = vsel %vm8572, %v8573, %v8569
    %v8575 = vadd.s32 %v8570, %v8574
    %v8576 = vadd.s32 %v8575, 536870912
    %v8577 = vshrl.u32 %v8576, 30
    %v8578 = vshll.u32 %v8577, 30
    %v8579 = vsub.s32 %v8575, %v8578
    %vm8580 = vcmp.lt.s32.totalorder %v8579, 0
    %v8581 = vsub.s32 0, %v8579
    %v8582 = vsel %vm8580, %v8581, %v8579
    %v8583 = vclz %v8582
    %v8584 = vsub.s32 %v8583, 2
    %vm8585 = vcmp.gt.s32.totalorder 0, %v8584
    %v8586 = vsel %vm8585, 0, %v8584
    %v8587 = vsub.s32 32, %v8586
    %v8588 = vshll.u32 %v8579, %v8586
    %v8589 = vshrl.u32 %v8571, %v8587
    %v8590 = vor.u32 %v8588, %v8589
    %v8591 = vsub.s32 4294967266, %v8586
    %v8592 = vadd.s32 %v8591, 127
    %v8593 = vshll.u32 %v8592, 23
    %v8594 = vor.u32 4788187, %v8593
    %v8595 = vand.u32 2147483647, %v8594
    %v8597 = vcvt.s32.f32 %v8590
    %v8598 = vmul.f32 %v8597, %v8595
    %v8599 = vxor.u32 %v8598, 2147483648
    %v8600 = vsel %vm8517, %v8599, %v8598
    %v8601 = vsub.s32 4, %v8577
    %v8602 = vsel %vm8517, %v8601, %v8577
    %v8603 = vsel %vm8516, %v7865, %v8600
    %v8604 = vsel %vm8516, 0, %v8602
    %v8605 = vcosq.f32.pop %v8603
    %v8606 = vsinq.f32.pop %v8603
    %vm8607 = vweird.f32 %v7865
    %v8608 = vadd.s32 %v8604, 3
    %v8609 = vand.u32 %v8608, 3
    %vm8610 = vcmp.lt.s32.totalorder %v8609, 2
    %vm8611 = vcmp.eq.s32.totalorder %v8609, 0
    %v8612 = vxor.u32 %v8606, 2147483648
    %v8613 = vsel %vm8611, %v8605, %v8612
    %vm8614 = vcmp.eq.s32.totalorder %v8609, 2
    %v8615 = vxor.u32 %v8605, 2147483648
    %v8616 = vsel %vm8614, %v8615, %v8606
    %v8617 = vsel %vm8610, %v8613, %v8616
    %v8618 = vsel %vm8607, nan, %v8617
    %v8619 = vand.u32 2147483647, %v7866
    %vm8620 = vcmp.le.f32.partialorder %v8619, 0.7853982
    %vm8621 = vcmp.lt.s32.totalorder %v7866, 0
    %v8622 = vand.u32 %v7866, 2139095040
    %v8623 = vshrl.u32 %v8622, 23
    %v8624 = vsub.s32 %v8623, 127
    %v8625 = vand.u32 2147483647, %v7866
    %v8626 = vand.u32 %v8625, 8388607
    %v8627 = vor.u32 %v8626, 8388608
    %v8628 = vsub.s32 0, %v8627
    %v8629 = vadd.s32 %v8624, 1
    %vm8630 = vcmp.gt.s32.totalorder %v8629, 0
    %v8631 = vsel %vm8630, %v8629, 0
    %v8632 = vshrl.u32 %v8631, 5
    %v8633 = vand.u32 %v8631, 31
    %v8634 = vsub.s32 32, %v8633
    %v8635 = vshrl.u32 683565275, %v8634
    %v8636 = vshll.u32 683565275, %v8633
    %v8637 = vshrl.u32 2475754826, %v8634
    %v8638 = vor.u32 %v8636, %v8637
    %v8639 = vshll.u32 2475754826, %v8633
    %v8640 = vshrl.u32 2131351028, %v8634
    %v8641 = vor.u32 %v8639, %v8640
    %v8642 = vshll.u32 2131351028, %v8633
    %v8643 = vshrl.u32 2102212464, %v8634
    %v8644 = vor.u32 %v8642, %v8643
    %v8645 = vshll.u32 2102212464, %v8633
    %v8646 = vshrl.u32 920167782, %v8634
    %v8647 = vor.u32 %v8645, %v8646
    %v8648 = vshll.u32 920167782, %v8633
    %v8649 = vshrl.u32 1326507024, %v8634
    %v8650 = vor.u32 %v8648, %v8649
    %vm8651 = vcmp.lt.s32.totalorder %v8632, 1
    %vm8652 = vcmp.lt.s32.totalorder %v8632, 2
    %vm8653 = vcmp.lt.s32.totalorder %v8632, 3
    %vm8654 = vcmp.lt.s32.totalorder %v8632, 4
    %v8655 = vsel %vm8651, %v8635, %v8638
    %v8656 = vsel %vm8654, %v8644, 2102212464
    %v8657 = vsel %vm8653, %v8641, %v8656
    %v8658 = vsel %vm8652, %v8655, %v8657
    %v8659 = vsel %vm8651, %v8638, %v8641
    %v8660 = vsel %vm8654, %v8647, 920167782
    %v8661 = vsel %vm8653, %v8644, %v8660
    %v8662 = vsel %vm8652, %v8659, %v8661
    %v8663 = vsel %vm8651, %v8641, %v8644
    %v8664 = vsel %vm8654, %v8650, 1326507024
    %v8665 = vsel %vm8653, %v8647, %v8664
    %v8666 = vsel %vm8652, %v8663, %v8665
    %v8667 = vshll.u32 %v8627, 8
    %v8668 = vmul.u32.u64.compose %v8667, %v8666
    %v8669 = vextract.low.u32 %v8668
    %v8670 = vextract.high.u32 %v8668
    %v8671 = vmul.u32.u64.compose %v8667, %v8662
    %v8672 = vextract.low.u32 %v8671
    %v8673 = vextract.high.u32 %v8671
    %v8674 = vmul.u32 %v8667, %v8658
    %v8675 = vadd.s32 %v8670, %v8672
    %vm8676 = vc.u32 %v8670, %v8672
    %v8677 = vadd.s32 %v8673, 1
    %v8678 = vsel %vm8676, %v8677, %v8673
    %v8679 = vadd.s32 %v8674, %v8678
    %v8680 = vadd.s32 %v8679, 536870912
    %v8681 = vshrl.u32 %v8680, 30
    %v8682 = vshll.u32 %v8681, 30
    %v8683 = vsub.s32 %v8679, %v8682
    %vm8684 = vcmp.lt.s32.totalorder %v8683, 0
    %v8685 = vsub.s32 0, %v8683
    %v8686 = vsel %vm8684, %v8685, %v8683
    %v8687 = vclz %v8686
    %v8688 = vsub.s32 %v8687, 2
    %vm8689 = vcmp.gt.s32.totalorder 0, %v8688
    %v8690 = vsel %vm8689, 0, %v8688
    %v8691 = vsub.s32 32, %v8690
    %v8692 = vshll.u32 %v8683, %v8690
    %v8693 = vshrl.u32 %v8675, %v8691
    %v8694 = vor.u32 %v8692, %v8693
    %v8695 = vsub.s32 4294967266, %v8690
    %v8696 = vadd.s32 %v8695, 127
    %v8697 = vshll.u32 %v8696, 23
    %v8698 = vor.u32 4788187, %v8697
    %v8699 = vand.u32 2147483647, %v8698
    %v8701 = vcvt.s32.f32 %v8694
    %v8702 = vmul.f32 %v8701, %v8699
    %v8703 = vxor.u32 %v8702, 2147483648
    %v8704 = vsel %vm8621, %v8703, %v8702
    %v8705 = vsub.s32 4, %v8681
    %v8706 = vsel %vm8621, %v8705, %v8681
    %v8707 = vsel %vm8620, %v7866, %v8704
    %v8708 = vsel %vm8620, 0, %v8706
    %v8709 = vcosq.f32.pop %v8707
    %v8710 = vsinq.f32.pop %v8707
    %vm8711 = vweird.f32 %v7866
    %v8712 = vadd.s32 %v8708, 3
    %v8713 = vand.u32 %v8712, 3
    %vm8714 = vcmp.lt.s32.totalorder %v8713, 2
    %vm8715 = vcmp.eq.s32.totalorder %v8713, 0
    %v8716 = vxor.u32 %v8710, 2147483648
    %v8717 = vsel %vm8715, %v8709, %v8716
    %vm8718 = vcmp.eq.s32.totalorder %v8713, 2
    %v8719 = vxor.u32 %v8709, 2147483648
    %v8720 = vsel %vm8718, %v8719, %v8710
    %v8721 = vsel %vm8714, %v8717, %v8720
    %v8722 = vsel %vm8711, nan, %v8721
    %v8723 = vand.u32 2147483647, %v7867
    %vm8724 = vcmp.le.f32.partialorder %v8723, 0.7853982
    %vm8725 = vcmp.lt.s32.totalorder %v7867, 0
    %v8726 = vand.u32 %v7867, 2139095040
    %v8727 = vshrl.u32 %v8726, 23
    %v8728 = vsub.s32 %v8727, 127
    %v8729 = vand.u32 2147483647, %v7867
    %v8730 = vand.u32 %v8729, 8388607
    %v8731 = vor.u32 %v8730, 8388608
    %v8732 = vsub.s32 0, %v8731
    %v8733 = vadd.s32 %v8728, 1
    %vm8734 = vcmp.gt.s32.totalorder %v8733, 0
    %v8735 = vsel %vm8734, %v8733, 0
    %v8736 = vshrl.u32 %v8735, 5
    %v8737 = vand.u32 %v8735, 31
    %v8738 = vsub.s32 32, %v8737
    %v8739 = vshrl.u32 683565275, %v8738
    %v8740 = vshll.u32 683565275, %v8737
    %v8741 = vshrl.u32 2475754826, %v8738
    %v8742 = vor.u32 %v8740, %v8741
    %v8743 = vshll.u32 2475754826, %v8737
    %v8744 = vshrl.u32 2131351028, %v8738
    %v8745 = vor.u32 %v8743, %v8744
    %v8746 = vshll.u32 2131351028, %v8737
    %v8747 = vshrl.u32 2102212464, %v8738
    %v8748 = vor.u32 %v8746, %v8747
    %v8749 = vshll.u32 2102212464, %v8737
    %v8750 = vshrl.u32 920167782, %v8738
    %v8751 = vor.u32 %v8749, %v8750
    %v8752 = vshll.u32 920167782, %v8737
    %v8753 = vshrl.u32 1326507024, %v8738
    %v8754 = vor.u32 %v8752, %v8753
    %vm8755 = vcmp.lt.s32.totalorder %v8736, 1
    %vm8756 = vcmp.lt.s32.totalorder %v8736, 2
    %vm8757 = vcmp.lt.s32.totalorder %v8736, 3
    %vm8758 = vcmp.lt.s32.totalorder %v8736, 4
    %v8759 = vsel %vm8755, %v8739, %v8742
    %v8760 = vsel %vm8758, %v8748, 2102212464
    %v8761 = vsel %vm8757, %v8745, %v8760
    %v8762 = vsel %vm8756, %v8759, %v8761
    %v8763 = vsel %vm8755, %v8742, %v8745
    %v8764 = vsel %vm8758, %v8751, 920167782
    %v8765 = vsel %vm8757, %v8748, %v8764
    %v8766 = vsel %vm8756, %v8763, %v8765
    %v8767 = vsel %vm8755, %v8745, %v8748
    %v8768 = vsel %vm8758, %v8754, 1326507024
    %v8769 = vsel %vm8757, %v8751, %v8768
    %v8770 = vsel %vm8756, %v8767, %v8769
    %v8771 = vshll.u32 %v8731, 8
    %v8772 = vmul.u32.u64.compose %v8771, %v8770
    %v8773 = vextract.low.u32 %v8772
    %v8774 = vextract.high.u32 %v8772
    %v8775 = vmul.u32.u64.compose %v8771, %v8766
    %v8776 = vextract.low.u32 %v8775
    %v8777 = vextract.high.u32 %v8775
    %v8778 = vmul.u32 %v8771, %v8762
    %v8779 = vadd.s32 %v8774, %v8776
    %vm8780 = vc.u32 %v8774, %v8776
    %v8781 = vadd.s32 %v8777, 1
    %v8782 = vsel %vm8780, %v8781, %v8777
    %v8783 = vadd.s32 %v8778, %v8782
    %v8784 = vadd.s32 %v8783, 536870912
    %v8785 = vshrl.u32 %v8784, 30
    %v8786 = vshll.u32 %v8785, 30
    %v8787 = vsub.s32 %v8783, %v8786
    %vm8788 = vcmp.lt.s32.totalorder %v8787, 0
    %v8789 = vsub.s32 0, %v8787
    %v8790 = vsel %vm8788, %v8789, %v8787
    %v8791 = vclz %v8790
    %v8792 = vsub.s32 %v8791, 2
    %vm8793 = vcmp.gt.s32.totalorder 0, %v8792
    %v8794 = vsel %vm8793, 0, %v8792
    %v8795 = vsub.s32 32, %v8794
    %v8796 = vshll.u32 %v8787, %v8794
    %v8797 = vshrl.u32 %v8779, %v8795
    %v8798 = vor.u32 %v8796, %v8797
    %v8799 = vsub.s32 4294967266, %v8794
    %v8800 = vadd.s32 %v8799, 127
    %v8801 = vshll.u32 %v8800, 23
    %v8802 = vor.u32 4788187, %v8801
    %v8803 = vand.u32 2147483647, %v8802
    %v8805 = vcvt.s32.f32 %v8798
    %v8806 = vmul.f32 %v8805, %v8803
    %v8807 = vxor.u32 %v8806, 2147483648
    %v8808 = vsel %vm8725, %v8807, %v8806
    %v8809 = vsub.s32 4, %v8785
    %v8810 = vsel %vm8725, %v8809, %v8785
    %v8811 = vsel %vm8724, %v7867, %v8808
    %v8812 = vsel %vm8724, 0, %v8810
    %v8813 = vcosq.f32.pop %v8811
    %v8814 = vsinq.f32.pop %v8811
    %vm8815 = vweird.f32 %v7867
    %v8816 = vadd.s32 %v8812, 3
    %v8817 = vand.u32 %v8816, 3
    %vm8818 = vcmp.lt.s32.totalorder %v8817, 2
    %vm8819 = vcmp.eq.s32.totalorder %v8817, 0
    %v8820 = vxor.u32 %v8814, 2147483648
    %v8821 = vsel %vm8819, %v8813, %v8820
    %vm8822 = vcmp.eq.s32.totalorder %v8817, 2
    %v8823 = vxor.u32 %v8813, 2147483648
    %v8824 = vsel %vm8822, %v8823, %v8814
    %v8825 = vsel %vm8818, %v8821, %v8824
    %v8826 = vsel %vm8815, nan, %v8825
    %v8827 = vand.u32 2147483647, %v7868
    %vm8828 = vcmp.le.f32.partialorder %v8827, 0.7853982
    %vm8829 = vcmp.lt.s32.totalorder %v7868, 0
    %v8830 = vand.u32 %v7868, 2139095040
    %v8831 = vshrl.u32 %v8830, 23
    %v8832 = vsub.s32 %v8831, 127
    %v8833 = vand.u32 2147483647, %v7868
    %v8834 = vand.u32 %v8833, 8388607
    %v8835 = vor.u32 %v8834, 8388608
    %v8836 = vsub.s32 0, %v8835
    %v8837 = vadd.s32 %v8832, 1
    %vm8838 = vcmp.gt.s32.totalorder %v8837, 0
    %v8839 = vsel %vm8838, %v8837, 0
    %v8840 = vshrl.u32 %v8839, 5
    %v8841 = vand.u32 %v8839, 31
    %v8842 = vsub.s32 32, %v8841
    %v8843 = vshrl.u32 683565275, %v8842
    %v8844 = vshll.u32 683565275, %v8841
    %v8845 = vshrl.u32 2475754826, %v8842
    %v8846 = vor.u32 %v8844, %v8845
    %v8847 = vshll.u32 2475754826, %v8841
    %v8848 = vshrl.u32 2131351028, %v8842
    %v8849 = vor.u32 %v8847, %v8848
    %v8850 = vshll.u32 2131351028, %v8841
    %v8851 = vshrl.u32 2102212464, %v8842
    %v8852 = vor.u32 %v8850, %v8851
    %v8853 = vshll.u32 2102212464, %v8841
    %v8854 = vshrl.u32 920167782, %v8842
    %v8855 = vor.u32 %v8853, %v8854
    %v8856 = vshll.u32 920167782, %v8841
    %v8857 = vshrl.u32 1326507024, %v8842
    %v8858 = vor.u32 %v8856, %v8857
    %vm8859 = vcmp.lt.s32.totalorder %v8840, 1
    %vm8860 = vcmp.lt.s32.totalorder %v8840, 2
    %vm8861 = vcmp.lt.s32.totalorder %v8840, 3
    %vm8862 = vcmp.lt.s32.totalorder %v8840, 4
    %v8863 = vsel %vm8859, %v8843, %v8846
    %v8864 = vsel %vm8862, %v8852, 2102212464
    %v8865 = vsel %vm8861, %v8849, %v8864
    %v8866 = vsel %vm8860, %v8863, %v8865
    %v8867 = vsel %vm8859, %v8846, %v8849
    %v8868 = vsel %vm8862, %v8855, 920167782
    %v8869 = vsel %vm8861, %v8852, %v8868
    %v8870 = vsel %vm8860, %v8867, %v8869
    %v8871 = vsel %vm8859, %v8849, %v8852
    %v8872 = vsel %vm8862, %v8858, 1326507024
    %v8873 = vsel %vm8861, %v8855, %v8872
    %v8874 = vsel %vm8860, %v8871, %v8873
    %v8875 = vshll.u32 %v8835, 8
    %v8876 = vmul.u32.u64.compose %v8875, %v8874
    %v8877 = vextract.low.u32 %v8876
    %v8878 = vextract.high.u32 %v8876
    %v8879 = vmul.u32.u64.compose %v8875, %v8870
    %v8880 = vextract.low.u32 %v8879
    %v8881 = vextract.high.u32 %v8879
    %v8882 = vmul.u32 %v8875, %v8866
    %v8883 = vadd.s32 %v8878, %v8880
    %vm8884 = vc.u32 %v8878, %v8880
    %v8885 = vadd.s32 %v8881, 1
    %v8886 = vsel %vm8884, %v8885, %v8881
    %v8887 = vadd.s32 %v8882, %v8886
    %v8888 = vadd.s32 %v8887, 536870912
    %v8889 = vshrl.u32 %v8888, 30
    %v8890 = vshll.u32 %v8889, 30
    %v8891 = vsub.s32 %v8887, %v8890
    %vm8892 = vcmp.lt.s32.totalorder %v8891, 0
    %v8893 = vsub.s32 0, %v8891
    %v8894 = vsel %vm8892, %v8893, %v8891
    %v8895 = vclz %v8894
    %v8896 = vsub.s32 %v8895, 2
    %vm8897 = vcmp.gt.s32.totalorder 0, %v8896
    %v8898 = vsel %vm8897, 0, %v8896
    %v8899 = vsub.s32 32, %v8898
    %v8900 = vshll.u32 %v8891, %v8898
    %v8901 = vshrl.u32 %v8883, %v8899
    %v8902 = vor.u32 %v8900, %v8901
    %v8903 = vsub.s32 4294967266, %v8898
    %v8904 = vadd.s32 %v8903, 127
    %v8905 = vshll.u32 %v8904, 23
    %v8906 = vor.u32 4788187, %v8905
    %v8907 = vand.u32 2147483647, %v8906
    %v8909 = vcvt.s32.f32 %v8902
    %v8910 = vmul.f32 %v8909, %v8907
    %v8911 = vxor.u32 %v8910, 2147483648
    %v8912 = vsel %vm8829, %v8911, %v8910
    %v8913 = vsub.s32 4, %v8889
    %v8914 = vsel %vm8829, %v8913, %v8889
    %v8915 = vsel %vm8828, %v7868, %v8912
    %v8916 = vsel %vm8828, 0, %v8914
    %v8917 = vcosq.f32.pop %v8915
    %v8918 = vsinq.f32.pop %v8915
    %vm8919 = vweird.f32 %v7868
    %v8920 = vadd.s32 %v8916, 3
    %v8921 = vand.u32 %v8920, 3
    %vm8922 = vcmp.lt.s32.totalorder %v8921, 2
    %vm8923 = vcmp.eq.s32.totalorder %v8921, 0
    %v8924 = vxor.u32 %v8918, 2147483648
    %v8925 = vsel %vm8923, %v8917, %v8924
    %vm8926 = vcmp.eq.s32.totalorder %v8921, 2
    %v8927 = vxor.u32 %v8917, 2147483648
    %v8928 = vsel %vm8926, %v8927, %v8918
    %v8929 = vsel %vm8922, %v8925, %v8928
    %v8930 = vsel %vm8919, nan, %v8929
    %v8931 = vand.u32 2147483647, %v7869
    %vm8932 = vcmp.le.f32.partialorder %v8931, 0.7853982
    %vm8933 = vcmp.lt.s32.totalorder %v7869, 0
    %v8934 = vand.u32 %v7869, 2139095040
    %v8935 = vshrl.u32 %v8934, 23
    %v8936 = vsub.s32 %v8935, 127
    %v8937 = vand.u32 2147483647, %v7869
    %v8938 = vand.u32 %v8937, 8388607
    %v8939 = vor.u32 %v8938, 8388608
    %v8940 = vsub.s32 0, %v8939
    %v8941 = vadd.s32 %v8936, 1
    %vm8942 = vcmp.gt.s32.totalorder %v8941, 0
    %v8943 = vsel %vm8942, %v8941, 0
    %v8944 = vshrl.u32 %v8943, 5
    %v8945 = vand.u32 %v8943, 31
    %v8946 = vsub.s32 32, %v8945
    %v8947 = vshrl.u32 683565275, %v8946
    %v8948 = vshll.u32 683565275, %v8945
    %v8949 = vshrl.u32 2475754826, %v8946
    %v8950 = vor.u32 %v8948, %v8949
    %v8951 = vshll.u32 2475754826, %v8945
    %v8952 = vshrl.u32 2131351028, %v8946
    %v8953 = vor.u32 %v8951, %v8952
    %v8954 = vshll.u32 2131351028, %v8945
    %v8955 = vshrl.u32 2102212464, %v8946
    %v8956 = vor.u32 %v8954, %v8955
    %v8957 = vshll.u32 2102212464, %v8945
    %v8958 = vshrl.u32 920167782, %v8946
    %v8959 = vor.u32 %v8957, %v8958
    %v8960 = vshll.u32 920167782, %v8945
    %v8961 = vshrl.u32 1326507024, %v8946
    %v8962 = vor.u32 %v8960, %v8961
    %vm8963 = vcmp.lt.s32.totalorder %v8944, 1
    %vm8964 = vcmp.lt.s32.totalorder %v8944, 2
    %vm8965 = vcmp.lt.s32.totalorder %v8944, 3
    %vm8966 = vcmp.lt.s32.totalorder %v8944, 4
    %v8967 = vsel %vm8963, %v8947, %v8950
    %v8968 = vsel %vm8966, %v8956, 2102212464
    %v8969 = vsel %vm8965, %v8953, %v8968
    %v8970 = vsel %vm8964, %v8967, %v8969
    %v8971 = vsel %vm8963, %v8950, %v8953
    %v8972 = vsel %vm8966, %v8959, 920167782
    %v8973 = vsel %vm8965, %v8956, %v8972
    %v8974 = vsel %vm8964, %v8971, %v8973
    %v8975 = vsel %vm8963, %v8953, %v8956
    %v8976 = vsel %vm8966, %v8962, 1326507024
    %v8977 = vsel %vm8965, %v8959, %v8976
    %v8978 = vsel %vm8964, %v8975, %v8977
    %v8979 = vshll.u32 %v8939, 8
    %v8980 = vmul.u32.u64.compose %v8979, %v8978
    %v8981 = vextract.low.u32 %v8980
    %v8982 = vextract.high.u32 %v8980
    %v8983 = vmul.u32.u64.compose %v8979, %v8974
    %v8984 = vextract.low.u32 %v8983
    %v8985 = vextract.high.u32 %v8983
    %v8986 = vmul.u32 %v8979, %v8970
    %v8987 = vadd.s32 %v8982, %v8984
    %vm8988 = vc.u32 %v8982, %v8984
    %v8989 = vadd.s32 %v8985, 1
    %v8990 = vsel %vm8988, %v8989, %v8985
    %v8991 = vadd.s32 %v8986, %v8990
    %v8992 = vadd.s32 %v8991, 536870912
    %v8993 = vshrl.u32 %v8992, 30
    %v8994 = vshll.u32 %v8993, 30
    %v8995 = vsub.s32 %v8991, %v8994
    %vm8996 = vcmp.lt.s32.totalorder %v8995, 0
    %v8997 = vsub.s32 0, %v8995
    %v8998 = vsel %vm8996, %v8997, %v8995
    %v8999 = vclz %v8998
    %v9000 = vsub.s32 %v8999, 2
    %vm9001 = vcmp.gt.s32.totalorder 0, %v9000
    %v9002 = vsel %vm9001, 0, %v9000
    %v9003 = vsub.s32 32, %v9002
    %v9004 = vshll.u32 %v8995, %v9002
    %v9005 = vshrl.u32 %v8987, %v9003
    %v9006 = vor.u32 %v9004, %v9005
    %v9007 = vsub.s32 4294967266, %v9002
    %v9008 = vadd.s32 %v9007, 127
    %v9009 = vshll.u32 %v9008, 23
    %v9010 = vor.u32 4788187, %v9009
    %v9011 = vand.u32 2147483647, %v9010
    %v9013 = vcvt.s32.f32 %v9006
    %v9014 = vmul.f32 %v9013, %v9011
    %v9015 = vxor.u32 %v9014, 2147483648
    %v9016 = vsel %vm8933, %v9015, %v9014
    %v9017 = vsub.s32 4, %v8993
    %v9018 = vsel %vm8933, %v9017, %v8993
    %v9019 = vsel %vm8932, %v7869, %v9016
    %v9020 = vsel %vm8932, 0, %v9018
    %v9021 = vcosq.f32.pop %v9019
    %v9022 = vsinq.f32.pop %v9019
    %vm9023 = vweird.f32 %v7869
    %v9024 = vadd.s32 %v9020, 3
    %v9025 = vand.u32 %v9024, 3
    %vm9026 = vcmp.lt.s32.totalorder %v9025, 2
    %vm9027 = vcmp.eq.s32.totalorder %v9025, 0
    %v9028 = vxor.u32 %v9022, 2147483648
    %v9029 = vsel %vm9027, %v9021, %v9028
    %vm9030 = vcmp.eq.s32.totalorder %v9025, 2
    %v9031 = vxor.u32 %v9021, 2147483648
    %v9032 = vsel %vm9030, %v9031, %v9022
    %v9033 = vsel %vm9026, %v9029, %v9032
    %v9034 = vsel %vm9023, nan, %v9033
    %v9035 = vand.u32 2147483647, %v7870
    %vm9036 = vcmp.le.f32.partialorder %v9035, 0.7853982
    %vm9037 = vcmp.lt.s32.totalorder %v7870, 0
    %v9038 = vand.u32 %v7870, 2139095040
    %v9039 = vshrl.u32 %v9038, 23
    %v9040 = vsub.s32 %v9039, 127
    %v9041 = vand.u32 2147483647, %v7870
    %v9042 = vand.u32 %v9041, 8388607
    %v9043 = vor.u32 %v9042, 8388608
    %v9044 = vsub.s32 0, %v9043
    %v9045 = vadd.s32 %v9040, 1
    %vm9046 = vcmp.gt.s32.totalorder %v9045, 0
    %v9047 = vsel %vm9046, %v9045, 0
    %v9048 = vshrl.u32 %v9047, 5
    %v9049 = vand.u32 %v9047, 31
    %v9050 = vsub.s32 32, %v9049
    %v9051 = vshrl.u32 683565275, %v9050
    %v9052 = vshll.u32 683565275, %v9049
    %v9053 = vshrl.u32 2475754826, %v9050
    %v9054 = vor.u32 %v9052, %v9053
    %v9055 = vshll.u32 2475754826, %v9049
    %v9056 = vshrl.u32 2131351028, %v9050
    %v9057 = vor.u32 %v9055, %v9056
    %v9058 = vshll.u32 2131351028, %v9049
    %v9059 = vshrl.u32 2102212464, %v9050
    %v9060 = vor.u32 %v9058, %v9059
    %v9061 = vshll.u32 2102212464, %v9049
    %v9062 = vshrl.u32 920167782, %v9050
    %v9063 = vor.u32 %v9061, %v9062
    %v9064 = vshll.u32 920167782, %v9049
    %v9065 = vshrl.u32 1326507024, %v9050
    %v9066 = vor.u32 %v9064, %v9065
    %vm9067 = vcmp.lt.s32.totalorder %v9048, 1
    %vm9068 = vcmp.lt.s32.totalorder %v9048, 2
    %vm9069 = vcmp.lt.s32.totalorder %v9048, 3
    %vm9070 = vcmp.lt.s32.totalorder %v9048, 4
    %v9071 = vsel %vm9067, %v9051, %v9054
    %v9072 = vsel %vm9070, %v9060, 2102212464
    %v9073 = vsel %vm9069, %v9057, %v9072
    %v9074 = vsel %vm9068, %v9071, %v9073
    %v9075 = vsel %vm9067, %v9054, %v9057
    %v9076 = vsel %vm9070, %v9063, 920167782
    %v9077 = vsel %vm9069, %v9060, %v9076
    %v9078 = vsel %vm9068, %v9075, %v9077
    %v9079 = vsel %vm9067, %v9057, %v9060
    %v9080 = vsel %vm9070, %v9066, 1326507024
    %v9081 = vsel %vm9069, %v9063, %v9080
    %v9082 = vsel %vm9068, %v9079, %v9081
    %v9083 = vshll.u32 %v9043, 8
    %v9084 = vmul.u32.u64.compose %v9083, %v9082
    %v9085 = vextract.low.u32 %v9084
    %v9086 = vextract.high.u32 %v9084
    %v9087 = vmul.u32.u64.compose %v9083, %v9078
    %v9088 = vextract.low.u32 %v9087
    %v9089 = vextract.high.u32 %v9087
    %v9090 = vmul.u32 %v9083, %v9074
    %v9091 = vadd.s32 %v9086, %v9088
    %vm9092 = vc.u32 %v9086, %v9088
    %v9093 = vadd.s32 %v9089, 1
    %v9094 = vsel %vm9092, %v9093, %v9089
    %v9095 = vadd.s32 %v9090, %v9094
    %v9096 = vadd.s32 %v9095, 536870912
    %v9097 = vshrl.u32 %v9096, 30
    %v9098 = vshll.u32 %v9097, 30
    %v9099 = vsub.s32 %v9095, %v9098
    %vm9100 = vcmp.lt.s32.totalorder %v9099, 0
    %v9101 = vsub.s32 0, %v9099
    %v9102 = vsel %vm9100, %v9101, %v9099
    %v9103 = vclz %v9102
    %v9104 = vsub.s32 %v9103, 2
    %vm9105 = vcmp.gt.s32.totalorder 0, %v9104
    %v9106 = vsel %vm9105, 0, %v9104
    %v9107 = vsub.s32 32, %v9106
    %v9108 = vshll.u32 %v9099, %v9106
    %v9109 = vshrl.u32 %v9091, %v9107
    %v9110 = vor.u32 %v9108, %v9109
    %v9111 = vsub.s32 4294967266, %v9106
    %v9112 = vadd.s32 %v9111, 127
    %v9113 = vshll.u32 %v9112, 23
    %v9114 = vor.u32 4788187, %v9113
    %v9115 = vand.u32 2147483647, %v9114
    %v9117 = vcvt.s32.f32 %v9110
    %v9118 = vmul.f32 %v9117, %v9115
    %v9119 = vxor.u32 %v9118, 2147483648
    %v9120 = vsel %vm9037, %v9119, %v9118
    %v9121 = vsub.s32 4, %v9097
    %v9122 = vsel %vm9037, %v9121, %v9097
    %v9123 = vsel %vm9036, %v7870, %v9120
    %v9124 = vsel %vm9036, 0, %v9122
    %v9125 = vcosq.f32.pop %v9123
    %v9126 = vsinq.f32.pop %v9123
    %vm9127 = vweird.f32 %v7870
    %v9128 = vadd.s32 %v9124, 3
    %v9129 = vand.u32 %v9128, 3
    %vm9130 = vcmp.lt.s32.totalorder %v9129, 2
    %vm9131 = vcmp.eq.s32.totalorder %v9129, 0
    %v9132 = vxor.u32 %v9126, 2147483648
    %v9133 = vsel %vm9131, %v9125, %v9132
    %vm9134 = vcmp.eq.s32.totalorder %v9129, 2
    %v9135 = vxor.u32 %v9125, 2147483648
    %v9136 = vsel %vm9134, %v9135, %v9126
    %v9137 = vsel %vm9130, %v9133, %v9136
    %v9138 = vsel %vm9127, nan, %v9137
    %v9139 = vand.u32 2147483647, %v7871
    %vm9140 = vcmp.le.f32.partialorder %v9139, 0.7853982
    %vm9141 = vcmp.lt.s32.totalorder %v7871, 0
    %v9142 = vand.u32 %v7871, 2139095040
    %v9143 = vshrl.u32 %v9142, 23
    %v9144 = vsub.s32 %v9143, 127
    %v9145 = vand.u32 2147483647, %v7871
    %v9146 = vand.u32 %v9145, 8388607
    %v9147 = vor.u32 %v9146, 8388608
    %v9148 = vsub.s32 0, %v9147
    %v9149 = vadd.s32 %v9144, 1
    %vm9150 = vcmp.gt.s32.totalorder %v9149, 0
    %v9151 = vsel %vm9150, %v9149, 0
    %v9152 = vshrl.u32 %v9151, 5
    %v9153 = vand.u32 %v9151, 31
    %v9154 = vsub.s32 32, %v9153
    %v9155 = vshrl.u32 683565275, %v9154
    %v9156 = vshll.u32 683565275, %v9153
    %v9157 = vshrl.u32 2475754826, %v9154
    %v9158 = vor.u32 %v9156, %v9157
    %v9159 = vshll.u32 2475754826, %v9153
    %v9160 = vshrl.u32 2131351028, %v9154
    %v9161 = vor.u32 %v9159, %v9160
    %v9162 = vshll.u32 2131351028, %v9153
    %v9163 = vshrl.u32 2102212464, %v9154
    %v9164 = vor.u32 %v9162, %v9163
    %v9165 = vshll.u32 2102212464, %v9153
    %v9166 = vshrl.u32 920167782, %v9154
    %v9167 = vor.u32 %v9165, %v9166
    %v9168 = vshll.u32 920167782, %v9153
    %v9169 = vshrl.u32 1326507024, %v9154
    %v9170 = vor.u32 %v9168, %v9169
    %vm9171 = vcmp.lt.s32.totalorder %v9152, 1
    %vm9172 = vcmp.lt.s32.totalorder %v9152, 2
    %vm9173 = vcmp.lt.s32.totalorder %v9152, 3
    %vm9174 = vcmp.lt.s32.totalorder %v9152, 4
    %v9175 = vsel %vm9171, %v9155, %v9158
    %v9176 = vsel %vm9174, %v9164, 2102212464
    %v9177 = vsel %vm9173, %v9161, %v9176
    %v9178 = vsel %vm9172, %v9175, %v9177
    %v9179 = vsel %vm9171, %v9158, %v9161
    %v9180 = vsel %vm9174, %v9167, 920167782
    %v9181 = vsel %vm9173, %v9164, %v9180
    %v9182 = vsel %vm9172, %v9179, %v9181
    %v9183 = vsel %vm9171, %v9161, %v9164
    %v9184 = vsel %vm9174, %v9170, 1326507024
    %v9185 = vsel %vm9173, %v9167, %v9184
    %v9186 = vsel %vm9172, %v9183, %v9185
    %v9187 = vshll.u32 %v9147, 8
    %v9188 = vmul.u32.u64.compose %v9187, %v9186
    %v9189 = vextract.low.u32 %v9188
    %v9190 = vextract.high.u32 %v9188
    %v9191 = vmul.u32.u64.compose %v9187, %v9182
    %v9192 = vextract.low.u32 %v9191
    %v9193 = vextract.high.u32 %v9191
    %v9194 = vmul.u32 %v9187, %v9178
    %v9195 = vadd.s32 %v9190, %v9192
    %vm9196 = vc.u32 %v9190, %v9192
    %v9197 = vadd.s32 %v9193, 1
    %v9198 = vsel %vm9196, %v9197, %v9193
    %v9199 = vadd.s32 %v9194, %v9198
    %v9200 = vadd.s32 %v9199, 536870912
    %v9201 = vshrl.u32 %v9200, 30
    %v9202 = vshll.u32 %v9201, 30
    %v9203 = vsub.s32 %v9199, %v9202
    %vm9204 = vcmp.lt.s32.totalorder %v9203, 0
    %v9205 = vsub.s32 0, %v9203
    %v9206 = vsel %vm9204, %v9205, %v9203
    %v9207 = vclz %v9206
    %v9208 = vsub.s32 %v9207, 2
    %vm9209 = vcmp.gt.s32.totalorder 0, %v9208
    %v9210 = vsel %vm9209, 0, %v9208
    %v9211 = vsub.s32 32, %v9210
    %v9212 = vshll.u32 %v9203, %v9210
    %v9213 = vshrl.u32 %v9195, %v9211
    %v9214 = vor.u32 %v9212, %v9213
    %v9215 = vsub.s32 4294967266, %v9210
    %v9216 = vadd.s32 %v9215, 127
    %v9217 = vshll.u32 %v9216, 23
    %v9218 = vor.u32 4788187, %v9217
    %v9219 = vand.u32 2147483647, %v9218
    %v9221 = vcvt.s32.f32 %v9214
    %v9222 = vmul.f32 %v9221, %v9219
    %v9223 = vxor.u32 %v9222, 2147483648
    %v9224 = vsel %vm9141, %v9223, %v9222
    %v9225 = vsub.s32 4, %v9201
    %v9226 = vsel %vm9141, %v9225, %v9201
    %v9227 = vsel %vm9140, %v7871, %v9224
    %v9228 = vsel %vm9140, 0, %v9226
    %v9229 = vcosq.f32.pop %v9227
    %v9230 = vsinq.f32.pop %v9227
    %vm9231 = vweird.f32 %v7871
    %v9232 = vadd.s32 %v9228, 3
    %v9233 = vand.u32 %v9232, 3
    %vm9234 = vcmp.lt.s32.totalorder %v9233, 2
    %vm9235 = vcmp.eq.s32.totalorder %v9233, 0
    %v9236 = vxor.u32 %v9230, 2147483648
    %v9237 = vsel %vm9235, %v9229, %v9236
    %vm9238 = vcmp.eq.s32.totalorder %v9233, 2
    %v9239 = vxor.u32 %v9229, 2147483648
    %v9240 = vsel %vm9238, %v9239, %v9230
    %v9241 = vsel %vm9234, %v9237, %v9240
    %v9242 = vsel %vm9231, nan, %v9241
    %v9243 = vand.u32 2147483647, %v7872
    %vm9244 = vcmp.le.f32.partialorder %v9243, 0.7853982
    %vm9245 = vcmp.lt.s32.totalorder %v7872, 0
    %v9246 = vand.u32 %v7872, 2139095040
    %v9247 = vshrl.u32 %v9246, 23
    %v9248 = vsub.s32 %v9247, 127
    %v9249 = vand.u32 2147483647, %v7872
    %v9250 = vand.u32 %v9249, 8388607
    %v9251 = vor.u32 %v9250, 8388608
    %v9252 = vsub.s32 0, %v9251
    %v9253 = vadd.s32 %v9248, 1
    %vm9254 = vcmp.gt.s32.totalorder %v9253, 0
    %v9255 = vsel %vm9254, %v9253, 0
    %v9256 = vshrl.u32 %v9255, 5
    %v9257 = vand.u32 %v9255, 31
    %v9258 = vsub.s32 32, %v9257
    %v9259 = vshrl.u32 683565275, %v9258
    %v9260 = vshll.u32 683565275, %v9257
    %v9261 = vshrl.u32 2475754826, %v9258
    %v9262 = vor.u32 %v9260, %v9261
    %v9263 = vshll.u32 2475754826, %v9257
    %v9264 = vshrl.u32 2131351028, %v9258
    %v9265 = vor.u32 %v9263, %v9264
    %v9266 = vshll.u32 2131351028, %v9257
    %v9267 = vshrl.u32 2102212464, %v9258
    %v9268 = vor.u32 %v9266, %v9267
    %v9269 = vshll.u32 2102212464, %v9257
    %v9270 = vshrl.u32 920167782, %v9258
    %v9271 = vor.u32 %v9269, %v9270
    %v9272 = vshll.u32 920167782, %v9257
    %v9273 = vshrl.u32 1326507024, %v9258
    %v9274 = vor.u32 %v9272, %v9273
    %vm9275 = vcmp.lt.s32.totalorder %v9256, 1
    %vm9276 = vcmp.lt.s32.totalorder %v9256, 2
    %vm9277 = vcmp.lt.s32.totalorder %v9256, 3
    %vm9278 = vcmp.lt.s32.totalorder %v9256, 4
    %v9279 = vsel %vm9275, %v9259, %v9262
    %v9280 = vsel %vm9278, %v9268, 2102212464
    %v9281 = vsel %vm9277, %v9265, %v9280
    %v9282 = vsel %vm9276, %v9279, %v9281
    %v9283 = vsel %vm9275, %v9262, %v9265
    %v9284 = vsel %vm9278, %v9271, 920167782
    %v9285 = vsel %vm9277, %v9268, %v9284
    %v9286 = vsel %vm9276, %v9283, %v9285
    %v9287 = vsel %vm9275, %v9265, %v9268
    %v9288 = vsel %vm9278, %v9274, 1326507024
    %v9289 = vsel %vm9277, %v9271, %v9288
    %v9290 = vsel %vm9276, %v9287, %v9289
    %v9291 = vshll.u32 %v9251, 8
    %v9292 = vmul.u32.u64.compose %v9291, %v9290
    %v9293 = vextract.low.u32 %v9292
    %v9294 = vextract.high.u32 %v9292
    %v9295 = vmul.u32.u64.compose %v9291, %v9286
    %v9296 = vextract.low.u32 %v9295
    %v9297 = vextract.high.u32 %v9295
    %v9298 = vmul.u32 %v9291, %v9282
    %v9299 = vadd.s32 %v9294, %v9296
    %vm9300 = vc.u32 %v9294, %v9296
    %v9301 = vadd.s32 %v9297, 1
    %v9302 = vsel %vm9300, %v9301, %v9297
    %v9303 = vadd.s32 %v9298, %v9302
    %v9304 = vadd.s32 %v9303, 536870912
    %v9305 = vshrl.u32 %v9304, 30
    %v9306 = vshll.u32 %v9305, 30
    %v9307 = vsub.s32 %v9303, %v9306
    %vm9308 = vcmp.lt.s32.totalorder %v9307, 0
    %v9309 = vsub.s32 0, %v9307
    %v9310 = vsel %vm9308, %v9309, %v9307
    %v9311 = vclz %v9310
    %v9312 = vsub.s32 %v9311, 2
    %vm9313 = vcmp.gt.s32.totalorder 0, %v9312
    %v9314 = vsel %vm9313, 0, %v9312
    %v9315 = vsub.s32 32, %v9314
    %v9316 = vshll.u32 %v9307, %v9314
    %v9317 = vshrl.u32 %v9299, %v9315
    %v9318 = vor.u32 %v9316, %v9317
    %v9319 = vsub.s32 4294967266, %v9314
    %v9320 = vadd.s32 %v9319, 127
    %v9321 = vshll.u32 %v9320, 23
    %v9322 = vor.u32 4788187, %v9321
    %v9323 = vand.u32 2147483647, %v9322
    %v9325 = vcvt.s32.f32 %v9318
    %v9326 = vmul.f32 %v9325, %v9323
    %v9327 = vxor.u32 %v9326, 2147483648
    %v9328 = vsel %vm9245, %v9327, %v9326
    %v9329 = vsub.s32 4, %v9305
    %v9330 = vsel %vm9245, %v9329, %v9305
    %v9331 = vsel %vm9244, %v7872, %v9328
    %v9332 = vsel %vm9244, 0, %v9330
    %v9333 = vcosq.f32.pop %v9331
    %v9334 = vsinq.f32.pop %v9331
    %vm9335 = vweird.f32 %v7872
    %v9336 = vadd.s32 %v9332, 3
    %v9337 = vand.u32 %v9336, 3
    %vm9338 = vcmp.lt.s32.totalorder %v9337, 2
    %vm9339 = vcmp.eq.s32.totalorder %v9337, 0
    %v9340 = vxor.u32 %v9334, 2147483648
    %v9341 = vsel %vm9339, %v9333, %v9340
    %vm9342 = vcmp.eq.s32.totalorder %v9337, 2
    %v9343 = vxor.u32 %v9333, 2147483648
    %v9344 = vsel %vm9342, %v9343, %v9334
    %v9345 = vsel %vm9338, %v9341, %v9344
    %v9346 = vsel %vm9335, nan, %v9345
    %v9347 = vand.u32 2147483647, %v7873
    %vm9348 = vcmp.le.f32.partialorder %v9347, 0.7853982
    %vm9349 = vcmp.lt.s32.totalorder %v7873, 0
    %v9350 = vand.u32 %v7873, 2139095040
    %v9351 = vshrl.u32 %v9350, 23
    %v9352 = vsub.s32 %v9351, 127
    %v9353 = vand.u32 2147483647, %v7873
    %v9354 = vand.u32 %v9353, 8388607
    %v9355 = vor.u32 %v9354, 8388608
    %v9356 = vsub.s32 0, %v9355
    %v9357 = vadd.s32 %v9352, 1
    %vm9358 = vcmp.gt.s32.totalorder %v9357, 0
    %v9359 = vsel %vm9358, %v9357, 0
    %v9360 = vshrl.u32 %v9359, 5
    %v9361 = vand.u32 %v9359, 31
    %v9362 = vsub.s32 32, %v9361
    %v9363 = vshrl.u32 683565275, %v9362
    %v9364 = vshll.u32 683565275, %v9361
    %v9365 = vshrl.u32 2475754826, %v9362
    %v9366 = vor.u32 %v9364, %v9365
    %v9367 = vshll.u32 2475754826, %v9361
    %v9368 = vshrl.u32 2131351028, %v9362
    %v9369 = vor.u32 %v9367, %v9368
    %v9370 = vshll.u32 2131351028, %v9361
    %v9371 = vshrl.u32 2102212464, %v9362
    %v9372 = vor.u32 %v9370, %v9371
    %v9373 = vshll.u32 2102212464, %v9361
    %v9374 = vshrl.u32 920167782, %v9362
    %v9375 = vor.u32 %v9373, %v9374
    %v9376 = vshll.u32 920167782, %v9361
    %v9377 = vshrl.u32 1326507024, %v9362
    %v9378 = vor.u32 %v9376, %v9377
    %vm9379 = vcmp.lt.s32.totalorder %v9360, 1
    %vm9380 = vcmp.lt.s32.totalorder %v9360, 2
    %vm9381 = vcmp.lt.s32.totalorder %v9360, 3
    %vm9382 = vcmp.lt.s32.totalorder %v9360, 4
    %v9383 = vsel %vm9379, %v9363, %v9366
    %v9384 = vsel %vm9382, %v9372, 2102212464
    %v9385 = vsel %vm9381, %v9369, %v9384
    %v9386 = vsel %vm9380, %v9383, %v9385
    %v9387 = vsel %vm9379, %v9366, %v9369
    %v9388 = vsel %vm9382, %v9375, 920167782
    %v9389 = vsel %vm9381, %v9372, %v9388
    %v9390 = vsel %vm9380, %v9387, %v9389
    %v9391 = vsel %vm9379, %v9369, %v9372
    %v9392 = vsel %vm9382, %v9378, 1326507024
    %v9393 = vsel %vm9381, %v9375, %v9392
    %v9394 = vsel %vm9380, %v9391, %v9393
    %v9395 = vshll.u32 %v9355, 8
    %v9396 = vmul.u32.u64.compose %v9395, %v9394
    %v9397 = vextract.low.u32 %v9396
    %v9398 = vextract.high.u32 %v9396
    %v9399 = vmul.u32.u64.compose %v9395, %v9390
    %v9400 = vextract.low.u32 %v9399
    %v9401 = vextract.high.u32 %v9399
    %v9402 = vmul.u32 %v9395, %v9386
    %v9403 = vadd.s32 %v9398, %v9400
    %vm9404 = vc.u32 %v9398, %v9400
    %v9405 = vadd.s32 %v9401, 1
    %v9406 = vsel %vm9404, %v9405, %v9401
    %v9407 = vadd.s32 %v9402, %v9406
    %v9408 = vadd.s32 %v9407, 536870912
    %v9409 = vshrl.u32 %v9408, 30
    %v9410 = vshll.u32 %v9409, 30
    %v9411 = vsub.s32 %v9407, %v9410
    %vm9412 = vcmp.lt.s32.totalorder %v9411, 0
    %v9413 = vsub.s32 0, %v9411
    %v9414 = vsel %vm9412, %v9413, %v9411
    %v9415 = vclz %v9414
    %v9416 = vsub.s32 %v9415, 2
    %vm9417 = vcmp.gt.s32.totalorder 0, %v9416
    %v9418 = vsel %vm9417, 0, %v9416
    %v9419 = vsub.s32 32, %v9418
    %v9420 = vshll.u32 %v9411, %v9418
    %v9421 = vshrl.u32 %v9403, %v9419
    %v9422 = vor.u32 %v9420, %v9421
    %v9423 = vsub.s32 4294967266, %v9418
    %v9424 = vadd.s32 %v9423, 127
    %v9425 = vshll.u32 %v9424, 23
    %v9426 = vor.u32 4788187, %v9425
    %v9427 = vand.u32 2147483647, %v9426
    %v9429 = vcvt.s32.f32 %v9422
    %v9430 = vmul.f32 %v9429, %v9427
    %v9431 = vxor.u32 %v9430, 2147483648
    %v9432 = vsel %vm9349, %v9431, %v9430
    %v9433 = vsub.s32 4, %v9409
    %v9434 = vsel %vm9349, %v9433, %v9409
    %v9435 = vsel %vm9348, %v7873, %v9432
    %v9436 = vsel %vm9348, 0, %v9434
    %v9437 = vcosq.f32.pop %v9435
    %v9438 = vsinq.f32.pop %v9435
    %vm9439 = vweird.f32 %v7873
    %v9440 = vadd.s32 %v9436, 3
    %v9441 = vand.u32 %v9440, 3
    %vm9442 = vcmp.lt.s32.totalorder %v9441, 2
    %vm9443 = vcmp.eq.s32.totalorder %v9441, 0
    %v9444 = vxor.u32 %v9438, 2147483648
    %v9445 = vsel %vm9443, %v9437, %v9444
    %vm9446 = vcmp.eq.s32.totalorder %v9441, 2
    %v9447 = vxor.u32 %v9437, 2147483648
    %v9448 = vsel %vm9446, %v9447, %v9438
    %v9449 = vsel %vm9442, %v9445, %v9448
    %v9450 = vsel %vm9439, nan, %v9449
    %v9451 = vand.u32 2147483647, %v7874
    %vm9452 = vcmp.le.f32.partialorder %v9451, 0.7853982
    %vm9453 = vcmp.lt.s32.totalorder %v7874, 0
    %v9454 = vand.u32 %v7874, 2139095040
    %v9455 = vshrl.u32 %v9454, 23
    %v9456 = vsub.s32 %v9455, 127
    %v9457 = vand.u32 2147483647, %v7874
    %v9458 = vand.u32 %v9457, 8388607
    %v9459 = vor.u32 %v9458, 8388608
    %v9460 = vsub.s32 0, %v9459
    %v9461 = vadd.s32 %v9456, 1
    %vm9462 = vcmp.gt.s32.totalorder %v9461, 0
    %v9463 = vsel %vm9462, %v9461, 0
    %v9464 = vshrl.u32 %v9463, 5
    %v9465 = vand.u32 %v9463, 31
    %v9466 = vsub.s32 32, %v9465
    %v9467 = vshrl.u32 683565275, %v9466
    %v9468 = vshll.u32 683565275, %v9465
    %v9469 = vshrl.u32 2475754826, %v9466
    %v9470 = vor.u32 %v9468, %v9469
    %v9471 = vshll.u32 2475754826, %v9465
    %v9472 = vshrl.u32 2131351028, %v9466
    %v9473 = vor.u32 %v9471, %v9472
    %v9474 = vshll.u32 2131351028, %v9465
    %v9475 = vshrl.u32 2102212464, %v9466
    %v9476 = vor.u32 %v9474, %v9475
    %v9477 = vshll.u32 2102212464, %v9465
    %v9478 = vshrl.u32 920167782, %v9466
    %v9479 = vor.u32 %v9477, %v9478
    %v9480 = vshll.u32 920167782, %v9465
    %v9481 = vshrl.u32 1326507024, %v9466
    %v9482 = vor.u32 %v9480, %v9481
    %vm9483 = vcmp.lt.s32.totalorder %v9464, 1
    %vm9484 = vcmp.lt.s32.totalorder %v9464, 2
    %vm9485 = vcmp.lt.s32.totalorder %v9464, 3
    %vm9486 = vcmp.lt.s32.totalorder %v9464, 4
    %v9487 = vsel %vm9483, %v9467, %v9470
    %v9488 = vsel %vm9486, %v9476, 2102212464
    %v9489 = vsel %vm9485, %v9473, %v9488
    %v9490 = vsel %vm9484, %v9487, %v9489
    %v9491 = vsel %vm9483, %v9470, %v9473
    %v9492 = vsel %vm9486, %v9479, 920167782
    %v9493 = vsel %vm9485, %v9476, %v9492
    %v9494 = vsel %vm9484, %v9491, %v9493
    %v9495 = vsel %vm9483, %v9473, %v9476
    %v9496 = vsel %vm9486, %v9482, 1326507024
    %v9497 = vsel %vm9485, %v9479, %v9496
    %v9498 = vsel %vm9484, %v9495, %v9497
    %v9499 = vshll.u32 %v9459, 8
    %v9500 = vmul.u32.u64.compose %v9499, %v9498
    %v9501 = vextract.low.u32 %v9500
    %v9502 = vextract.high.u32 %v9500
    %v9503 = vmul.u32.u64.compose %v9499, %v9494
    %v9504 = vextract.low.u32 %v9503
    %v9505 = vextract.high.u32 %v9503
    %v9506 = vmul.u32 %v9499, %v9490
    %v9507 = vadd.s32 %v9502, %v9504
    %vm9508 = vc.u32 %v9502, %v9504
    %v9509 = vadd.s32 %v9505, 1
    %v9510 = vsel %vm9508, %v9509, %v9505
    %v9511 = vadd.s32 %v9506, %v9510
    %v9512 = vadd.s32 %v9511, 536870912
    %v9513 = vshrl.u32 %v9512, 30
    %v9514 = vshll.u32 %v9513, 30
    %v9515 = vsub.s32 %v9511, %v9514
    %vm9516 = vcmp.lt.s32.totalorder %v9515, 0
    %v9517 = vsub.s32 0, %v9515
    %v9518 = vsel %vm9516, %v9517, %v9515
    %v9519 = vclz %v9518
    %v9520 = vsub.s32 %v9519, 2
    %vm9521 = vcmp.gt.s32.totalorder 0, %v9520
    %v9522 = vsel %vm9521, 0, %v9520
    %v9523 = vsub.s32 32, %v9522
    %v9524 = vshll.u32 %v9515, %v9522
    %v9525 = vshrl.u32 %v9507, %v9523
    %v9526 = vor.u32 %v9524, %v9525
    %v9527 = vsub.s32 4294967266, %v9522
    %v9528 = vadd.s32 %v9527, 127
    %v9529 = vshll.u32 %v9528, 23
    %v9530 = vor.u32 4788187, %v9529
    %v9531 = vand.u32 2147483647, %v9530
    %v9533 = vcvt.s32.f32 %v9526
    %v9534 = vmul.f32 %v9533, %v9531
    %v9535 = vxor.u32 %v9534, 2147483648
    %v9536 = vsel %vm9453, %v9535, %v9534
    %v9537 = vsub.s32 4, %v9513
    %v9538 = vsel %vm9453, %v9537, %v9513
    %v9539 = vsel %vm9452, %v7874, %v9536
    %v9540 = vsel %vm9452, 0, %v9538
    %v9541 = vcosq.f32.pop %v9539
    %v9542 = vsinq.f32.pop %v9539
    %vm9543 = vweird.f32 %v7874
    %v9544 = vadd.s32 %v9540, 3
    %v9545 = vand.u32 %v9544, 3
    %vm9546 = vcmp.lt.s32.totalorder %v9545, 2
    %vm9547 = vcmp.eq.s32.totalorder %v9545, 0
    %v9548 = vxor.u32 %v9542, 2147483648
    %v9549 = vsel %vm9547, %v9541, %v9548
    %vm9550 = vcmp.eq.s32.totalorder %v9545, 2
    %v9551 = vxor.u32 %v9541, 2147483648
    %v9552 = vsel %vm9550, %v9551, %v9542
    %v9553 = vsel %vm9546, %v9549, %v9552
    %v9554 = vsel %vm9543, nan, %v9553
    %v9555 = vand.u32 2147483647, %v7875
    %vm9556 = vcmp.le.f32.partialorder %v9555, 0.7853982
    %vm9557 = vcmp.lt.s32.totalorder %v7875, 0
    %v9558 = vand.u32 %v7875, 2139095040
    %v9559 = vshrl.u32 %v9558, 23
    %v9560 = vsub.s32 %v9559, 127
    %v9561 = vand.u32 2147483647, %v7875
    %v9562 = vand.u32 %v9561, 8388607
    %v9563 = vor.u32 %v9562, 8388608
    %v9564 = vsub.s32 0, %v9563
    %v9565 = vadd.s32 %v9560, 1
    %vm9566 = vcmp.gt.s32.totalorder %v9565, 0
    %v9567 = vsel %vm9566, %v9565, 0
    %v9568 = vshrl.u32 %v9567, 5
    %v9569 = vand.u32 %v9567, 31
    %v9570 = vsub.s32 32, %v9569
    %v9571 = vshrl.u32 683565275, %v9570
    %v9572 = vshll.u32 683565275, %v9569
    %v9573 = vshrl.u32 2475754826, %v9570
    %v9574 = vor.u32 %v9572, %v9573
    %v9575 = vshll.u32 2475754826, %v9569
    %v9576 = vshrl.u32 2131351028, %v9570
    %v9577 = vor.u32 %v9575, %v9576
    %v9578 = vshll.u32 2131351028, %v9569
    %v9579 = vshrl.u32 2102212464, %v9570
    %v9580 = vor.u32 %v9578, %v9579
    %v9581 = vshll.u32 2102212464, %v9569
    %v9582 = vshrl.u32 920167782, %v9570
    %v9583 = vor.u32 %v9581, %v9582
    %v9584 = vshll.u32 920167782, %v9569
    %v9585 = vshrl.u32 1326507024, %v9570
    %v9586 = vor.u32 %v9584, %v9585
    %vm9587 = vcmp.lt.s32.totalorder %v9568, 1
    %vm9588 = vcmp.lt.s32.totalorder %v9568, 2
    %vm9589 = vcmp.lt.s32.totalorder %v9568, 3
    %vm9590 = vcmp.lt.s32.totalorder %v9568, 4
    %v9591 = vsel %vm9587, %v9571, %v9574
    %v9592 = vsel %vm9590, %v9580, 2102212464
    %v9593 = vsel %vm9589, %v9577, %v9592
    %v9594 = vsel %vm9588, %v9591, %v9593
    %v9595 = vsel %vm9587, %v9574, %v9577
    %v9596 = vsel %vm9590, %v9583, 920167782
    %v9597 = vsel %vm9589, %v9580, %v9596
    %v9598 = vsel %vm9588, %v9595, %v9597
    %v9599 = vsel %vm9587, %v9577, %v9580
    %v9600 = vsel %vm9590, %v9586, 1326507024
    %v9601 = vsel %vm9589, %v9583, %v9600
    %v9602 = vsel %vm9588, %v9599, %v9601
    %v9603 = vshll.u32 %v9563, 8
    %v9604 = vmul.u32.u64.compose %v9603, %v9602
    %v9605 = vextract.low.u32 %v9604
    %v9606 = vextract.high.u32 %v9604
    %v9607 = vmul.u32.u64.compose %v9603, %v9598
    %v9608 = vextract.low.u32 %v9607
    %v9609 = vextract.high.u32 %v9607
    %v9610 = vmul.u32 %v9603, %v9594
    %v9611 = vadd.s32 %v9606, %v9608
    %vm9612 = vc.u32 %v9606, %v9608
    %v9613 = vadd.s32 %v9609, 1
    %v9614 = vsel %vm9612, %v9613, %v9609
    %v9615 = vadd.s32 %v9610, %v9614
    %v9616 = vadd.s32 %v9615, 536870912
    %v9617 = vshrl.u32 %v9616, 30
    %v9618 = vshll.u32 %v9617, 30
    %v9619 = vsub.s32 %v9615, %v9618
    %vm9620 = vcmp.lt.s32.totalorder %v9619, 0
    %v9621 = vsub.s32 0, %v9619
    %v9622 = vsel %vm9620, %v9621, %v9619
    %v9623 = vclz %v9622
    %v9624 = vsub.s32 %v9623, 2
    %vm9625 = vcmp.gt.s32.totalorder 0, %v9624
    %v9626 = vsel %vm9625, 0, %v9624
    %v9627 = vsub.s32 32, %v9626
    %v9628 = vshll.u32 %v9619, %v9626
    %v9629 = vshrl.u32 %v9611, %v9627
    %v9630 = vor.u32 %v9628, %v9629
    %v9631 = vsub.s32 4294967266, %v9626
    %v9632 = vadd.s32 %v9631, 127
    %v9633 = vshll.u32 %v9632, 23
    %v9634 = vor.u32 4788187, %v9633
    %v9635 = vand.u32 2147483647, %v9634
    %v9637 = vcvt.s32.f32 %v9630
    %v9638 = vmul.f32 %v9637, %v9635
    %v9639 = vxor.u32 %v9638, 2147483648
    %v9640 = vsel %vm9557, %v9639, %v9638
    %v9641 = vsub.s32 4, %v9617
    %v9642 = vsel %vm9557, %v9641, %v9617
    %v9643 = vsel %vm9556, %v7875, %v9640
    %v9644 = vsel %vm9556, 0, %v9642
    %v9645 = vcosq.f32.pop %v9643
    %v9646 = vsinq.f32.pop %v9643
    %vm9647 = vweird.f32 %v7875
    %v9648 = vadd.s32 %v9644, 3
    %v9649 = vand.u32 %v9648, 3
    %vm9650 = vcmp.lt.s32.totalorder %v9649, 2
    %vm9651 = vcmp.eq.s32.totalorder %v9649, 0
    %v9652 = vxor.u32 %v9646, 2147483648
    %v9653 = vsel %vm9651, %v9645, %v9652
    %vm9654 = vcmp.eq.s32.totalorder %v9649, 2
    %v9655 = vxor.u32 %v9645, 2147483648
    %v9656 = vsel %vm9654, %v9655, %v9646
    %v9657 = vsel %vm9650, %v9653, %v9656
    %v9658 = vsel %vm9647, nan, %v9657
    %v9659 = vand.u32 2147483647, %v7876
    %vm9660 = vcmp.le.f32.partialorder %v9659, 0.7853982
    %vm9661 = vcmp.lt.s32.totalorder %v7876, 0
    %v9662 = vand.u32 %v7876, 2139095040
    %v9663 = vshrl.u32 %v9662, 23
    %v9664 = vsub.s32 %v9663, 127
    %v9665 = vand.u32 2147483647, %v7876
    %v9666 = vand.u32 %v9665, 8388607
    %v9667 = vor.u32 %v9666, 8388608
    %v9668 = vsub.s32 0, %v9667
    %v9669 = vadd.s32 %v9664, 1
    %vm9670 = vcmp.gt.s32.totalorder %v9669, 0
    %v9671 = vsel %vm9670, %v9669, 0
    %v9672 = vshrl.u32 %v9671, 5
    %v9673 = vand.u32 %v9671, 31
    %v9674 = vsub.s32 32, %v9673
    %v9675 = vshrl.u32 683565275, %v9674
    %v9676 = vshll.u32 683565275, %v9673
    %v9677 = vshrl.u32 2475754826, %v9674
    %v9678 = vor.u32 %v9676, %v9677
    %v9679 = vshll.u32 2475754826, %v9673
    %v9680 = vshrl.u32 2131351028, %v9674
    %v9681 = vor.u32 %v9679, %v9680
    %v9682 = vshll.u32 2131351028, %v9673
    %v9683 = vshrl.u32 2102212464, %v9674
    %v9684 = vor.u32 %v9682, %v9683
    %v9685 = vshll.u32 2102212464, %v9673
    %v9686 = vshrl.u32 920167782, %v9674
    %v9687 = vor.u32 %v9685, %v9686
    %v9688 = vshll.u32 920167782, %v9673
    %v9689 = vshrl.u32 1326507024, %v9674
    %v9690 = vor.u32 %v9688, %v9689
    %vm9691 = vcmp.lt.s32.totalorder %v9672, 1
    %vm9692 = vcmp.lt.s32.totalorder %v9672, 2
    %vm9693 = vcmp.lt.s32.totalorder %v9672, 3
    %vm9694 = vcmp.lt.s32.totalorder %v9672, 4
    %v9695 = vsel %vm9691, %v9675, %v9678
    %v9696 = vsel %vm9694, %v9684, 2102212464
    %v9697 = vsel %vm9693, %v9681, %v9696
    %v9698 = vsel %vm9692, %v9695, %v9697
    %v9699 = vsel %vm9691, %v9678, %v9681
    %v9700 = vsel %vm9694, %v9687, 920167782
    %v9701 = vsel %vm9693, %v9684, %v9700
    %v9702 = vsel %vm9692, %v9699, %v9701
    %v9703 = vsel %vm9691, %v9681, %v9684
    %v9704 = vsel %vm9694, %v9690, 1326507024
    %v9705 = vsel %vm9693, %v9687, %v9704
    %v9706 = vsel %vm9692, %v9703, %v9705
    %v9707 = vshll.u32 %v9667, 8
    %v9708 = vmul.u32.u64.compose %v9707, %v9706
    %v9709 = vextract.low.u32 %v9708
    %v9710 = vextract.high.u32 %v9708
    %v9711 = vmul.u32.u64.compose %v9707, %v9702
    %v9712 = vextract.low.u32 %v9711
    %v9713 = vextract.high.u32 %v9711
    %v9714 = vmul.u32 %v9707, %v9698
    %v9715 = vadd.s32 %v9710, %v9712
    %vm9716 = vc.u32 %v9710, %v9712
    %v9717 = vadd.s32 %v9713, 1
    %v9718 = vsel %vm9716, %v9717, %v9713
    %v9719 = vadd.s32 %v9714, %v9718
    %v9720 = vadd.s32 %v9719, 536870912
    %v9721 = vshrl.u32 %v9720, 30
    %v9722 = vshll.u32 %v9721, 30
    %v9723 = vsub.s32 %v9719, %v9722
    %vm9724 = vcmp.lt.s32.totalorder %v9723, 0
    %v9725 = vsub.s32 0, %v9723
    %v9726 = vsel %vm9724, %v9725, %v9723
    %v9727 = vclz %v9726
    %v9728 = vsub.s32 %v9727, 2
    %vm9729 = vcmp.gt.s32.totalorder 0, %v9728
    %v9730 = vsel %vm9729, 0, %v9728
    %v9731 = vsub.s32 32, %v9730
    %v9732 = vshll.u32 %v9723, %v9730
    %v9733 = vshrl.u32 %v9715, %v9731
    %v9734 = vor.u32 %v9732, %v9733
    %v9735 = vsub.s32 4294967266, %v9730
    %v9736 = vadd.s32 %v9735, 127
    %v9737 = vshll.u32 %v9736, 23
    %v9738 = vor.u32 4788187, %v9737
    %v9739 = vand.u32 2147483647, %v9738
    %v9741 = vcvt.s32.f32 %v9734
    %v9742 = vmul.f32 %v9741, %v9739
    %v9743 = vxor.u32 %v9742, 2147483648
    %v9744 = vsel %vm9661, %v9743, %v9742
    %v9745 = vsub.s32 4, %v9721
    %v9746 = vsel %vm9661, %v9745, %v9721
    %v9747 = vsel %vm9660, %v7876, %v9744
    %v9748 = vsel %vm9660, 0, %v9746
    %v9749 = vcosq.f32.pop %v9747
    %v9750 = vsinq.f32.pop %v9747
    %vm9751 = vweird.f32 %v7876
    %v9752 = vadd.s32 %v9748, 3
    %v9753 = vand.u32 %v9752, 3
    %vm9754 = vcmp.lt.s32.totalorder %v9753, 2
    %vm9755 = vcmp.eq.s32.totalorder %v9753, 0
    %v9756 = vxor.u32 %v9750, 2147483648
    %v9757 = vsel %vm9755, %v9749, %v9756
    %vm9758 = vcmp.eq.s32.totalorder %v9753, 2
    %v9759 = vxor.u32 %v9749, 2147483648
    %v9760 = vsel %vm9758, %v9759, %v9750
    %v9761 = vsel %vm9754, %v9757, %v9760
    %v9762 = vsel %vm9751, nan, %v9761
    %v9763 = vand.u32 2147483647, %v7877
    %vm9764 = vcmp.le.f32.partialorder %v9763, 0.7853982
    %vm9765 = vcmp.lt.s32.totalorder %v7877, 0
    %v9766 = vand.u32 %v7877, 2139095040
    %v9767 = vshrl.u32 %v9766, 23
    %v9768 = vsub.s32 %v9767, 127
    %v9769 = vand.u32 2147483647, %v7877
    %v9770 = vand.u32 %v9769, 8388607
    %v9771 = vor.u32 %v9770, 8388608
    %v9772 = vsub.s32 0, %v9771
    %v9773 = vadd.s32 %v9768, 1
    %vm9774 = vcmp.gt.s32.totalorder %v9773, 0
    %v9775 = vsel %vm9774, %v9773, 0
    %v9776 = vshrl.u32 %v9775, 5
    %v9777 = vand.u32 %v9775, 31
    %v9778 = vsub.s32 32, %v9777
    %v9779 = vshrl.u32 683565275, %v9778
    %v9780 = vshll.u32 683565275, %v9777
    %v9781 = vshrl.u32 2475754826, %v9778
    %v9782 = vor.u32 %v9780, %v9781
    %v9783 = vshll.u32 2475754826, %v9777
    %v9784 = vshrl.u32 2131351028, %v9778
    %v9785 = vor.u32 %v9783, %v9784
    %v9786 = vshll.u32 2131351028, %v9777
    %v9787 = vshrl.u32 2102212464, %v9778
    %v9788 = vor.u32 %v9786, %v9787
    %v9789 = vshll.u32 2102212464, %v9777
    %v9790 = vshrl.u32 920167782, %v9778
    %v9791 = vor.u32 %v9789, %v9790
    %v9792 = vshll.u32 920167782, %v9777
    %v9793 = vshrl.u32 1326507024, %v9778
    %v9794 = vor.u32 %v9792, %v9793
    %vm9795 = vcmp.lt.s32.totalorder %v9776, 1
    %vm9796 = vcmp.lt.s32.totalorder %v9776, 2
    %vm9797 = vcmp.lt.s32.totalorder %v9776, 3
    %vm9798 = vcmp.lt.s32.totalorder %v9776, 4
    %v9799 = vsel %vm9795, %v9779, %v9782
    %v9800 = vsel %vm9798, %v9788, 2102212464
    %v9801 = vsel %vm9797, %v9785, %v9800
    %v9802 = vsel %vm9796, %v9799, %v9801
    %v9803 = vsel %vm9795, %v9782, %v9785
    %v9804 = vsel %vm9798, %v9791, 920167782
    %v9805 = vsel %vm9797, %v9788, %v9804
    %v9806 = vsel %vm9796, %v9803, %v9805
    %v9807 = vsel %vm9795, %v9785, %v9788
    %v9808 = vsel %vm9798, %v9794, 1326507024
    %v9809 = vsel %vm9797, %v9791, %v9808
    %v9810 = vsel %vm9796, %v9807, %v9809
    %v9811 = vshll.u32 %v9771, 8
    %v9812 = vmul.u32.u64.compose %v9811, %v9810
    %v9813 = vextract.low.u32 %v9812
    %v9814 = vextract.high.u32 %v9812
    %v9815 = vmul.u32.u64.compose %v9811, %v9806
    %v9816 = vextract.low.u32 %v9815
    %v9817 = vextract.high.u32 %v9815
    %v9818 = vmul.u32 %v9811, %v9802
    %v9819 = vadd.s32 %v9814, %v9816
    %vm9820 = vc.u32 %v9814, %v9816
    %v9821 = vadd.s32 %v9817, 1
    %v9822 = vsel %vm9820, %v9821, %v9817
    %v9823 = vadd.s32 %v9818, %v9822
    %v9824 = vadd.s32 %v9823, 536870912
    %v9825 = vshrl.u32 %v9824, 30
    %v9826 = vshll.u32 %v9825, 30
    %v9827 = vsub.s32 %v9823, %v9826
    %vm9828 = vcmp.lt.s32.totalorder %v9827, 0
    %v9829 = vsub.s32 0, %v9827
    %v9830 = vsel %vm9828, %v9829, %v9827
    %v9831 = vclz %v9830
    %v9832 = vsub.s32 %v9831, 2
    %vm9833 = vcmp.gt.s32.totalorder 0, %v9832
    %v9834 = vsel %vm9833, 0, %v9832
    %v9835 = vsub.s32 32, %v9834
    %v9836 = vshll.u32 %v9827, %v9834
    %v9837 = vshrl.u32 %v9819, %v9835
    %v9838 = vor.u32 %v9836, %v9837
    %v9839 = vsub.s32 4294967266, %v9834
    %v9840 = vadd.s32 %v9839, 127
    %v9841 = vshll.u32 %v9840, 23
    %v9842 = vor.u32 4788187, %v9841
    %v9843 = vand.u32 2147483647, %v9842
    %v9845 = vcvt.s32.f32 %v9838
    %v9846 = vmul.f32 %v9845, %v9843
    %v9847 = vxor.u32 %v9846, 2147483648
    %v9848 = vsel %vm9765, %v9847, %v9846
    %v9849 = vsub.s32 4, %v9825
    %v9850 = vsel %vm9765, %v9849, %v9825
    %v9851 = vsel %vm9764, %v7877, %v9848
    %v9852 = vsel %vm9764, 0, %v9850
    %v9853 = vcosq.f32.pop %v9851
    %v9854 = vsinq.f32.pop %v9851
    %vm9855 = vweird.f32 %v7877
    %v9856 = vadd.s32 %v9852, 3
    %v9857 = vand.u32 %v9856, 3
    %vm9858 = vcmp.lt.s32.totalorder %v9857, 2
    %vm9859 = vcmp.eq.s32.totalorder %v9857, 0
    %v9860 = vxor.u32 %v9854, 2147483648
    %v9861 = vsel %vm9859, %v9853, %v9860
    %vm9862 = vcmp.eq.s32.totalorder %v9857, 2
    %v9863 = vxor.u32 %v9853, 2147483648
    %v9864 = vsel %vm9862, %v9863, %v9854
    %v9865 = vsel %vm9858, %v9861, %v9864
    %v9866 = vsel %vm9855, nan, %v9865
    %v9867 = vand.u32 2147483647, %v7878
    %vm9868 = vcmp.le.f32.partialorder %v9867, 0.7853982
    %vm9869 = vcmp.lt.s32.totalorder %v7878, 0
    %v9870 = vand.u32 %v7878, 2139095040
    %v9871 = vshrl.u32 %v9870, 23
    %v9872 = vsub.s32 %v9871, 127
    %v9873 = vand.u32 2147483647, %v7878
    %v9874 = vand.u32 %v9873, 8388607
    %v9875 = vor.u32 %v9874, 8388608
    %v9876 = vsub.s32 0, %v9875
    %v9877 = vadd.s32 %v9872, 1
    %vm9878 = vcmp.gt.s32.totalorder %v9877, 0
    %v9879 = vsel %vm9878, %v9877, 0
    %v9880 = vshrl.u32 %v9879, 5
    %v9881 = vand.u32 %v9879, 31
    %v9882 = vsub.s32 32, %v9881
    %v9883 = vshrl.u32 683565275, %v9882
    %v9884 = vshll.u32 683565275, %v9881
    %v9885 = vshrl.u32 2475754826, %v9882
    %v9886 = vor.u32 %v9884, %v9885
    %v9887 = vshll.u32 2475754826, %v9881
    %v9888 = vshrl.u32 2131351028, %v9882
    %v9889 = vor.u32 %v9887, %v9888
    %v9890 = vshll.u32 2131351028, %v9881
    %v9891 = vshrl.u32 2102212464, %v9882
    %v9892 = vor.u32 %v9890, %v9891
    %v9893 = vshll.u32 2102212464, %v9881
    %v9894 = vshrl.u32 920167782, %v9882
    %v9895 = vor.u32 %v9893, %v9894
    %v9896 = vshll.u32 920167782, %v9881
    %v9897 = vshrl.u32 1326507024, %v9882
    %v9898 = vor.u32 %v9896, %v9897
    %vm9899 = vcmp.lt.s32.totalorder %v9880, 1
    %vm9900 = vcmp.lt.s32.totalorder %v9880, 2
    %vm9901 = vcmp.lt.s32.totalorder %v9880, 3
    %vm9902 = vcmp.lt.s32.totalorder %v9880, 4
    %v9903 = vsel %vm9899, %v9883, %v9886
    %v9904 = vsel %vm9902, %v9892, 2102212464
    %v9905 = vsel %vm9901, %v9889, %v9904
    %v9906 = vsel %vm9900, %v9903, %v9905
    %v9907 = vsel %vm9899, %v9886, %v9889
    %v9908 = vsel %vm9902, %v9895, 920167782
    %v9909 = vsel %vm9901, %v9892, %v9908
    %v9910 = vsel %vm9900, %v9907, %v9909
    %v9911 = vsel %vm9899, %v9889, %v9892
    %v9912 = vsel %vm9902, %v9898, 1326507024
    %v9913 = vsel %vm9901, %v9895, %v9912
    %v9914 = vsel %vm9900, %v9911, %v9913
    %v9915 = vshll.u32 %v9875, 8
    %v9916 = vmul.u32.u64.compose %v9915, %v9914
    %v9917 = vextract.low.u32 %v9916
    %v9918 = vextract.high.u32 %v9916
    %v9919 = vmul.u32.u64.compose %v9915, %v9910
    %v9920 = vextract.low.u32 %v9919
    %v9921 = vextract.high.u32 %v9919
    %v9922 = vmul.u32 %v9915, %v9906
    %v9923 = vadd.s32 %v9918, %v9920
    %vm9924 = vc.u32 %v9918, %v9920
    %v9925 = vadd.s32 %v9921, 1
    %v9926 = vsel %vm9924, %v9925, %v9921
    %v9927 = vadd.s32 %v9922, %v9926
    %v9928 = vadd.s32 %v9927, 536870912
    %v9929 = vshrl.u32 %v9928, 30
    %v9930 = vshll.u32 %v9929, 30
    %v9931 = vsub.s32 %v9927, %v9930
    %vm9932 = vcmp.lt.s32.totalorder %v9931, 0
    %v9933 = vsub.s32 0, %v9931
    %v9934 = vsel %vm9932, %v9933, %v9931
    %v9935 = vclz %v9934
    %v9936 = vsub.s32 %v9935, 2
    %vm9937 = vcmp.gt.s32.totalorder 0, %v9936
    %v9938 = vsel %vm9937, 0, %v9936
    %v9939 = vsub.s32 32, %v9938
    %v9940 = vshll.u32 %v9931, %v9938
    %v9941 = vshrl.u32 %v9923, %v9939
    %v9942 = vor.u32 %v9940, %v9941
    %v9943 = vsub.s32 4294967266, %v9938
    %v9944 = vadd.s32 %v9943, 127
    %v9945 = vshll.u32 %v9944, 23
    %v9946 = vor.u32 4788187, %v9945
    %v9947 = vand.u32 2147483647, %v9946
    %v9949 = vcvt.s32.f32 %v9942
    %v9950 = vmul.f32 %v9949, %v9947
    %v9951 = vxor.u32 %v9950, 2147483648
    %v9952 = vsel %vm9869, %v9951, %v9950
    %v9953 = vsub.s32 4, %v9929
    %v9954 = vsel %vm9869, %v9953, %v9929
    %v9955 = vsel %vm9868, %v7878, %v9952
    %v9956 = vsel %vm9868, 0, %v9954
    %v9957 = vcosq.f32.pop %v9955
    %v9958 = vsinq.f32.pop %v9955
    %vm9959 = vweird.f32 %v7878
    %v9960 = vadd.s32 %v9956, 3
    %v9961 = vand.u32 %v9960, 3
    %vm9962 = vcmp.lt.s32.totalorder %v9961, 2
    %vm9963 = vcmp.eq.s32.totalorder %v9961, 0
    %v9964 = vxor.u32 %v9958, 2147483648
    %v9965 = vsel %vm9963, %v9957, %v9964
    %vm9966 = vcmp.eq.s32.totalorder %v9961, 2
    %v9967 = vxor.u32 %v9957, 2147483648
    %v9968 = vsel %vm9966, %v9967, %v9958
    %v9969 = vsel %vm9962, %v9965, %v9968
    %v9970 = vsel %vm9959, nan, %v9969
    %v9971 = vand.u32 2147483647, %v7879
    %vm9972 = vcmp.le.f32.partialorder %v9971, 0.7853982
    %vm9973 = vcmp.lt.s32.totalorder %v7879, 0
    %v9974 = vand.u32 %v7879, 2139095040
    %v9975 = vshrl.u32 %v9974, 23
    %v9976 = vsub.s32 %v9975, 127
    %v9977 = vand.u32 2147483647, %v7879
    %v9978 = vand.u32 %v9977, 8388607
    %v9979 = vor.u32 %v9978, 8388608
    %v9980 = vsub.s32 0, %v9979
    %v9981 = vadd.s32 %v9976, 1
    %vm9982 = vcmp.gt.s32.totalorder %v9981, 0
    %v9983 = vsel %vm9982, %v9981, 0
    %v9984 = vshrl.u32 %v9983, 5
    %v9985 = vand.u32 %v9983, 31
    %v9986 = vsub.s32 32, %v9985
    %v9987 = vshrl.u32 683565275, %v9986
    %v9988 = vshll.u32 683565275, %v9985
    %v9989 = vshrl.u32 2475754826, %v9986
    %v9990 = vor.u32 %v9988, %v9989
    %v9991 = vshll.u32 2475754826, %v9985
    %v9992 = vshrl.u32 2131351028, %v9986
    %v9993 = vor.u32 %v9991, %v9992
    %v9994 = vshll.u32 2131351028, %v9985
    %v9995 = vshrl.u32 2102212464, %v9986
    %v9996 = vor.u32 %v9994, %v9995
    %v9997 = vshll.u32 2102212464, %v9985
    %v9998 = vshrl.u32 920167782, %v9986
    %v9999 = vor.u32 %v9997, %v9998
    %v10000 = vshll.u32 920167782, %v9985
    %v10001 = vshrl.u32 1326507024, %v9986
    %v10002 = vor.u32 %v10000, %v10001
    %vm10003 = vcmp.lt.s32.totalorder %v9984, 1
    %vm10004 = vcmp.lt.s32.totalorder %v9984, 2
    %vm10005 = vcmp.lt.s32.totalorder %v9984, 3
    %vm10006 = vcmp.lt.s32.totalorder %v9984, 4
    %v10007 = vsel %vm10003, %v9987, %v9990
    %v10008 = vsel %vm10006, %v9996, 2102212464
    %v10009 = vsel %vm10005, %v9993, %v10008
    %v10010 = vsel %vm10004, %v10007, %v10009
    %v10011 = vsel %vm10003, %v9990, %v9993
    %v10012 = vsel %vm10006, %v9999, 920167782
    %v10013 = vsel %vm10005, %v9996, %v10012
    %v10014 = vsel %vm10004, %v10011, %v10013
    %v10015 = vsel %vm10003, %v9993, %v9996
    %v10016 = vsel %vm10006, %v10002, 1326507024
    %v10017 = vsel %vm10005, %v9999, %v10016
    %v10018 = vsel %vm10004, %v10015, %v10017
    %v10019 = vshll.u32 %v9979, 8
    %v10020 = vmul.u32.u64.compose %v10019, %v10018
    %v10021 = vextract.low.u32 %v10020
    %v10022 = vextract.high.u32 %v10020
    %v10023 = vmul.u32.u64.compose %v10019, %v10014
    %v10024 = vextract.low.u32 %v10023
    %v10025 = vextract.high.u32 %v10023
    %v10026 = vmul.u32 %v10019, %v10010
    %v10027 = vadd.s32 %v10022, %v10024
    %vm10028 = vc.u32 %v10022, %v10024
    %v10029 = vadd.s32 %v10025, 1
    %v10030 = vsel %vm10028, %v10029, %v10025
    %v10031 = vadd.s32 %v10026, %v10030
    %v10032 = vadd.s32 %v10031, 536870912
    %v10033 = vshrl.u32 %v10032, 30
    %v10034 = vshll.u32 %v10033, 30
    %v10035 = vsub.s32 %v10031, %v10034
    %vm10036 = vcmp.lt.s32.totalorder %v10035, 0
    %v10037 = vsub.s32 0, %v10035
    %v10038 = vsel %vm10036, %v10037, %v10035
    %v10039 = vclz %v10038
    %v10040 = vsub.s32 %v10039, 2
    %vm10041 = vcmp.gt.s32.totalorder 0, %v10040
    %v10042 = vsel %vm10041, 0, %v10040
    %v10043 = vsub.s32 32, %v10042
    %v10044 = vshll.u32 %v10035, %v10042
    %v10045 = vshrl.u32 %v10027, %v10043
    %v10046 = vor.u32 %v10044, %v10045
    %v10047 = vsub.s32 4294967266, %v10042
    %v10048 = vadd.s32 %v10047, 127
    %v10049 = vshll.u32 %v10048, 23
    %v10050 = vor.u32 4788187, %v10049
    %v10051 = vand.u32 2147483647, %v10050
    %v10053 = vcvt.s32.f32 %v10046
    %v10054 = vmul.f32 %v10053, %v10051
    %v10055 = vxor.u32 %v10054, 2147483648
    %v10056 = vsel %vm9973, %v10055, %v10054
    %v10057 = vsub.s32 4, %v10033
    %v10058 = vsel %vm9973, %v10057, %v10033
    %v10059 = vsel %vm9972, %v7879, %v10056
    %v10060 = vsel %vm9972, 0, %v10058
    %v10061 = vcosq.f32.pop %v10059
    %v10062 = vsinq.f32.pop %v10059
    %vm10063 = vweird.f32 %v7879
    %v10064 = vadd.s32 %v10060, 3
    %v10065 = vand.u32 %v10064, 3
    %vm10066 = vcmp.lt.s32.totalorder %v10065, 2
    %vm10067 = vcmp.eq.s32.totalorder %v10065, 0
    %v10068 = vxor.u32 %v10062, 2147483648
    %v10069 = vsel %vm10067, %v10061, %v10068
    %vm10070 = vcmp.eq.s32.totalorder %v10065, 2
    %v10071 = vxor.u32 %v10061, 2147483648
    %v10072 = vsel %vm10070, %v10071, %v10062
    %v10073 = vsel %vm10066, %v10069, %v10072
    %v10074 = vsel %vm10063, nan, %v10073
    %v10075 = vand.u32 2147483647, %v7880
    %vm10076 = vcmp.le.f32.partialorder %v10075, 0.7853982
    %vm10077 = vcmp.lt.s32.totalorder %v7880, 0
    %v10078 = vand.u32 %v7880, 2139095040
    %v10079 = vshrl.u32 %v10078, 23
    %v10080 = vsub.s32 %v10079, 127
    %v10081 = vand.u32 2147483647, %v7880
    %v10082 = vand.u32 %v10081, 8388607
    %v10083 = vor.u32 %v10082, 8388608
    %v10084 = vsub.s32 0, %v10083
    %v10085 = vadd.s32 %v10080, 1
    %vm10086 = vcmp.gt.s32.totalorder %v10085, 0
    %v10087 = vsel %vm10086, %v10085, 0
    %v10088 = vshrl.u32 %v10087, 5
    %v10089 = vand.u32 %v10087, 31
    %v10090 = vsub.s32 32, %v10089
    %v10091 = vshrl.u32 683565275, %v10090
    %v10092 = vshll.u32 683565275, %v10089
    %v10093 = vshrl.u32 2475754826, %v10090
    %v10094 = vor.u32 %v10092, %v10093
    %v10095 = vshll.u32 2475754826, %v10089
    %v10096 = vshrl.u32 2131351028, %v10090
    %v10097 = vor.u32 %v10095, %v10096
    %v10098 = vshll.u32 2131351028, %v10089
    %v10099 = vshrl.u32 2102212464, %v10090
    %v10100 = vor.u32 %v10098, %v10099
    %v10101 = vshll.u32 2102212464, %v10089
    %v10102 = vshrl.u32 920167782, %v10090
    %v10103 = vor.u32 %v10101, %v10102
    %v10104 = vshll.u32 920167782, %v10089
    %v10105 = vshrl.u32 1326507024, %v10090
    %v10106 = vor.u32 %v10104, %v10105
    %vm10107 = vcmp.lt.s32.totalorder %v10088, 1
    %vm10108 = vcmp.lt.s32.totalorder %v10088, 2
    %vm10109 = vcmp.lt.s32.totalorder %v10088, 3
    %vm10110 = vcmp.lt.s32.totalorder %v10088, 4
    %v10111 = vsel %vm10107, %v10091, %v10094
    %v10112 = vsel %vm10110, %v10100, 2102212464
    %v10113 = vsel %vm10109, %v10097, %v10112
    %v10114 = vsel %vm10108, %v10111, %v10113
    %v10115 = vsel %vm10107, %v10094, %v10097
    %v10116 = vsel %vm10110, %v10103, 920167782
    %v10117 = vsel %vm10109, %v10100, %v10116
    %v10118 = vsel %vm10108, %v10115, %v10117
    %v10119 = vsel %vm10107, %v10097, %v10100
    %v10120 = vsel %vm10110, %v10106, 1326507024
    %v10121 = vsel %vm10109, %v10103, %v10120
    %v10122 = vsel %vm10108, %v10119, %v10121
    %v10123 = vshll.u32 %v10083, 8
    %v10124 = vmul.u32.u64.compose %v10123, %v10122
    %v10125 = vextract.low.u32 %v10124
    %v10126 = vextract.high.u32 %v10124
    %v10127 = vmul.u32.u64.compose %v10123, %v10118
    %v10128 = vextract.low.u32 %v10127
    %v10129 = vextract.high.u32 %v10127
    %v10130 = vmul.u32 %v10123, %v10114
    %v10131 = vadd.s32 %v10126, %v10128
    %vm10132 = vc.u32 %v10126, %v10128
    %v10133 = vadd.s32 %v10129, 1
    %v10134 = vsel %vm10132, %v10133, %v10129
    %v10135 = vadd.s32 %v10130, %v10134
    %v10136 = vadd.s32 %v10135, 536870912
    %v10137 = vshrl.u32 %v10136, 30
    %v10138 = vshll.u32 %v10137, 30
    %v10139 = vsub.s32 %v10135, %v10138
    %vm10140 = vcmp.lt.s32.totalorder %v10139, 0
    %v10141 = vsub.s32 0, %v10139
    %v10142 = vsel %vm10140, %v10141, %v10139
    %v10143 = vclz %v10142
    %v10144 = vsub.s32 %v10143, 2
    %vm10145 = vcmp.gt.s32.totalorder 0, %v10144
    %v10146 = vsel %vm10145, 0, %v10144
    %v10147 = vsub.s32 32, %v10146
    %v10148 = vshll.u32 %v10139, %v10146
    %v10149 = vshrl.u32 %v10131, %v10147
    %v10150 = vor.u32 %v10148, %v10149
    %v10151 = vsub.s32 4294967266, %v10146
    %v10152 = vadd.s32 %v10151, 127
    %v10153 = vshll.u32 %v10152, 23
    %v10154 = vor.u32 4788187, %v10153
    %v10155 = vand.u32 2147483647, %v10154
    %v10157 = vcvt.s32.f32 %v10150
    %v10158 = vmul.f32 %v10157, %v10155
    %v10159 = vxor.u32 %v10158, 2147483648
    %v10160 = vsel %vm10077, %v10159, %v10158
    %v10161 = vsub.s32 4, %v10137
    %v10162 = vsel %vm10077, %v10161, %v10137
    %v10163 = vsel %vm10076, %v7880, %v10160
    %v10164 = vsel %vm10076, 0, %v10162
    %v10165 = vcosq.f32.pop %v10163
    %v10166 = vsinq.f32.pop %v10163
    %vm10167 = vweird.f32 %v7880
    %v10168 = vadd.s32 %v10164, 3
    %v10169 = vand.u32 %v10168, 3
    %vm10170 = vcmp.lt.s32.totalorder %v10169, 2
    %vm10171 = vcmp.eq.s32.totalorder %v10169, 0
    %v10172 = vxor.u32 %v10166, 2147483648
    %v10173 = vsel %vm10171, %v10165, %v10172
    %vm10174 = vcmp.eq.s32.totalorder %v10169, 2
    %v10175 = vxor.u32 %v10165, 2147483648
    %v10176 = vsel %vm10174, %v10175, %v10166
    %v10177 = vsel %vm10170, %v10173, %v10176
    %v10178 = vsel %vm10167, nan, %v10177
    %v10179 = vand.u32 2147483647, %v7881
    %vm10180 = vcmp.le.f32.partialorder %v10179, 0.7853982
    %vm10181 = vcmp.lt.s32.totalorder %v7881, 0
    %v10182 = vand.u32 %v7881, 2139095040
    %v10183 = vshrl.u32 %v10182, 23
    %v10184 = vsub.s32 %v10183, 127
    %v10185 = vand.u32 2147483647, %v7881
    %v10186 = vand.u32 %v10185, 8388607
    %v10187 = vor.u32 %v10186, 8388608
    %v10188 = vsub.s32 0, %v10187
    %v10189 = vadd.s32 %v10184, 1
    %vm10190 = vcmp.gt.s32.totalorder %v10189, 0
    %v10191 = vsel %vm10190, %v10189, 0
    %v10192 = vshrl.u32 %v10191, 5
    %v10193 = vand.u32 %v10191, 31
    %v10194 = vsub.s32 32, %v10193
    %v10195 = vshrl.u32 683565275, %v10194
    %v10196 = vshll.u32 683565275, %v10193
    %v10197 = vshrl.u32 2475754826, %v10194
    %v10198 = vor.u32 %v10196, %v10197
    %v10199 = vshll.u32 2475754826, %v10193
    %v10200 = vshrl.u32 2131351028, %v10194
    %v10201 = vor.u32 %v10199, %v10200
    %v10202 = vshll.u32 2131351028, %v10193
    %v10203 = vshrl.u32 2102212464, %v10194
    %v10204 = vor.u32 %v10202, %v10203
    %v10205 = vshll.u32 2102212464, %v10193
    %v10206 = vshrl.u32 920167782, %v10194
    %v10207 = vor.u32 %v10205, %v10206
    %v10208 = vshll.u32 920167782, %v10193
    %v10209 = vshrl.u32 1326507024, %v10194
    %v10210 = vor.u32 %v10208, %v10209
    %vm10211 = vcmp.lt.s32.totalorder %v10192, 1
    %vm10212 = vcmp.lt.s32.totalorder %v10192, 2
    %vm10213 = vcmp.lt.s32.totalorder %v10192, 3
    %vm10214 = vcmp.lt.s32.totalorder %v10192, 4
    %v10215 = vsel %vm10211, %v10195, %v10198
    %v10216 = vsel %vm10214, %v10204, 2102212464
    %v10217 = vsel %vm10213, %v10201, %v10216
    %v10218 = vsel %vm10212, %v10215, %v10217
    %v10219 = vsel %vm10211, %v10198, %v10201
    %v10220 = vsel %vm10214, %v10207, 920167782
    %v10221 = vsel %vm10213, %v10204, %v10220
    %v10222 = vsel %vm10212, %v10219, %v10221
    %v10223 = vsel %vm10211, %v10201, %v10204
    %v10224 = vsel %vm10214, %v10210, 1326507024
    %v10225 = vsel %vm10213, %v10207, %v10224
    %v10226 = vsel %vm10212, %v10223, %v10225
    %v10227 = vshll.u32 %v10187, 8
    %v10228 = vmul.u32.u64.compose %v10227, %v10226
    %v10229 = vextract.low.u32 %v10228
    %v10230 = vextract.high.u32 %v10228
    %v10231 = vmul.u32.u64.compose %v10227, %v10222
    %v10232 = vextract.low.u32 %v10231
    %v10233 = vextract.high.u32 %v10231
    %v10234 = vmul.u32 %v10227, %v10218
    %v10235 = vadd.s32 %v10230, %v10232
    %vm10236 = vc.u32 %v10230, %v10232
    %v10237 = vadd.s32 %v10233, 1
    %v10238 = vsel %vm10236, %v10237, %v10233
    %v10239 = vadd.s32 %v10234, %v10238
    %v10240 = vadd.s32 %v10239, 536870912
    %v10241 = vshrl.u32 %v10240, 30
    %v10242 = vshll.u32 %v10241, 30
    %v10243 = vsub.s32 %v10239, %v10242
    %vm10244 = vcmp.lt.s32.totalorder %v10243, 0
    %v10245 = vsub.s32 0, %v10243
    %v10246 = vsel %vm10244, %v10245, %v10243
    %v10247 = vclz %v10246
    %v10248 = vsub.s32 %v10247, 2
    %vm10249 = vcmp.gt.s32.totalorder 0, %v10248
    %v10250 = vsel %vm10249, 0, %v10248
    %v10251 = vsub.s32 32, %v10250
    %v10252 = vshll.u32 %v10243, %v10250
    %v10253 = vshrl.u32 %v10235, %v10251
    %v10254 = vor.u32 %v10252, %v10253
    %v10255 = vsub.s32 4294967266, %v10250
    %v10256 = vadd.s32 %v10255, 127
    %v10257 = vshll.u32 %v10256, 23
    %v10258 = vor.u32 4788187, %v10257
    %v10259 = vand.u32 2147483647, %v10258
    %v10261 = vcvt.s32.f32 %v10254
    %v10262 = vmul.f32 %v10261, %v10259
    %v10263 = vxor.u32 %v10262, 2147483648
    %v10264 = vsel %vm10181, %v10263, %v10262
    %v10265 = vsub.s32 4, %v10241
    %v10266 = vsel %vm10181, %v10265, %v10241
    %v10267 = vsel %vm10180, %v7881, %v10264
    %v10268 = vsel %vm10180, 0, %v10266
    %v10269 = vcosq.f32.pop %v10267
    %v10270 = vsinq.f32.pop %v10267
    %vm10271 = vweird.f32 %v7881
    %v10272 = vadd.s32 %v10268, 3
    %v10273 = vand.u32 %v10272, 3
    %vm10274 = vcmp.lt.s32.totalorder %v10273, 2
    %vm10275 = vcmp.eq.s32.totalorder %v10273, 0
    %v10276 = vxor.u32 %v10270, 2147483648
    %v10277 = vsel %vm10275, %v10269, %v10276
    %vm10278 = vcmp.eq.s32.totalorder %v10273, 2
    %v10279 = vxor.u32 %v10269, 2147483648
    %v10280 = vsel %vm10278, %v10279, %v10270
    %v10281 = vsel %vm10274, %v10277, %v10280
    %v10282 = vsel %vm10271, nan, %v10281
    %v10283 = vand.u32 2147483647, %v7882
    %vm10284 = vcmp.le.f32.partialorder %v10283, 0.7853982
    %vm10285 = vcmp.lt.s32.totalorder %v7882, 0
    %v10286 = vand.u32 %v7882, 2139095040
    %v10287 = vshrl.u32 %v10286, 23
    %v10288 = vsub.s32 %v10287, 127
    %v10289 = vand.u32 2147483647, %v7882
    %v10290 = vand.u32 %v10289, 8388607
    %v10291 = vor.u32 %v10290, 8388608
    %v10292 = vsub.s32 0, %v10291
    %v10293 = vadd.s32 %v10288, 1
    %vm10294 = vcmp.gt.s32.totalorder %v10293, 0
    %v10295 = vsel %vm10294, %v10293, 0
    %v10296 = vshrl.u32 %v10295, 5
    %v10297 = vand.u32 %v10295, 31
    %v10298 = vsub.s32 32, %v10297
    %v10299 = vshrl.u32 683565275, %v10298
    %v10300 = vshll.u32 683565275, %v10297
    %v10301 = vshrl.u32 2475754826, %v10298
    %v10302 = vor.u32 %v10300, %v10301
    %v10303 = vshll.u32 2475754826, %v10297
    %v10304 = vshrl.u32 2131351028, %v10298
    %v10305 = vor.u32 %v10303, %v10304
    %v10306 = vshll.u32 2131351028, %v10297
    %v10307 = vshrl.u32 2102212464, %v10298
    %v10308 = vor.u32 %v10306, %v10307
    %v10309 = vshll.u32 2102212464, %v10297
    %v10310 = vshrl.u32 920167782, %v10298
    %v10311 = vor.u32 %v10309, %v10310
    %v10312 = vshll.u32 920167782, %v10297
    %v10313 = vshrl.u32 1326507024, %v10298
    %v10314 = vor.u32 %v10312, %v10313
    %vm10315 = vcmp.lt.s32.totalorder %v10296, 1
    %vm10316 = vcmp.lt.s32.totalorder %v10296, 2
    %vm10317 = vcmp.lt.s32.totalorder %v10296, 3
    %vm10318 = vcmp.lt.s32.totalorder %v10296, 4
    %v10319 = vsel %vm10315, %v10299, %v10302
    %v10320 = vsel %vm10318, %v10308, 2102212464
    %v10321 = vsel %vm10317, %v10305, %v10320
    %v10322 = vsel %vm10316, %v10319, %v10321
    %v10323 = vsel %vm10315, %v10302, %v10305
    %v10324 = vsel %vm10318, %v10311, 920167782
    %v10325 = vsel %vm10317, %v10308, %v10324
    %v10326 = vsel %vm10316, %v10323, %v10325
    %v10327 = vsel %vm10315, %v10305, %v10308
    %v10328 = vsel %vm10318, %v10314, 1326507024
    %v10329 = vsel %vm10317, %v10311, %v10328
    %v10330 = vsel %vm10316, %v10327, %v10329
    %v10331 = vshll.u32 %v10291, 8
    %v10332 = vmul.u32.u64.compose %v10331, %v10330
    %v10333 = vextract.low.u32 %v10332
    %v10334 = vextract.high.u32 %v10332
    %v10335 = vmul.u32.u64.compose %v10331, %v10326
    %v10336 = vextract.low.u32 %v10335
    %v10337 = vextract.high.u32 %v10335
    %v10338 = vmul.u32 %v10331, %v10322
    %v10339 = vadd.s32 %v10334, %v10336
    %vm10340 = vc.u32 %v10334, %v10336
    %v10341 = vadd.s32 %v10337, 1
    %v10342 = vsel %vm10340, %v10341, %v10337
    %v10343 = vadd.s32 %v10338, %v10342
    %v10344 = vadd.s32 %v10343, 536870912
    %v10345 = vshrl.u32 %v10344, 30
    %v10346 = vshll.u32 %v10345, 30
    %v10347 = vsub.s32 %v10343, %v10346
    %vm10348 = vcmp.lt.s32.totalorder %v10347, 0
    %v10349 = vsub.s32 0, %v10347
    %v10350 = vsel %vm10348, %v10349, %v10347
    %v10351 = vclz %v10350
    %v10352 = vsub.s32 %v10351, 2
    %vm10353 = vcmp.gt.s32.totalorder 0, %v10352
    %v10354 = vsel %vm10353, 0, %v10352
    %v10355 = vsub.s32 32, %v10354
    %v10356 = vshll.u32 %v10347, %v10354
    %v10357 = vshrl.u32 %v10339, %v10355
    %v10358 = vor.u32 %v10356, %v10357
    %v10359 = vsub.s32 4294967266, %v10354
    %v10360 = vadd.s32 %v10359, 127
    %v10361 = vshll.u32 %v10360, 23
    %v10362 = vor.u32 4788187, %v10361
    %v10363 = vand.u32 2147483647, %v10362
    %v10365 = vcvt.s32.f32 %v10358
    %v10366 = vmul.f32 %v10365, %v10363
    %v10367 = vxor.u32 %v10366, 2147483648
    %v10368 = vsel %vm10285, %v10367, %v10366
    %v10369 = vsub.s32 4, %v10345
    %v10370 = vsel %vm10285, %v10369, %v10345
    %v10371 = vsel %vm10284, %v7882, %v10368
    %v10372 = vsel %vm10284, 0, %v10370
    %v10373 = vcosq.f32.pop %v10371
    %v10374 = vsinq.f32.pop %v10371
    %vm10375 = vweird.f32 %v7882
    %v10376 = vadd.s32 %v10372, 3
    %v10377 = vand.u32 %v10376, 3
    %vm10378 = vcmp.lt.s32.totalorder %v10377, 2
    %vm10379 = vcmp.eq.s32.totalorder %v10377, 0
    %v10380 = vxor.u32 %v10374, 2147483648
    %v10381 = vsel %vm10379, %v10373, %v10380
    %vm10382 = vcmp.eq.s32.totalorder %v10377, 2
    %v10383 = vxor.u32 %v10373, 2147483648
    %v10384 = vsel %vm10382, %v10383, %v10374
    %v10385 = vsel %vm10378, %v10381, %v10384
    %v10386 = vsel %vm10375, nan, %v10385
    %v10387 = vand.u32 2147483647, %v7883
    %vm10388 = vcmp.le.f32.partialorder %v10387, 0.7853982
    %vm10389 = vcmp.lt.s32.totalorder %v7883, 0
    %v10390 = vand.u32 %v7883, 2139095040
    %v10391 = vshrl.u32 %v10390, 23
    %v10392 = vsub.s32 %v10391, 127
    %v10393 = vand.u32 2147483647, %v7883
    %v10394 = vand.u32 %v10393, 8388607
    %v10395 = vor.u32 %v10394, 8388608
    %v10396 = vsub.s32 0, %v10395
    %v10397 = vadd.s32 %v10392, 1
    %vm10398 = vcmp.gt.s32.totalorder %v10397, 0
    %v10399 = vsel %vm10398, %v10397, 0
    %v10400 = vshrl.u32 %v10399, 5
    %v10401 = vand.u32 %v10399, 31
    %v10402 = vsub.s32 32, %v10401
    %v10403 = vshrl.u32 683565275, %v10402
    %v10404 = vshll.u32 683565275, %v10401
    %v10405 = vshrl.u32 2475754826, %v10402
    %v10406 = vor.u32 %v10404, %v10405
    %v10407 = vshll.u32 2475754826, %v10401
    %v10408 = vshrl.u32 2131351028, %v10402
    %v10409 = vor.u32 %v10407, %v10408
    %v10410 = vshll.u32 2131351028, %v10401
    %v10411 = vshrl.u32 2102212464, %v10402
    %v10412 = vor.u32 %v10410, %v10411
    %v10413 = vshll.u32 2102212464, %v10401
    %v10414 = vshrl.u32 920167782, %v10402
    %v10415 = vor.u32 %v10413, %v10414
    %v10416 = vshll.u32 920167782, %v10401
    %v10417 = vshrl.u32 1326507024, %v10402
    %v10418 = vor.u32 %v10416, %v10417
    %vm10419 = vcmp.lt.s32.totalorder %v10400, 1
    %vm10420 = vcmp.lt.s32.totalorder %v10400, 2
    %vm10421 = vcmp.lt.s32.totalorder %v10400, 3
    %vm10422 = vcmp.lt.s32.totalorder %v10400, 4
    %v10423 = vsel %vm10419, %v10403, %v10406
    %v10424 = vsel %vm10422, %v10412, 2102212464
    %v10425 = vsel %vm10421, %v10409, %v10424
    %v10426 = vsel %vm10420, %v10423, %v10425
    %v10427 = vsel %vm10419, %v10406, %v10409
    %v10428 = vsel %vm10422, %v10415, 920167782
    %v10429 = vsel %vm10421, %v10412, %v10428
    %v10430 = vsel %vm10420, %v10427, %v10429
    %v10431 = vsel %vm10419, %v10409, %v10412
    %v10432 = vsel %vm10422, %v10418, 1326507024
    %v10433 = vsel %vm10421, %v10415, %v10432
    %v10434 = vsel %vm10420, %v10431, %v10433
    %v10435 = vshll.u32 %v10395, 8
    %v10436 = vmul.u32.u64.compose %v10435, %v10434
    %v10437 = vextract.low.u32 %v10436
    %v10438 = vextract.high.u32 %v10436
    %v10439 = vmul.u32.u64.compose %v10435, %v10430
    %v10440 = vextract.low.u32 %v10439
    %v10441 = vextract.high.u32 %v10439
    %v10442 = vmul.u32 %v10435, %v10426
    %v10443 = vadd.s32 %v10438, %v10440
    %vm10444 = vc.u32 %v10438, %v10440
    %v10445 = vadd.s32 %v10441, 1
    %v10446 = vsel %vm10444, %v10445, %v10441
    %v10447 = vadd.s32 %v10442, %v10446
    %v10448 = vadd.s32 %v10447, 536870912
    %v10449 = vshrl.u32 %v10448, 30
    %v10450 = vshll.u32 %v10449, 30
    %v10451 = vsub.s32 %v10447, %v10450
    %vm10452 = vcmp.lt.s32.totalorder %v10451, 0
    %v10453 = vsub.s32 0, %v10451
    %v10454 = vsel %vm10452, %v10453, %v10451
    %v10455 = vclz %v10454
    %v10456 = vsub.s32 %v10455, 2
    %vm10457 = vcmp.gt.s32.totalorder 0, %v10456
    %v10458 = vsel %vm10457, 0, %v10456
    %v10459 = vsub.s32 32, %v10458
    %v10460 = vshll.u32 %v10451, %v10458
    %v10461 = vshrl.u32 %v10443, %v10459
    %v10462 = vor.u32 %v10460, %v10461
    %v10463 = vsub.s32 4294967266, %v10458
    %v10464 = vadd.s32 %v10463, 127
    %v10465 = vshll.u32 %v10464, 23
    %v10466 = vor.u32 4788187, %v10465
    %v10467 = vand.u32 2147483647, %v10466
    %v10469 = vcvt.s32.f32 %v10462
    %v10470 = vmul.f32 %v10469, %v10467
    %v10471 = vxor.u32 %v10470, 2147483648
    %v10472 = vsel %vm10389, %v10471, %v10470
    %v10473 = vsub.s32 4, %v10449
    %v10474 = vsel %vm10389, %v10473, %v10449
    %v10475 = vsel %vm10388, %v7883, %v10472
    %v10476 = vsel %vm10388, 0, %v10474
    %v10477 = vcosq.f32.pop %v10475
    %v10478 = vsinq.f32.pop %v10475
    %vm10479 = vweird.f32 %v7883
    %v10480 = vadd.s32 %v10476, 3
    %v10481 = vand.u32 %v10480, 3
    %vm10482 = vcmp.lt.s32.totalorder %v10481, 2
    %vm10483 = vcmp.eq.s32.totalorder %v10481, 0
    %v10484 = vxor.u32 %v10478, 2147483648
    %v10485 = vsel %vm10483, %v10477, %v10484
    %vm10486 = vcmp.eq.s32.totalorder %v10481, 2
    %v10487 = vxor.u32 %v10477, 2147483648
    %v10488 = vsel %vm10486, %v10487, %v10478
    %v10489 = vsel %vm10482, %v10485, %v10488
    %v10490 = vsel %vm10479, nan, %v10489
    %v10491 = vand.u32 2147483647, %v7884
    %vm10492 = vcmp.le.f32.partialorder %v10491, 0.7853982
    %vm10493 = vcmp.lt.s32.totalorder %v7884, 0
    %v10494 = vand.u32 %v7884, 2139095040
    %v10495 = vshrl.u32 %v10494, 23
    %v10496 = vsub.s32 %v10495, 127
    %v10497 = vand.u32 2147483647, %v7884
    %v10498 = vand.u32 %v10497, 8388607
    %v10499 = vor.u32 %v10498, 8388608
    %v10500 = vsub.s32 0, %v10499
    %v10501 = vadd.s32 %v10496, 1
    %vm10502 = vcmp.gt.s32.totalorder %v10501, 0
    %v10503 = vsel %vm10502, %v10501, 0
    %v10504 = vshrl.u32 %v10503, 5
    %v10505 = vand.u32 %v10503, 31
    %v10506 = vsub.s32 32, %v10505
    %v10507 = vshrl.u32 683565275, %v10506
    %v10508 = vshll.u32 683565275, %v10505
    %v10509 = vshrl.u32 2475754826, %v10506
    %v10510 = vor.u32 %v10508, %v10509
    %v10511 = vshll.u32 2475754826, %v10505
    %v10512 = vshrl.u32 2131351028, %v10506
    %v10513 = vor.u32 %v10511, %v10512
    %v10514 = vshll.u32 2131351028, %v10505
    %v10515 = vshrl.u32 2102212464, %v10506
    %v10516 = vor.u32 %v10514, %v10515
    %v10517 = vshll.u32 2102212464, %v10505
    %v10518 = vshrl.u32 920167782, %v10506
    %v10519 = vor.u32 %v10517, %v10518
    %v10520 = vshll.u32 920167782, %v10505
    %v10521 = vshrl.u32 1326507024, %v10506
    %v10522 = vor.u32 %v10520, %v10521
    %vm10523 = vcmp.lt.s32.totalorder %v10504, 1
    %vm10524 = vcmp.lt.s32.totalorder %v10504, 2
    %vm10525 = vcmp.lt.s32.totalorder %v10504, 3
    %vm10526 = vcmp.lt.s32.totalorder %v10504, 4
    %v10527 = vsel %vm10523, %v10507, %v10510
    %v10528 = vsel %vm10526, %v10516, 2102212464
    %v10529 = vsel %vm10525, %v10513, %v10528
    %v10530 = vsel %vm10524, %v10527, %v10529
    %v10531 = vsel %vm10523, %v10510, %v10513
    %v10532 = vsel %vm10526, %v10519, 920167782
    %v10533 = vsel %vm10525, %v10516, %v10532
    %v10534 = vsel %vm10524, %v10531, %v10533
    %v10535 = vsel %vm10523, %v10513, %v10516
    %v10536 = vsel %vm10526, %v10522, 1326507024
    %v10537 = vsel %vm10525, %v10519, %v10536
    %v10538 = vsel %vm10524, %v10535, %v10537
    %v10539 = vshll.u32 %v10499, 8
    %v10540 = vmul.u32.u64.compose %v10539, %v10538
    %v10541 = vextract.low.u32 %v10540
    %v10542 = vextract.high.u32 %v10540
    %v10543 = vmul.u32.u64.compose %v10539, %v10534
    %v10544 = vextract.low.u32 %v10543
    %v10545 = vextract.high.u32 %v10543
    %v10546 = vmul.u32 %v10539, %v10530
    %v10547 = vadd.s32 %v10542, %v10544
    %vm10548 = vc.u32 %v10542, %v10544
    %v10549 = vadd.s32 %v10545, 1
    %v10550 = vsel %vm10548, %v10549, %v10545
    %v10551 = vadd.s32 %v10546, %v10550
    %v10552 = vadd.s32 %v10551, 536870912
    %v10553 = vshrl.u32 %v10552, 30
    %v10554 = vshll.u32 %v10553, 30
    %v10555 = vsub.s32 %v10551, %v10554
    %vm10556 = vcmp.lt.s32.totalorder %v10555, 0
    %v10557 = vsub.s32 0, %v10555
    %v10558 = vsel %vm10556, %v10557, %v10555
    %v10559 = vclz %v10558
    %v10560 = vsub.s32 %v10559, 2
    %vm10561 = vcmp.gt.s32.totalorder 0, %v10560
    %v10562 = vsel %vm10561, 0, %v10560
    %v10563 = vsub.s32 32, %v10562
    %v10564 = vshll.u32 %v10555, %v10562
    %v10565 = vshrl.u32 %v10547, %v10563
    %v10566 = vor.u32 %v10564, %v10565
    %v10567 = vsub.s32 4294967266, %v10562
    %v10568 = vadd.s32 %v10567, 127
    %v10569 = vshll.u32 %v10568, 23
    %v10570 = vor.u32 4788187, %v10569
    %v10571 = vand.u32 2147483647, %v10570
    %v10573 = vcvt.s32.f32 %v10566
    %v10574 = vmul.f32 %v10573, %v10571
    %v10575 = vxor.u32 %v10574, 2147483648
    %v10576 = vsel %vm10493, %v10575, %v10574
    %v10577 = vsub.s32 4, %v10553
    %v10578 = vsel %vm10493, %v10577, %v10553
    %v10579 = vsel %vm10492, %v7884, %v10576
    %v10580 = vsel %vm10492, 0, %v10578
    %v10581 = vcosq.f32.pop %v10579
    %v10582 = vsinq.f32.pop %v10579
    %vm10583 = vweird.f32 %v7884
    %v10584 = vadd.s32 %v10580, 3
    %v10585 = vand.u32 %v10584, 3
    %vm10586 = vcmp.lt.s32.totalorder %v10585, 2
    %vm10587 = vcmp.eq.s32.totalorder %v10585, 0
    %v10588 = vxor.u32 %v10582, 2147483648
    %v10589 = vsel %vm10587, %v10581, %v10588
    %vm10590 = vcmp.eq.s32.totalorder %v10585, 2
    %v10591 = vxor.u32 %v10581, 2147483648
    %v10592 = vsel %vm10590, %v10591, %v10582
    %v10593 = vsel %vm10586, %v10589, %v10592
    %v10594 = vsel %vm10583, nan, %v10593
    %v10595 = vand.u32 2147483647, %v7885
    %vm10596 = vcmp.le.f32.partialorder %v10595, 0.7853982
    %vm10597 = vcmp.lt.s32.totalorder %v7885, 0
    %v10598 = vand.u32 %v7885, 2139095040
    %v10599 = vshrl.u32 %v10598, 23
    %v10600 = vsub.s32 %v10599, 127
    %v10601 = vand.u32 2147483647, %v7885
    %v10602 = vand.u32 %v10601, 8388607
    %v10603 = vor.u32 %v10602, 8388608
    %v10604 = vsub.s32 0, %v10603
    %v10605 = vadd.s32 %v10600, 1
    %vm10606 = vcmp.gt.s32.totalorder %v10605, 0
    %v10607 = vsel %vm10606, %v10605, 0
    %v10608 = vshrl.u32 %v10607, 5
    %v10609 = vand.u32 %v10607, 31
    %v10610 = vsub.s32 32, %v10609
    %v10611 = vshrl.u32 683565275, %v10610
    %v10612 = vshll.u32 683565275, %v10609
    %v10613 = vshrl.u32 2475754826, %v10610
    %v10614 = vor.u32 %v10612, %v10613
    %v10615 = vshll.u32 2475754826, %v10609
    %v10616 = vshrl.u32 2131351028, %v10610
    %v10617 = vor.u32 %v10615, %v10616
    %v10618 = vshll.u32 2131351028, %v10609
    %v10619 = vshrl.u32 2102212464, %v10610
    %v10620 = vor.u32 %v10618, %v10619
    %v10621 = vshll.u32 2102212464, %v10609
    %v10622 = vshrl.u32 920167782, %v10610
    %v10623 = vor.u32 %v10621, %v10622
    %v10624 = vshll.u32 920167782, %v10609
    %v10625 = vshrl.u32 1326507024, %v10610
    %v10626 = vor.u32 %v10624, %v10625
    %vm10627 = vcmp.lt.s32.totalorder %v10608, 1
    %vm10628 = vcmp.lt.s32.totalorder %v10608, 2
    %vm10629 = vcmp.lt.s32.totalorder %v10608, 3
    %vm10630 = vcmp.lt.s32.totalorder %v10608, 4
    %v10631 = vsel %vm10627, %v10611, %v10614
    %v10632 = vsel %vm10630, %v10620, 2102212464
    %v10633 = vsel %vm10629, %v10617, %v10632
    %v10634 = vsel %vm10628, %v10631, %v10633
    %v10635 = vsel %vm10627, %v10614, %v10617
    %v10636 = vsel %vm10630, %v10623, 920167782
    %v10637 = vsel %vm10629, %v10620, %v10636
    %v10638 = vsel %vm10628, %v10635, %v10637
    %v10639 = vsel %vm10627, %v10617, %v10620
    %v10640 = vsel %vm10630, %v10626, 1326507024
    %v10641 = vsel %vm10629, %v10623, %v10640
    %v10642 = vsel %vm10628, %v10639, %v10641
    %v10643 = vshll.u32 %v10603, 8
    %v10644 = vmul.u32.u64.compose %v10643, %v10642
    %v10645 = vextract.low.u32 %v10644
    %v10646 = vextract.high.u32 %v10644
    %v10647 = vmul.u32.u64.compose %v10643, %v10638
    %v10648 = vextract.low.u32 %v10647
    %v10649 = vextract.high.u32 %v10647
    %v10650 = vmul.u32 %v10643, %v10634
    %v10651 = vadd.s32 %v10646, %v10648
    %vm10652 = vc.u32 %v10646, %v10648
    %v10653 = vadd.s32 %v10649, 1
    %v10654 = vsel %vm10652, %v10653, %v10649
    %v10655 = vadd.s32 %v10650, %v10654
    %v10656 = vadd.s32 %v10655, 536870912
    %v10657 = vshrl.u32 %v10656, 30
    %v10658 = vshll.u32 %v10657, 30
    %v10659 = vsub.s32 %v10655, %v10658
    %vm10660 = vcmp.lt.s32.totalorder %v10659, 0
    %v10661 = vsub.s32 0, %v10659
    %v10662 = vsel %vm10660, %v10661, %v10659
    %v10663 = vclz %v10662
    %v10664 = vsub.s32 %v10663, 2
    %vm10665 = vcmp.gt.s32.totalorder 0, %v10664
    %v10666 = vsel %vm10665, 0, %v10664
    %v10667 = vsub.s32 32, %v10666
    %v10668 = vshll.u32 %v10659, %v10666
    %v10669 = vshrl.u32 %v10651, %v10667
    %v10670 = vor.u32 %v10668, %v10669
    %v10671 = vsub.s32 4294967266, %v10666
    %v10672 = vadd.s32 %v10671, 127
    %v10673 = vshll.u32 %v10672, 23
    %v10674 = vor.u32 4788187, %v10673
    %v10675 = vand.u32 2147483647, %v10674
    %v10677 = vcvt.s32.f32 %v10670
    %v10678 = vmul.f32 %v10677, %v10675
    %v10679 = vxor.u32 %v10678, 2147483648
    %v10680 = vsel %vm10597, %v10679, %v10678
    %v10681 = vsub.s32 4, %v10657
    %v10682 = vsel %vm10597, %v10681, %v10657
    %v10683 = vsel %vm10596, %v7885, %v10680
    %v10684 = vsel %vm10596, 0, %v10682
    %v10685 = vcosq.f32.pop %v10683
    %v10686 = vsinq.f32.pop %v10683
    %vm10687 = vweird.f32 %v7885
    %v10688 = vadd.s32 %v10684, 3
    %v10689 = vand.u32 %v10688, 3
    %vm10690 = vcmp.lt.s32.totalorder %v10689, 2
    %vm10691 = vcmp.eq.s32.totalorder %v10689, 0
    %v10692 = vxor.u32 %v10686, 2147483648
    %v10693 = vsel %vm10691, %v10685, %v10692
    %vm10694 = vcmp.eq.s32.totalorder %v10689, 2
    %v10695 = vxor.u32 %v10685, 2147483648
    %v10696 = vsel %vm10694, %v10695, %v10686
    %v10697 = vsel %vm10690, %v10693, %v10696
    %v10698 = vsel %vm10687, nan, %v10697
    %v10699 = vand.u32 2147483647, %v7886
    %vm10700 = vcmp.le.f32.partialorder %v10699, 0.7853982
    %vm10701 = vcmp.lt.s32.totalorder %v7886, 0
    %v10702 = vand.u32 %v7886, 2139095040
    %v10703 = vshrl.u32 %v10702, 23
    %v10704 = vsub.s32 %v10703, 127
    %v10705 = vand.u32 2147483647, %v7886
    %v10706 = vand.u32 %v10705, 8388607
    %v10707 = vor.u32 %v10706, 8388608
    %v10708 = vsub.s32 0, %v10707
    %v10709 = vadd.s32 %v10704, 1
    %vm10710 = vcmp.gt.s32.totalorder %v10709, 0
    %v10711 = vsel %vm10710, %v10709, 0
    %v10712 = vshrl.u32 %v10711, 5
    %v10713 = vand.u32 %v10711, 31
    %v10714 = vsub.s32 32, %v10713
    %v10715 = vshrl.u32 683565275, %v10714
    %v10716 = vshll.u32 683565275, %v10713
    %v10717 = vshrl.u32 2475754826, %v10714
    %v10718 = vor.u32 %v10716, %v10717
    %v10719 = vshll.u32 2475754826, %v10713
    %v10720 = vshrl.u32 2131351028, %v10714
    %v10721 = vor.u32 %v10719, %v10720
    %v10722 = vshll.u32 2131351028, %v10713
    %v10723 = vshrl.u32 2102212464, %v10714
    %v10724 = vor.u32 %v10722, %v10723
    %v10725 = vshll.u32 2102212464, %v10713
    %v10726 = vshrl.u32 920167782, %v10714
    %v10727 = vor.u32 %v10725, %v10726
    %v10728 = vshll.u32 920167782, %v10713
    %v10729 = vshrl.u32 1326507024, %v10714
    %v10730 = vor.u32 %v10728, %v10729
    %vm10731 = vcmp.lt.s32.totalorder %v10712, 1
    %vm10732 = vcmp.lt.s32.totalorder %v10712, 2
    %vm10733 = vcmp.lt.s32.totalorder %v10712, 3
    %vm10734 = vcmp.lt.s32.totalorder %v10712, 4
    %v10735 = vsel %vm10731, %v10715, %v10718
    %v10736 = vsel %vm10734, %v10724, 2102212464
    %v10737 = vsel %vm10733, %v10721, %v10736
    %v10738 = vsel %vm10732, %v10735, %v10737
    %v10739 = vsel %vm10731, %v10718, %v10721
    %v10740 = vsel %vm10734, %v10727, 920167782
    %v10741 = vsel %vm10733, %v10724, %v10740
    %v10742 = vsel %vm10732, %v10739, %v10741
    %v10743 = vsel %vm10731, %v10721, %v10724
    %v10744 = vsel %vm10734, %v10730, 1326507024
    %v10745 = vsel %vm10733, %v10727, %v10744
    %v10746 = vsel %vm10732, %v10743, %v10745
    %v10747 = vshll.u32 %v10707, 8
    %v10748 = vmul.u32.u64.compose %v10747, %v10746
    %v10749 = vextract.low.u32 %v10748
    %v10750 = vextract.high.u32 %v10748
    %v10751 = vmul.u32.u64.compose %v10747, %v10742
    %v10752 = vextract.low.u32 %v10751
    %v10753 = vextract.high.u32 %v10751
    %v10754 = vmul.u32 %v10747, %v10738
    %v10755 = vadd.s32 %v10750, %v10752
    %vm10756 = vc.u32 %v10750, %v10752
    %v10757 = vadd.s32 %v10753, 1
    %v10758 = vsel %vm10756, %v10757, %v10753
    %v10759 = vadd.s32 %v10754, %v10758
    %v10760 = vadd.s32 %v10759, 536870912
    %v10761 = vshrl.u32 %v10760, 30
    %v10762 = vshll.u32 %v10761, 30
    %v10763 = vsub.s32 %v10759, %v10762
    %vm10764 = vcmp.lt.s32.totalorder %v10763, 0
    %v10765 = vsub.s32 0, %v10763
    %v10766 = vsel %vm10764, %v10765, %v10763
    %v10767 = vclz %v10766
    %v10768 = vsub.s32 %v10767, 2
    %vm10769 = vcmp.gt.s32.totalorder 0, %v10768
    %v10770 = vsel %vm10769, 0, %v10768
    %v10771 = vsub.s32 32, %v10770
    %v10772 = vshll.u32 %v10763, %v10770
    %v10773 = vshrl.u32 %v10755, %v10771
    %v10774 = vor.u32 %v10772, %v10773
    %v10775 = vsub.s32 4294967266, %v10770
    %v10776 = vadd.s32 %v10775, 127
    %v10777 = vshll.u32 %v10776, 23
    %v10778 = vor.u32 4788187, %v10777
    %v10779 = vand.u32 2147483647, %v10778
    %v10781 = vcvt.s32.f32 %v10774
    %v10782 = vmul.f32 %v10781, %v10779
    %v10783 = vxor.u32 %v10782, 2147483648
    %v10784 = vsel %vm10701, %v10783, %v10782
    %v10785 = vsub.s32 4, %v10761
    %v10786 = vsel %vm10701, %v10785, %v10761
    %v10787 = vsel %vm10700, %v7886, %v10784
    %v10788 = vsel %vm10700, 0, %v10786
    %v10789 = vcosq.f32.pop %v10787
    %v10790 = vsinq.f32.pop %v10787
    %vm10791 = vweird.f32 %v7886
    %v10792 = vadd.s32 %v10788, 3
    %v10793 = vand.u32 %v10792, 3
    %vm10794 = vcmp.lt.s32.totalorder %v10793, 2
    %vm10795 = vcmp.eq.s32.totalorder %v10793, 0
    %v10796 = vxor.u32 %v10790, 2147483648
    %v10797 = vsel %vm10795, %v10789, %v10796
    %vm10798 = vcmp.eq.s32.totalorder %v10793, 2
    %v10799 = vxor.u32 %v10789, 2147483648
    %v10800 = vsel %vm10798, %v10799, %v10790
    %v10801 = vsel %vm10794, %v10797, %v10800
    %v10802 = vsel %vm10791, nan, %v10801
    %v10803 = vand.u32 2147483647, %v7887
    %vm10804 = vcmp.le.f32.partialorder %v10803, 0.7853982
    %vm10805 = vcmp.lt.s32.totalorder %v7887, 0
    %v10806 = vand.u32 %v7887, 2139095040
    %v10807 = vshrl.u32 %v10806, 23
    %v10808 = vsub.s32 %v10807, 127
    %v10809 = vand.u32 2147483647, %v7887
    %v10810 = vand.u32 %v10809, 8388607
    %v10811 = vor.u32 %v10810, 8388608
    %v10812 = vsub.s32 0, %v10811
    %v10813 = vadd.s32 %v10808, 1
    %vm10814 = vcmp.gt.s32.totalorder %v10813, 0
    %v10815 = vsel %vm10814, %v10813, 0
    %v10816 = vshrl.u32 %v10815, 5
    %v10817 = vand.u32 %v10815, 31
    %v10818 = vsub.s32 32, %v10817
    %v10819 = vshrl.u32 683565275, %v10818
    %v10820 = vshll.u32 683565275, %v10817
    %v10821 = vshrl.u32 2475754826, %v10818
    %v10822 = vor.u32 %v10820, %v10821
    %v10823 = vshll.u32 2475754826, %v10817
    %v10824 = vshrl.u32 2131351028, %v10818
    %v10825 = vor.u32 %v10823, %v10824
    %v10826 = vshll.u32 2131351028, %v10817
    %v10827 = vshrl.u32 2102212464, %v10818
    %v10828 = vor.u32 %v10826, %v10827
    %v10829 = vshll.u32 2102212464, %v10817
    %v10830 = vshrl.u32 920167782, %v10818
    %v10831 = vor.u32 %v10829, %v10830
    %v10832 = vshll.u32 920167782, %v10817
    %v10833 = vshrl.u32 1326507024, %v10818
    %v10834 = vor.u32 %v10832, %v10833
    %vm10835 = vcmp.lt.s32.totalorder %v10816, 1
    %vm10836 = vcmp.lt.s32.totalorder %v10816, 2
    %vm10837 = vcmp.lt.s32.totalorder %v10816, 3
    %vm10838 = vcmp.lt.s32.totalorder %v10816, 4
    %v10839 = vsel %vm10835, %v10819, %v10822
    %v10840 = vsel %vm10838, %v10828, 2102212464
    %v10841 = vsel %vm10837, %v10825, %v10840
    %v10842 = vsel %vm10836, %v10839, %v10841
    %v10843 = vsel %vm10835, %v10822, %v10825
    %v10844 = vsel %vm10838, %v10831, 920167782
    %v10845 = vsel %vm10837, %v10828, %v10844
    %v10846 = vsel %vm10836, %v10843, %v10845
    %v10847 = vsel %vm10835, %v10825, %v10828
    %v10848 = vsel %vm10838, %v10834, 1326507024
    %v10849 = vsel %vm10837, %v10831, %v10848
    %v10850 = vsel %vm10836, %v10847, %v10849
    %v10851 = vshll.u32 %v10811, 8
    %v10852 = vmul.u32.u64.compose %v10851, %v10850
    %v10853 = vextract.low.u32 %v10852
    %v10854 = vextract.high.u32 %v10852
    %v10855 = vmul.u32.u64.compose %v10851, %v10846
    %v10856 = vextract.low.u32 %v10855
    %v10857 = vextract.high.u32 %v10855
    %v10858 = vmul.u32 %v10851, %v10842
    %v10859 = vadd.s32 %v10854, %v10856
    %vm10860 = vc.u32 %v10854, %v10856
    %v10861 = vadd.s32 %v10857, 1
    %v10862 = vsel %vm10860, %v10861, %v10857
    %v10863 = vadd.s32 %v10858, %v10862
    %v10864 = vadd.s32 %v10863, 536870912
    %v10865 = vshrl.u32 %v10864, 30
    %v10866 = vshll.u32 %v10865, 30
    %v10867 = vsub.s32 %v10863, %v10866
    %vm10868 = vcmp.lt.s32.totalorder %v10867, 0
    %v10869 = vsub.s32 0, %v10867
    %v10870 = vsel %vm10868, %v10869, %v10867
    %v10871 = vclz %v10870
    %v10872 = vsub.s32 %v10871, 2
    %vm10873 = vcmp.gt.s32.totalorder 0, %v10872
    %v10874 = vsel %vm10873, 0, %v10872
    %v10875 = vsub.s32 32, %v10874
    %v10876 = vshll.u32 %v10867, %v10874
    %v10877 = vshrl.u32 %v10859, %v10875
    %v10878 = vor.u32 %v10876, %v10877
    %v10879 = vsub.s32 4294967266, %v10874
    %v10880 = vadd.s32 %v10879, 127
    %v10881 = vshll.u32 %v10880, 23
    %v10882 = vor.u32 4788187, %v10881
    %v10883 = vand.u32 2147483647, %v10882
    %v10885 = vcvt.s32.f32 %v10878
    %v10886 = vmul.f32 %v10885, %v10883
    %v10887 = vxor.u32 %v10886, 2147483648
    %v10888 = vsel %vm10805, %v10887, %v10886
    %v10889 = vsub.s32 4, %v10865
    %v10890 = vsel %vm10805, %v10889, %v10865
    %v10891 = vsel %vm10804, %v7887, %v10888
    %v10892 = vsel %vm10804, 0, %v10890
    %v10893 = vcosq.f32.pop %v10891
    %v10894 = vsinq.f32.pop %v10891
    %vm10895 = vweird.f32 %v7887
    %v10896 = vadd.s32 %v10892, 3
    %v10897 = vand.u32 %v10896, 3
    %vm10898 = vcmp.lt.s32.totalorder %v10897, 2
    %vm10899 = vcmp.eq.s32.totalorder %v10897, 0
    %v10900 = vxor.u32 %v10894, 2147483648
    %v10901 = vsel %vm10899, %v10893, %v10900
    %vm10902 = vcmp.eq.s32.totalorder %v10897, 2
    %v10903 = vxor.u32 %v10893, 2147483648
    %v10904 = vsel %vm10902, %v10903, %v10894
    %v10905 = vsel %vm10898, %v10901, %v10904
    %v10906 = vsel %vm10895, nan, %v10905
    %v10907 = vand.u32 2147483647, %v7888
    %vm10908 = vcmp.le.f32.partialorder %v10907, 0.7853982
    %vm10909 = vcmp.lt.s32.totalorder %v7888, 0
    %v10910 = vand.u32 %v7888, 2139095040
    %v10911 = vshrl.u32 %v10910, 23
    %v10912 = vsub.s32 %v10911, 127
    %v10913 = vand.u32 2147483647, %v7888
    %v10914 = vand.u32 %v10913, 8388607
    %v10915 = vor.u32 %v10914, 8388608
    %v10916 = vsub.s32 0, %v10915
    %v10917 = vadd.s32 %v10912, 1
    %vm10918 = vcmp.gt.s32.totalorder %v10917, 0
    %v10919 = vsel %vm10918, %v10917, 0
    %v10920 = vshrl.u32 %v10919, 5
    %v10921 = vand.u32 %v10919, 31
    %v10922 = vsub.s32 32, %v10921
    %v10923 = vshrl.u32 683565275, %v10922
    %v10924 = vshll.u32 683565275, %v10921
    %v10925 = vshrl.u32 2475754826, %v10922
    %v10926 = vor.u32 %v10924, %v10925
    %v10927 = vshll.u32 2475754826, %v10921
    %v10928 = vshrl.u32 2131351028, %v10922
    %v10929 = vor.u32 %v10927, %v10928
    %v10930 = vshll.u32 2131351028, %v10921
    %v10931 = vshrl.u32 2102212464, %v10922
    %v10932 = vor.u32 %v10930, %v10931
    %v10933 = vshll.u32 2102212464, %v10921
    %v10934 = vshrl.u32 920167782, %v10922
    %v10935 = vor.u32 %v10933, %v10934
    %v10936 = vshll.u32 920167782, %v10921
    %v10937 = vshrl.u32 1326507024, %v10922
    %v10938 = vor.u32 %v10936, %v10937
    %vm10939 = vcmp.lt.s32.totalorder %v10920, 1
    %vm10940 = vcmp.lt.s32.totalorder %v10920, 2
    %vm10941 = vcmp.lt.s32.totalorder %v10920, 3
    %vm10942 = vcmp.lt.s32.totalorder %v10920, 4
    %v10943 = vsel %vm10939, %v10923, %v10926
    %v10944 = vsel %vm10942, %v10932, 2102212464
    %v10945 = vsel %vm10941, %v10929, %v10944
    %v10946 = vsel %vm10940, %v10943, %v10945
    %v10947 = vsel %vm10939, %v10926, %v10929
    %v10948 = vsel %vm10942, %v10935, 920167782
    %v10949 = vsel %vm10941, %v10932, %v10948
    %v10950 = vsel %vm10940, %v10947, %v10949
    %v10951 = vsel %vm10939, %v10929, %v10932
    %v10952 = vsel %vm10942, %v10938, 1326507024
    %v10953 = vsel %vm10941, %v10935, %v10952
    %v10954 = vsel %vm10940, %v10951, %v10953
    %v10955 = vshll.u32 %v10915, 8
    %v10956 = vmul.u32.u64.compose %v10955, %v10954
    %v10957 = vextract.low.u32 %v10956
    %v10958 = vextract.high.u32 %v10956
    %v10959 = vmul.u32.u64.compose %v10955, %v10950
    %v10960 = vextract.low.u32 %v10959
    %v10961 = vextract.high.u32 %v10959
    %v10962 = vmul.u32 %v10955, %v10946
    %v10963 = vadd.s32 %v10958, %v10960
    %vm10964 = vc.u32 %v10958, %v10960
    %v10965 = vadd.s32 %v10961, 1
    %v10966 = vsel %vm10964, %v10965, %v10961
    %v10967 = vadd.s32 %v10962, %v10966
    %v10968 = vadd.s32 %v10967, 536870912
    %v10969 = vshrl.u32 %v10968, 30
    %v10970 = vshll.u32 %v10969, 30
    %v10971 = vsub.s32 %v10967, %v10970
    %vm10972 = vcmp.lt.s32.totalorder %v10971, 0
    %v10973 = vsub.s32 0, %v10971
    %v10974 = vsel %vm10972, %v10973, %v10971
    %v10975 = vclz %v10974
    %v10976 = vsub.s32 %v10975, 2
    %vm10977 = vcmp.gt.s32.totalorder 0, %v10976
    %v10978 = vsel %vm10977, 0, %v10976
    %v10979 = vsub.s32 32, %v10978
    %v10980 = vshll.u32 %v10971, %v10978
    %v10981 = vshrl.u32 %v10963, %v10979
    %v10982 = vor.u32 %v10980, %v10981
    %v10983 = vsub.s32 4294967266, %v10978
    %v10984 = vadd.s32 %v10983, 127
    %v10985 = vshll.u32 %v10984, 23
    %v10986 = vor.u32 4788187, %v10985
    %v10987 = vand.u32 2147483647, %v10986
    %v10989 = vcvt.s32.f32 %v10982
    %v10990 = vmul.f32 %v10989, %v10987
    %v10991 = vxor.u32 %v10990, 2147483648
    %v10992 = vsel %vm10909, %v10991, %v10990
    %v10993 = vsub.s32 4, %v10969
    %v10994 = vsel %vm10909, %v10993, %v10969
    %v10995 = vsel %vm10908, %v7888, %v10992
    %v10996 = vsel %vm10908, 0, %v10994
    %v10997 = vcosq.f32.pop %v10995
    %v10998 = vsinq.f32.pop %v10995
    %vm10999 = vweird.f32 %v7888
    %v11000 = vadd.s32 %v10996, 3
    %v11001 = vand.u32 %v11000, 3
    %vm11002 = vcmp.lt.s32.totalorder %v11001, 2
    %vm11003 = vcmp.eq.s32.totalorder %v11001, 0
    %v11004 = vxor.u32 %v10998, 2147483648
    %v11005 = vsel %vm11003, %v10997, %v11004
    %vm11006 = vcmp.eq.s32.totalorder %v11001, 2
    %v11007 = vxor.u32 %v10997, 2147483648
    %v11008 = vsel %vm11006, %v11007, %v10998
    %v11009 = vsel %vm11002, %v11005, %v11008
    %v11010 = vsel %vm10999, nan, %v11009
    %v11011 = vand.u32 2147483647, %v7889
    %vm11012 = vcmp.le.f32.partialorder %v11011, 0.7853982
    %vm11013 = vcmp.lt.s32.totalorder %v7889, 0
    %v11014 = vand.u32 %v7889, 2139095040
    %v11015 = vshrl.u32 %v11014, 23
    %v11016 = vsub.s32 %v11015, 127
    %v11017 = vand.u32 2147483647, %v7889
    %v11018 = vand.u32 %v11017, 8388607
    %v11019 = vor.u32 %v11018, 8388608
    %v11020 = vsub.s32 0, %v11019
    %v11021 = vadd.s32 %v11016, 1
    %vm11022 = vcmp.gt.s32.totalorder %v11021, 0
    %v11023 = vsel %vm11022, %v11021, 0
    %v11024 = vshrl.u32 %v11023, 5
    %v11025 = vand.u32 %v11023, 31
    %v11026 = vsub.s32 32, %v11025
    %v11027 = vshrl.u32 683565275, %v11026
    %v11028 = vshll.u32 683565275, %v11025
    %v11029 = vshrl.u32 2475754826, %v11026
    %v11030 = vor.u32 %v11028, %v11029
    %v11031 = vshll.u32 2475754826, %v11025
    %v11032 = vshrl.u32 2131351028, %v11026
    %v11033 = vor.u32 %v11031, %v11032
    %v11034 = vshll.u32 2131351028, %v11025
    %v11035 = vshrl.u32 2102212464, %v11026
    %v11036 = vor.u32 %v11034, %v11035
    %v11037 = vshll.u32 2102212464, %v11025
    %v11038 = vshrl.u32 920167782, %v11026
    %v11039 = vor.u32 %v11037, %v11038
    %v11040 = vshll.u32 920167782, %v11025
    %v11041 = vshrl.u32 1326507024, %v11026
    %v11042 = vor.u32 %v11040, %v11041
    %vm11043 = vcmp.lt.s32.totalorder %v11024, 1
    %vm11044 = vcmp.lt.s32.totalorder %v11024, 2
    %vm11045 = vcmp.lt.s32.totalorder %v11024, 3
    %vm11046 = vcmp.lt.s32.totalorder %v11024, 4
    %v11047 = vsel %vm11043, %v11027, %v11030
    %v11048 = vsel %vm11046, %v11036, 2102212464
    %v11049 = vsel %vm11045, %v11033, %v11048
    %v11050 = vsel %vm11044, %v11047, %v11049
    %v11051 = vsel %vm11043, %v11030, %v11033
    %v11052 = vsel %vm11046, %v11039, 920167782
    %v11053 = vsel %vm11045, %v11036, %v11052
    %v11054 = vsel %vm11044, %v11051, %v11053
    %v11055 = vsel %vm11043, %v11033, %v11036
    %v11056 = vsel %vm11046, %v11042, 1326507024
    %v11057 = vsel %vm11045, %v11039, %v11056
    %v11058 = vsel %vm11044, %v11055, %v11057
    %v11059 = vshll.u32 %v11019, 8
    %v11060 = vmul.u32.u64.compose %v11059, %v11058
    %v11061 = vextract.low.u32 %v11060
    %v11062 = vextract.high.u32 %v11060
    %v11063 = vmul.u32.u64.compose %v11059, %v11054
    %v11064 = vextract.low.u32 %v11063
    %v11065 = vextract.high.u32 %v11063
    %v11066 = vmul.u32 %v11059, %v11050
    %v11067 = vadd.s32 %v11062, %v11064
    %vm11068 = vc.u32 %v11062, %v11064
    %v11069 = vadd.s32 %v11065, 1
    %v11070 = vsel %vm11068, %v11069, %v11065
    %v11071 = vadd.s32 %v11066, %v11070
    %v11072 = vadd.s32 %v11071, 536870912
    %v11073 = vshrl.u32 %v11072, 30
    %v11074 = vshll.u32 %v11073, 30
    %v11075 = vsub.s32 %v11071, %v11074
    %vm11076 = vcmp.lt.s32.totalorder %v11075, 0
    %v11077 = vsub.s32 0, %v11075
    %v11078 = vsel %vm11076, %v11077, %v11075
    %v11079 = vclz %v11078
    %v11080 = vsub.s32 %v11079, 2
    %vm11081 = vcmp.gt.s32.totalorder 0, %v11080
    %v11082 = vsel %vm11081, 0, %v11080
    %v11083 = vsub.s32 32, %v11082
    %v11084 = vshll.u32 %v11075, %v11082
    %v11085 = vshrl.u32 %v11067, %v11083
    %v11086 = vor.u32 %v11084, %v11085
    %v11087 = vsub.s32 4294967266, %v11082
    %v11088 = vadd.s32 %v11087, 127
    %v11089 = vshll.u32 %v11088, 23
    %v11090 = vor.u32 4788187, %v11089
    %v11091 = vand.u32 2147483647, %v11090
    %v11093 = vcvt.s32.f32 %v11086
    %v11094 = vmul.f32 %v11093, %v11091
    %v11095 = vxor.u32 %v11094, 2147483648
    %v11096 = vsel %vm11013, %v11095, %v11094
    %v11097 = vsub.s32 4, %v11073
    %v11098 = vsel %vm11013, %v11097, %v11073
    %v11099 = vsel %vm11012, %v7889, %v11096
    %v11100 = vsel %vm11012, 0, %v11098
    %v11101 = vcosq.f32.pop %v11099
    %v11102 = vsinq.f32.pop %v11099
    %vm11103 = vweird.f32 %v7889
    %v11104 = vadd.s32 %v11100, 3
    %v11105 = vand.u32 %v11104, 3
    %vm11106 = vcmp.lt.s32.totalorder %v11105, 2
    %vm11107 = vcmp.eq.s32.totalorder %v11105, 0
    %v11108 = vxor.u32 %v11102, 2147483648
    %v11109 = vsel %vm11107, %v11101, %v11108
    %vm11110 = vcmp.eq.s32.totalorder %v11105, 2
    %v11111 = vxor.u32 %v11101, 2147483648
    %v11112 = vsel %vm11110, %v11111, %v11102
    %v11113 = vsel %vm11106, %v11109, %v11112
    %v11114 = vsel %vm11103, nan, %v11113
    %v11115 = vand.u32 2147483647, %v7890
    %vm11116 = vcmp.le.f32.partialorder %v11115, 0.7853982
    %vm11117 = vcmp.lt.s32.totalorder %v7890, 0
    %v11118 = vand.u32 %v7890, 2139095040
    %v11119 = vshrl.u32 %v11118, 23
    %v11120 = vsub.s32 %v11119, 127
    %v11121 = vand.u32 2147483647, %v7890
    %v11122 = vand.u32 %v11121, 8388607
    %v11123 = vor.u32 %v11122, 8388608
    %v11124 = vsub.s32 0, %v11123
    %v11125 = vadd.s32 %v11120, 1
    %vm11126 = vcmp.gt.s32.totalorder %v11125, 0
    %v11127 = vsel %vm11126, %v11125, 0
    %v11128 = vshrl.u32 %v11127, 5
    %v11129 = vand.u32 %v11127, 31
    %v11130 = vsub.s32 32, %v11129
    %v11131 = vshrl.u32 683565275, %v11130
    %v11132 = vshll.u32 683565275, %v11129
    %v11133 = vshrl.u32 2475754826, %v11130
    %v11134 = vor.u32 %v11132, %v11133
    %v11135 = vshll.u32 2475754826, %v11129
    %v11136 = vshrl.u32 2131351028, %v11130
    %v11137 = vor.u32 %v11135, %v11136
    %v11138 = vshll.u32 2131351028, %v11129
    %v11139 = vshrl.u32 2102212464, %v11130
    %v11140 = vor.u32 %v11138, %v11139
    %v11141 = vshll.u32 2102212464, %v11129
    %v11142 = vshrl.u32 920167782, %v11130
    %v11143 = vor.u32 %v11141, %v11142
    %v11144 = vshll.u32 920167782, %v11129
    %v11145 = vshrl.u32 1326507024, %v11130
    %v11146 = vor.u32 %v11144, %v11145
    %vm11147 = vcmp.lt.s32.totalorder %v11128, 1
    %vm11148 = vcmp.lt.s32.totalorder %v11128, 2
    %vm11149 = vcmp.lt.s32.totalorder %v11128, 3
    %vm11150 = vcmp.lt.s32.totalorder %v11128, 4
    %v11151 = vsel %vm11147, %v11131, %v11134
    %v11152 = vsel %vm11150, %v11140, 2102212464
    %v11153 = vsel %vm11149, %v11137, %v11152
    %v11154 = vsel %vm11148, %v11151, %v11153
    %v11155 = vsel %vm11147, %v11134, %v11137
    %v11156 = vsel %vm11150, %v11143, 920167782
    %v11157 = vsel %vm11149, %v11140, %v11156
    %v11158 = vsel %vm11148, %v11155, %v11157
    %v11159 = vsel %vm11147, %v11137, %v11140
    %v11160 = vsel %vm11150, %v11146, 1326507024
    %v11161 = vsel %vm11149, %v11143, %v11160
    %v11162 = vsel %vm11148, %v11159, %v11161
    %v11163 = vshll.u32 %v11123, 8
    %v11164 = vmul.u32.u64.compose %v11163, %v11162
    %v11165 = vextract.low.u32 %v11164
    %v11166 = vextract.high.u32 %v11164
    %v11167 = vmul.u32.u64.compose %v11163, %v11158
    %v11168 = vextract.low.u32 %v11167
    %v11169 = vextract.high.u32 %v11167
    %v11170 = vmul.u32 %v11163, %v11154
    %v11171 = vadd.s32 %v11166, %v11168
    %vm11172 = vc.u32 %v11166, %v11168
    %v11173 = vadd.s32 %v11169, 1
    %v11174 = vsel %vm11172, %v11173, %v11169
    %v11175 = vadd.s32 %v11170, %v11174
    %v11176 = vadd.s32 %v11175, 536870912
    %v11177 = vshrl.u32 %v11176, 30
    %v11178 = vshll.u32 %v11177, 30
    %v11179 = vsub.s32 %v11175, %v11178
    %vm11180 = vcmp.lt.s32.totalorder %v11179, 0
    %v11181 = vsub.s32 0, %v11179
    %v11182 = vsel %vm11180, %v11181, %v11179
    %v11183 = vclz %v11182
    %v11184 = vsub.s32 %v11183, 2
    %vm11185 = vcmp.gt.s32.totalorder 0, %v11184
    %v11186 = vsel %vm11185, 0, %v11184
    %v11187 = vsub.s32 32, %v11186
    %v11188 = vshll.u32 %v11179, %v11186
    %v11189 = vshrl.u32 %v11171, %v11187
    %v11190 = vor.u32 %v11188, %v11189
    %v11191 = vsub.s32 4294967266, %v11186
    %v11192 = vadd.s32 %v11191, 127
    %v11193 = vshll.u32 %v11192, 23
    %v11194 = vor.u32 4788187, %v11193
    %v11195 = vand.u32 2147483647, %v11194
    %v11197 = vcvt.s32.f32 %v11190
    %v11198 = vmul.f32 %v11197, %v11195
    %v11199 = vxor.u32 %v11198, 2147483648
    %v11200 = vsel %vm11117, %v11199, %v11198
    %v11201 = vsub.s32 4, %v11177
    %v11202 = vsel %vm11117, %v11201, %v11177
    %v11203 = vsel %vm11116, %v7890, %v11200
    %v11204 = vsel %vm11116, 0, %v11202
    %v11205 = vcosq.f32.pop %v11203
    %v11206 = vsinq.f32.pop %v11203
    %vm11207 = vweird.f32 %v7890
    %v11208 = vadd.s32 %v11204, 3
    %v11209 = vand.u32 %v11208, 3
    %vm11210 = vcmp.lt.s32.totalorder %v11209, 2
    %vm11211 = vcmp.eq.s32.totalorder %v11209, 0
    %v11212 = vxor.u32 %v11206, 2147483648
    %v11213 = vsel %vm11211, %v11205, %v11212
    %vm11214 = vcmp.eq.s32.totalorder %v11209, 2
    %v11215 = vxor.u32 %v11205, 2147483648
    %v11216 = vsel %vm11214, %v11215, %v11206
    %v11217 = vsel %vm11210, %v11213, %v11216
    %v11218 = vsel %vm11207, nan, %v11217
    %v11219 = vmul.f32 %v7994, %v7994
    %v11220 = vmul.f32 %v8098, %v8098
    %v11221 = vmul.f32 %v8202, %v8202
    %v11222 = vmul.f32 %v8306, %v8306
    %v11223 = vmul.f32 %v8410, %v8410
    %v11224 = vmul.f32 %v8514, %v8514
    %v11225 = vmul.f32 %v8618, %v8618
    %v11226 = vmul.f32 %v8722, %v8722
    %v11227 = vmul.f32 %v8826, %v8826
    %v11228 = vmul.f32 %v8930, %v8930
    %v11229 = vmul.f32 %v9034, %v9034
    %v11230 = vmul.f32 %v9138, %v9138
    %v11231 = vmul.f32 %v9242, %v9242
    %v11232 = vmul.f32 %v9346, %v9346
    %v11233 = vmul.f32 %v9450, %v9450
    %v11234 = vmul.f32 %v9554, %v9554
    %v11235 = vmul.f32 %v9658, %v9658
    %v11236 = vmul.f32 %v9762, %v9762
    %v11237 = vmul.f32 %v9866, %v9866
    %v11238 = vmul.f32 %v9970, %v9970
    %v11239 = vmul.f32 %v10074, %v10074
    %v11240 = vmul.f32 %v10178, %v10178
    %v11241 = vmul.f32 %v10282, %v10282
    %v11242 = vmul.f32 %v10386, %v10386
    %v11243 = vmul.f32 %v10490, %v10490
    %v11244 = vmul.f32 %v10594, %v10594
    %v11245 = vmul.f32 %v10698, %v10698
    %v11246 = vmul.f32 %v10802, %v10802
    %v11247 = vmul.f32 %v10906, %v10906
    %v11248 = vmul.f32 %v11010, %v11010
    %v11249 = vmul.f32 %v11114, %v11114
    %v11250 = vmul.f32 %v11218, %v11218
    %11251 = vset.pattern.permute.xlu0 9
    %11252 = vperm.xlu0 %11251, %v41
    %v11253 = vpop.permute.xlu0 %11252
    %11255 = vset.pattern.permute.xlu0 9
    %11256 = vperm.xlu0 %11255, %v42
    %v11257 = vpop.permute.xlu0 %11256
    %11259 = vset.pattern.permute.xlu0 9
    %11260 = vperm.xlu0 %11259, %v43
    %v11261 = vpop.permute.xlu0 %11260
    %11263 = vset.pattern.permute.xlu0 9
    %11264 = vperm.xlu0 %11263, %v44
    %v11265 = vpop.permute.xlu0 %11264
    %11267 = vset.pattern.permute.xlu0 9
    %11268 = vperm.xlu0 %11267, %v45
    %v11269 = vpop.permute.xlu0 %11268
    %11271 = vset.pattern.permute.xlu0 9
    %11272 = vperm.xlu0 %11271, %v46
    %v11273 = vpop.permute.xlu0 %11272
    %11275 = vset.pattern.permute.xlu0 9
    %11276 = vperm.xlu0 %11275, %v47
    %v11277 = vpop.permute.xlu0 %11276
    %11279 = vset.pattern.permute.xlu0 9
    %11280 = vperm.xlu0 %11279, %v48
    %v11281 = vpop.permute.xlu0 %11280
    %v11283 = vmul.f32 %v11219, %v11253
    %v11284 = vmul.f32 %v11220, %v11253
    %v11285 = vmul.f32 %v11221, %v11253
    %v11286 = vmul.f32 %v11222, %v11253
    %v11287 = vmul.f32 %v11223, %v11257
    %v11288 = vmul.f32 %v11224, %v11257
    %v11289 = vmul.f32 %v11225, %v11257
    %v11290 = vmul.f32 %v11226, %v11257
    %v11291 = vmul.f32 %v11227, %v11261
    %v11292 = vmul.f32 %v11228, %v11261
    %v11293 = vmul.f32 %v11229, %v11261
    %v11294 = vmul.f32 %v11230, %v11261
    %v11295 = vmul.f32 %v11231, %v11265
    %v11296 = vmul.f32 %v11232, %v11265
    %v11297 = vmul.f32 %v11233, %v11265
    %v11298 = vmul.f32 %v11234, %v11265
    %v11299 = vmul.f32 %v11235, %v11269
    %v11300 = vmul.f32 %v11236, %v11269
    %v11301 = vmul.f32 %v11237, %v11269
    %v11302 = vmul.f32 %v11238, %v11269
    %v11303 = vmul.f32 %v11239, %v11273
    %v11304 = vmul.f32 %v11240, %v11273
    %v11305 = vmul.f32 %v11241, %v11273
    %v11306 = vmul.f32 %v11242, %v11273
    %v11307 = vmul.f32 %v11243, %v11277
    %v11308 = vmul.f32 %v11244, %v11277
    %v11309 = vmul.f32 %v11245, %v11277
    %v11310 = vmul.f32 %v11246, %v11277
    %v11311 = vmul.f32 %v11247, %v11281
    %v11312 = vmul.f32 %v11248, %v11281
    %v11313 = vmul.f32 %v11249, %v11281
    %v11314 = vmul.f32 %v11250, %v11281
    %v11315 = vadd.f32 %v7668, %v11283
    %v11316 = vadd.f32 %v7670, %v11284
    %v11317 = vadd.f32 %v7781, %v11285
    %v11318 = vadd.f32 %v7783, %v11286
    %v11319 = vadd.f32 %v7674, %v11287
    %v11320 = vadd.f32 %v7676, %v11288
    %v11321 = vadd.f32 %v7787, %v11289
    %v11322 = vadd.f32 %v7789, %v11290
    %v11323 = vadd.f32 %v7680, %v11291
    %v11324 = vadd.f32 %v7682, %v11292
    %v11325 = vadd.f32 %v7793, %v11293
    %v11326 = vadd.f32 %v7795, %v11294
    %v11327 = vadd.f32 %v7686, %v11295
    %v11328 = vadd.f32 %v7688, %v11296
    %v11329 = vadd.f32 %v7799, %v11297
    %v11330 = vadd.f32 %v7801, %v11298
    %v11331 = vadd.f32 %v7692, %v11299
    %v11332 = vadd.f32 %v7694, %v11300
    %v11333 = vadd.f32 %v7805, %v11301
    %v11334 = vadd.f32 %v7807, %v11302
    %v11335 = vadd.f32 %v7698, %v11303
    %v11336 = vadd.f32 %v7700, %v11304
    %v11337 = vadd.f32 %v7811, %v11305
    %v11338 = vadd.f32 %v7813, %v11306
    %v11339 = vadd.f32 %v7704, %v11307
    %v11340 = vadd.f32 %v7706, %v11308
    %v11341 = vadd.f32 %v7817, %v11309
    %v11342 = vadd.f32 %v7819, %v11310
    %v11343 = vadd.f32 %v7710, %v11311
    %v11344 = vadd.f32 %v7712, %v11312
    %v11345 = vadd.f32 %v7823, %v11313
    %v11346 = vadd.f32 %v7825, %v11314
    %v11347 = vld [vmem:[%s4] sm:$0x1]
    %v11348 = vld [vmem:[#allocation2] sm:$0x1]
    %11350 = vset.pattern.permute.xlu0 0
    %11351 = vperm.xlu0 %11350, %v11348
    %v11352 = vpop.permute.xlu0 %11351
    %v11354 = vlaneseq
    %v11355 = vshrl.u32 %v11354, 7
    %v11356 = vsub.s32 0, %v11355
    %v11357 = vrot.slane %v11352, %v11356
    %v11359 = vsel %vm3766, %v11347, 0
    %11361 = vmatprep.subr.mxu0 %v11316
    %11362 = vmatpush1.msra.mxu0 %v11315
    %11363 = vmatprep.subr.mxu0 %v11320
    %11364 = vmatpush1.msra.mxu0 %v11319
    %11365 = vmatprep.subr.mxu0 %v11324
    %11366 = vmatpush1.msra.mxu0 %v11323
    %11367 = vmatprep.subr.mxu0 %v11328
    %11368 = vmatpush1.msra.mxu0 %v11327
    %11369 = vmatprep.subr.mxu0 %v11332
    %11370 = vmatpush1.msra.mxu0 %v11331
    %11371 = vmatprep.subr.mxu0 %v11336
    %11372 = vmatpush1.msra.mxu0 %v11335
    %11373 = vmatprep.subr.mxu0 %v11340
    %11374 = vmatpush1.msra.mxu0 %v11339
    %11375 = vmatprep.subr.mxu0 %v11344
    %11376 = vmatpush1.msra.mxu0 %v11343
    %11377 = vmatprep.subr.mxu0 0.0
    %11378 = vmatpush1.msra.mxu0 0.0
    %11379 = vmatprep.subr.mxu0 0.0
    %11380 = vmatpush1.msra.mxu0 0.0
    %11381 = vmatprep.subr.mxu0 0.0
    %11382 = vmatpush1.msra.mxu0 0.0
    %11383 = vmatprep.subr.mxu0 0.0
    %11384 = vmatpush1.msra.mxu0 0.0
    %11385 = vmatprep.subr.mxu0 0.0
    %11386 = vmatpush1.msra.mxu0 0.0
    %11387 = vmatprep.subr.mxu0 0.0
    %11388 = vmatpush1.msra.mxu0 0.0
    %11389 = vmatprep.subr.mxu0 0.0
    %11390 = vmatpush1.msra.mxu0 0.0
    %11391 = vmatprep.subr.mxu0 0.0
    %11392 = vmatpush1.msra.mxu0 0.0
    %11393 = vmatprep.subr.mxu0 0.0
    %11394 = vmatpush1.msra.mxu0 0.0
    %11395 = vmatprep.subr.mxu0 0.0
    %11396 = vmatpush1.msra.mxu0 0.0
    %11397 = vmatprep.subr.mxu0 0.0
    %11398 = vmatpush1.msra.mxu0 0.0
    %11399 = vmatprep.subr.mxu0 0.0
    %11400 = vmatpush1.msra.mxu0 0.0
    %11401 = vmatprep.subr.mxu0 0.0
    %11402 = vmatpush1.msra.mxu0 0.0
    %11403 = vmatprep.subr.mxu0 0.0
    %11404 = vmatpush1.msra.mxu0 0.0
    %11405 = vmatprep.subr.mxu0 0.0
    %11406 = vmatpush1.msra.mxu0 0.0
    %11407 = vmatprep.subr.mxu0 0.0
    %11408 = vmatpush1.msra.mxu0 0.0
    %11409 = vmatprep.subr.mxu0 0.0
    %11410 = vmatpush1.msra.mxu0 0.0
    %11411 = vmatprep.subr.mxu0 0.0
    %11412 = vmatpush1.msra.mxu0 0.0
    %11413 = vmatprep.subr.mxu0 0.0
    %11414 = vmatpush1.msra.mxu0 0.0
    %11415 = vmatprep.subr.mxu0 0.0
    %11416 = vmatpush1.msra.mxu0 0.0
    %11417 = vmatprep.subr.mxu0 0.0
    %11418 = vmatpush1.msra.mxu0 0.0
    %11419 = vmatprep.subr.mxu0 0.0
    %11420 = vmatpush1.msra.mxu0 0.0
    %11421 = vmatprep.subr.mxu0 0.0
    %11422 = vmatpush1.msra.mxu0 0.0
    %11423 = vmatprep.subr.mxu0 0.0
    %11424 = vmatpush1.msra.mxu0 0.0
    %11425 = vmatprep.mubr.f32.mxu0 0.0
    %11426 = vmatmul.mubr.f32.gmra.mrb[0].mxu0 %v11359
    %v11427 = vpop.f32.mrb[0].mxu0
    %v11428 = vadd.f32 %v11357, %v11427
    %v11429 = vpop.f32.mrb[0].mxu0
    %v11430 = vadd.f32 %v11357, %v11429
    %11431 = vdwg.mxu0
    %11432 = vmatprep.subr.mxu0 %v11318
    %11433 = vmatpush1.msra.mxu0 %v11317
    %11434 = vmatprep.subr.mxu0 %v11322
    %11435 = vmatpush1.msra.mxu0 %v11321
    %11436 = vmatprep.subr.mxu0 %v11326
    %11437 = vmatpush1.msra.mxu0 %v11325
    %11438 = vmatprep.subr.mxu0 %v11330
    %11439 = vmatpush1.msra.mxu0 %v11329
    %11440 = vmatprep.subr.mxu0 %v11334
    %11441 = vmatpush1.msra.mxu0 %v11333
    %11442 = vmatprep.subr.mxu0 %v11338
    %11443 = vmatpush1.msra.mxu0 %v11337
    %11444 = vmatprep.subr.mxu0 %v11342
    %11445 = vmatpush1.msra.mxu0 %v11341
    %11446 = vmatprep.subr.mxu0 %v11346
    %11447 = vmatpush1.msra.mxu0 %v11345
    %11448 = vmatprep.subr.mxu0 0.0
    %11449 = vmatpush1.msra.mxu0 0.0
    %11450 = vmatprep.subr.mxu0 0.0
    %11451 = vmatpush1.msra.mxu0 0.0
    %11452 = vmatprep.subr.mxu0 0.0
    %11453 = vmatpush1.msra.mxu0 0.0
    %11454 = vmatprep.subr.mxu0 0.0
    %11455 = vmatpush1.msra.mxu0 0.0
    %11456 = vmatprep.subr.mxu0 0.0
    %11457 = vmatpush1.msra.mxu0 0.0
    %11458 = vmatprep.subr.mxu0 0.0
    %11459 = vmatpush1.msra.mxu0 0.0
    %11460 = vmatprep.subr.mxu0 0.0
    %11461 = vmatpush1.msra.mxu0 0.0
    %11462 = vmatprep.subr.mxu0 0.0
    %11463 = vmatpush1.msra.mxu0 0.0
    %11464 = vmatprep.subr.mxu0 0.0
    %11465 = vmatpush1.msra.mxu0 0.0
    %11466 = vmatprep.subr.mxu0 0.0
    %11467 = vmatpush1.msra.mxu0 0.0
    %11468 = vmatprep.subr.mxu0 0.0
    %11469 = vmatpush1.msra.mxu0 0.0
    %11470 = vmatprep.subr.mxu0 0.0
    %11471 = vmatpush1.msra.mxu0 0.0
    %11472 = vmatprep.subr.mxu0 0.0
    %11473 = vmatpush1.msra.mxu0 0.0
    %11474 = vmatprep.subr.mxu0 0.0
    %11475 = vmatpush1.msra.mxu0 0.0
    %11476 = vmatprep.subr.mxu0 0.0
    %11477 = vmatpush1.msra.mxu0 0.0
    %11478 = vmatprep.subr.mxu0 0.0
    %11479 = vmatpush1.msra.mxu0 0.0
    %11480 = vmatprep.subr.mxu0 0.0
    %11481 = vmatpush1.msra.mxu0 0.0
    %11482 = vmatprep.subr.mxu0 0.0
    %11483 = vmatpush1.msra.mxu0 0.0
    %11484 = vmatprep.subr.mxu0 0.0
    %11485 = vmatpush1.msra.mxu0 0.0
    %11486 = vmatprep.subr.mxu0 0.0
    %11487 = vmatpush1.msra.mxu0 0.0
    %11488 = vmatprep.subr.mxu0 0.0
    %11489 = vmatpush1.msra.mxu0 0.0
    %11490 = vmatprep.subr.mxu0 0.0
    %11491 = vmatpush1.msra.mxu0 0.0
    %11492 = vmatprep.subr.mxu0 0.0
    %11493 = vmatpush1.msra.mxu0 0.0
    %11494 = vmatprep.subr.mxu0 0.0
    %11495 = vmatpush1.msra.mxu0 0.0
    %11496 = vmatprep.mubr.f32.mxu0 0.0
    %11497 = vmatmul.mubr.f32.gmra.mrb[0].mxu0 %v11359
    %v11498 = vpop.f32.mrb[0].mxu0
    %v11499 = vadd.f32 %v11357, %v11498
    %v11500 = vpop.f32.mrb[0].mxu0
    %v11501 = vadd.f32 %v11357, %v11500
    %11502 = vdwg.mxu0
    %v11503 = vxor.u32 %v11428, 2147483648
    %v11504 = vxor.u32 %v11430, 2147483648
    %v11505 = vxor.u32 %v11499, 2147483648
    %v11506 = vxor.u32 %v11501, 2147483648
    %v11507 = vmul.f32 %v11503, 1.442695
    %v11508 = vpow.pop %v11507
    %v11509 = vmul.f32 %v11504, 1.442695
    %v11510 = vpow.pop %v11509
    %v11511 = vmul.f32 %v11505, 1.442695
    %v11512 = vpow.pop %v11511
    %v11513 = vmul.f32 %v11506, 1.442695
    %v11514 = vpow.pop %v11513
    %v11515 = vadd.f32 %v11508, 1.0
    %v11516 = vadd.f32 %v11510, 1.0
    %v11517 = vadd.f32 %v11512, 1.0
    %v11518 = vadd.f32 %v11514, 1.0
    %v11519 = vrcp.pop %v11515
    %v11520 = vmul.f32 1.0, %v11519
    %v11521 = vrcp.pop %v11516
    %v11522 = vmul.f32 1.0, %v11521
    %v11523 = vrcp.pop %v11517
    %v11524 = vmul.f32 1.0, %v11523
    %v11525 = vrcp.pop %v11518
    %v11526 = vmul.f32 1.0, %v11525
    %v11531 = vcombine.low %v11520, %v11522
    %v11532 = vcombine.low %v11524, %v11526
    %v11534 = vunpack.c.l.s4 1966171168
    %v11535 = vunpack.c.0.s8 %v11534
    %v11536 = vlaneseq
    %v11537 = vshrl.u32 %v11536, 7
    %v11538 = vsub.s32 %v11535, %v11537
    %v11539 = vrot.slane %v11531, %v11538
    %v11541 = vunpack.c.l.s4 1966171168
    %v11542 = vunpack.c.0.s8 %v11541
    %v11543 = vlaneseq
    %v11544 = vshrl.u32 %v11543, 7
    %v11545 = vsub.s32 %v11542, %v11544
    %v11546 = vrot.slane %v11532, %v11545
    %v11547 = vcombine.low %v11539, %v11546
    %v11549 = vunpack.c.l.s4 1966171168
    %v11550 = vunpack.c.0.s8 %v11549
    %v11551 = vlaneseq
    %v11552 = vshrl.u32 %v11551, 7
    %v11553 = vsub.s32 %v11550, %v11552
    %v11554 = vrot.slane %v11547, %v11553
    %v11556 = vlaneseq
    %vm11557 = vcmp.ge.s32.totalorder %v11556, 0
    %vm11558 = vcmp.lt.s32.totalorder %v11556, 512
    %vm11559 = vmand %vm11557, %vm11558
    %11560 = vst.msk [vmem:[#allocation6] sm:$0xf] %vm11559, %v11554
    // Predicated region
    $region30: #{tpu_custom_call.1} parent=1 // pred_check
      _
    $region31: #{tpu_custom_call.1} parent=1 // pred_check_branch
      %11562 = sbr.rel (0) target = $region33
    $region32: #{tpu_custom_call.1} parent=1 // pred_region
      %s11564 = ssub.s32 64, 64
      %11565 = vsyncadd [#allocation5], %s11564
      %s11567 = sshll.u32 [#allocation6], 4
      %s11568 = int_to_ptr.vmem [resolvable:$true] %s11567
      %11570 = dma.vmem_to_hbm [thread:$0]  %s11568, 64, %s6, [#allocation5]
    $region33: #{tpu_custom_call.1} parent=1 // pred_fallthru
      _
    // Predicated region
    $region34: #{tpu_custom_call.1} parent=1 // pred_check
      _
    $region35: #{tpu_custom_call.1} parent=1 // pred_check_branch
      %11572 = sbr.rel (0) target = $region37
    $region36: #{tpu_custom_call.1} parent=1 // pred_region
      %11573 = dma.done [#allocation5], 64
    $region37: #{tpu_custom_call.1} parent=1 // pred_fallthru
      _
    %11574 = vsyncpa [#allocation4], 1
    %11575 = vsyncpa [#allocation5], 1

</llo_original>
